<compile_context>
chip_gen: v7x
topology: tpu7x:2x2x1
jax: 0.10.0
libtpu: 0.0.40
codegen_flags: <defaults>
</compile_context>

<pallas_src>
import jax
import jax.numpy as jnp
from jax import lax
from jax.experimental import pallas as pl
from jax.experimental.pallas import tpu as pltpu

NEGATIVE_SLOPE = -0.3
N_BATCH, C_IN, H_IN, W_IN = 2, 20, 8, 8
C_MID, C_OUT = 40, 20
GROUPS1, GROUPS2 = 5, 5
K1, K2 = 5, 3
S1, P1, D1 = 1, 1, 3
S2, P2, D2 = 2, 1, 3

# TODO(synk): the original module declares ConvTranspose2d(20, 353, groups=9) and
# ConvTranspose2d(353, 20, groups=5); 353 is divisible by neither 9 nor 5, so the
# PyTorch module cannot even be constructed.  We keep the exact structure (grouped,
# dilated, strided transposed convs, each followed by where(x>0, x, x*slope)) at
# small, valid channel counts.

# ------------------------------ derived geometry ------------------------------
PAD1 = D1 * (K1 - 1) - P1                                   # 11
H1 = (H_IN - 1) * S1 + 1 + 2 * PAD1 - D1 * (K1 - 1)         # 18
PAD2 = D2 * (K2 - 1) - P2                                   # 5
H2 = (H1 - 1) * S2 + 1 + 2 * PAD2 - D2 * (K2 - 1)           # 39


def _taps_1d(r):
    """Taps contributing to output parity r: list of (t4 offset, flipped tap idx)."""
    out = []
    for a in range(K2):
        num = r + a * D2 - PAD2
        if num % S2 == 0:
            out.append((num // S2, a))
    return out


_TAPS_RI = [_taps_1d(r) for r in range(S2)]                 # [[(-1,1)], [(-2,0),(1,2)]]
_U_RI = [len(range(r, H2, S2)) for r in range(S2)]          # outputs per parity [20,19]

# zero padding of the conv1 grid = most negative conv2 tap offset (static tie, per review)
GP = max(0, max(-o for taps in _TAPS_RI for (o, _) in taps))            # 2
assert all(o + GP >= 0 for taps in _TAPS_RI for (o, _) in taps)

# common (zero padded) conv1 output grid, rounded up to a multiple of 8 so every
# conv2 row shift (multiple of HP) is sublane aligned.
_HP_MIN = max([H1 + 2 * GP] +
              [(u - 1) + (o + GP) + 1
               for taps, u in zip(_TAPS_RI, _U_RI) for (o, _) in taps])  # 22
HP = ((_HP_MIN + 7) // 8) * 8                                            # 24
HPHP = HP * HP                                                           # 576
assert HP % 8 == 0
# every shifted read issued for a *valid* conv2 output stays inside one image row
for taps, u in zip(_TAPS_RI, _U_RI):
    for (o, _) in taps:
        assert 0 <= (u - 1) + (o + GP) < HP

# conv2 column(j)-shift blocks, lane-stacked along K of the conv2 matmuls
JBLOCKS = [(ob + GP, rj, b) for rj in range(S2) for (ob, b) in _TAPS_RI[rj]]
NJB = len(JBLOCKS)                                                       # 3
# conv2 matmul instances: one per (output row parity, row tap)
IMATS = [(ri, oa + GP, a) for ri in range(S2) for (oa, a) in _TAPS_RI[ri]]
NIM = len(IMATS)                                                         # 3
MAX_SI = max(si for (_, si, _) in IMATS)                                 # 3
T4ROWS = HPHP + MAX_SI * HP                                              # 648
assert T4ROWS % 8 == 0
assert HPHP + max(js for (js, _, _) in JBLOCKS) <= T4ROWS

XPADL = GP + PAD1                                                        # 13
HX = D1 * (K1 - 1) + HP                                                  # 36
assert HX - H_IN - XPADL >= 0
KDIM = K1 * C_IN                                                         # 100
NPHASE = S2 * S2                                                         # 4


def _leaky(y):
    return jnp.where(y > 0, y, y * NEGATIVE_SLOPE)


# -------------------------------- Pallas kernel --------------------------------
def _fused_kernel(xr_ref, w1_ref, b1_ref, m_ref, w2_ref, b2_ref, o_ref,
                  t4_ref, t4c_ref):
    # conv_t1: 5 accumulated matmuls (K = K1*C_IN = 100) over 8-aligned row-shifted
    # slices of the column-im2col input; + bias, leaky, and grid-validity mask.
    acc = None
    for a in range(K1):
        lhs = xr_ref[pl.ds(a * D1 * HP, HPHP), :]
        d = jnp.dot(lhs, w1_ref[a], preferred_element_type=jnp.float32)
        acc = d if acc is None else acc + d
    y1 = _leaky(acc + b1_ref[...]) * m_ref[...]

    # t4: spatially zero-padded, flattened conv1 activation (tail rows zeroed).
    t4_ref[pl.ds(0, HPHP), :] = y1
    t4_ref[pl.ds(HPHP, T4ROWS - HPHP), :] = jnp.zeros(
        (T4ROWS - HPHP, C_MID), jnp.float32)

    # t4c: column(j)-shift im2col of t4, lane-stacked along K (width 3*40 = 120).
    t4c_ref[pl.ds(0, HPHP), :] = jnp.concatenate(
        [t4_ref[pl.ds(js, HPHP), :] for (js, _, _) in JBLOCKS], axis=1)
    t4c_ref[pl.ds(HPHP, T4ROWS - HPHP), :] = jnp.zeros(
        (T4ROWS - HPHP, NJB * C_MID), jnp.float32)

    # conv_t2: one K=120 matmul per (row parity, row tap), all reads sublane
    # aligned; the stacked weights place every result directly into its
    # phase-packed lane block of the (HPHP, 4*C_OUT) output.
    out = None
    for m, (_, si, _) in enumerate(IMATS):
        d = jnp.dot(t4c_ref[pl.ds(si * HP, HPHP), :], w2_ref[m],
                    preferred_element_type=jnp.float32)
        out = d if out is None else out + d
    o_ref[...] = _leaky(out + b2_ref[...])


def _fused_pallas(xr, w1a, b1, mask, w2s, b2t):
    flops = 2 * N_BATCH * HPHP * (K1 * KDIM * C_MID
                                  + NIM * NJB * C_MID * NPHASE * C_OUT)
    bytes_accessed = 4 * (xr.size + w1a.size + b1.size + mask.size + w2s.size
                          + b2t.size + N_BATCH * HPHP * NPHASE * C_OUT)
    return pl.pallas_call(
        _fused_kernel,
        out_shape=jax.ShapeDtypeStruct((N_BATCH, HPHP, NPHASE * C_OUT),
                                       jnp.float32),
        grid=(N_BATCH,),
        in_specs=[
            pl.BlockSpec((None, HX * HP, KDIM), lambda n: (n, 0, 0)),
            pl.BlockSpec((K1, KDIM, C_MID), lambda n: (0, 0, 0)),
            pl.BlockSpec((1, C_MID), lambda n: (0, 0)),
            pl.BlockSpec((HPHP, 1), lambda n: (0, 0)),
            pl.BlockSpec((NIM, NJB * C_MID, NPHASE * C_OUT), lambda n: (0, 0, 0)),
            pl.BlockSpec((1, NPHASE * C_OUT), lambda n: (0, 0)),
        ],
        out_specs=pl.BlockSpec((None, HPHP, NPHASE * C_OUT), lambda n: (n, 0, 0)),
        scratch_shapes=[
            pltpu.VMEM((T4ROWS, C_MID), jnp.float32),
            pltpu.VMEM((T4ROWS, NJB * C_MID), jnp.float32),
        ],
        compiler_params=pltpu.CompilerParams(
            dimension_semantics=("parallel",),
            vmem_limit_bytes=32 * 1024 * 1024),
        cost_estimate=pl.CostEstimate(
            flops=int(flops), transcendentals=0,
            bytes_accessed=int(bytes_accessed)),
    )(xr, w1a, b1, mask, w2s, b2t)


# ------------------------------ weight preparation ------------------------------
def _dense_tap_weights(w_t, groups):
    """(Cin, Cout_g, k, k) transposed-conv weight -> (k, k, Cin, Cout) per-tap dense
    matrices: spatially flipped and zero-filled across groups (block diagonal)."""
    cin, cout_g, k, _ = w_t.shape
    cin_g = cin // groups
    cout = cout_g * groups
    wf = w_t[:, :, ::-1, ::-1].transpose(2, 3, 0, 1)           # (k, k, Cin, Cout_g)
    wd = jnp.zeros((k, k, cin, cout), w_t.dtype)
    for g in range(groups):
        wd = wd.at[:, :, g * cin_g:(g + 1) * cin_g,
                   g * cout_g:(g + 1) * cout_g].set(
            wf[:, :, g * cin_g:(g + 1) * cin_g, :])
    return wd


def _prep_weights(params):
    # conv1: per row-tap a, a (K1*C_IN, C_MID) matrix ordered (b, cin) to match xr.
    w1d = _dense_tap_weights(params["w1"], GROUPS1)            # (5,5,20,40)
    w1a = w1d.reshape(K1, K1 * C_IN, C_MID)                    # (5,100,40)
    b1 = params["b1"].reshape(1, C_MID)

    # conv2: per (row parity, row tap) matmul, a (NJB*C_MID, NPHASE*C_OUT) matrix
    # whose K blocks are the j-shift slabs and whose N blocks are the phase slots.
    w2d = _dense_tap_weights(params["w2"], GROUPS2)            # (3,3,40,20)
    w2s = jnp.zeros((NIM, NJB * C_MID, NPHASE * C_OUT), jnp.float32)
    for m, (ri, _, a) in enumerate(IMATS):
        for k, (_, rj, b) in enumerate(JBLOCKS):
            col0 = (ri * S2 + rj) * C_OUT
            w2s = w2s.at[m, k * C_MID:(k + 1) * C_MID,
                         col0:col0 + C_OUT].set(w2d[a, b])
    b2t = jnp.tile(params["b2"].reshape(1, C_OUT), (1, NPHASE))   # (1, 80)
    return w1a, b1, w2s, b2t


# ----------------------------------- forward ------------------------------------
def model_forward(x_nchw, params):
    n = x_nchw.shape[0]
    assert n == N_BATCH
    x = jnp.transpose(x_nchw, (0, 2, 3, 1)).astype(jnp.float32)          # NHWC
    padr = HX - H_IN - XPADL
    x_pp = jnp.pad(x, ((0, 0), (XPADL, padr), (XPADL, padr), (0, 0)))    # (N,36,36,20)

    # column (W) im2col only: tiny (~0.3 MB/batch), no 25x patch duplication.
    xr = jnp.concatenate(
        [x_pp[:, :, D1 * b:D1 * b + HP, :] for b in range(K1)], axis=-1)  # (N,36,24,100)
    xr = xr.reshape(n, HX * HP, KDIM)

    # mask of grid rows that hold real conv1 outputs (border rows must be exactly 0
    # so conv2's shifted reads see proper zero padding).
    v = ((jnp.arange(HP) >= GP) & (jnp.arange(HP) < GP + H1)).astype(jnp.float32)
    mask = (v[:, None] * v[None, :]).reshape(HPHP, 1)

    w1a, b1, w2s, b2t = _prep_weights(params)
    o = _fused_pallas(xr, w1a, b1, mask, w2s, b2t)             # (N, 576, 80)

    # lanes are (ri, rj, c); de-interleave the 4 stride-2 phases into NCHW.
    o = o.reshape(n, HP, HP, S2, S2, C_OUT)
    o = o.transpose(0, 5, 1, 3, 2, 4).reshape(n, C_OUT, HP * S2, HP * S2)
    return o[:, :, :H2, :H2]


# ------------------------------ pure-JAX reference ------------------------------
def _ref_conv_transpose(x_nchw, w_t, bias, *, stride, padding, dilation, groups):
    cin, cout_g, k, _ = w_t.shape
    cin_g = cin // groups
    pad = dilation * (k - 1) - padding
    w = w_t.reshape(groups, cin_g, cout_g, k, k)
    w = w.transpose(0, 2, 1, 3, 4)[..., ::-1, ::-1]
    w = w.reshape(groups * cout_g, cin_g, k, k)
    y = lax.conv_general_dilated(
        x_nchw, w, window_strides=(1, 1), padding=[(pad, pad), (pad, pad)],
        lhs_dilation=(stride, stride), rhs_dilation=(dilation, dilation),
        dimension_numbers=("NCHW", "OIHW", "NCHW"),
        feature_group_count=groups,
        precision=lax.Precision.HIGHEST)
    return y + bias[None, :, None, None]


def _ref_forward(x_nchw, params):
    t1 = _ref_conv_transpose(x_nchw, params["w1"], params["b1"],
                             stride=S1, padding=P1, dilation=D1, groups=GROUPS1)
    t4 = _leaky(t1)
    t5 = _ref_conv_transpose(t4, params["w2"], params["b2"],
                             stride=S2, padding=P2, dilation=D2, groups=GROUPS2)
    return _leaky(t5)


if __name__ == "__main__":
    key = jax.random.PRNGKey(0)
    kx, kw1, kb1, kw2, kb2 = jax.random.split(key, 5)

    def uinit(k, shape, fan):
        bound = 1.0 / (fan ** 0.5)
        return jax.random.uniform(k, shape, jnp.float32, -bound, bound)

    params = {
        "w1": uinit(kw1, (C_IN, C_MID // GROUPS1, K1, K1), (C_MID // GROUPS1) * K1 * K1),
        "b1": uinit(kb1, (C_MID,), (C_MID // GROUPS1) * K1 * K1),
        "w2": uinit(kw2, (C_MID, C_OUT // GROUPS2, K2, K2), (C_OUT // GROUPS2) * K2 * K2),
        "b2": uinit(kb2, (C_OUT,), (C_OUT // GROUPS2) * K2 * K2),
    }

    x = jax.random.normal(kx, (N_BATCH, C_IN, H_IN, W_IN), jnp.float32)

    out = jax.jit(model_forward)(x, params)
    out = jax.block_until_ready(out)

    ref = _ref_forward(x, params)
    assert out.shape == ref.shape == (N_BATCH, C_OUT, H2, H2), (out.shape, ref.shape)
    err = float(jnp.max(jnp.abs(out - ref)))
    assert jnp.allclose(out, ref, atol=1e-3, rtol=1e-3), err

    print("KERNEL_OK")
</pallas_src>

<mosaic_0001>
module attributes {stable_mosaic.version = 11 : i64} {
  func.func @_fused_kernel(%arg0: i32, %arg1: memref<1x864x100xf32, #tpu.memory_space<vmem>>, %arg2: memref<5x100x40xf32, #tpu.memory_space<vmem>>, %arg3: memref<1x40xf32, #tpu.memory_space<vmem>>, %arg4: memref<576x1xf32, #tpu.memory_space<vmem>>, %arg5: memref<3x120x80xf32, #tpu.memory_space<vmem>>, %arg6: memref<1x80xf32, #tpu.memory_space<vmem>>, %arg7: memref<1x576x80xf32, #tpu.memory_space<vmem>>, %arg8: memref<648x40xf32, #tpu.memory_space<vmem>>, %arg9: memref<648x120xf32, #tpu.memory_space<vmem>>) attributes {dimension_semantics = [#tpu.dimension_semantics<parallel>], iteration_bounds = array<i64: 2>, scalar_prefetch = 0 : i64, scratch_operands = 2 : i64, tpu.core_type = #tpu.core_type<tc>, window_params = [{transform_indices = @transform_0, window_bounds = array<i64: 1, 864, 100>}, {pipeline_mode = #tpu.pipeline_mode<synchronous>, transform_indices = @transform_1, window_bounds = array<i64: 5, 100, 40>}, {pipeline_mode = #tpu.pipeline_mode<synchronous>, transform_indices = @transform_2, window_bounds = array<i64: 1, 40>}, {pipeline_mode = #tpu.pipeline_mode<synchronous>, transform_indices = @transform_3, window_bounds = array<i64: 576, 1>}, {pipeline_mode = #tpu.pipeline_mode<synchronous>, transform_indices = @transform_4, window_bounds = array<i64: 3, 120, 80>}, {pipeline_mode = #tpu.pipeline_mode<synchronous>, transform_indices = @transform_5, window_bounds = array<i64: 1, 80>}, {transform_indices = @transform_6, window_bounds = array<i64: 1, 576, 80>}]} {
    %c0 = arith.constant 0 : index
    %c0_0 = arith.constant 0 : index
    %c0_1 = arith.constant 0 : index
    %0 = vector.load %arg1[%c0, %c0_0, %c0_1] : memref<1x864x100xf32, #tpu.memory_space<vmem>>, vector<1x576x100xf32>
    %1 = vector.shape_cast %0 : vector<1x576x100xf32> to vector<576x100xf32>
    %c0_2 = arith.constant 0 : index
    %c0_3 = arith.constant 0 : index
    %c0_4 = arith.constant 0 : index
    %2 = vector.load %arg2[%c0_2, %c0_3, %c0_4] : memref<5x100x40xf32, #tpu.memory_space<vmem>>, vector<1x100x40xf32>
    %3 = vector.shape_cast %2 : vector<1x100x40xf32> to vector<100x40xf32>
    %cst = arith.constant dense<0.000000e+00> : vector<576x40xf32>
    %4 = tpu.matmul %1, %3, %cst {dimension_numbers = #tpu.dot_dimension_numbers<[1], [0], [0], [1], [0, 0, 1, 1], [], []>} : vector<576x100xf32>, vector<100x40xf32>, vector<576x40xf32> -> vector<576x40xf32>
    %c0_5 = arith.constant 0 : index
    %c72 = arith.constant 72 : index
    %c0_6 = arith.constant 0 : index
    %5 = vector.load %arg1[%c0_5, %c72, %c0_6] : memref<1x864x100xf32, #tpu.memory_space<vmem>>, vector<1x576x100xf32>
    %6 = vector.shape_cast %5 : vector<1x576x100xf32> to vector<576x100xf32>
    %c1 = arith.constant 1 : index
    %c0_7 = arith.constant 0 : index
    %c0_8 = arith.constant 0 : index
    %7 = vector.load %arg2[%c1, %c0_7, %c0_8] : memref<5x100x40xf32, #tpu.memory_space<vmem>>, vector<1x100x40xf32>
    %8 = vector.shape_cast %7 : vector<1x100x40xf32> to vector<100x40xf32>
    %cst_9 = arith.constant dense<0.000000e+00> : vector<576x40xf32>
    %9 = tpu.matmul %6, %8, %cst_9 {dimension_numbers = #tpu.dot_dimension_numbers<[1], [0], [0], [1], [0, 0, 1, 1], [], []>} : vector<576x100xf32>, vector<100x40xf32>, vector<576x40xf32> -> vector<576x40xf32>
    %10 = arith.addf %4, %9 : vector<576x40xf32>
    %c0_10 = arith.constant 0 : index
    %c144 = arith.constant 144 : index
    %c0_11 = arith.constant 0 : index
    %11 = vector.load %arg1[%c0_10, %c144, %c0_11] : memref<1x864x100xf32, #tpu.memory_space<vmem>>, vector<1x576x100xf32>
    %12 = vector.shape_cast %11 : vector<1x576x100xf32> to vector<576x100xf32>
    %c2 = arith.constant 2 : index
    %c0_12 = arith.constant 0 : index
    %c0_13 = arith.constant 0 : index
    %13 = vector.load %arg2[%c2, %c0_12, %c0_13] : memref<5x100x40xf32, #tpu.memory_space<vmem>>, vector<1x100x40xf32>
    %14 = vector.shape_cast %13 : vector<1x100x40xf32> to vector<100x40xf32>
    %cst_14 = arith.constant dense<0.000000e+00> : vector<576x40xf32>
    %15 = tpu.matmul %12, %14, %cst_14 {dimension_numbers = #tpu.dot_dimension_numbers<[1], [0], [0], [1], [0, 0, 1, 1], [], []>} : vector<576x100xf32>, vector<100x40xf32>, vector<576x40xf32> -> vector<576x40xf32>
    %16 = arith.addf %10, %15 : vector<576x40xf32>
    %c0_15 = arith.constant 0 : index
    %c216 = arith.constant 216 : index
    %c0_16 = arith.constant 0 : index
    %17 = vector.load %arg1[%c0_15, %c216, %c0_16] : memref<1x864x100xf32, #tpu.memory_space<vmem>>, vector<1x576x100xf32>
    %18 = vector.shape_cast %17 : vector<1x576x100xf32> to vector<576x100xf32>
    %c3 = arith.constant 3 : index
    %c0_17 = arith.constant 0 : index
    %c0_18 = arith.constant 0 : index
    %19 = vector.load %arg2[%c3, %c0_17, %c0_18] : memref<5x100x40xf32, #tpu.memory_space<vmem>>, vector<1x100x40xf32>
    %20 = vector.shape_cast %19 : vector<1x100x40xf32> to vector<100x40xf32>
    %cst_19 = arith.constant dense<0.000000e+00> : vector<576x40xf32>
    %21 = tpu.matmul %18, %20, %cst_19 {dimension_numbers = #tpu.dot_dimension_numbers<[1], [0], [0], [1], [0, 0, 1, 1], [], []>} : vector<576x100xf32>, vector<100x40xf32>, vector<576x40xf32> -> vector<576x40xf32>
    %22 = arith.addf %16, %21 : vector<576x40xf32>
    %c0_20 = arith.constant 0 : index
    %c288 = arith.constant 288 : index
    %c0_21 = arith.constant 0 : index
    %23 = vector.load %arg1[%c0_20, %c288, %c0_21] : memref<1x864x100xf32, #tpu.memory_space<vmem>>, vector<1x576x100xf32>
    %24 = vector.shape_cast %23 : vector<1x576x100xf32> to vector<576x100xf32>
    %c4 = arith.constant 4 : index
    %c0_22 = arith.constant 0 : index
    %c0_23 = arith.constant 0 : index
    %25 = vector.load %arg2[%c4, %c0_22, %c0_23] : memref<5x100x40xf32, #tpu.memory_space<vmem>>, vector<1x100x40xf32>
    %26 = vector.shape_cast %25 : vector<1x100x40xf32> to vector<100x40xf32>
    %cst_24 = arith.constant dense<0.000000e+00> : vector<576x40xf32>
    %27 = tpu.matmul %24, %26, %cst_24 {dimension_numbers = #tpu.dot_dimension_numbers<[1], [0], [0], [1], [0, 0, 1, 1], [], []>} : vector<576x100xf32>, vector<100x40xf32>, vector<576x40xf32> -> vector<576x40xf32>
    %28 = arith.addf %22, %27 : vector<576x40xf32>
    %c0_25 = arith.constant 0 : index
    %c0_26 = arith.constant 0 : index
    %29 = vector.load %arg3[%c0_25, %c0_26] : memref<1x40xf32, #tpu.memory_space<vmem>>, vector<1x40xf32>
    %30 = vector.broadcast %29 : vector<1x40xf32> to vector<576x40xf32>
    %31 = arith.addf %28, %30 : vector<576x40xf32>
    %cst_27 = arith.constant 0.000000e+00 : f32
    %32 = vector.broadcast %cst_27 : f32 to vector<576x40xf32>
    %33 = arith.cmpf ogt, %31, %32 : vector<576x40xf32>
    %cst_28 = arith.constant -3.000000e-01 : f32
    %34 = vector.broadcast %cst_28 : f32 to vector<576x40xf32>
    %35 = arith.mulf %31, %34 : vector<576x40xf32>
    %36 = arith.select %33, %31, %35 : vector<576x40xi1>, vector<576x40xf32>
    %c0_29 = arith.constant 0 : index
    %c0_30 = arith.constant 0 : index
    %37 = vector.load %arg4[%c0_29, %c0_30] : memref<576x1xf32, #tpu.memory_space<vmem>>, vector<576x1xf32>
    %38 = vector.broadcast %37 : vector<576x1xf32> to vector<576x40xf32>
    %39 = arith.mulf %36, %38 : vector<576x40xf32>
    %c0_31 = arith.constant 0 : index
    %c0_32 = arith.constant 0 : index
    %40 = vector.load %arg8[%c0_31, %c0_32] : memref<648x40xf32, #tpu.memory_space<vmem>>, vector<576x40xf32>
    tpu.vector_store %arg8[%c0_31, %c0_32], %39 {strides = array<i32>} : memref<648x40xf32, #tpu.memory_space<vmem>>, vector<576x40xf32>,
    %cst_33 = arith.constant 0.000000e+00 : f32
    %41 = vector.broadcast %cst_33 : f32 to vector<72x40xf32>
    %c576 = arith.constant 576 : index
    %c0_34 = arith.constant 0 : index
    %42 = vector.load %arg8[%c576, %c0_34] : memref<648x40xf32, #tpu.memory_space<vmem>>, vector<72x40xf32>
    tpu.vector_store %arg8[%c576, %c0_34], %41 {strides = array<i32>} : memref<648x40xf32, #tpu.memory_space<vmem>>, vector<72x40xf32>,
    %c1_35 = arith.constant 1 : index
    %c0_36 = arith.constant 0 : index
    %43 = vector.load %arg8[%c1_35, %c0_36] : memref<648x40xf32, #tpu.memory_space<vmem>>, vector<576x40xf32>
    %c0_37 = arith.constant 0 : index
    %c0_38 = arith.constant 0 : index
    %44 = vector.load %arg8[%c0_37, %c0_38] : memref<648x40xf32, #tpu.memory_space<vmem>>, vector<576x40xf32>
    %c3_39 = arith.constant 3 : index
    %c0_40 = arith.constant 0 : index
    %45 = vector.load %arg8[%c3_39, %c0_40] : memref<648x40xf32, #tpu.memory_space<vmem>>, vector<576x40xf32>
    %46 = tpu.concatenate %43, %44, %45 in 1 : vector<576x40xf32>, vector<576x40xf32>, vector<576x40xf32> -> vector<576x120xf32>
    %c0_41 = arith.constant 0 : index
    %c0_42 = arith.constant 0 : index
    %47 = vector.load %arg9[%c0_41, %c0_42] : memref<648x120xf32, #tpu.memory_space<vmem>>, vector<576x120xf32>
    tpu.vector_store %arg9[%c0_41, %c0_42], %46 {strides = array<i32>} : memref<648x120xf32, #tpu.memory_space<vmem>>, vector<576x120xf32>,
    %cst_43 = arith.constant 0.000000e+00 : f32
    %48 = vector.broadcast %cst_43 : f32 to vector<72x120xf32>
    %c576_44 = arith.constant 576 : index
    %c0_45 = arith.constant 0 : index
    %49 = vector.load %arg9[%c576_44, %c0_45] : memref<648x120xf32, #tpu.memory_space<vmem>>, vector<72x120xf32>
    tpu.vector_store %arg9[%c576_44, %c0_45], %48 {strides = array<i32>} : memref<648x120xf32, #tpu.memory_space<vmem>>, vector<72x120xf32>,
    %c24 = arith.constant 24 : index
    %c0_46 = arith.constant 0 : index
    %50 = vector.load %arg9[%c24, %c0_46] : memref<648x120xf32, #tpu.memory_space<vmem>>, vector<576x120xf32>
    %c0_47 = arith.constant 0 : index
    %c0_48 = arith.constant 0 : index
    %c0_49 = arith.constant 0 : index
    %51 = vector.load %arg5[%c0_47, %c0_48, %c0_49] : memref<3x120x80xf32, #tpu.memory_space<vmem>>, vector<1x120x80xf32>
    %52 = vector.shape_cast %51 : vector<1x120x80xf32> to vector<120x80xf32>
    %cst_50 = arith.constant dense<0.000000e+00> : vector<576x80xf32>
    %53 = tpu.matmul %50, %52, %cst_50 {dimension_numbers = #tpu.dot_dimension_numbers<[1], [0], [0], [1], [0, 0, 1, 1], [], []>} : vector<576x120xf32>, vector<120x80xf32>, vector<576x80xf32> -> vector<576x80xf32>
    %c0_51 = arith.constant 0 : index
    %c0_52 = arith.constant 0 : index
    %54 = vector.load %arg9[%c0_51, %c0_52] : memref<648x120xf32, #tpu.memory_space<vmem>>, vector<576x120xf32>
    %c1_53 = arith.constant 1 : index
    %c0_54 = arith.constant 0 : index
    %c0_55 = arith.constant 0 : index
    %55 = vector.load %arg5[%c1_53, %c0_54, %c0_55] : memref<3x120x80xf32, #tpu.memory_space<vmem>>, vector<1x120x80xf32>
    %56 = vector.shape_cast %55 : vector<1x120x80xf32> to vector<120x80xf32>
    %cst_56 = arith.constant dense<0.000000e+00> : vector<576x80xf32>
    %57 = tpu.matmul %54, %56, %cst_56 {dimension_numbers = #tpu.dot_dimension_numbers<[1], [0], [0], [1], [0, 0, 1, 1], [], []>} : vector<576x120xf32>, vector<120x80xf32>, vector<576x80xf32> -> vector<576x80xf32>
    %58 = arith.addf %53, %57 : vector<576x80xf32>
    %c72_57 = arith.constant 72 : index
    %c0_58 = arith.constant 0 : index
    %59 = vector.load %arg9[%c72_57, %c0_58] : memref<648x120xf32, #tpu.memory_space<vmem>>, vector<576x120xf32>
    %c2_59 = arith.constant 2 : index
    %c0_60 = arith.constant 0 : index
    %c0_61 = arith.constant 0 : index
    %60 = vector.load %arg5[%c2_59, %c0_60, %c0_61] : memref<3x120x80xf32, #tpu.memory_space<vmem>>, vector<1x120x80xf32>
    %61 = vector.shape_cast %60 : vector<1x120x80xf32> to vector<120x80xf32>
    %cst_62 = arith.constant dense<0.000000e+00> : vector<576x80xf32>
    %62 = tpu.matmul %59, %61, %cst_62 {dimension_numbers = #tpu.dot_dimension_numbers<[1], [0], [0], [1], [0, 0, 1, 1], [], []>} : vector<576x120xf32>, vector<120x80xf32>, vector<576x80xf32> -> vector<576x80xf32>
    %63 = arith.addf %58, %62 : vector<576x80xf32>
    %c0_63 = arith.constant 0 : index
    %c0_64 = arith.constant 0 : index
    %64 = vector.load %arg6[%c0_63, %c0_64] : memref<1x80xf32, #tpu.memory_space<vmem>>, vector<1x80xf32>
    %65 = vector.broadcast %64 : vector<1x80xf32> to vector<576x80xf32>
    %66 = arith.addf %63, %65 : vector<576x80xf32>
    %cst_65 = arith.constant 0.000000e+00 : f32
    %67 = vector.broadcast %cst_65 : f32 to vector<576x80xf32>
    %68 = arith.cmpf ogt, %66, %67 : vector<576x80xf32>
    %cst_66 = arith.constant -3.000000e-01 : f32
    %69 = vector.broadcast %cst_66 : f32 to vector<576x80xf32>
    %70 = arith.mulf %66, %69 : vector<576x80xf32>
    %71 = arith.select %68, %66, %70 : vector<576x80xi1>, vector<576x80xf32>
    %c0_67 = arith.constant 0 : index
    %c0_68 = arith.constant 0 : index
    %c0_69 = arith.constant 0 : index
    %72 = vector.load %arg7[%c0_67, %c0_68, %c0_69] : memref<1x576x80xf32, #tpu.memory_space<vmem>>, vector<1x576x80xf32>
    %73 = vector.shape_cast %72 : vector<1x576x80xf32> to vector<576x80xf32>
    %74 = vector.shape_cast %71 : vector<576x80xf32> to vector<1x576x80xf32>
    tpu.vector_store %arg7[%c0_67, %c0_68, %c0_69], %74 {strides = array<i32>} : memref<1x576x80xf32, #tpu.memory_space<vmem>>, vector<1x576x80xf32>,
    return
  }
  func.func @transform_0(%arg0: i32) -> (i32, i32, i32) {
    %c0_i32 = arith.constant 0 : i32
    %c0_i32_0 = arith.constant 0 : i32
    %c0_i32_1 = arith.constant 0 : i32
    return %arg0, %c0_i32, %c0_i32_0 : i32, i32, i32
  }
  func.func @transform_1(%arg0: i32) -> (i32, i32, i32) {
    %c0_i32 = arith.constant 0 : i32
    %c0_i32_0 = arith.constant 0 : i32
    %c0_i32_1 = arith.constant 0 : i32
    %c0_i32_2 = arith.constant 0 : i32
    return %c0_i32, %c0_i32_0, %c0_i32_1 : i32, i32, i32
  }
  func.func @transform_2(%arg0: i32) -> (i32, i32) {
    %c0_i32 = arith.constant 0 : i32
    %c0_i32_0 = arith.constant 0 : i32
    %c0_i32_1 = arith.constant 0 : i32
    return %c0_i32, %c0_i32_0 : i32, i32
  }
  func.func @transform_3(%arg0: i32) -> (i32, i32) {
    %c0_i32 = arith.constant 0 : i32
    %c0_i32_0 = arith.constant 0 : i32
    %c0_i32_1 = arith.constant 0 : i32
    return %c0_i32, %c0_i32_0 : i32, i32
  }
  func.func @transform_4(%arg0: i32) -> (i32, i32, i32) {
    %c0_i32 = arith.constant 0 : i32
    %c0_i32_0 = arith.constant 0 : i32
    %c0_i32_1 = arith.constant 0 : i32
    %c0_i32_2 = arith.constant 0 : i32
    return %c0_i32, %c0_i32_0, %c0_i32_1 : i32, i32, i32
  }
  func.func @transform_5(%arg0: i32) -> (i32, i32) {
    %c0_i32 = arith.constant 0 : i32
    %c0_i32_0 = arith.constant 0 : i32
    %c0_i32_1 = arith.constant 0 : i32
    return %c0_i32, %c0_i32_0 : i32, i32
  }
  func.func @transform_6(%arg0: i32) -> (i32, i32, i32) {
    %c0_i32 = arith.constant 0 : i32
    %c0_i32_0 = arith.constant 0 : i32
    %c0_i32_1 = arith.constant 0 : i32
    return %arg0, %c0_i32, %c0_i32_0 : i32, i32, i32
  }
}

</mosaic_0001>

<llo_original>
// kernel: model_forward.1
$region0: #{model_forward.1}
  #allocation0 [shape = 'u32[]', space=smem, size = 0x4, offset = 0x4, fixed_abs, tag = 'smem constant byte address 0x4 - core index']
  #allocation1 [shape = 'u32[144,128]{1,0:T(1,128)}', space=vmem, size = 0x12000, scoped, tag = 'internal scratch']
  #allocation2 [shape = 'f32[648,40]{1,0:T(8,128)}', space=vmem, size = 0x51000, scoped, tag = 'scratch operand']
  #allocation3 [shape = 'f32[648,120]{1,0:T(8,128)}', space=vmem, size = 0x51000, scoped, tag = 'scratch operand']
  %s0 = inlined_call_operand.vmem [shape: f32[2,864,100], index: 0, kind: input, shape index: {}]
  %s1 = inlined_call_operand.vmem [shape: f32[5,100,40], index: 1, kind: input, shape index: {}]
  %s2 = inlined_call_operand.vmem [shape: f32[1,40], index: 2, kind: input, shape index: {}]
  %s3 = inlined_call_operand.vmem [shape: f32[576,1], index: 3, kind: input, shape index: {}]
  %s4 = inlined_call_operand.vmem [shape: f32[3,120,80], index: 4, kind: input, shape index: {}]
  %s5 = inlined_call_operand.vmem [shape: f32[1,80], index: 5, kind: input, shape index: {}]
  %s6 = inlined_call_operand.vmem [shape: f32[2,576,80], index: 6, kind: output, shape index: {}]
  %s7 = sld [smem:[#allocation0]]
  $region57: #{model_forward.1} parent=0
    _
  %s9 = ssub.s32 1, %s7
  %s10 = scalar_select 0, %s9, %s7
  loop: start=0, step=1, limit=4
  $region2: #{model_forward.1} parent=0 // loop_pre_header
    _
  $region3: #{model_forward.1} parent=0 // loop_header
    %s12 = sphi 0, %s16
    %p13 = scmp.ge.s32.totalorder %s12, 4
    %s22 = sphi 0, %s24
    %s25 = sphi 0, %s22
    %s26 = sphi 0, %s25
    %s42 = sphi 0, %s26
    %s46 = sphi 0, %s46
    %s48 = sphi 0, %s46
    %s49 = sphi 0, %s48
    %s63 = sphi 0, %s49
    %s67 = sphi 0, %s67
    %s69 = sphi 0, %s67
    %s70 = sphi 0, %s69
    %s84 = sphi 0, %s70
    %s88 = sphi 0, %s88
    %s90 = sphi 0, %s88
    %s91 = sphi 0, %s90
    %s105 = sphi 0, %s91
    %s109 = sphi 0, %s109
    %s111 = sphi 0, %s109
    %s112 = sphi 0, %s111
    %s126 = sphi 0, %s112
    %s130 = sphi 0, %s130
    %s132 = sphi 0, %s130
    %s133 = sphi 0, %s132
    %s147 = sphi 0, %s133
    %s153 = sphi 0, %s155
    %s156 = sphi 0, %s153
    %s157 = sphi 0, %s156
    %s173 = sphi 0, %s157
  $region4: #{model_forward.1} parent=0 // loop_header_branch
    %15 = sbr.rel (%p13) target = $region8
  $region5: #{model_forward.1} parent=0 // loop_body
    %s17 = ssub.s32 %s12, 1
    %s18 = ssub.s32 %s12, 2
    %s19 = sadd.s32 %s12, 1
    %s20 = ssub.s32 %s12, %s19
    %p21 = scmp.eq.s32.totalorder %s20, 0
    %s23 = sadd.s32 %s22, 1
    %s24 = scalar_select %p21, %s22, %s23
    %p27 = pneg %p21
    %p28 = scmp.eq.s32.totalorder %s12, 1
    %p29 = por %p27, %p28
    %p30 = scmp.ne.s32.totalorder %s22, %s25
    %p31 = scmp.eq.s32.totalorder %s12, 0
    %p32 = por %p30, %p31
    %p33 = scmp.ne.s32.totalorder %s22, %s25
    %p34 = scmp.eq.s32.totalorder %s17, 1
    %p35 = por %p33, %p34
    %p36 = scmp.ne.s32.totalorder %s25, %s26
    %p37 = scmp.eq.s32.totalorder %s17, 0
    %p38 = por %p36, %p37
    %p39 = scmp.ne.s32.totalorder %s25, %s26
    %p40 = scmp.eq.s32.totalorder %s18, 1
    %p41 = por %p39, %p40
    %p43 = scmp.ne.s32.totalorder %s26, %s42
    %p44 = scmp.eq.s32.totalorder %s18, 0
    %p45 = por %p43, %p44
    %s47 = sadd.s32 %s46, 1
    %p50 = scmp.eq.s32.totalorder %s12, 1
    %p51 = scmp.ne.s32.totalorder %s46, %s48
    %p52 = scmp.eq.s32.totalorder %s12, 0
    %p53 = por %p51, %p52
    %p54 = scmp.ne.s32.totalorder %s46, %s48
    %p55 = scmp.eq.s32.totalorder %s17, 1
    %p56 = por %p54, %p55
    %p57 = scmp.ne.s32.totalorder %s48, %s49
    %p58 = scmp.eq.s32.totalorder %s17, 0
    %p59 = por %p57, %p58
    %p60 = scmp.ne.s32.totalorder %s48, %s49
    %p61 = scmp.eq.s32.totalorder %s18, 1
    %p62 = por %p60, %p61
    %p64 = scmp.ne.s32.totalorder %s49, %s63
    %p65 = scmp.eq.s32.totalorder %s18, 0
    %p66 = por %p64, %p65
    %s68 = sadd.s32 %s67, 1
    %p71 = scmp.eq.s32.totalorder %s12, 1
    %p72 = scmp.ne.s32.totalorder %s67, %s69
    %p73 = scmp.eq.s32.totalorder %s12, 0
    %p74 = por %p72, %p73
    %p75 = scmp.ne.s32.totalorder %s67, %s69
    %p76 = scmp.eq.s32.totalorder %s17, 1
    %p77 = por %p75, %p76
    %p78 = scmp.ne.s32.totalorder %s69, %s70
    %p79 = scmp.eq.s32.totalorder %s17, 0
    %p80 = por %p78, %p79
    %p81 = scmp.ne.s32.totalorder %s69, %s70
    %p82 = scmp.eq.s32.totalorder %s18, 1
    %p83 = por %p81, %p82
    %p85 = scmp.ne.s32.totalorder %s70, %s84
    %p86 = scmp.eq.s32.totalorder %s18, 0
    %p87 = por %p85, %p86
    %s89 = sadd.s32 %s88, 1
    %p92 = scmp.eq.s32.totalorder %s12, 1
    %p93 = scmp.ne.s32.totalorder %s88, %s90
    %p94 = scmp.eq.s32.totalorder %s12, 0
    %p95 = por %p93, %p94
    %p96 = scmp.ne.s32.totalorder %s88, %s90
    %p97 = scmp.eq.s32.totalorder %s17, 1
    %p98 = por %p96, %p97
    %p99 = scmp.ne.s32.totalorder %s90, %s91
    %p100 = scmp.eq.s32.totalorder %s17, 0
    %p101 = por %p99, %p100
    %p102 = scmp.ne.s32.totalorder %s90, %s91
    %p103 = scmp.eq.s32.totalorder %s18, 1
    %p104 = por %p102, %p103
    %p106 = scmp.ne.s32.totalorder %s91, %s105
    %p107 = scmp.eq.s32.totalorder %s18, 0
    %p108 = por %p106, %p107
    %s110 = sadd.s32 %s109, 1
    %p113 = scmp.eq.s32.totalorder %s12, 1
    %p114 = scmp.ne.s32.totalorder %s109, %s111
    %p115 = scmp.eq.s32.totalorder %s12, 0
    %p116 = por %p114, %p115
    %p117 = scmp.ne.s32.totalorder %s109, %s111
    %p118 = scmp.eq.s32.totalorder %s17, 1
    %p119 = por %p117, %p118
    %p120 = scmp.ne.s32.totalorder %s111, %s112
    %p121 = scmp.eq.s32.totalorder %s17, 0
    %p122 = por %p120, %p121
    %p123 = scmp.ne.s32.totalorder %s111, %s112
    %p124 = scmp.eq.s32.totalorder %s18, 1
    %p125 = por %p123, %p124
    %p127 = scmp.ne.s32.totalorder %s112, %s126
    %p128 = scmp.eq.s32.totalorder %s18, 0
    %p129 = por %p127, %p128
    %s131 = sadd.s32 %s130, 1
    %p134 = scmp.eq.s32.totalorder %s12, 1
    %p135 = scmp.ne.s32.totalorder %s130, %s132
    %p136 = scmp.eq.s32.totalorder %s12, 0
    %p137 = por %p135, %p136
    %p138 = scmp.ne.s32.totalorder %s130, %s132
    %p139 = scmp.eq.s32.totalorder %s17, 1
    %p140 = por %p138, %p139
    %p141 = scmp.ne.s32.totalorder %s132, %s133
    %p142 = scmp.eq.s32.totalorder %s17, 0
    %p143 = por %p141, %p142
    %p144 = scmp.ne.s32.totalorder %s132, %s133
    %p145 = scmp.eq.s32.totalorder %s18, 1
    %p146 = por %p144, %p145
    %p148 = scmp.ne.s32.totalorder %s133, %s147
    %p149 = scmp.eq.s32.totalorder %s18, 0
    %p150 = por %p148, %p149
    %s151 = ssub.s32 %s12, %s19
    %p152 = scmp.eq.s32.totalorder %s151, 0
    %s154 = sadd.s32 %s153, 1
    %s155 = scalar_select %p152, %s153, %s154
    %p158 = pneg %p152
    %p159 = scmp.eq.s32.totalorder %s12, 1
    %p160 = por %p158, %p159
    %p161 = scmp.ne.s32.totalorder %s153, %s156
    %p162 = scmp.eq.s32.totalorder %s12, 0
    %p163 = por %p161, %p162
    %p164 = scmp.ne.s32.totalorder %s153, %s156
    %p165 = scmp.eq.s32.totalorder %s17, 1
    %p166 = por %p164, %p165
    %p167 = scmp.ne.s32.totalorder %s156, %s157
    %p168 = scmp.eq.s32.totalorder %s17, 0
    %p169 = por %p167, %p168
    %p170 = scmp.ne.s32.totalorder %s156, %s157
    %p171 = scmp.eq.s32.totalorder %s18, 1
    %p172 = por %p170, %p171
    %p174 = scmp.ne.s32.totalorder %s157, %s173
    %p175 = scmp.eq.s32.totalorder %s18, 0
    %p176 = por %p174, %p175
    %p177 = scmp.le.s32.totalorder 1, %s12
    %p178 = scmp.lt.s32.totalorder %s12, 3
    %p179 = pnand %p177, %p178
    %p180 = pneg %p179
    // Predicated region
    $region9: #{model_forward.1} parent=5 // pred_check
      _
    $region10: #{model_forward.1} parent=5 // pred_check_branch
      %182 = sbr.rel (%p179) target = $region12
    $region11: #{model_forward.1} parent=5 // pred_region
      %s183 = ssub.s32 %s12, 1
      // Predicated region
      $region13: #{model_forward.1} parent=11 // pred_check
        %p184 = pneg %p59
      $region14: #{model_forward.1} parent=11 // pred_check_branch
        %186 = sbr.rel (%p184) target = $region16
      $region15: #{model_forward.1} parent=11 // pred_region
        _
      $region16: #{model_forward.1} parent=11 // pred_fallthru
        _
      // Predicated region
      $region17: #{model_forward.1} parent=11 // pred_check
        %p187 = pneg %p80
      $region18: #{model_forward.1} parent=11 // pred_check_branch
        %189 = sbr.rel (%p187) target = $region20
      $region19: #{model_forward.1} parent=11 // pred_region
        _
      $region20: #{model_forward.1} parent=11 // pred_fallthru
        _
      // Predicated region
      $region21: #{model_forward.1} parent=11 // pred_check
        %p190 = pneg %p101
      $region22: #{model_forward.1} parent=11 // pred_check_branch
        %192 = sbr.rel (%p190) target = $region24
      $region23: #{model_forward.1} parent=11 // pred_region
        _
      $region24: #{model_forward.1} parent=11 // pred_fallthru
        _
      // Predicated region
      $region25: #{model_forward.1} parent=11 // pred_check
        %p193 = pneg %p122
      $region26: #{model_forward.1} parent=11 // pred_check_branch
        %195 = sbr.rel (%p193) target = $region28
      $region27: #{model_forward.1} parent=11 // pred_region
        _
      $region28: #{model_forward.1} parent=11 // pred_fallthru
        _
      // Predicated region
      $region29: #{model_forward.1} parent=11 // pred_check
        %p196 = pneg %p143
      $region30: #{model_forward.1} parent=11 // pred_check_branch
        %198 = sbr.rel (%p196) target = $region32
      $region31: #{model_forward.1} parent=11 // pred_region
        _
      $region32: #{model_forward.1} parent=11 // pred_fallthru
        _
    $region12: #{model_forward.1} parent=5 // pred_fallthru
      _
    %p199 = scmp.lt.s32.totalorder %s12, 2
    // Predicated region
    $region33: #{model_forward.1} parent=5 // pred_check
      %p200 = pneg %p199
    $region34: #{model_forward.1} parent=5 // pred_check_branch
      %202 = sbr.rel (%p200) target = $region36
    $region35: #{model_forward.1} parent=5 // pred_region
      // Predicated region
      $region37: #{model_forward.1} parent=35 // pred_check
        %p203 = pneg %p32
      $region38: #{model_forward.1} parent=35 // pred_check_branch
        %205 = sbr.rel (%p203) target = $region40
      $region39: #{model_forward.1} parent=35 // pred_region
        %p206 = scmp.lt.s32.totalorder %s12, 1
        %s207 = scalar_select %p206, %s12, 1
        %s208 = smul.addr %s207, 108
        %s209 = smul.addr %s208, 8
        %s210 = scalar_lea.vmem %s0, %s209
      $region40: #{model_forward.1} parent=35 // pred_fallthru
        _
    $region36: #{model_forward.1} parent=5 // pred_fallthru
      _
    %p211 = scmp.le.s32.totalorder 1, %s12
    %p212 = scmp.lt.s32.totalorder %s12, 3
    %p213 = pnand %p211, %p212
    %p214 = pneg %p213
    // Predicated region
    $region41: #{model_forward.1} parent=5 // pred_check
      _
    $region42: #{model_forward.1} parent=5 // pred_check_branch
      %216 = sbr.rel (%p213) target = $region44
    $region43: #{model_forward.1} parent=5 // pred_region
      %s217 = ssub.s32 %s12, 1
      %p218 = scmp.lt.s32.totalorder %s17, 1
      %s219 = scalar_select %p218, %s17, 1
      %s220 = smul.addr %s219, 108
      %s221 = smul.addr %s220, 8
      %s222 = scalar_lea.vmem %s0, %s221
      %p223 = pneg %p38
      %p224 = pneg %p35
      %p225 = pneg %p59
      %p226 = pneg %p56
      %p227 = pneg %p80
      %p228 = pneg %p77
      %p229 = pneg %p101
      %p230 = pneg %p98
      %p231 = pneg %p122
      %p232 = pneg %p119
      %p233 = pneg %p143
      %p234 = pneg %p140
      %p235 = pneg %p169
      %p236 = pneg %p166
      %p237 = scmp.lt.s32.totalorder %s17, 1
      %s238 = scalar_select %p237, %s17, 1
      %s239 = smul.addr %s238, 72
      %s240 = smul.addr %s239, 8
      %s241 = scalar_lea.vmem %s6, %s240
      %p242 = scmp.lt.s32.totalorder %s17, 1
      %s243 = scalar_select %p242, %s17, 1
      %s244 = smul.addr %s243, 108
      %s245 = smul.addr %s244, 8
      %s246 = scalar_lea.vmem %s0, %s245
      %p247 = scmp.lt.s32.totalorder %s17, 1
      %s248 = scalar_select %p247, %s17, 1
      %s249 = smul.addr %s248, 72
      %s250 = smul.addr %s249, 8
      %s251 = scalar_lea.vmem %s6, %s250
      %v252 = vld [vmem:[%s246] sm:$0xff]
      %v253 = vld [vmem:[%s246 + $0x8] sm:$0xff]
      %v254 = vld [vmem:[%s246 + $0x10] sm:$0xff]
      %v255 = vld [vmem:[%s246 + $0x18] sm:$0xff]
      %v256 = vld [vmem:[%s246 + $0x20] sm:$0xff]
      %v257 = vld [vmem:[%s246 + $0x28] sm:$0xff]
      %v258 = vld [vmem:[%s246 + $0x30] sm:$0xff]
      %v259 = vld [vmem:[%s246 + $0x38] sm:$0xff]
      %v260 = vld [vmem:[%s246 + $0x40] sm:$0xff]
      %v261 = vld [vmem:[%s246 + $0x48] sm:$0xff]
      %v262 = vld [vmem:[%s246 + $0x50] sm:$0xff]
      %v263 = vld [vmem:[%s246 + $0x58] sm:$0xff]
      %v264 = vld [vmem:[%s246 + $0x60] sm:$0xff]
      %v265 = vld [vmem:[%s246 + $0x68] sm:$0xff]
      %v266 = vld [vmem:[%s246 + $0x70] sm:$0xff]
      %v267 = vld [vmem:[%s246 + $0x78] sm:$0xff]
      %v268 = vld [vmem:[%s246 + $0x80] sm:$0xff]
      %v269 = vld [vmem:[%s246 + $0x88] sm:$0xff]
      %v270 = vld [vmem:[%s246 + $0x90] sm:$0xff]
      %v271 = vld [vmem:[%s246 + $0x98] sm:$0xff]
      %v272 = vld [vmem:[%s246 + $0xa0] sm:$0xff]
      %v273 = vld [vmem:[%s246 + $0xa8] sm:$0xff]
      %v274 = vld [vmem:[%s246 + $0xb0] sm:$0xff]
      %v275 = vld [vmem:[%s246 + $0xb8] sm:$0xff]
      %v276 = vld [vmem:[%s246 + $0xc0] sm:$0xff]
      %v277 = vld [vmem:[%s246 + $0xc8] sm:$0xff]
      %v278 = vld [vmem:[%s246 + $0xd0] sm:$0xff]
      %v279 = vld [vmem:[%s246 + $0xd8] sm:$0xff]
      %v280 = vld [vmem:[%s246 + $0xe0] sm:$0xff]
      %v281 = vld [vmem:[%s246 + $0xe8] sm:$0xff]
      %v282 = vld [vmem:[%s246 + $0xf0] sm:$0xff]
      %v283 = vld [vmem:[%s246 + $0xf8] sm:$0xff]
      %v284 = vld [vmem:[%s246 + $0x100] sm:$0xff]
      %v285 = vld [vmem:[%s246 + $0x108] sm:$0xff]
      %v286 = vld [vmem:[%s246 + $0x110] sm:$0xff]
      %v287 = vld [vmem:[%s246 + $0x118] sm:$0xff]
      %v288 = vld [vmem:[%s246 + $0x120] sm:$0xff]
      %v289 = vld [vmem:[%s246 + $0x128] sm:$0xff]
      %v290 = vld [vmem:[%s246 + $0x130] sm:$0xff]
      %v291 = vld [vmem:[%s246 + $0x138] sm:$0xff]
      %v292 = vld [vmem:[%s246 + $0x140] sm:$0xff]
      %v293 = vld [vmem:[%s246 + $0x148] sm:$0xff]
      %v294 = vld [vmem:[%s246 + $0x150] sm:$0xff]
      %v295 = vld [vmem:[%s246 + $0x158] sm:$0xff]
      %v296 = vld [vmem:[%s246 + $0x160] sm:$0xff]
      %v297 = vld [vmem:[%s246 + $0x168] sm:$0xff]
      %v298 = vld [vmem:[%s246 + $0x170] sm:$0xff]
      %v299 = vld [vmem:[%s246 + $0x178] sm:$0xff]
      %v300 = vld [vmem:[%s246 + $0x180] sm:$0xff]
      %v301 = vld [vmem:[%s246 + $0x188] sm:$0xff]
      %v302 = vld [vmem:[%s246 + $0x190] sm:$0xff]
      %v303 = vld [vmem:[%s246 + $0x198] sm:$0xff]
      %v304 = vld [vmem:[%s246 + $0x1a0] sm:$0xff]
      %v305 = vld [vmem:[%s246 + $0x1a8] sm:$0xff]
      %v306 = vld [vmem:[%s246 + $0x1b0] sm:$0xff]
      %v307 = vld [vmem:[%s246 + $0x1b8] sm:$0xff]
      %v308 = vld [vmem:[%s246 + $0x1c0] sm:$0xff]
      %v309 = vld [vmem:[%s246 + $0x1c8] sm:$0xff]
      %v310 = vld [vmem:[%s246 + $0x1d0] sm:$0xff]
      %v311 = vld [vmem:[%s246 + $0x1d8] sm:$0xff]
      %v312 = vld [vmem:[%s246 + $0x1e0] sm:$0xff]
      %v313 = vld [vmem:[%s246 + $0x1e8] sm:$0xff]
      %v314 = vld [vmem:[%s246 + $0x1f0] sm:$0xff]
      %v315 = vld [vmem:[%s246 + $0x1f8] sm:$0xff]
      %v316 = vld [vmem:[%s246 + $0x200] sm:$0xff]
      %v317 = vld [vmem:[%s246 + $0x208] sm:$0xff]
      %v318 = vld [vmem:[%s246 + $0x210] sm:$0xff]
      %v319 = vld [vmem:[%s246 + $0x218] sm:$0xff]
      %v320 = vld [vmem:[%s246 + $0x220] sm:$0xff]
      %v321 = vld [vmem:[%s246 + $0x228] sm:$0xff]
      %v322 = vld [vmem:[%s246 + $0x230] sm:$0xff]
      %v323 = vld [vmem:[%s246 + $0x238] sm:$0xff]
      %v324 = vld [vmem:[%s1] sm:$0xff]
      %v325 = vld [vmem:[%s1 + $0x8] sm:$0xff]
      %v326 = vld [vmem:[%s1 + $0x10] sm:$0xff]
      %v327 = vld [vmem:[%s1 + $0x18] sm:$0xff]
      %v328 = vld [vmem:[%s1 + $0x20] sm:$0xff]
      %v329 = vld [vmem:[%s1 + $0x28] sm:$0xff]
      %v330 = vld [vmem:[%s1 + $0x30] sm:$0xff]
      %v331 = vld [vmem:[%s1 + $0x38] sm:$0xff]
      %v332 = vld [vmem:[%s1 + $0x40] sm:$0xff]
      %v333 = vld [vmem:[%s1 + $0x48] sm:$0xff]
      %v334 = vld [vmem:[%s1 + $0x50] sm:$0xff]
      %v335 = vld [vmem:[%s1 + $0x58] sm:$0xff]
      %v336 = vld [vmem:[%s1 + $0x60] sm:$0xf]
      %v337 = vld [vmem:[%s246 + $0x240] sm:$0xff]
      %v338 = vld [vmem:[%s246 + $0x248] sm:$0xff]
      %v339 = vld [vmem:[%s246 + $0x250] sm:$0xff]
      %v340 = vld [vmem:[%s246 + $0x258] sm:$0xff]
      %v341 = vld [vmem:[%s246 + $0x260] sm:$0xff]
      %v342 = vld [vmem:[%s246 + $0x268] sm:$0xff]
      %v343 = vld [vmem:[%s246 + $0x270] sm:$0xff]
      %v344 = vld [vmem:[%s246 + $0x278] sm:$0xff]
      %v345 = vld [vmem:[%s246 + $0x280] sm:$0xff]
      %s346 = scalar_lea.vmem %s1, 104
      %v347 = vld [vmem:[%s346] sm:$0xff]
      %v348 = vld [vmem:[%s346 + $0x8] sm:$0xff]
      %v349 = vld [vmem:[%s346 + $0x10] sm:$0xff]
      %v350 = vld [vmem:[%s346 + $0x18] sm:$0xff]
      %v351 = vld [vmem:[%s346 + $0x20] sm:$0xff]
      %v352 = vld [vmem:[%s346 + $0x28] sm:$0xff]
      %v353 = vld [vmem:[%s346 + $0x30] sm:$0xff]
      %v354 = vld [vmem:[%s346 + $0x38] sm:$0xff]
      %v355 = vld [vmem:[%s346 + $0x40] sm:$0xff]
      %v356 = vld [vmem:[%s346 + $0x48] sm:$0xff]
      %v357 = vld [vmem:[%s346 + $0x50] sm:$0xff]
      %v358 = vld [vmem:[%s346 + $0x58] sm:$0xff]
      %v359 = vld [vmem:[%s346 + $0x60] sm:$0xf]
      %vm360 = vcmask 818176
      %v362 = vsel %vm360, %v261, 0
      %v365 = vsel %vm360, %v262, 0
      %v368 = vsel %vm360, %v263, 0
      %v371 = vsel %vm360, %v264, 0
      %v374 = vsel %vm360, %v265, 0
      %v377 = vsel %vm360, %v266, 0
      %v380 = vsel %vm360, %v267, 0
      %v383 = vsel %vm360, %v268, 0
      %v386 = vsel %vm360, %v269, 0
      %v389 = vsel %vm360, %v270, 0
      %v392 = vsel %vm360, %v271, 0
      %v395 = vsel %vm360, %v272, 0
      %v398 = vsel %vm360, %v273, 0
      %v401 = vsel %vm360, %v274, 0
      %v404 = vsel %vm360, %v275, 0
      %v407 = vsel %vm360, %v276, 0
      %v410 = vsel %vm360, %v277, 0
      %v413 = vsel %vm360, %v278, 0
      %v416 = vsel %vm360, %v279, 0
      %v419 = vsel %vm360, %v280, 0
      %v422 = vsel %vm360, %v281, 0
      %v425 = vsel %vm360, %v282, 0
      %v428 = vsel %vm360, %v283, 0
      %v431 = vsel %vm360, %v284, 0
      %v434 = vsel %vm360, %v285, 0
      %v437 = vsel %vm360, %v286, 0
      %v440 = vsel %vm360, %v287, 0
      %v443 = vsel %vm360, %v288, 0
      %v446 = vsel %vm360, %v289, 0
      %v449 = vsel %vm360, %v290, 0
      %v452 = vsel %vm360, %v291, 0
      %v455 = vsel %vm360, %v292, 0
      %v458 = vsel %vm360, %v293, 0
      %v461 = vsel %vm360, %v294, 0
      %v464 = vsel %vm360, %v295, 0
      %v467 = vsel %vm360, %v296, 0
      %v470 = vsel %vm360, %v297, 0
      %v473 = vsel %vm360, %v298, 0
      %v476 = vsel %vm360, %v299, 0
      %v479 = vsel %vm360, %v300, 0
      %v482 = vsel %vm360, %v301, 0
      %v485 = vsel %vm360, %v302, 0
      %v488 = vsel %vm360, %v303, 0
      %v491 = vsel %vm360, %v304, 0
      %v494 = vsel %vm360, %v305, 0
      %v497 = vsel %vm360, %v306, 0
      %v500 = vsel %vm360, %v307, 0
      %v503 = vsel %vm360, %v308, 0
      %v506 = vsel %vm360, %v309, 0
      %v509 = vsel %vm360, %v310, 0
      %v512 = vsel %vm360, %v311, 0
      %v515 = vsel %vm360, %v312, 0
      %v518 = vsel %vm360, %v313, 0
      %v521 = vsel %vm360, %v314, 0
      %v524 = vsel %vm360, %v315, 0
      %v527 = vsel %vm360, %v316, 0
      %v530 = vsel %vm360, %v317, 0
      %v533 = vsel %vm360, %v318, 0
      %v536 = vsel %vm360, %v319, 0
      %v539 = vsel %vm360, %v320, 0
      %v542 = vsel %vm360, %v321, 0
      %v545 = vsel %vm360, %v322, 0
      %v548 = vsel %vm360, %v323, 0
      %v551 = vsel %vm360, %v337, 0
      %v554 = vsel %vm360, %v338, 0
      %v557 = vsel %vm360, %v339, 0
      %v560 = vsel %vm360, %v340, 0
      %v563 = vsel %vm360, %v341, 0
      %v566 = vsel %vm360, %v342, 0
      %v569 = vsel %vm360, %v343, 0
      %v572 = vsel %vm360, %v344, 0
      %v575 = vsel %vm360, %v345, 0
      %vm577 = vcmask 1043456
      %v579 = vsel %vm577, %v359, 0
      %581 = vmatprep.subr.mxu0 0.0
      %582 = vmatpush1.msra.mxu0 %v347
      %583 = vmatprep.subr.mxu0 0.0
      %584 = vmatpush1.msra.mxu0 %v348
      %585 = vmatprep.subr.mxu0 0.0
      %586 = vmatpush1.msra.mxu0 %v349
      %587 = vmatprep.subr.mxu0 0.0
      %588 = vmatpush1.msra.mxu0 %v350
      %589 = vmatprep.subr.mxu0 0.0
      %590 = vmatpush1.msra.mxu0 %v351
      %591 = vmatprep.subr.mxu0 0.0
      %592 = vmatpush1.msra.mxu0 %v352
      %593 = vmatprep.subr.mxu0 0.0
      %594 = vmatpush1.msra.mxu0 %v353
      %595 = vmatprep.subr.mxu0 0.0
      %596 = vmatpush1.msra.mxu0 %v354
      %597 = vmatprep.subr.mxu0 0.0
      %598 = vmatpush1.msra.mxu0 %v355
      %599 = vmatprep.subr.mxu0 0.0
      %600 = vmatpush1.msra.mxu0 %v356
      %601 = vmatprep.subr.mxu0 0.0
      %602 = vmatpush1.msra.mxu0 %v357
      %603 = vmatprep.subr.mxu0 0.0
      %604 = vmatpush1.msra.mxu0 %v358
      %605 = vmatprep.subr.mxu0 0.0
      %606 = vmatpush1.msra.mxu0 %v579
      %607 = vmatprep.subr.mxu0 0.0
      %608 = vmatpush1.msra.mxu0 0.0
      %609 = vmatprep.subr.mxu0 0.0
      %610 = vmatpush1.msra.mxu0 0.0
      %611 = vmatprep.subr.mxu0 0.0
      %612 = vmatpush1.msra.mxu0 0.0
      %613 = vmatprep.subr.mxu0 0.0
      %614 = vmatpush1.msra.mxu0 0.0
      %615 = vmatprep.subr.mxu0 0.0
      %616 = vmatpush1.msra.mxu0 0.0
      %617 = vmatprep.subr.mxu0 0.0
      %618 = vmatpush1.msra.mxu0 0.0
      %619 = vmatprep.subr.mxu0 0.0
      %620 = vmatpush1.msra.mxu0 0.0
      %621 = vmatprep.subr.mxu0 0.0
      %622 = vmatpush1.msra.mxu0 0.0
      %623 = vmatprep.subr.mxu0 0.0
      %624 = vmatpush1.msra.mxu0 0.0
      %625 = vmatprep.subr.mxu0 0.0
      %626 = vmatpush1.msra.mxu0 0.0
      %627 = vmatprep.subr.mxu0 0.0
      %628 = vmatpush1.msra.mxu0 0.0
      %629 = vmatprep.subr.mxu0 0.0
      %630 = vmatpush1.msra.mxu0 0.0
      %631 = vmatprep.subr.mxu0 0.0
      %632 = vmatpush1.msra.mxu0 0.0
      %633 = vmatprep.subr.mxu0 0.0
      %634 = vmatpush1.msra.mxu0 0.0
      %635 = vmatprep.subr.mxu0 0.0
      %636 = vmatpush1.msra.mxu0 0.0
      %637 = vmatprep.subr.mxu0 0.0
      %638 = vmatpush1.msra.mxu0 0.0
      %639 = vmatprep.subr.mxu0 0.0
      %640 = vmatpush1.msra.mxu0 0.0
      %641 = vmatprep.subr.mxu0 0.0
      %642 = vmatpush1.msra.mxu0 0.0
      %643 = vmatprep.subr.mxu0 0.0
      %644 = vmatpush1.msra.mxu0 0.0
      %645 = vmatprep.mubr.f32.mxu0 0.0
      %646 = vmatmul.mubr.f32.gmra.mrb[0].mxu0 %v362
      %v647 = vpop.f32.mrb[0].mxu0
      %v648 = vadd.f32 0.0, %v647
      %v649 = vpop.f32.mrb[0].mxu0
      %650 = vmatprep.mubr.f32.mxu0 0.0
      %651 = vmatmul.mubr.f32.gmra.mrb[0].mxu0 %v365
      %v652 = vpop.f32.mrb[0].mxu0
      %v653 = vadd.f32 0.0, %v652
      %v654 = vpop.f32.mrb[0].mxu0
      %655 = vmatprep.mubr.f32.mxu0 0.0
      %656 = vmatmul.mubr.f32.gmra.mrb[0].mxu0 %v368
      %v657 = vpop.f32.mrb[0].mxu0
      %v658 = vadd.f32 0.0, %v657
      %v659 = vpop.f32.mrb[0].mxu0
      %660 = vmatprep.mubr.f32.mxu0 0.0
      %661 = vmatmul.mubr.f32.gmra.mrb[0].mxu0 %v371
      %v662 = vpop.f32.mrb[0].mxu0
      %v663 = vadd.f32 0.0, %v662
      %v664 = vpop.f32.mrb[0].mxu0
      %665 = vmatprep.mubr.f32.mxu0 0.0
      %666 = vmatmul.mubr.f32.gmra.mrb[0].mxu0 %v374
      %v667 = vpop.f32.mrb[0].mxu0
      %v668 = vadd.f32 0.0, %v667
      %v669 = vpop.f32.mrb[0].mxu0
      %670 = vmatprep.mubr.f32.mxu0 0.0
      %671 = vmatmul.mubr.f32.gmra.mrb[0].mxu0 %v377
      %v672 = vpop.f32.mrb[0].mxu0
      %v673 = vadd.f32 0.0, %v672
      %v674 = vpop.f32.mrb[0].mxu0
      %675 = vmatprep.mubr.f32.mxu0 0.0
      %676 = vmatmul.mubr.f32.gmra.mrb[0].mxu0 %v380
      %v677 = vpop.f32.mrb[0].mxu0
      %v678 = vadd.f32 0.0, %v677
      %v679 = vpop.f32.mrb[0].mxu0
      %680 = vmatprep.mubr.f32.mxu0 0.0
      %681 = vmatmul.mubr.f32.gmra.mrb[0].mxu0 %v383
      %v682 = vpop.f32.mrb[0].mxu0
      %v683 = vadd.f32 0.0, %v682
      %v684 = vpop.f32.mrb[0].mxu0
      %685 = vmatprep.mubr.f32.mxu0 0.0
      %686 = vmatmul.mubr.f32.gmra.mrb[0].mxu0 %v386
      %v687 = vpop.f32.mrb[0].mxu0
      %v688 = vadd.f32 0.0, %v687
      %v689 = vpop.f32.mrb[0].mxu0
      %690 = vmatprep.mubr.f32.mxu0 0.0
      %691 = vmatmul.mubr.f32.gmra.mrb[0].mxu0 %v389
      %v692 = vpop.f32.mrb[0].mxu0
      %v693 = vadd.f32 0.0, %v692
      %v694 = vpop.f32.mrb[0].mxu0
      %695 = vmatprep.mubr.f32.mxu0 0.0
      %696 = vmatmul.mubr.f32.gmra.mrb[0].mxu0 %v392
      %v697 = vpop.f32.mrb[0].mxu0
      %v698 = vadd.f32 0.0, %v697
      %v699 = vpop.f32.mrb[0].mxu0
      %700 = vmatprep.mubr.f32.mxu0 0.0
      %701 = vmatmul.mubr.f32.gmra.mrb[0].mxu0 %v395
      %v702 = vpop.f32.mrb[0].mxu0
      %v703 = vadd.f32 0.0, %v702
      %v704 = vpop.f32.mrb[0].mxu0
      %705 = vmatprep.mubr.f32.mxu0 0.0
      %706 = vmatmul.mubr.f32.gmra.mrb[0].mxu0 %v398
      %v707 = vpop.f32.mrb[0].mxu0
      %v708 = vadd.f32 0.0, %v707
      %v709 = vpop.f32.mrb[0].mxu0
      %710 = vmatprep.mubr.f32.mxu0 0.0
      %711 = vmatmul.mubr.f32.gmra.mrb[0].mxu0 %v401
      %v712 = vpop.f32.mrb[0].mxu0
      %v713 = vadd.f32 0.0, %v712
      %v714 = vpop.f32.mrb[0].mxu0
      %715 = vmatprep.mubr.f32.mxu0 0.0
      %716 = vmatmul.mubr.f32.gmra.mrb[0].mxu0 %v404
      %v717 = vpop.f32.mrb[0].mxu0
      %v718 = vadd.f32 0.0, %v717
      %v719 = vpop.f32.mrb[0].mxu0
      %720 = vmatprep.mubr.f32.mxu0 0.0
      %721 = vmatmul.mubr.f32.gmra.mrb[0].mxu0 %v407
      %v722 = vpop.f32.mrb[0].mxu0
      %v723 = vadd.f32 0.0, %v722
      %v724 = vpop.f32.mrb[0].mxu0
      %725 = vmatprep.mubr.f32.mxu0 0.0
      %726 = vmatmul.mubr.f32.gmra.mrb[0].mxu0 %v410
      %v727 = vpop.f32.mrb[0].mxu0
      %v728 = vadd.f32 0.0, %v727
      %v729 = vpop.f32.mrb[0].mxu0
      %730 = vmatprep.mubr.f32.mxu0 0.0
      %731 = vmatmul.mubr.f32.gmra.mrb[0].mxu0 %v413
      %v732 = vpop.f32.mrb[0].mxu0
      %v733 = vadd.f32 0.0, %v732
      %v734 = vpop.f32.mrb[0].mxu0
      %735 = vmatprep.mubr.f32.mxu0 0.0
      %736 = vmatmul.mubr.f32.gmra.mrb[0].mxu0 %v416
      %v737 = vpop.f32.mrb[0].mxu0
      %v738 = vadd.f32 0.0, %v737
      %v739 = vpop.f32.mrb[0].mxu0
      %740 = vmatprep.mubr.f32.mxu0 0.0
      %741 = vmatmul.mubr.f32.gmra.mrb[0].mxu0 %v419
      %v742 = vpop.f32.mrb[0].mxu0
      %v743 = vadd.f32 0.0, %v742
      %v744 = vpop.f32.mrb[0].mxu0
      %745 = vmatprep.mubr.f32.mxu0 0.0
      %746 = vmatmul.mubr.f32.gmra.mrb[0].mxu0 %v422
      %v747 = vpop.f32.mrb[0].mxu0
      %v748 = vadd.f32 0.0, %v747
      %v749 = vpop.f32.mrb[0].mxu0
      %750 = vmatprep.mubr.f32.mxu0 0.0
      %751 = vmatmul.mubr.f32.gmra.mrb[0].mxu0 %v425
      %v752 = vpop.f32.mrb[0].mxu0
      %v753 = vadd.f32 0.0, %v752
      %v754 = vpop.f32.mrb[0].mxu0
      %755 = vmatprep.mubr.f32.mxu0 0.0
      %756 = vmatmul.mubr.f32.gmra.mrb[0].mxu0 %v428
      %v757 = vpop.f32.mrb[0].mxu0
      %v758 = vadd.f32 0.0, %v757
      %v759 = vpop.f32.mrb[0].mxu0
      %760 = vmatprep.mubr.f32.mxu0 0.0
      %761 = vmatmul.mubr.f32.gmra.mrb[0].mxu0 %v431
      %v762 = vpop.f32.mrb[0].mxu0
      %v763 = vadd.f32 0.0, %v762
      %v764 = vpop.f32.mrb[0].mxu0
      %765 = vmatprep.mubr.f32.mxu0 0.0
      %766 = vmatmul.mubr.f32.gmra.mrb[0].mxu0 %v434
      %v767 = vpop.f32.mrb[0].mxu0
      %v768 = vadd.f32 0.0, %v767
      %v769 = vpop.f32.mrb[0].mxu0
      %770 = vmatprep.mubr.f32.mxu0 0.0
      %771 = vmatmul.mubr.f32.gmra.mrb[0].mxu0 %v437
      %v772 = vpop.f32.mrb[0].mxu0
      %v773 = vadd.f32 0.0, %v772
      %v774 = vpop.f32.mrb[0].mxu0
      %775 = vmatprep.mubr.f32.mxu0 0.0
      %776 = vmatmul.mubr.f32.gmra.mrb[0].mxu0 %v440
      %v777 = vpop.f32.mrb[0].mxu0
      %v778 = vadd.f32 0.0, %v777
      %v779 = vpop.f32.mrb[0].mxu0
      %780 = vmatprep.mubr.f32.mxu0 0.0
      %781 = vmatmul.mubr.f32.gmra.mrb[0].mxu0 %v443
      %v782 = vpop.f32.mrb[0].mxu0
      %v783 = vadd.f32 0.0, %v782
      %v784 = vpop.f32.mrb[0].mxu0
      %785 = vmatprep.mubr.f32.mxu0 0.0
      %786 = vmatmul.mubr.f32.gmra.mrb[0].mxu0 %v446
      %v787 = vpop.f32.mrb[0].mxu0
      %v788 = vadd.f32 0.0, %v787
      %v789 = vpop.f32.mrb[0].mxu0
      %790 = vmatprep.mubr.f32.mxu0 0.0
      %791 = vmatmul.mubr.f32.gmra.mrb[0].mxu0 %v449
      %v792 = vpop.f32.mrb[0].mxu0
      %v793 = vadd.f32 0.0, %v792
      %v794 = vpop.f32.mrb[0].mxu0
      %795 = vmatprep.mubr.f32.mxu0 0.0
      %796 = vmatmul.mubr.f32.gmra.mrb[0].mxu0 %v452
      %v797 = vpop.f32.mrb[0].mxu0
      %v798 = vadd.f32 0.0, %v797
      %v799 = vpop.f32.mrb[0].mxu0
      %800 = vmatprep.mubr.f32.mxu0 0.0
      %801 = vmatmul.mubr.f32.gmra.mrb[0].mxu0 %v455
      %v802 = vpop.f32.mrb[0].mxu0
      %v803 = vadd.f32 0.0, %v802
      %v804 = vpop.f32.mrb[0].mxu0
      %805 = vmatprep.mubr.f32.mxu0 0.0
      %806 = vmatmul.mubr.f32.gmra.mrb[0].mxu0 %v458
      %v807 = vpop.f32.mrb[0].mxu0
      %v808 = vadd.f32 0.0, %v807
      %v809 = vpop.f32.mrb[0].mxu0
      %810 = vmatprep.mubr.f32.mxu0 0.0
      %811 = vmatmul.mubr.f32.gmra.mrb[0].mxu0 %v461
      %v812 = vpop.f32.mrb[0].mxu0
      %v813 = vadd.f32 0.0, %v812
      %v814 = vpop.f32.mrb[0].mxu0
      %815 = vmatprep.mubr.f32.mxu0 0.0
      %816 = vmatmul.mubr.f32.gmra.mrb[0].mxu0 %v464
      %v817 = vpop.f32.mrb[0].mxu0
      %v818 = vadd.f32 0.0, %v817
      %v819 = vpop.f32.mrb[0].mxu0
      %820 = vmatprep.mubr.f32.mxu0 0.0
      %821 = vmatmul.mubr.f32.gmra.mrb[0].mxu0 %v467
      %v822 = vpop.f32.mrb[0].mxu0
      %v823 = vadd.f32 0.0, %v822
      %v824 = vpop.f32.mrb[0].mxu0
      %825 = vmatprep.mubr.f32.mxu0 0.0
      %826 = vmatmul.mubr.f32.gmra.mrb[0].mxu0 %v470
      %v827 = vpop.f32.mrb[0].mxu0
      %v828 = vadd.f32 0.0, %v827
      %v829 = vpop.f32.mrb[0].mxu0
      %830 = vmatprep.mubr.f32.mxu0 0.0
      %831 = vmatmul.mubr.f32.gmra.mrb[0].mxu0 %v473
      %v832 = vpop.f32.mrb[0].mxu0
      %v833 = vadd.f32 0.0, %v832
      %v834 = vpop.f32.mrb[0].mxu0
      %835 = vmatprep.mubr.f32.mxu0 0.0
      %836 = vmatmul.mubr.f32.gmra.mrb[0].mxu0 %v476
      %v837 = vpop.f32.mrb[0].mxu0
      %v838 = vadd.f32 0.0, %v837
      %v839 = vpop.f32.mrb[0].mxu0
      %840 = vmatprep.mubr.f32.mxu0 0.0
      %841 = vmatmul.mubr.f32.gmra.mrb[0].mxu0 %v479
      %v842 = vpop.f32.mrb[0].mxu0
      %v843 = vadd.f32 0.0, %v842
      %v844 = vpop.f32.mrb[0].mxu0
      %845 = vmatprep.mubr.f32.mxu0 0.0
      %846 = vmatmul.mubr.f32.gmra.mrb[0].mxu0 %v482
      %v847 = vpop.f32.mrb[0].mxu0
      %v848 = vadd.f32 0.0, %v847
      %v849 = vpop.f32.mrb[0].mxu0
      %850 = vmatprep.mubr.f32.mxu0 0.0
      %851 = vmatmul.mubr.f32.gmra.mrb[0].mxu0 %v485
      %v852 = vpop.f32.mrb[0].mxu0
      %v853 = vadd.f32 0.0, %v852
      %v854 = vpop.f32.mrb[0].mxu0
      %855 = vmatprep.mubr.f32.mxu0 0.0
      %856 = vmatmul.mubr.f32.gmra.mrb[0].mxu0 %v488
      %v857 = vpop.f32.mrb[0].mxu0
      %v858 = vadd.f32 0.0, %v857
      %v859 = vpop.f32.mrb[0].mxu0
      %860 = vmatprep.mubr.f32.mxu0 0.0
      %861 = vmatmul.mubr.f32.gmra.mrb[0].mxu0 %v491
      %v862 = vpop.f32.mrb[0].mxu0
      %v863 = vadd.f32 0.0, %v862
      %v864 = vpop.f32.mrb[0].mxu0
      %865 = vmatprep.mubr.f32.mxu0 0.0
      %866 = vmatmul.mubr.f32.gmra.mrb[0].mxu0 %v494
      %v867 = vpop.f32.mrb[0].mxu0
      %v868 = vadd.f32 0.0, %v867
      %v869 = vpop.f32.mrb[0].mxu0
      %870 = vmatprep.mubr.f32.mxu0 0.0
      %871 = vmatmul.mubr.f32.gmra.mrb[0].mxu0 %v497
      %v872 = vpop.f32.mrb[0].mxu0
      %v873 = vadd.f32 0.0, %v872
      %v874 = vpop.f32.mrb[0].mxu0
      %875 = vmatprep.mubr.f32.mxu0 0.0
      %876 = vmatmul.mubr.f32.gmra.mrb[0].mxu0 %v500
      %v877 = vpop.f32.mrb[0].mxu0
      %v878 = vadd.f32 0.0, %v877
      %v879 = vpop.f32.mrb[0].mxu0
      %880 = vmatprep.mubr.f32.mxu0 0.0
      %881 = vmatmul.mubr.f32.gmra.mrb[0].mxu0 %v503
      %v882 = vpop.f32.mrb[0].mxu0
      %v883 = vadd.f32 0.0, %v882
      %v884 = vpop.f32.mrb[0].mxu0
      %885 = vmatprep.mubr.f32.mxu0 0.0
      %886 = vmatmul.mubr.f32.gmra.mrb[0].mxu0 %v506
      %v887 = vpop.f32.mrb[0].mxu0
      %v888 = vadd.f32 0.0, %v887
      %v889 = vpop.f32.mrb[0].mxu0
      %890 = vmatprep.mubr.f32.mxu0 0.0
      %891 = vmatmul.mubr.f32.gmra.mrb[0].mxu0 %v509
      %v892 = vpop.f32.mrb[0].mxu0
      %v893 = vadd.f32 0.0, %v892
      %v894 = vpop.f32.mrb[0].mxu0
      %895 = vmatprep.mubr.f32.mxu0 0.0
      %896 = vmatmul.mubr.f32.gmra.mrb[0].mxu0 %v512
      %v897 = vpop.f32.mrb[0].mxu0
      %v898 = vadd.f32 0.0, %v897
      %v899 = vpop.f32.mrb[0].mxu0
      %900 = vmatprep.mubr.f32.mxu0 0.0
      %901 = vmatmul.mubr.f32.gmra.mrb[0].mxu0 %v515
      %v902 = vpop.f32.mrb[0].mxu0
      %v903 = vadd.f32 0.0, %v902
      %v904 = vpop.f32.mrb[0].mxu0
      %905 = vmatprep.mubr.f32.mxu0 0.0
      %906 = vmatmul.mubr.f32.gmra.mrb[0].mxu0 %v518
      %v907 = vpop.f32.mrb[0].mxu0
      %v908 = vadd.f32 0.0, %v907
      %v909 = vpop.f32.mrb[0].mxu0
      %910 = vmatprep.mubr.f32.mxu0 0.0
      %911 = vmatmul.mubr.f32.gmra.mrb[0].mxu0 %v521
      %v912 = vpop.f32.mrb[0].mxu0
      %v913 = vadd.f32 0.0, %v912
      %v914 = vpop.f32.mrb[0].mxu0
      %915 = vmatprep.mubr.f32.mxu0 0.0
      %916 = vmatmul.mubr.f32.gmra.mrb[0].mxu0 %v524
      %v917 = vpop.f32.mrb[0].mxu0
      %v918 = vadd.f32 0.0, %v917
      %v919 = vpop.f32.mrb[0].mxu0
      %920 = vmatprep.mubr.f32.mxu0 0.0
      %921 = vmatmul.mubr.f32.gmra.mrb[0].mxu0 %v527
      %v922 = vpop.f32.mrb[0].mxu0
      %v923 = vadd.f32 0.0, %v922
      %v924 = vpop.f32.mrb[0].mxu0
      %925 = vmatprep.mubr.f32.mxu0 0.0
      %926 = vmatmul.mubr.f32.gmra.mrb[0].mxu0 %v530
      %v927 = vpop.f32.mrb[0].mxu0
      %v928 = vadd.f32 0.0, %v927
      %v929 = vpop.f32.mrb[0].mxu0
      %930 = vmatprep.mubr.f32.mxu0 0.0
      %931 = vmatmul.mubr.f32.gmra.mrb[0].mxu0 %v533
      %v932 = vpop.f32.mrb[0].mxu0
      %v933 = vadd.f32 0.0, %v932
      %v934 = vpop.f32.mrb[0].mxu0
      %935 = vmatprep.mubr.f32.mxu0 0.0
      %936 = vmatmul.mubr.f32.gmra.mrb[0].mxu0 %v536
      %v937 = vpop.f32.mrb[0].mxu0
      %v938 = vadd.f32 0.0, %v937
      %v939 = vpop.f32.mrb[0].mxu0
      %940 = vmatprep.mubr.f32.mxu0 0.0
      %941 = vmatmul.mubr.f32.gmra.mrb[0].mxu0 %v539
      %v942 = vpop.f32.mrb[0].mxu0
      %v943 = vadd.f32 0.0, %v942
      %v944 = vpop.f32.mrb[0].mxu0
      %945 = vmatprep.mubr.f32.mxu0 0.0
      %946 = vmatmul.mubr.f32.gmra.mrb[0].mxu0 %v542
      %v947 = vpop.f32.mrb[0].mxu0
      %v948 = vadd.f32 0.0, %v947
      %v949 = vpop.f32.mrb[0].mxu0
      %950 = vmatprep.mubr.f32.mxu0 0.0
      %951 = vmatmul.mubr.f32.gmra.mrb[0].mxu0 %v545
      %v952 = vpop.f32.mrb[0].mxu0
      %v953 = vadd.f32 0.0, %v952
      %v954 = vpop.f32.mrb[0].mxu0
      %955 = vmatprep.mubr.f32.mxu0 0.0
      %956 = vmatmul.mubr.f32.gmra.mrb[0].mxu0 %v548
      %v957 = vpop.f32.mrb[0].mxu0
      %v958 = vadd.f32 0.0, %v957
      %v959 = vpop.f32.mrb[0].mxu0
      %960 = vmatprep.mubr.f32.mxu0 0.0
      %961 = vmatmul.mubr.f32.gmra.mrb[0].mxu0 %v551
      %v962 = vpop.f32.mrb[0].mxu0
      %v963 = vadd.f32 0.0, %v962
      %v964 = vpop.f32.mrb[0].mxu0
      %965 = vmatprep.mubr.f32.mxu0 0.0
      %966 = vmatmul.mubr.f32.gmra.mrb[0].mxu0 %v554
      %v967 = vpop.f32.mrb[0].mxu0
      %v968 = vadd.f32 0.0, %v967
      %v969 = vpop.f32.mrb[0].mxu0
      %970 = vmatprep.mubr.f32.mxu0 0.0
      %971 = vmatmul.mubr.f32.gmra.mrb[0].mxu0 %v557
      %v972 = vpop.f32.mrb[0].mxu0
      %v973 = vadd.f32 0.0, %v972
      %v974 = vpop.f32.mrb[0].mxu0
      %975 = vmatprep.mubr.f32.mxu0 0.0
      %976 = vmatmul.mubr.f32.gmra.mrb[0].mxu0 %v560
      %v977 = vpop.f32.mrb[0].mxu0
      %v978 = vadd.f32 0.0, %v977
      %v979 = vpop.f32.mrb[0].mxu0
      %980 = vmatprep.mubr.f32.mxu0 0.0
      %981 = vmatmul.mubr.f32.gmra.mrb[0].mxu0 %v563
      %v982 = vpop.f32.mrb[0].mxu0
      %v983 = vadd.f32 0.0, %v982
      %v984 = vpop.f32.mrb[0].mxu0
      %985 = vmatprep.mubr.f32.mxu0 0.0
      %986 = vmatmul.mubr.f32.gmra.mrb[0].mxu0 %v566
      %v987 = vpop.f32.mrb[0].mxu0
      %v988 = vadd.f32 0.0, %v987
      %v989 = vpop.f32.mrb[0].mxu0
      %990 = vmatprep.mubr.f32.mxu0 0.0
      %991 = vmatmul.mubr.f32.gmra.mrb[0].mxu0 %v569
      %v992 = vpop.f32.mrb[0].mxu0
      %v993 = vadd.f32 0.0, %v992
      %v994 = vpop.f32.mrb[0].mxu0
      %995 = vmatprep.mubr.f32.mxu0 0.0
      %996 = vmatmul.mubr.f32.gmra.mrb[0].mxu0 %v572
      %v997 = vpop.f32.mrb[0].mxu0
      %v998 = vadd.f32 0.0, %v997
      %v999 = vpop.f32.mrb[0].mxu0
      %1000 = vmatprep.mubr.f32.mxu0 0.0
      %1001 = vmatmul.mubr.f32.gmra.mrb[0].mxu0 %v575
      %v1002 = vpop.f32.mrb[0].mxu0
      %v1003 = vadd.f32 0.0, %v1002
      %v1004 = vpop.f32.mrb[0].mxu0
      %1005 = vdwg.mxu0
      %v1007 = vsel %vm360, %v252, 0
      %v1010 = vsel %vm360, %v253, 0
      %v1013 = vsel %vm360, %v254, 0
      %v1016 = vsel %vm360, %v255, 0
      %v1019 = vsel %vm360, %v256, 0
      %v1022 = vsel %vm360, %v257, 0
      %v1025 = vsel %vm360, %v258, 0
      %v1028 = vsel %vm360, %v259, 0
      %v1031 = vsel %vm360, %v260, 0
      %v1034 = vsel %vm577, %v336, 0
      %1036 = vmatprep.subr.mxu0 0.0
      %1037 = vmatpush1.msra.mxu0 %v324
      %1038 = vmatprep.subr.mxu0 0.0
      %1039 = vmatpush1.msra.mxu0 %v325
      %1040 = vmatprep.subr.mxu0 0.0
      %1041 = vmatpush1.msra.mxu0 %v326
      %1042 = vmatprep.subr.mxu0 0.0
      %1043 = vmatpush1.msra.mxu0 %v327
      %1044 = vmatprep.subr.mxu0 0.0
      %1045 = vmatpush1.msra.mxu0 %v328
      %1046 = vmatprep.subr.mxu0 0.0
      %1047 = vmatpush1.msra.mxu0 %v329
      %1048 = vmatprep.subr.mxu0 0.0
      %1049 = vmatpush1.msra.mxu0 %v330
      %1050 = vmatprep.subr.mxu0 0.0
      %1051 = vmatpush1.msra.mxu0 %v331
      %1052 = vmatprep.subr.mxu0 0.0
      %1053 = vmatpush1.msra.mxu0 %v332
      %1054 = vmatprep.subr.mxu0 0.0
      %1055 = vmatpush1.msra.mxu0 %v333
      %1056 = vmatprep.subr.mxu0 0.0
      %1057 = vmatpush1.msra.mxu0 %v334
      %1058 = vmatprep.subr.mxu0 0.0
      %1059 = vmatpush1.msra.mxu0 %v335
      %1060 = vmatprep.subr.mxu0 0.0
      %1061 = vmatpush1.msra.mxu0 %v1034
      %1062 = vmatprep.subr.mxu0 0.0
      %1063 = vmatpush1.msra.mxu0 0.0
      %1064 = vmatprep.subr.mxu0 0.0
      %1065 = vmatpush1.msra.mxu0 0.0
      %1066 = vmatprep.subr.mxu0 0.0
      %1067 = vmatpush1.msra.mxu0 0.0
      %1068 = vmatprep.subr.mxu0 0.0
      %1069 = vmatpush1.msra.mxu0 0.0
      %1070 = vmatprep.subr.mxu0 0.0
      %1071 = vmatpush1.msra.mxu0 0.0
      %1072 = vmatprep.subr.mxu0 0.0
      %1073 = vmatpush1.msra.mxu0 0.0
      %1074 = vmatprep.subr.mxu0 0.0
      %1075 = vmatpush1.msra.mxu0 0.0
      %1076 = vmatprep.subr.mxu0 0.0
      %1077 = vmatpush1.msra.mxu0 0.0
      %1078 = vmatprep.subr.mxu0 0.0
      %1079 = vmatpush1.msra.mxu0 0.0
      %1080 = vmatprep.subr.mxu0 0.0
      %1081 = vmatpush1.msra.mxu0 0.0
      %1082 = vmatprep.subr.mxu0 0.0
      %1083 = vmatpush1.msra.mxu0 0.0
      %1084 = vmatprep.subr.mxu0 0.0
      %1085 = vmatpush1.msra.mxu0 0.0
      %1086 = vmatprep.subr.mxu0 0.0
      %1087 = vmatpush1.msra.mxu0 0.0
      %1088 = vmatprep.subr.mxu0 0.0
      %1089 = vmatpush1.msra.mxu0 0.0
      %1090 = vmatprep.subr.mxu0 0.0
      %1091 = vmatpush1.msra.mxu0 0.0
      %1092 = vmatprep.subr.mxu0 0.0
      %1093 = vmatpush1.msra.mxu0 0.0
      %1094 = vmatprep.subr.mxu0 0.0
      %1095 = vmatpush1.msra.mxu0 0.0
      %1096 = vmatprep.subr.mxu0 0.0
      %1097 = vmatpush1.msra.mxu0 0.0
      %1098 = vmatprep.subr.mxu0 0.0
      %1099 = vmatpush1.msra.mxu0 0.0
      %1100 = vmatprep.mubr.f32.mxu0 0.0
      %1101 = vmatmul.mubr.f32.gmra.mrb[0].mxu0 %v1007
      %v1102 = vpop.f32.mrb[0].mxu0
      %v1103 = vadd.f32 %v648, %v1102
      %v1104 = vpop.f32.mrb[0].mxu0
      %1105 = vmatprep.mubr.f32.mxu0 0.0
      %1106 = vmatmul.mubr.f32.gmra.mrb[0].mxu0 %v1010
      %v1107 = vpop.f32.mrb[0].mxu0
      %v1108 = vadd.f32 %v653, %v1107
      %v1109 = vpop.f32.mrb[0].mxu0
      %1110 = vmatprep.mubr.f32.mxu0 0.0
      %1111 = vmatmul.mubr.f32.gmra.mrb[0].mxu0 %v1013
      %v1112 = vpop.f32.mrb[0].mxu0
      %v1113 = vadd.f32 %v658, %v1112
      %v1114 = vpop.f32.mrb[0].mxu0
      %1115 = vmatprep.mubr.f32.mxu0 0.0
      %1116 = vmatmul.mubr.f32.gmra.mrb[0].mxu0 %v1016
      %v1117 = vpop.f32.mrb[0].mxu0
      %v1118 = vadd.f32 %v663, %v1117
      %v1119 = vpop.f32.mrb[0].mxu0
      %1120 = vmatprep.mubr.f32.mxu0 0.0
      %1121 = vmatmul.mubr.f32.gmra.mrb[0].mxu0 %v1019
      %v1122 = vpop.f32.mrb[0].mxu0
      %v1123 = vadd.f32 %v668, %v1122
      %v1124 = vpop.f32.mrb[0].mxu0
      %1125 = vmatprep.mubr.f32.mxu0 0.0
      %1126 = vmatmul.mubr.f32.gmra.mrb[0].mxu0 %v1022
      %v1127 = vpop.f32.mrb[0].mxu0
      %v1128 = vadd.f32 %v673, %v1127
      %v1129 = vpop.f32.mrb[0].mxu0
      %1130 = vmatprep.mubr.f32.mxu0 0.0
      %1131 = vmatmul.mubr.f32.gmra.mrb[0].mxu0 %v1025
      %v1132 = vpop.f32.mrb[0].mxu0
      %v1133 = vadd.f32 %v678, %v1132
      %v1134 = vpop.f32.mrb[0].mxu0
      %1135 = vmatprep.mubr.f32.mxu0 0.0
      %1136 = vmatmul.mubr.f32.gmra.mrb[0].mxu0 %v1028
      %v1137 = vpop.f32.mrb[0].mxu0
      %v1138 = vadd.f32 %v683, %v1137
      %v1139 = vpop.f32.mrb[0].mxu0
      %1140 = vmatprep.mubr.f32.mxu0 0.0
      %1141 = vmatmul.mubr.f32.gmra.mrb[0].mxu0 %v1031
      %v1142 = vpop.f32.mrb[0].mxu0
      %v1143 = vadd.f32 %v688, %v1142
      %v1144 = vpop.f32.mrb[0].mxu0
      %1145 = vmatprep.mubr.f32.mxu0 0.0
      %1146 = vmatmul.mubr.f32.gmra.mrb[0].mxu0 %v362
      %v1147 = vpop.f32.mrb[0].mxu0
      %v1148 = vadd.f32 %v693, %v1147
      %v1149 = vpop.f32.mrb[0].mxu0
      %1150 = vmatprep.mubr.f32.mxu0 0.0
      %1151 = vmatmul.mubr.f32.gmra.mrb[0].mxu0 %v365
      %v1152 = vpop.f32.mrb[0].mxu0
      %v1153 = vadd.f32 %v698, %v1152
      %v1154 = vpop.f32.mrb[0].mxu0
      %1155 = vmatprep.mubr.f32.mxu0 0.0
      %1156 = vmatmul.mubr.f32.gmra.mrb[0].mxu0 %v368
      %v1157 = vpop.f32.mrb[0].mxu0
      %v1158 = vadd.f32 %v703, %v1157
      %v1159 = vpop.f32.mrb[0].mxu0
      %1160 = vmatprep.mubr.f32.mxu0 0.0
      %1161 = vmatmul.mubr.f32.gmra.mrb[0].mxu0 %v371
      %v1162 = vpop.f32.mrb[0].mxu0
      %v1163 = vadd.f32 %v708, %v1162
      %v1164 = vpop.f32.mrb[0].mxu0
      %1165 = vmatprep.mubr.f32.mxu0 0.0
      %1166 = vmatmul.mubr.f32.gmra.mrb[0].mxu0 %v374
      %v1167 = vpop.f32.mrb[0].mxu0
      %v1168 = vadd.f32 %v713, %v1167
      %v1169 = vpop.f32.mrb[0].mxu0
      %1170 = vmatprep.mubr.f32.mxu0 0.0
      %1171 = vmatmul.mubr.f32.gmra.mrb[0].mxu0 %v377
      %v1172 = vpop.f32.mrb[0].mxu0
      %v1173 = vadd.f32 %v718, %v1172
      %v1174 = vpop.f32.mrb[0].mxu0
      %1175 = vmatprep.mubr.f32.mxu0 0.0
      %1176 = vmatmul.mubr.f32.gmra.mrb[0].mxu0 %v380
      %v1177 = vpop.f32.mrb[0].mxu0
      %v1178 = vadd.f32 %v723, %v1177
      %v1179 = vpop.f32.mrb[0].mxu0
      %1180 = vmatprep.mubr.f32.mxu0 0.0
      %1181 = vmatmul.mubr.f32.gmra.mrb[0].mxu0 %v383
      %v1182 = vpop.f32.mrb[0].mxu0
      %v1183 = vadd.f32 %v728, %v1182
      %v1184 = vpop.f32.mrb[0].mxu0
      %1185 = vmatprep.mubr.f32.mxu0 0.0
      %1186 = vmatmul.mubr.f32.gmra.mrb[0].mxu0 %v386
      %v1187 = vpop.f32.mrb[0].mxu0
      %v1188 = vadd.f32 %v733, %v1187
      %v1189 = vpop.f32.mrb[0].mxu0
      %1190 = vmatprep.mubr.f32.mxu0 0.0
      %1191 = vmatmul.mubr.f32.gmra.mrb[0].mxu0 %v389
      %v1192 = vpop.f32.mrb[0].mxu0
      %v1193 = vadd.f32 %v738, %v1192
      %v1194 = vpop.f32.mrb[0].mxu0
      %1195 = vmatprep.mubr.f32.mxu0 0.0
      %1196 = vmatmul.mubr.f32.gmra.mrb[0].mxu0 %v392
      %v1197 = vpop.f32.mrb[0].mxu0
      %v1198 = vadd.f32 %v743, %v1197
      %v1199 = vpop.f32.mrb[0].mxu0
      %1200 = vmatprep.mubr.f32.mxu0 0.0
      %1201 = vmatmul.mubr.f32.gmra.mrb[0].mxu0 %v395
      %v1202 = vpop.f32.mrb[0].mxu0
      %v1203 = vadd.f32 %v748, %v1202
      %v1204 = vpop.f32.mrb[0].mxu0
      %1205 = vmatprep.mubr.f32.mxu0 0.0
      %1206 = vmatmul.mubr.f32.gmra.mrb[0].mxu0 %v398
      %v1207 = vpop.f32.mrb[0].mxu0
      %v1208 = vadd.f32 %v753, %v1207
      %v1209 = vpop.f32.mrb[0].mxu0
      %1210 = vmatprep.mubr.f32.mxu0 0.0
      %1211 = vmatmul.mubr.f32.gmra.mrb[0].mxu0 %v401
      %v1212 = vpop.f32.mrb[0].mxu0
      %v1213 = vadd.f32 %v758, %v1212
      %v1214 = vpop.f32.mrb[0].mxu0
      %1215 = vmatprep.mubr.f32.mxu0 0.0
      %1216 = vmatmul.mubr.f32.gmra.mrb[0].mxu0 %v404
      %v1217 = vpop.f32.mrb[0].mxu0
      %v1218 = vadd.f32 %v763, %v1217
      %v1219 = vpop.f32.mrb[0].mxu0
      %1220 = vmatprep.mubr.f32.mxu0 0.0
      %1221 = vmatmul.mubr.f32.gmra.mrb[0].mxu0 %v407
      %v1222 = vpop.f32.mrb[0].mxu0
      %v1223 = vadd.f32 %v768, %v1222
      %v1224 = vpop.f32.mrb[0].mxu0
      %1225 = vmatprep.mubr.f32.mxu0 0.0
      %1226 = vmatmul.mubr.f32.gmra.mrb[0].mxu0 %v410
      %v1227 = vpop.f32.mrb[0].mxu0
      %v1228 = vadd.f32 %v773, %v1227
      %v1229 = vpop.f32.mrb[0].mxu0
      %1230 = vmatprep.mubr.f32.mxu0 0.0
      %1231 = vmatmul.mubr.f32.gmra.mrb[0].mxu0 %v413
      %v1232 = vpop.f32.mrb[0].mxu0
      %v1233 = vadd.f32 %v778, %v1232
      %v1234 = vpop.f32.mrb[0].mxu0
      %1235 = vmatprep.mubr.f32.mxu0 0.0
      %1236 = vmatmul.mubr.f32.gmra.mrb[0].mxu0 %v416
      %v1237 = vpop.f32.mrb[0].mxu0
      %v1238 = vadd.f32 %v783, %v1237
      %v1239 = vpop.f32.mrb[0].mxu0
      %1240 = vmatprep.mubr.f32.mxu0 0.0
      %1241 = vmatmul.mubr.f32.gmra.mrb[0].mxu0 %v419
      %v1242 = vpop.f32.mrb[0].mxu0
      %v1243 = vadd.f32 %v788, %v1242
      %v1244 = vpop.f32.mrb[0].mxu0
      %1245 = vmatprep.mubr.f32.mxu0 0.0
      %1246 = vmatmul.mubr.f32.gmra.mrb[0].mxu0 %v422
      %v1247 = vpop.f32.mrb[0].mxu0
      %v1248 = vadd.f32 %v793, %v1247
      %v1249 = vpop.f32.mrb[0].mxu0
      %1250 = vmatprep.mubr.f32.mxu0 0.0
      %1251 = vmatmul.mubr.f32.gmra.mrb[0].mxu0 %v425
      %v1252 = vpop.f32.mrb[0].mxu0
      %v1253 = vadd.f32 %v798, %v1252
      %v1254 = vpop.f32.mrb[0].mxu0
      %1255 = vmatprep.mubr.f32.mxu0 0.0
      %1256 = vmatmul.mubr.f32.gmra.mrb[0].mxu0 %v428
      %v1257 = vpop.f32.mrb[0].mxu0
      %v1258 = vadd.f32 %v803, %v1257
      %v1259 = vpop.f32.mrb[0].mxu0
      %1260 = vmatprep.mubr.f32.mxu0 0.0
      %1261 = vmatmul.mubr.f32.gmra.mrb[0].mxu0 %v431
      %v1262 = vpop.f32.mrb[0].mxu0
      %v1263 = vadd.f32 %v808, %v1262
      %v1264 = vpop.f32.mrb[0].mxu0
      %1265 = vmatprep.mubr.f32.mxu0 0.0
      %1266 = vmatmul.mubr.f32.gmra.mrb[0].mxu0 %v434
      %v1267 = vpop.f32.mrb[0].mxu0
      %v1268 = vadd.f32 %v813, %v1267
      %v1269 = vpop.f32.mrb[0].mxu0
      %1270 = vmatprep.mubr.f32.mxu0 0.0
      %1271 = vmatmul.mubr.f32.gmra.mrb[0].mxu0 %v437
      %v1272 = vpop.f32.mrb[0].mxu0
      %v1273 = vadd.f32 %v818, %v1272
      %v1274 = vpop.f32.mrb[0].mxu0
      %1275 = vmatprep.mubr.f32.mxu0 0.0
      %1276 = vmatmul.mubr.f32.gmra.mrb[0].mxu0 %v440
      %v1277 = vpop.f32.mrb[0].mxu0
      %v1278 = vadd.f32 %v823, %v1277
      %v1279 = vpop.f32.mrb[0].mxu0
      %1280 = vmatprep.mubr.f32.mxu0 0.0
      %1281 = vmatmul.mubr.f32.gmra.mrb[0].mxu0 %v443
      %v1282 = vpop.f32.mrb[0].mxu0
      %v1283 = vadd.f32 %v828, %v1282
      %v1284 = vpop.f32.mrb[0].mxu0
      %1285 = vmatprep.mubr.f32.mxu0 0.0
      %1286 = vmatmul.mubr.f32.gmra.mrb[0].mxu0 %v446
      %v1287 = vpop.f32.mrb[0].mxu0
      %v1288 = vadd.f32 %v833, %v1287
      %v1289 = vpop.f32.mrb[0].mxu0
      %1290 = vmatprep.mubr.f32.mxu0 0.0
      %1291 = vmatmul.mubr.f32.gmra.mrb[0].mxu0 %v449
      %v1292 = vpop.f32.mrb[0].mxu0
      %v1293 = vadd.f32 %v838, %v1292
      %v1294 = vpop.f32.mrb[0].mxu0
      %1295 = vmatprep.mubr.f32.mxu0 0.0
      %1296 = vmatmul.mubr.f32.gmra.mrb[0].mxu0 %v452
      %v1297 = vpop.f32.mrb[0].mxu0
      %v1298 = vadd.f32 %v843, %v1297
      %v1299 = vpop.f32.mrb[0].mxu0
      %1300 = vmatprep.mubr.f32.mxu0 0.0
      %1301 = vmatmul.mubr.f32.gmra.mrb[0].mxu0 %v455
      %v1302 = vpop.f32.mrb[0].mxu0
      %v1303 = vadd.f32 %v848, %v1302
      %v1304 = vpop.f32.mrb[0].mxu0
      %1305 = vmatprep.mubr.f32.mxu0 0.0
      %1306 = vmatmul.mubr.f32.gmra.mrb[0].mxu0 %v458
      %v1307 = vpop.f32.mrb[0].mxu0
      %v1308 = vadd.f32 %v853, %v1307
      %v1309 = vpop.f32.mrb[0].mxu0
      %1310 = vmatprep.mubr.f32.mxu0 0.0
      %1311 = vmatmul.mubr.f32.gmra.mrb[0].mxu0 %v461
      %v1312 = vpop.f32.mrb[0].mxu0
      %v1313 = vadd.f32 %v858, %v1312
      %v1314 = vpop.f32.mrb[0].mxu0
      %1315 = vmatprep.mubr.f32.mxu0 0.0
      %1316 = vmatmul.mubr.f32.gmra.mrb[0].mxu0 %v464
      %v1317 = vpop.f32.mrb[0].mxu0
      %v1318 = vadd.f32 %v863, %v1317
      %v1319 = vpop.f32.mrb[0].mxu0
      %1320 = vmatprep.mubr.f32.mxu0 0.0
      %1321 = vmatmul.mubr.f32.gmra.mrb[0].mxu0 %v467
      %v1322 = vpop.f32.mrb[0].mxu0
      %v1323 = vadd.f32 %v868, %v1322
      %v1324 = vpop.f32.mrb[0].mxu0
      %1325 = vmatprep.mubr.f32.mxu0 0.0
      %1326 = vmatmul.mubr.f32.gmra.mrb[0].mxu0 %v470
      %v1327 = vpop.f32.mrb[0].mxu0
      %v1328 = vadd.f32 %v873, %v1327
      %v1329 = vpop.f32.mrb[0].mxu0
      %1330 = vmatprep.mubr.f32.mxu0 0.0
      %1331 = vmatmul.mubr.f32.gmra.mrb[0].mxu0 %v473
      %v1332 = vpop.f32.mrb[0].mxu0
      %v1333 = vadd.f32 %v878, %v1332
      %v1334 = vpop.f32.mrb[0].mxu0
      %1335 = vmatprep.mubr.f32.mxu0 0.0
      %1336 = vmatmul.mubr.f32.gmra.mrb[0].mxu0 %v476
      %v1337 = vpop.f32.mrb[0].mxu0
      %v1338 = vadd.f32 %v883, %v1337
      %v1339 = vpop.f32.mrb[0].mxu0
      %1340 = vmatprep.mubr.f32.mxu0 0.0
      %1341 = vmatmul.mubr.f32.gmra.mrb[0].mxu0 %v479
      %v1342 = vpop.f32.mrb[0].mxu0
      %v1343 = vadd.f32 %v888, %v1342
      %v1344 = vpop.f32.mrb[0].mxu0
      %1345 = vmatprep.mubr.f32.mxu0 0.0
      %1346 = vmatmul.mubr.f32.gmra.mrb[0].mxu0 %v482
      %v1347 = vpop.f32.mrb[0].mxu0
      %v1348 = vadd.f32 %v893, %v1347
      %v1349 = vpop.f32.mrb[0].mxu0
      %1350 = vmatprep.mubr.f32.mxu0 0.0
      %1351 = vmatmul.mubr.f32.gmra.mrb[0].mxu0 %v485
      %v1352 = vpop.f32.mrb[0].mxu0
      %v1353 = vadd.f32 %v898, %v1352
      %v1354 = vpop.f32.mrb[0].mxu0
      %1355 = vmatprep.mubr.f32.mxu0 0.0
      %1356 = vmatmul.mubr.f32.gmra.mrb[0].mxu0 %v488
      %v1357 = vpop.f32.mrb[0].mxu0
      %v1358 = vadd.f32 %v903, %v1357
      %v1359 = vpop.f32.mrb[0].mxu0
      %1360 = vmatprep.mubr.f32.mxu0 0.0
      %1361 = vmatmul.mubr.f32.gmra.mrb[0].mxu0 %v491
      %v1362 = vpop.f32.mrb[0].mxu0
      %v1363 = vadd.f32 %v908, %v1362
      %v1364 = vpop.f32.mrb[0].mxu0
      %1365 = vmatprep.mubr.f32.mxu0 0.0
      %1366 = vmatmul.mubr.f32.gmra.mrb[0].mxu0 %v494
      %v1367 = vpop.f32.mrb[0].mxu0
      %v1368 = vadd.f32 %v913, %v1367
      %v1369 = vpop.f32.mrb[0].mxu0
      %1370 = vmatprep.mubr.f32.mxu0 0.0
      %1371 = vmatmul.mubr.f32.gmra.mrb[0].mxu0 %v497
      %v1372 = vpop.f32.mrb[0].mxu0
      %v1373 = vadd.f32 %v918, %v1372
      %v1374 = vpop.f32.mrb[0].mxu0
      %1375 = vmatprep.mubr.f32.mxu0 0.0
      %1376 = vmatmul.mubr.f32.gmra.mrb[0].mxu0 %v500
      %v1377 = vpop.f32.mrb[0].mxu0
      %v1378 = vadd.f32 %v923, %v1377
      %v1379 = vpop.f32.mrb[0].mxu0
      %1380 = vmatprep.mubr.f32.mxu0 0.0
      %1381 = vmatmul.mubr.f32.gmra.mrb[0].mxu0 %v503
      %v1382 = vpop.f32.mrb[0].mxu0
      %v1383 = vadd.f32 %v928, %v1382
      %v1384 = vpop.f32.mrb[0].mxu0
      %1385 = vmatprep.mubr.f32.mxu0 0.0
      %1386 = vmatmul.mubr.f32.gmra.mrb[0].mxu0 %v506
      %v1387 = vpop.f32.mrb[0].mxu0
      %v1388 = vadd.f32 %v933, %v1387
      %v1389 = vpop.f32.mrb[0].mxu0
      %1390 = vmatprep.mubr.f32.mxu0 0.0
      %1391 = vmatmul.mubr.f32.gmra.mrb[0].mxu0 %v509
      %v1392 = vpop.f32.mrb[0].mxu0
      %v1393 = vadd.f32 %v938, %v1392
      %v1394 = vpop.f32.mrb[0].mxu0
      %1395 = vmatprep.mubr.f32.mxu0 0.0
      %1396 = vmatmul.mubr.f32.gmra.mrb[0].mxu0 %v512
      %v1397 = vpop.f32.mrb[0].mxu0
      %v1398 = vadd.f32 %v943, %v1397
      %v1399 = vpop.f32.mrb[0].mxu0
      %1400 = vmatprep.mubr.f32.mxu0 0.0
      %1401 = vmatmul.mubr.f32.gmra.mrb[0].mxu0 %v515
      %v1402 = vpop.f32.mrb[0].mxu0
      %v1403 = vadd.f32 %v948, %v1402
      %v1404 = vpop.f32.mrb[0].mxu0
      %1405 = vmatprep.mubr.f32.mxu0 0.0
      %1406 = vmatmul.mubr.f32.gmra.mrb[0].mxu0 %v518
      %v1407 = vpop.f32.mrb[0].mxu0
      %v1408 = vadd.f32 %v953, %v1407
      %v1409 = vpop.f32.mrb[0].mxu0
      %1410 = vmatprep.mubr.f32.mxu0 0.0
      %1411 = vmatmul.mubr.f32.gmra.mrb[0].mxu0 %v521
      %v1412 = vpop.f32.mrb[0].mxu0
      %v1413 = vadd.f32 %v958, %v1412
      %v1414 = vpop.f32.mrb[0].mxu0
      %1415 = vmatprep.mubr.f32.mxu0 0.0
      %1416 = vmatmul.mubr.f32.gmra.mrb[0].mxu0 %v524
      %v1417 = vpop.f32.mrb[0].mxu0
      %v1418 = vadd.f32 %v963, %v1417
      %v1419 = vpop.f32.mrb[0].mxu0
      %1420 = vmatprep.mubr.f32.mxu0 0.0
      %1421 = vmatmul.mubr.f32.gmra.mrb[0].mxu0 %v527
      %v1422 = vpop.f32.mrb[0].mxu0
      %v1423 = vadd.f32 %v968, %v1422
      %v1424 = vpop.f32.mrb[0].mxu0
      %1425 = vmatprep.mubr.f32.mxu0 0.0
      %1426 = vmatmul.mubr.f32.gmra.mrb[0].mxu0 %v530
      %v1427 = vpop.f32.mrb[0].mxu0
      %v1428 = vadd.f32 %v973, %v1427
      %v1429 = vpop.f32.mrb[0].mxu0
      %1430 = vmatprep.mubr.f32.mxu0 0.0
      %1431 = vmatmul.mubr.f32.gmra.mrb[0].mxu0 %v533
      %v1432 = vpop.f32.mrb[0].mxu0
      %v1433 = vadd.f32 %v978, %v1432
      %v1434 = vpop.f32.mrb[0].mxu0
      %1435 = vmatprep.mubr.f32.mxu0 0.0
      %1436 = vmatmul.mubr.f32.gmra.mrb[0].mxu0 %v536
      %v1437 = vpop.f32.mrb[0].mxu0
      %v1438 = vadd.f32 %v983, %v1437
      %v1439 = vpop.f32.mrb[0].mxu0
      %1440 = vmatprep.mubr.f32.mxu0 0.0
      %1441 = vmatmul.mubr.f32.gmra.mrb[0].mxu0 %v539
      %v1442 = vpop.f32.mrb[0].mxu0
      %v1443 = vadd.f32 %v988, %v1442
      %v1444 = vpop.f32.mrb[0].mxu0
      %1445 = vmatprep.mubr.f32.mxu0 0.0
      %1446 = vmatmul.mubr.f32.gmra.mrb[0].mxu0 %v542
      %v1447 = vpop.f32.mrb[0].mxu0
      %v1448 = vadd.f32 %v993, %v1447
      %v1449 = vpop.f32.mrb[0].mxu0
      %1450 = vmatprep.mubr.f32.mxu0 0.0
      %1451 = vmatmul.mubr.f32.gmra.mrb[0].mxu0 %v545
      %v1452 = vpop.f32.mrb[0].mxu0
      %v1453 = vadd.f32 %v998, %v1452
      %v1454 = vpop.f32.mrb[0].mxu0
      %1455 = vmatprep.mubr.f32.mxu0 0.0
      %1456 = vmatmul.mubr.f32.gmra.mrb[0].mxu0 %v548
      %v1457 = vpop.f32.mrb[0].mxu0
      %v1458 = vadd.f32 %v1003, %v1457
      %v1459 = vpop.f32.mrb[0].mxu0
      %1460 = vdwg.mxu0
      %v1461 = vld [vmem:[%s246 + $0x90] sm:$0xff]
      %v1462 = vld [vmem:[%s246 + $0x98] sm:$0xff]
      %v1463 = vld [vmem:[%s246 + $0xa0] sm:$0xff]
      %v1464 = vld [vmem:[%s246 + $0xa8] sm:$0xff]
      %v1465 = vld [vmem:[%s246 + $0xb0] sm:$0xff]
      %v1466 = vld [vmem:[%s246 + $0xb8] sm:$0xff]
      %v1467 = vld [vmem:[%s246 + $0xc0] sm:$0xff]
      %v1468 = vld [vmem:[%s246 + $0xc8] sm:$0xff]
      %v1469 = vld [vmem:[%s246 + $0xd0] sm:$0xff]
      %v1470 = vld [vmem:[%s246 + $0xd8] sm:$0xff]
      %v1471 = vld [vmem:[%s246 + $0xe0] sm:$0xff]
      %v1472 = vld [vmem:[%s246 + $0xe8] sm:$0xff]
      %v1473 = vld [vmem:[%s246 + $0xf0] sm:$0xff]
      %v1474 = vld [vmem:[%s246 + $0xf8] sm:$0xff]
      %v1475 = vld [vmem:[%s246 + $0x100] sm:$0xff]
      %v1476 = vld [vmem:[%s246 + $0x108] sm:$0xff]
      %v1477 = vld [vmem:[%s246 + $0x110] sm:$0xff]
      %v1478 = vld [vmem:[%s246 + $0x118] sm:$0xff]
      %v1479 = vld [vmem:[%s246 + $0x120] sm:$0xff]
      %v1480 = vld [vmem:[%s246 + $0x128] sm:$0xff]
      %v1481 = vld [vmem:[%s246 + $0x130] sm:$0xff]
      %v1482 = vld [vmem:[%s246 + $0x138] sm:$0xff]
      %v1483 = vld [vmem:[%s246 + $0x140] sm:$0xff]
      %v1484 = vld [vmem:[%s246 + $0x148] sm:$0xff]
      %v1485 = vld [vmem:[%s246 + $0x150] sm:$0xff]
      %v1486 = vld [vmem:[%s246 + $0x158] sm:$0xff]
      %v1487 = vld [vmem:[%s246 + $0x160] sm:$0xff]
      %v1488 = vld [vmem:[%s246 + $0x168] sm:$0xff]
      %v1489 = vld [vmem:[%s246 + $0x170] sm:$0xff]
      %v1490 = vld [vmem:[%s246 + $0x178] sm:$0xff]
      %v1491 = vld [vmem:[%s246 + $0x180] sm:$0xff]
      %v1492 = vld [vmem:[%s246 + $0x188] sm:$0xff]
      %v1493 = vld [vmem:[%s246 + $0x190] sm:$0xff]
      %v1494 = vld [vmem:[%s246 + $0x198] sm:$0xff]
      %v1495 = vld [vmem:[%s246 + $0x1a0] sm:$0xff]
      %v1496 = vld [vmem:[%s246 + $0x1a8] sm:$0xff]
      %v1497 = vld [vmem:[%s246 + $0x1b0] sm:$0xff]
      %v1498 = vld [vmem:[%s246 + $0x1b8] sm:$0xff]
      %v1499 = vld [vmem:[%s246 + $0x1c0] sm:$0xff]
      %v1500 = vld [vmem:[%s246 + $0x1c8] sm:$0xff]
      %v1501 = vld [vmem:[%s246 + $0x1d0] sm:$0xff]
      %v1502 = vld [vmem:[%s246 + $0x1d8] sm:$0xff]
      %v1503 = vld [vmem:[%s246 + $0x1e0] sm:$0xff]
      %v1504 = vld [vmem:[%s246 + $0x1e8] sm:$0xff]
      %v1505 = vld [vmem:[%s246 + $0x1f0] sm:$0xff]
      %v1506 = vld [vmem:[%s246 + $0x1f8] sm:$0xff]
      %v1507 = vld [vmem:[%s246 + $0x200] sm:$0xff]
      %v1508 = vld [vmem:[%s246 + $0x208] sm:$0xff]
      %v1509 = vld [vmem:[%s246 + $0x210] sm:$0xff]
      %v1510 = vld [vmem:[%s246 + $0x218] sm:$0xff]
      %v1511 = vld [vmem:[%s246 + $0x220] sm:$0xff]
      %v1512 = vld [vmem:[%s246 + $0x228] sm:$0xff]
      %v1513 = vld [vmem:[%s246 + $0x230] sm:$0xff]
      %v1514 = vld [vmem:[%s246 + $0x238] sm:$0xff]
      %v1515 = vld [vmem:[%s246 + $0x240] sm:$0xff]
      %v1516 = vld [vmem:[%s246 + $0x248] sm:$0xff]
      %v1517 = vld [vmem:[%s246 + $0x250] sm:$0xff]
      %v1518 = vld [vmem:[%s246 + $0x258] sm:$0xff]
      %v1519 = vld [vmem:[%s246 + $0x260] sm:$0xff]
      %v1520 = vld [vmem:[%s246 + $0x268] sm:$0xff]
      %v1521 = vld [vmem:[%s246 + $0x270] sm:$0xff]
      %v1522 = vld [vmem:[%s246 + $0x278] sm:$0xff]
      %v1523 = vld [vmem:[%s246 + $0x280] sm:$0xff]
      %v1524 = vld [vmem:[%s246 + $0x288] sm:$0xff]
      %v1525 = vld [vmem:[%s246 + $0x290] sm:$0xff]
      %v1526 = vld [vmem:[%s246 + $0x298] sm:$0xff]
      %v1527 = vld [vmem:[%s246 + $0x2a0] sm:$0xff]
      %v1528 = vld [vmem:[%s246 + $0x2a8] sm:$0xff]
      %v1529 = vld [vmem:[%s246 + $0x2b0] sm:$0xff]
      %v1530 = vld [vmem:[%s246 + $0x2b8] sm:$0xff]
      %v1531 = vld [vmem:[%s246 + $0x2c0] sm:$0xff]
      %v1532 = vld [vmem:[%s246 + $0x2c8] sm:$0xff]
      %s1533 = scalar_lea.vmem %s1, 208
      %v1534 = vld [vmem:[%s1533] sm:$0xff]
      %v1535 = vld [vmem:[%s1533 + $0x8] sm:$0xff]
      %v1536 = vld [vmem:[%s1533 + $0x10] sm:$0xff]
      %v1537 = vld [vmem:[%s1533 + $0x18] sm:$0xff]
      %v1538 = vld [vmem:[%s1533 + $0x20] sm:$0xff]
      %v1539 = vld [vmem:[%s1533 + $0x28] sm:$0xff]
      %v1540 = vld [vmem:[%s1533 + $0x30] sm:$0xff]
      %v1541 = vld [vmem:[%s1533 + $0x38] sm:$0xff]
      %v1542 = vld [vmem:[%s1533 + $0x40] sm:$0xff]
      %v1543 = vld [vmem:[%s1533 + $0x48] sm:$0xff]
      %v1544 = vld [vmem:[%s1533 + $0x50] sm:$0xff]
      %v1545 = vld [vmem:[%s1533 + $0x58] sm:$0xff]
      %v1546 = vld [vmem:[%s1533 + $0x60] sm:$0xf]
      %v1548 = vsel %vm360, %v1461, 0
      %v1551 = vsel %vm360, %v1462, 0
      %v1554 = vsel %vm360, %v1463, 0
      %v1557 = vsel %vm360, %v1464, 0
      %v1560 = vsel %vm360, %v1465, 0
      %v1563 = vsel %vm360, %v1466, 0
      %v1566 = vsel %vm360, %v1467, 0
      %v1569 = vsel %vm360, %v1468, 0
      %v1572 = vsel %vm360, %v1469, 0
      %v1575 = vsel %vm360, %v1470, 0
      %v1578 = vsel %vm360, %v1471, 0
      %v1581 = vsel %vm360, %v1472, 0
      %v1584 = vsel %vm360, %v1473, 0
      %v1587 = vsel %vm360, %v1474, 0
      %v1590 = vsel %vm360, %v1475, 0
      %v1593 = vsel %vm360, %v1476, 0
      %v1596 = vsel %vm360, %v1477, 0
      %v1599 = vsel %vm360, %v1478, 0
      %v1602 = vsel %vm360, %v1479, 0
      %v1605 = vsel %vm360, %v1480, 0
      %v1608 = vsel %vm360, %v1481, 0
      %v1611 = vsel %vm360, %v1482, 0
      %v1614 = vsel %vm360, %v1483, 0
      %v1617 = vsel %vm360, %v1484, 0
      %v1620 = vsel %vm360, %v1485, 0
      %v1623 = vsel %vm360, %v1486, 0
      %v1626 = vsel %vm360, %v1487, 0
      %v1629 = vsel %vm360, %v1488, 0
      %v1632 = vsel %vm360, %v1489, 0
      %v1635 = vsel %vm360, %v1490, 0
      %v1638 = vsel %vm360, %v1491, 0
      %v1641 = vsel %vm360, %v1492, 0
      %v1644 = vsel %vm360, %v1493, 0
      %v1647 = vsel %vm360, %v1494, 0
      %v1650 = vsel %vm360, %v1495, 0
      %v1653 = vsel %vm360, %v1496, 0
      %v1656 = vsel %vm360, %v1497, 0
      %v1659 = vsel %vm360, %v1498, 0
      %v1662 = vsel %vm360, %v1499, 0
      %v1665 = vsel %vm360, %v1500, 0
      %v1668 = vsel %vm360, %v1501, 0
      %v1671 = vsel %vm360, %v1502, 0
      %v1674 = vsel %vm360, %v1503, 0
      %v1677 = vsel %vm360, %v1504, 0
      %v1680 = vsel %vm360, %v1505, 0
      %v1683 = vsel %vm360, %v1506, 0
      %v1686 = vsel %vm360, %v1507, 0
      %v1689 = vsel %vm360, %v1508, 0
      %v1692 = vsel %vm360, %v1509, 0
      %v1695 = vsel %vm360, %v1510, 0
      %v1698 = vsel %vm360, %v1511, 0
      %v1701 = vsel %vm360, %v1512, 0
      %v1704 = vsel %vm360, %v1513, 0
      %v1707 = vsel %vm360, %v1514, 0
      %v1710 = vsel %vm360, %v1515, 0
      %v1713 = vsel %vm360, %v1516, 0
      %v1716 = vsel %vm360, %v1517, 0
      %v1719 = vsel %vm360, %v1518, 0
      %v1722 = vsel %vm360, %v1519, 0
      %v1725 = vsel %vm360, %v1520, 0
      %v1728 = vsel %vm360, %v1521, 0
      %v1731 = vsel %vm360, %v1522, 0
      %v1734 = vsel %vm360, %v1523, 0
      %v1737 = vsel %vm360, %v1524, 0
      %v1740 = vsel %vm360, %v1525, 0
      %v1743 = vsel %vm360, %v1526, 0
      %v1746 = vsel %vm360, %v1527, 0
      %v1749 = vsel %vm360, %v1528, 0
      %v1752 = vsel %vm360, %v1529, 0
      %v1755 = vsel %vm360, %v1530, 0
      %v1758 = vsel %vm360, %v1531, 0
      %v1761 = vsel %vm360, %v1532, 0
      %v1764 = vsel %vm577, %v1546, 0
      %1766 = vmatprep.subr.mxu0 0.0
      %1767 = vmatpush1.msra.mxu0 %v1534
      %1768 = vmatprep.subr.mxu0 0.0
      %1769 = vmatpush1.msra.mxu0 %v1535
      %1770 = vmatprep.subr.mxu0 0.0
      %1771 = vmatpush1.msra.mxu0 %v1536
      %1772 = vmatprep.subr.mxu0 0.0
      %1773 = vmatpush1.msra.mxu0 %v1537
      %1774 = vmatprep.subr.mxu0 0.0
      %1775 = vmatpush1.msra.mxu0 %v1538
      %1776 = vmatprep.subr.mxu0 0.0
      %1777 = vmatpush1.msra.mxu0 %v1539
      %1778 = vmatprep.subr.mxu0 0.0
      %1779 = vmatpush1.msra.mxu0 %v1540
      %1780 = vmatprep.subr.mxu0 0.0
      %1781 = vmatpush1.msra.mxu0 %v1541
      %1782 = vmatprep.subr.mxu0 0.0
      %1783 = vmatpush1.msra.mxu0 %v1542
      %1784 = vmatprep.subr.mxu0 0.0
      %1785 = vmatpush1.msra.mxu0 %v1543
      %1786 = vmatprep.subr.mxu0 0.0
      %1787 = vmatpush1.msra.mxu0 %v1544
      %1788 = vmatprep.subr.mxu0 0.0
      %1789 = vmatpush1.msra.mxu0 %v1545
      %1790 = vmatprep.subr.mxu0 0.0
      %1791 = vmatpush1.msra.mxu0 %v1764
      %1792 = vmatprep.subr.mxu0 0.0
      %1793 = vmatpush1.msra.mxu0 0.0
      %1794 = vmatprep.subr.mxu0 0.0
      %1795 = vmatpush1.msra.mxu0 0.0
      %1796 = vmatprep.subr.mxu0 0.0
      %1797 = vmatpush1.msra.mxu0 0.0
      %1798 = vmatprep.subr.mxu0 0.0
      %1799 = vmatpush1.msra.mxu0 0.0
      %1800 = vmatprep.subr.mxu0 0.0
      %1801 = vmatpush1.msra.mxu0 0.0
      %1802 = vmatprep.subr.mxu0 0.0
      %1803 = vmatpush1.msra.mxu0 0.0
      %1804 = vmatprep.subr.mxu0 0.0
      %1805 = vmatpush1.msra.mxu0 0.0
      %1806 = vmatprep.subr.mxu0 0.0
      %1807 = vmatpush1.msra.mxu0 0.0
      %1808 = vmatprep.subr.mxu0 0.0
      %1809 = vmatpush1.msra.mxu0 0.0
      %1810 = vmatprep.subr.mxu0 0.0
      %1811 = vmatpush1.msra.mxu0 0.0
      %1812 = vmatprep.subr.mxu0 0.0
      %1813 = vmatpush1.msra.mxu0 0.0
      %1814 = vmatprep.subr.mxu0 0.0
      %1815 = vmatpush1.msra.mxu0 0.0
      %1816 = vmatprep.subr.mxu0 0.0
      %1817 = vmatpush1.msra.mxu0 0.0
      %1818 = vmatprep.subr.mxu0 0.0
      %1819 = vmatpush1.msra.mxu0 0.0
      %1820 = vmatprep.subr.mxu0 0.0
      %1821 = vmatpush1.msra.mxu0 0.0
      %1822 = vmatprep.subr.mxu0 0.0
      %1823 = vmatpush1.msra.mxu0 0.0
      %1824 = vmatprep.subr.mxu0 0.0
      %1825 = vmatpush1.msra.mxu0 0.0
      %1826 = vmatprep.subr.mxu0 0.0
      %1827 = vmatpush1.msra.mxu0 0.0
      %1828 = vmatprep.subr.mxu0 0.0
      %1829 = vmatpush1.msra.mxu0 0.0
      %1830 = vmatprep.mubr.f32.mxu0 0.0
      %1831 = vmatmul.mubr.f32.gmra.mrb[0].mxu0 %v1548
      %v1832 = vpop.f32.mrb[0].mxu0
      %v1833 = vadd.f32 0.0, %v1832
      %v1834 = vpop.f32.mrb[0].mxu0
      %1835 = vmatprep.mubr.f32.mxu0 0.0
      %1836 = vmatmul.mubr.f32.gmra.mrb[0].mxu0 %v1551
      %v1837 = vpop.f32.mrb[0].mxu0
      %v1838 = vadd.f32 0.0, %v1837
      %v1839 = vpop.f32.mrb[0].mxu0
      %1840 = vmatprep.mubr.f32.mxu0 0.0
      %1841 = vmatmul.mubr.f32.gmra.mrb[0].mxu0 %v1554
      %v1842 = vpop.f32.mrb[0].mxu0
      %v1843 = vadd.f32 0.0, %v1842
      %v1844 = vpop.f32.mrb[0].mxu0
      %1845 = vmatprep.mubr.f32.mxu0 0.0
      %1846 = vmatmul.mubr.f32.gmra.mrb[0].mxu0 %v1557
      %v1847 = vpop.f32.mrb[0].mxu0
      %v1848 = vadd.f32 0.0, %v1847
      %v1849 = vpop.f32.mrb[0].mxu0
      %1850 = vmatprep.mubr.f32.mxu0 0.0
      %1851 = vmatmul.mubr.f32.gmra.mrb[0].mxu0 %v1560
      %v1852 = vpop.f32.mrb[0].mxu0
      %v1853 = vadd.f32 0.0, %v1852
      %v1854 = vpop.f32.mrb[0].mxu0
      %1855 = vmatprep.mubr.f32.mxu0 0.0
      %1856 = vmatmul.mubr.f32.gmra.mrb[0].mxu0 %v1563
      %v1857 = vpop.f32.mrb[0].mxu0
      %v1858 = vadd.f32 0.0, %v1857
      %v1859 = vpop.f32.mrb[0].mxu0
      %1860 = vmatprep.mubr.f32.mxu0 0.0
      %1861 = vmatmul.mubr.f32.gmra.mrb[0].mxu0 %v1566
      %v1862 = vpop.f32.mrb[0].mxu0
      %v1863 = vadd.f32 0.0, %v1862
      %v1864 = vpop.f32.mrb[0].mxu0
      %1865 = vmatprep.mubr.f32.mxu0 0.0
      %1866 = vmatmul.mubr.f32.gmra.mrb[0].mxu0 %v1569
      %v1867 = vpop.f32.mrb[0].mxu0
      %v1868 = vadd.f32 0.0, %v1867
      %v1869 = vpop.f32.mrb[0].mxu0
      %1870 = vmatprep.mubr.f32.mxu0 0.0
      %1871 = vmatmul.mubr.f32.gmra.mrb[0].mxu0 %v1572
      %v1872 = vpop.f32.mrb[0].mxu0
      %v1873 = vadd.f32 0.0, %v1872
      %v1874 = vpop.f32.mrb[0].mxu0
      %1875 = vmatprep.mubr.f32.mxu0 0.0
      %1876 = vmatmul.mubr.f32.gmra.mrb[0].mxu0 %v1575
      %v1877 = vpop.f32.mrb[0].mxu0
      %v1878 = vadd.f32 0.0, %v1877
      %v1879 = vpop.f32.mrb[0].mxu0
      %1880 = vmatprep.mubr.f32.mxu0 0.0
      %1881 = vmatmul.mubr.f32.gmra.mrb[0].mxu0 %v1578
      %v1882 = vpop.f32.mrb[0].mxu0
      %v1883 = vadd.f32 0.0, %v1882
      %v1884 = vpop.f32.mrb[0].mxu0
      %1885 = vmatprep.mubr.f32.mxu0 0.0
      %1886 = vmatmul.mubr.f32.gmra.mrb[0].mxu0 %v1581
      %v1887 = vpop.f32.mrb[0].mxu0
      %v1888 = vadd.f32 0.0, %v1887
      %v1889 = vpop.f32.mrb[0].mxu0
      %1890 = vmatprep.mubr.f32.mxu0 0.0
      %1891 = vmatmul.mubr.f32.gmra.mrb[0].mxu0 %v1584
      %v1892 = vpop.f32.mrb[0].mxu0
      %v1893 = vadd.f32 0.0, %v1892
      %v1894 = vpop.f32.mrb[0].mxu0
      %1895 = vmatprep.mubr.f32.mxu0 0.0
      %1896 = vmatmul.mubr.f32.gmra.mrb[0].mxu0 %v1587
      %v1897 = vpop.f32.mrb[0].mxu0
      %v1898 = vadd.f32 0.0, %v1897
      %v1899 = vpop.f32.mrb[0].mxu0
      %1900 = vmatprep.mubr.f32.mxu0 0.0
      %1901 = vmatmul.mubr.f32.gmra.mrb[0].mxu0 %v1590
      %v1902 = vpop.f32.mrb[0].mxu0
      %v1903 = vadd.f32 0.0, %v1902
      %v1904 = vpop.f32.mrb[0].mxu0
      %1905 = vmatprep.mubr.f32.mxu0 0.0
      %1906 = vmatmul.mubr.f32.gmra.mrb[0].mxu0 %v1593
      %v1907 = vpop.f32.mrb[0].mxu0
      %v1908 = vadd.f32 0.0, %v1907
      %v1909 = vpop.f32.mrb[0].mxu0
      %1910 = vmatprep.mubr.f32.mxu0 0.0
      %1911 = vmatmul.mubr.f32.gmra.mrb[0].mxu0 %v1596
      %v1912 = vpop.f32.mrb[0].mxu0
      %v1913 = vadd.f32 0.0, %v1912
      %v1914 = vpop.f32.mrb[0].mxu0
      %1915 = vmatprep.mubr.f32.mxu0 0.0
      %1916 = vmatmul.mubr.f32.gmra.mrb[0].mxu0 %v1599
      %v1917 = vpop.f32.mrb[0].mxu0
      %v1918 = vadd.f32 0.0, %v1917
      %v1919 = vpop.f32.mrb[0].mxu0
      %1920 = vmatprep.mubr.f32.mxu0 0.0
      %1921 = vmatmul.mubr.f32.gmra.mrb[0].mxu0 %v1602
      %v1922 = vpop.f32.mrb[0].mxu0
      %v1923 = vadd.f32 0.0, %v1922
      %v1924 = vpop.f32.mrb[0].mxu0
      %1925 = vmatprep.mubr.f32.mxu0 0.0
      %1926 = vmatmul.mubr.f32.gmra.mrb[0].mxu0 %v1605
      %v1927 = vpop.f32.mrb[0].mxu0
      %v1928 = vadd.f32 0.0, %v1927
      %v1929 = vpop.f32.mrb[0].mxu0
      %1930 = vmatprep.mubr.f32.mxu0 0.0
      %1931 = vmatmul.mubr.f32.gmra.mrb[0].mxu0 %v1608
      %v1932 = vpop.f32.mrb[0].mxu0
      %v1933 = vadd.f32 0.0, %v1932
      %v1934 = vpop.f32.mrb[0].mxu0
      %1935 = vmatprep.mubr.f32.mxu0 0.0
      %1936 = vmatmul.mubr.f32.gmra.mrb[0].mxu0 %v1611
      %v1937 = vpop.f32.mrb[0].mxu0
      %v1938 = vadd.f32 0.0, %v1937
      %v1939 = vpop.f32.mrb[0].mxu0
      %1940 = vmatprep.mubr.f32.mxu0 0.0
      %1941 = vmatmul.mubr.f32.gmra.mrb[0].mxu0 %v1614
      %v1942 = vpop.f32.mrb[0].mxu0
      %v1943 = vadd.f32 0.0, %v1942
      %v1944 = vpop.f32.mrb[0].mxu0
      %1945 = vmatprep.mubr.f32.mxu0 0.0
      %1946 = vmatmul.mubr.f32.gmra.mrb[0].mxu0 %v1617
      %v1947 = vpop.f32.mrb[0].mxu0
      %v1948 = vadd.f32 0.0, %v1947
      %v1949 = vpop.f32.mrb[0].mxu0
      %1950 = vmatprep.mubr.f32.mxu0 0.0
      %1951 = vmatmul.mubr.f32.gmra.mrb[0].mxu0 %v1620
      %v1952 = vpop.f32.mrb[0].mxu0
      %v1953 = vadd.f32 0.0, %v1952
      %v1954 = vpop.f32.mrb[0].mxu0
      %1955 = vmatprep.mubr.f32.mxu0 0.0
      %1956 = vmatmul.mubr.f32.gmra.mrb[0].mxu0 %v1623
      %v1957 = vpop.f32.mrb[0].mxu0
      %v1958 = vadd.f32 0.0, %v1957
      %v1959 = vpop.f32.mrb[0].mxu0
      %1960 = vmatprep.mubr.f32.mxu0 0.0
      %1961 = vmatmul.mubr.f32.gmra.mrb[0].mxu0 %v1626
      %v1962 = vpop.f32.mrb[0].mxu0
      %v1963 = vadd.f32 0.0, %v1962
      %v1964 = vpop.f32.mrb[0].mxu0
      %1965 = vmatprep.mubr.f32.mxu0 0.0
      %1966 = vmatmul.mubr.f32.gmra.mrb[0].mxu0 %v1629
      %v1967 = vpop.f32.mrb[0].mxu0
      %v1968 = vadd.f32 0.0, %v1967
      %v1969 = vpop.f32.mrb[0].mxu0
      %1970 = vmatprep.mubr.f32.mxu0 0.0
      %1971 = vmatmul.mubr.f32.gmra.mrb[0].mxu0 %v1632
      %v1972 = vpop.f32.mrb[0].mxu0
      %v1973 = vadd.f32 0.0, %v1972
      %v1974 = vpop.f32.mrb[0].mxu0
      %1975 = vmatprep.mubr.f32.mxu0 0.0
      %1976 = vmatmul.mubr.f32.gmra.mrb[0].mxu0 %v1635
      %v1977 = vpop.f32.mrb[0].mxu0
      %v1978 = vadd.f32 0.0, %v1977
      %v1979 = vpop.f32.mrb[0].mxu0
      %1980 = vmatprep.mubr.f32.mxu0 0.0
      %1981 = vmatmul.mubr.f32.gmra.mrb[0].mxu0 %v1638
      %v1982 = vpop.f32.mrb[0].mxu0
      %v1983 = vadd.f32 0.0, %v1982
      %v1984 = vpop.f32.mrb[0].mxu0
      %1985 = vmatprep.mubr.f32.mxu0 0.0
      %1986 = vmatmul.mubr.f32.gmra.mrb[0].mxu0 %v1641
      %v1987 = vpop.f32.mrb[0].mxu0
      %v1988 = vadd.f32 0.0, %v1987
      %v1989 = vpop.f32.mrb[0].mxu0
      %1990 = vmatprep.mubr.f32.mxu0 0.0
      %1991 = vmatmul.mubr.f32.gmra.mrb[0].mxu0 %v1644
      %v1992 = vpop.f32.mrb[0].mxu0
      %v1993 = vadd.f32 0.0, %v1992
      %v1994 = vpop.f32.mrb[0].mxu0
      %1995 = vmatprep.mubr.f32.mxu0 0.0
      %1996 = vmatmul.mubr.f32.gmra.mrb[0].mxu0 %v1647
      %v1997 = vpop.f32.mrb[0].mxu0
      %v1998 = vadd.f32 0.0, %v1997
      %v1999 = vpop.f32.mrb[0].mxu0
      %2000 = vmatprep.mubr.f32.mxu0 0.0
      %2001 = vmatmul.mubr.f32.gmra.mrb[0].mxu0 %v1650
      %v2002 = vpop.f32.mrb[0].mxu0
      %v2003 = vadd.f32 0.0, %v2002
      %v2004 = vpop.f32.mrb[0].mxu0
      %2005 = vmatprep.mubr.f32.mxu0 0.0
      %2006 = vmatmul.mubr.f32.gmra.mrb[0].mxu0 %v1653
      %v2007 = vpop.f32.mrb[0].mxu0
      %v2008 = vadd.f32 0.0, %v2007
      %v2009 = vpop.f32.mrb[0].mxu0
      %2010 = vmatprep.mubr.f32.mxu0 0.0
      %2011 = vmatmul.mubr.f32.gmra.mrb[0].mxu0 %v1656
      %v2012 = vpop.f32.mrb[0].mxu0
      %v2013 = vadd.f32 0.0, %v2012
      %v2014 = vpop.f32.mrb[0].mxu0
      %2015 = vmatprep.mubr.f32.mxu0 0.0
      %2016 = vmatmul.mubr.f32.gmra.mrb[0].mxu0 %v1659
      %v2017 = vpop.f32.mrb[0].mxu0
      %v2018 = vadd.f32 0.0, %v2017
      %v2019 = vpop.f32.mrb[0].mxu0
      %2020 = vmatprep.mubr.f32.mxu0 0.0
      %2021 = vmatmul.mubr.f32.gmra.mrb[0].mxu0 %v1662
      %v2022 = vpop.f32.mrb[0].mxu0
      %v2023 = vadd.f32 0.0, %v2022
      %v2024 = vpop.f32.mrb[0].mxu0
      %2025 = vmatprep.mubr.f32.mxu0 0.0
      %2026 = vmatmul.mubr.f32.gmra.mrb[0].mxu0 %v1665
      %v2027 = vpop.f32.mrb[0].mxu0
      %v2028 = vadd.f32 0.0, %v2027
      %v2029 = vpop.f32.mrb[0].mxu0
      %2030 = vmatprep.mubr.f32.mxu0 0.0
      %2031 = vmatmul.mubr.f32.gmra.mrb[0].mxu0 %v1668
      %v2032 = vpop.f32.mrb[0].mxu0
      %v2033 = vadd.f32 0.0, %v2032
      %v2034 = vpop.f32.mrb[0].mxu0
      %2035 = vmatprep.mubr.f32.mxu0 0.0
      %2036 = vmatmul.mubr.f32.gmra.mrb[0].mxu0 %v1671
      %v2037 = vpop.f32.mrb[0].mxu0
      %v2038 = vadd.f32 0.0, %v2037
      %v2039 = vpop.f32.mrb[0].mxu0
      %2040 = vmatprep.mubr.f32.mxu0 0.0
      %2041 = vmatmul.mubr.f32.gmra.mrb[0].mxu0 %v1674
      %v2042 = vpop.f32.mrb[0].mxu0
      %v2043 = vadd.f32 0.0, %v2042
      %v2044 = vpop.f32.mrb[0].mxu0
      %2045 = vmatprep.mubr.f32.mxu0 0.0
      %2046 = vmatmul.mubr.f32.gmra.mrb[0].mxu0 %v1677
      %v2047 = vpop.f32.mrb[0].mxu0
      %v2048 = vadd.f32 0.0, %v2047
      %v2049 = vpop.f32.mrb[0].mxu0
      %2050 = vmatprep.mubr.f32.mxu0 0.0
      %2051 = vmatmul.mubr.f32.gmra.mrb[0].mxu0 %v1680
      %v2052 = vpop.f32.mrb[0].mxu0
      %v2053 = vadd.f32 0.0, %v2052
      %v2054 = vpop.f32.mrb[0].mxu0
      %2055 = vmatprep.mubr.f32.mxu0 0.0
      %2056 = vmatmul.mubr.f32.gmra.mrb[0].mxu0 %v1683
      %v2057 = vpop.f32.mrb[0].mxu0
      %v2058 = vadd.f32 0.0, %v2057
      %v2059 = vpop.f32.mrb[0].mxu0
      %2060 = vmatprep.mubr.f32.mxu0 0.0
      %2061 = vmatmul.mubr.f32.gmra.mrb[0].mxu0 %v1686
      %v2062 = vpop.f32.mrb[0].mxu0
      %v2063 = vadd.f32 0.0, %v2062
      %v2064 = vpop.f32.mrb[0].mxu0
      %2065 = vmatprep.mubr.f32.mxu0 0.0
      %2066 = vmatmul.mubr.f32.gmra.mrb[0].mxu0 %v1689
      %v2067 = vpop.f32.mrb[0].mxu0
      %v2068 = vadd.f32 0.0, %v2067
      %v2069 = vpop.f32.mrb[0].mxu0
      %2070 = vmatprep.mubr.f32.mxu0 0.0
      %2071 = vmatmul.mubr.f32.gmra.mrb[0].mxu0 %v1692
      %v2072 = vpop.f32.mrb[0].mxu0
      %v2073 = vadd.f32 0.0, %v2072
      %v2074 = vpop.f32.mrb[0].mxu0
      %2075 = vmatprep.mubr.f32.mxu0 0.0
      %2076 = vmatmul.mubr.f32.gmra.mrb[0].mxu0 %v1695
      %v2077 = vpop.f32.mrb[0].mxu0
      %v2078 = vadd.f32 0.0, %v2077
      %v2079 = vpop.f32.mrb[0].mxu0
      %2080 = vmatprep.mubr.f32.mxu0 0.0
      %2081 = vmatmul.mubr.f32.gmra.mrb[0].mxu0 %v1698
      %v2082 = vpop.f32.mrb[0].mxu0
      %v2083 = vadd.f32 0.0, %v2082
      %v2084 = vpop.f32.mrb[0].mxu0
      %2085 = vmatprep.mubr.f32.mxu0 0.0
      %2086 = vmatmul.mubr.f32.gmra.mrb[0].mxu0 %v1701
      %v2087 = vpop.f32.mrb[0].mxu0
      %v2088 = vadd.f32 0.0, %v2087
      %v2089 = vpop.f32.mrb[0].mxu0
      %2090 = vmatprep.mubr.f32.mxu0 0.0
      %2091 = vmatmul.mubr.f32.gmra.mrb[0].mxu0 %v1704
      %v2092 = vpop.f32.mrb[0].mxu0
      %v2093 = vadd.f32 0.0, %v2092
      %v2094 = vpop.f32.mrb[0].mxu0
      %2095 = vmatprep.mubr.f32.mxu0 0.0
      %2096 = vmatmul.mubr.f32.gmra.mrb[0].mxu0 %v1707
      %v2097 = vpop.f32.mrb[0].mxu0
      %v2098 = vadd.f32 0.0, %v2097
      %v2099 = vpop.f32.mrb[0].mxu0
      %2100 = vmatprep.mubr.f32.mxu0 0.0
      %2101 = vmatmul.mubr.f32.gmra.mrb[0].mxu0 %v1710
      %v2102 = vpop.f32.mrb[0].mxu0
      %v2103 = vadd.f32 0.0, %v2102
      %v2104 = vpop.f32.mrb[0].mxu0
      %2105 = vmatprep.mubr.f32.mxu0 0.0
      %2106 = vmatmul.mubr.f32.gmra.mrb[0].mxu0 %v1713
      %v2107 = vpop.f32.mrb[0].mxu0
      %v2108 = vadd.f32 0.0, %v2107
      %v2109 = vpop.f32.mrb[0].mxu0
      %2110 = vmatprep.mubr.f32.mxu0 0.0
      %2111 = vmatmul.mubr.f32.gmra.mrb[0].mxu0 %v1716
      %v2112 = vpop.f32.mrb[0].mxu0
      %v2113 = vadd.f32 0.0, %v2112
      %v2114 = vpop.f32.mrb[0].mxu0
      %2115 = vmatprep.mubr.f32.mxu0 0.0
      %2116 = vmatmul.mubr.f32.gmra.mrb[0].mxu0 %v1719
      %v2117 = vpop.f32.mrb[0].mxu0
      %v2118 = vadd.f32 0.0, %v2117
      %v2119 = vpop.f32.mrb[0].mxu0
      %2120 = vmatprep.mubr.f32.mxu0 0.0
      %2121 = vmatmul.mubr.f32.gmra.mrb[0].mxu0 %v1722
      %v2122 = vpop.f32.mrb[0].mxu0
      %v2123 = vadd.f32 0.0, %v2122
      %v2124 = vpop.f32.mrb[0].mxu0
      %2125 = vmatprep.mubr.f32.mxu0 0.0
      %2126 = vmatmul.mubr.f32.gmra.mrb[0].mxu0 %v1725
      %v2127 = vpop.f32.mrb[0].mxu0
      %v2128 = vadd.f32 0.0, %v2127
      %v2129 = vpop.f32.mrb[0].mxu0
      %2130 = vmatprep.mubr.f32.mxu0 0.0
      %2131 = vmatmul.mubr.f32.gmra.mrb[0].mxu0 %v1728
      %v2132 = vpop.f32.mrb[0].mxu0
      %v2133 = vadd.f32 0.0, %v2132
      %v2134 = vpop.f32.mrb[0].mxu0
      %2135 = vmatprep.mubr.f32.mxu0 0.0
      %2136 = vmatmul.mubr.f32.gmra.mrb[0].mxu0 %v1731
      %v2137 = vpop.f32.mrb[0].mxu0
      %v2138 = vadd.f32 0.0, %v2137
      %v2139 = vpop.f32.mrb[0].mxu0
      %2140 = vmatprep.mubr.f32.mxu0 0.0
      %2141 = vmatmul.mubr.f32.gmra.mrb[0].mxu0 %v1734
      %v2142 = vpop.f32.mrb[0].mxu0
      %v2143 = vadd.f32 0.0, %v2142
      %v2144 = vpop.f32.mrb[0].mxu0
      %2145 = vmatprep.mubr.f32.mxu0 0.0
      %2146 = vmatmul.mubr.f32.gmra.mrb[0].mxu0 %v1737
      %v2147 = vpop.f32.mrb[0].mxu0
      %v2148 = vadd.f32 0.0, %v2147
      %v2149 = vpop.f32.mrb[0].mxu0
      %2150 = vmatprep.mubr.f32.mxu0 0.0
      %2151 = vmatmul.mubr.f32.gmra.mrb[0].mxu0 %v1740
      %v2152 = vpop.f32.mrb[0].mxu0
      %v2153 = vadd.f32 0.0, %v2152
      %v2154 = vpop.f32.mrb[0].mxu0
      %2155 = vmatprep.mubr.f32.mxu0 0.0
      %2156 = vmatmul.mubr.f32.gmra.mrb[0].mxu0 %v1743
      %v2157 = vpop.f32.mrb[0].mxu0
      %v2158 = vadd.f32 0.0, %v2157
      %v2159 = vpop.f32.mrb[0].mxu0
      %2160 = vmatprep.mubr.f32.mxu0 0.0
      %2161 = vmatmul.mubr.f32.gmra.mrb[0].mxu0 %v1746
      %v2162 = vpop.f32.mrb[0].mxu0
      %v2163 = vadd.f32 0.0, %v2162
      %v2164 = vpop.f32.mrb[0].mxu0
      %2165 = vmatprep.mubr.f32.mxu0 0.0
      %2166 = vmatmul.mubr.f32.gmra.mrb[0].mxu0 %v1749
      %v2167 = vpop.f32.mrb[0].mxu0
      %v2168 = vadd.f32 0.0, %v2167
      %v2169 = vpop.f32.mrb[0].mxu0
      %2170 = vmatprep.mubr.f32.mxu0 0.0
      %2171 = vmatmul.mubr.f32.gmra.mrb[0].mxu0 %v1752
      %v2172 = vpop.f32.mrb[0].mxu0
      %v2173 = vadd.f32 0.0, %v2172
      %v2174 = vpop.f32.mrb[0].mxu0
      %2175 = vmatprep.mubr.f32.mxu0 0.0
      %2176 = vmatmul.mubr.f32.gmra.mrb[0].mxu0 %v1755
      %v2177 = vpop.f32.mrb[0].mxu0
      %v2178 = vadd.f32 0.0, %v2177
      %v2179 = vpop.f32.mrb[0].mxu0
      %2180 = vmatprep.mubr.f32.mxu0 0.0
      %2181 = vmatmul.mubr.f32.gmra.mrb[0].mxu0 %v1758
      %v2182 = vpop.f32.mrb[0].mxu0
      %v2183 = vadd.f32 0.0, %v2182
      %v2184 = vpop.f32.mrb[0].mxu0
      %2185 = vmatprep.mubr.f32.mxu0 0.0
      %2186 = vmatmul.mubr.f32.gmra.mrb[0].mxu0 %v1761
      %v2187 = vpop.f32.mrb[0].mxu0
      %v2188 = vadd.f32 0.0, %v2187
      %v2189 = vpop.f32.mrb[0].mxu0
      %2190 = vdwg.mxu0
      %v2191 = vadd.f32 %v1103, %v1833
      %v2192 = vadd.f32 %v1108, %v1838
      %v2193 = vadd.f32 %v1113, %v1843
      %v2194 = vadd.f32 %v1118, %v1848
      %v2195 = vadd.f32 %v1123, %v1853
      %v2196 = vadd.f32 %v1128, %v1858
      %v2197 = vadd.f32 %v1133, %v1863
      %v2198 = vadd.f32 %v1138, %v1868
      %v2199 = vadd.f32 %v1143, %v1873
      %v2200 = vadd.f32 %v1148, %v1878
      %v2201 = vadd.f32 %v1153, %v1883
      %v2202 = vadd.f32 %v1158, %v1888
      %v2203 = vadd.f32 %v1163, %v1893
      %v2204 = vadd.f32 %v1168, %v1898
      %v2205 = vadd.f32 %v1173, %v1903
      %v2206 = vadd.f32 %v1178, %v1908
      %v2207 = vadd.f32 %v1183, %v1913
      %v2208 = vadd.f32 %v1188, %v1918
      %v2209 = vadd.f32 %v1193, %v1923
      %v2210 = vadd.f32 %v1198, %v1928
      %v2211 = vadd.f32 %v1203, %v1933
      %v2212 = vadd.f32 %v1208, %v1938
      %v2213 = vadd.f32 %v1213, %v1943
      %v2214 = vadd.f32 %v1218, %v1948
      %v2215 = vadd.f32 %v1223, %v1953
      %v2216 = vadd.f32 %v1228, %v1958
      %v2217 = vadd.f32 %v1233, %v1963
      %v2218 = vadd.f32 %v1238, %v1968
      %v2219 = vadd.f32 %v1243, %v1973
      %v2220 = vadd.f32 %v1248, %v1978
      %v2221 = vadd.f32 %v1253, %v1983
      %v2222 = vadd.f32 %v1258, %v1988
      %v2223 = vadd.f32 %v1263, %v1993
      %v2224 = vadd.f32 %v1268, %v1998
      %v2225 = vadd.f32 %v1273, %v2003
      %v2226 = vadd.f32 %v1278, %v2008
      %v2227 = vadd.f32 %v1283, %v2013
      %v2228 = vadd.f32 %v1288, %v2018
      %v2229 = vadd.f32 %v1293, %v2023
      %v2230 = vadd.f32 %v1298, %v2028
      %v2231 = vadd.f32 %v1303, %v2033
      %v2232 = vadd.f32 %v1308, %v2038
      %v2233 = vadd.f32 %v1313, %v2043
      %v2234 = vadd.f32 %v1318, %v2048
      %v2235 = vadd.f32 %v1323, %v2053
      %v2236 = vadd.f32 %v1328, %v2058
      %v2237 = vadd.f32 %v1333, %v2063
      %v2238 = vadd.f32 %v1338, %v2068
      %v2239 = vadd.f32 %v1343, %v2073
      %v2240 = vadd.f32 %v1348, %v2078
      %v2241 = vadd.f32 %v1353, %v2083
      %v2242 = vadd.f32 %v1358, %v2088
      %v2243 = vadd.f32 %v1363, %v2093
      %v2244 = vadd.f32 %v1368, %v2098
      %v2245 = vadd.f32 %v1373, %v2103
      %v2246 = vadd.f32 %v1378, %v2108
      %v2247 = vadd.f32 %v1383, %v2113
      %v2248 = vadd.f32 %v1388, %v2118
      %v2249 = vadd.f32 %v1393, %v2123
      %v2250 = vadd.f32 %v1398, %v2128
      %v2251 = vadd.f32 %v1403, %v2133
      %v2252 = vadd.f32 %v1408, %v2138
      %v2253 = vadd.f32 %v1413, %v2143
      %v2254 = vadd.f32 %v1418, %v2148
      %v2255 = vadd.f32 %v1423, %v2153
      %v2256 = vadd.f32 %v1428, %v2158
      %v2257 = vadd.f32 %v1433, %v2163
      %v2258 = vadd.f32 %v1438, %v2168
      %v2259 = vadd.f32 %v1443, %v2173
      %v2260 = vadd.f32 %v1448, %v2178
      %v2261 = vadd.f32 %v1453, %v2183
      %v2262 = vadd.f32 %v1458, %v2188
      %v2263 = vld [vmem:[%s246 + $0xd8] sm:$0xff]
      %v2264 = vld [vmem:[%s246 + $0xe0] sm:$0xff]
      %v2265 = vld [vmem:[%s246 + $0xe8] sm:$0xff]
      %v2266 = vld [vmem:[%s246 + $0xf0] sm:$0xff]
      %v2267 = vld [vmem:[%s246 + $0xf8] sm:$0xff]
      %v2268 = vld [vmem:[%s246 + $0x100] sm:$0xff]
      %v2269 = vld [vmem:[%s246 + $0x108] sm:$0xff]
      %v2270 = vld [vmem:[%s246 + $0x110] sm:$0xff]
      %v2271 = vld [vmem:[%s246 + $0x118] sm:$0xff]
      %v2272 = vld [vmem:[%s246 + $0x120] sm:$0xff]
      %v2273 = vld [vmem:[%s246 + $0x128] sm:$0xff]
      %v2274 = vld [vmem:[%s246 + $0x130] sm:$0xff]
      %v2275 = vld [vmem:[%s246 + $0x138] sm:$0xff]
      %v2276 = vld [vmem:[%s246 + $0x140] sm:$0xff]
      %v2277 = vld [vmem:[%s246 + $0x148] sm:$0xff]
      %v2278 = vld [vmem:[%s246 + $0x150] sm:$0xff]
      %v2279 = vld [vmem:[%s246 + $0x158] sm:$0xff]
      %v2280 = vld [vmem:[%s246 + $0x160] sm:$0xff]
      %v2281 = vld [vmem:[%s246 + $0x168] sm:$0xff]
      %v2282 = vld [vmem:[%s246 + $0x170] sm:$0xff]
      %v2283 = vld [vmem:[%s246 + $0x178] sm:$0xff]
      %v2284 = vld [vmem:[%s246 + $0x180] sm:$0xff]
      %v2285 = vld [vmem:[%s246 + $0x188] sm:$0xff]
      %v2286 = vld [vmem:[%s246 + $0x190] sm:$0xff]
      %v2287 = vld [vmem:[%s246 + $0x198] sm:$0xff]
      %v2288 = vld [vmem:[%s246 + $0x1a0] sm:$0xff]
      %v2289 = vld [vmem:[%s246 + $0x1a8] sm:$0xff]
      %v2290 = vld [vmem:[%s246 + $0x1b0] sm:$0xff]
      %v2291 = vld [vmem:[%s246 + $0x1b8] sm:$0xff]
      %v2292 = vld [vmem:[%s246 + $0x1c0] sm:$0xff]
      %v2293 = vld [vmem:[%s246 + $0x1c8] sm:$0xff]
      %v2294 = vld [vmem:[%s246 + $0x1d0] sm:$0xff]
      %v2295 = vld [vmem:[%s246 + $0x1d8] sm:$0xff]
      %v2296 = vld [vmem:[%s246 + $0x1e0] sm:$0xff]
      %v2297 = vld [vmem:[%s246 + $0x1e8] sm:$0xff]
      %v2298 = vld [vmem:[%s246 + $0x1f0] sm:$0xff]
      %v2299 = vld [vmem:[%s246 + $0x1f8] sm:$0xff]
      %v2300 = vld [vmem:[%s246 + $0x200] sm:$0xff]
      %v2301 = vld [vmem:[%s246 + $0x208] sm:$0xff]
      %v2302 = vld [vmem:[%s246 + $0x210] sm:$0xff]
      %v2303 = vld [vmem:[%s246 + $0x218] sm:$0xff]
      %v2304 = vld [vmem:[%s246 + $0x220] sm:$0xff]
      %v2305 = vld [vmem:[%s246 + $0x228] sm:$0xff]
      %v2306 = vld [vmem:[%s246 + $0x230] sm:$0xff]
      %v2307 = vld [vmem:[%s246 + $0x238] sm:$0xff]
      %v2308 = vld [vmem:[%s246 + $0x240] sm:$0xff]
      %v2309 = vld [vmem:[%s246 + $0x248] sm:$0xff]
      %v2310 = vld [vmem:[%s246 + $0x250] sm:$0xff]
      %v2311 = vld [vmem:[%s246 + $0x258] sm:$0xff]
      %v2312 = vld [vmem:[%s246 + $0x260] sm:$0xff]
      %v2313 = vld [vmem:[%s246 + $0x268] sm:$0xff]
      %v2314 = vld [vmem:[%s246 + $0x270] sm:$0xff]
      %v2315 = vld [vmem:[%s246 + $0x278] sm:$0xff]
      %v2316 = vld [vmem:[%s246 + $0x280] sm:$0xff]
      %v2317 = vld [vmem:[%s246 + $0x288] sm:$0xff]
      %v2318 = vld [vmem:[%s246 + $0x290] sm:$0xff]
      %v2319 = vld [vmem:[%s246 + $0x298] sm:$0xff]
      %v2320 = vld [vmem:[%s246 + $0x2a0] sm:$0xff]
      %v2321 = vld [vmem:[%s246 + $0x2a8] sm:$0xff]
      %v2322 = vld [vmem:[%s246 + $0x2b0] sm:$0xff]
      %v2323 = vld [vmem:[%s246 + $0x2b8] sm:$0xff]
      %v2324 = vld [vmem:[%s246 + $0x2c0] sm:$0xff]
      %v2325 = vld [vmem:[%s246 + $0x2c8] sm:$0xff]
      %v2326 = vld [vmem:[%s246 + $0x2d0] sm:$0xff]
      %v2327 = vld [vmem:[%s246 + $0x2d8] sm:$0xff]
      %v2328 = vld [vmem:[%s246 + $0x2e0] sm:$0xff]
      %v2329 = vld [vmem:[%s246 + $0x2e8] sm:$0xff]
      %v2330 = vld [vmem:[%s246 + $0x2f0] sm:$0xff]
      %v2331 = vld [vmem:[%s246 + $0x2f8] sm:$0xff]
      %v2332 = vld [vmem:[%s246 + $0x300] sm:$0xff]
      %v2333 = vld [vmem:[%s246 + $0x308] sm:$0xff]
      %v2334 = vld [vmem:[%s246 + $0x310] sm:$0xff]
      %s2335 = scalar_lea.vmem %s1, 312
      %v2336 = vld [vmem:[%s2335] sm:$0xff]
      %v2337 = vld [vmem:[%s2335 + $0x8] sm:$0xff]
      %v2338 = vld [vmem:[%s2335 + $0x10] sm:$0xff]
      %v2339 = vld [vmem:[%s2335 + $0x18] sm:$0xff]
      %v2340 = vld [vmem:[%s2335 + $0x20] sm:$0xff]
      %v2341 = vld [vmem:[%s2335 + $0x28] sm:$0xff]
      %v2342 = vld [vmem:[%s2335 + $0x30] sm:$0xff]
      %v2343 = vld [vmem:[%s2335 + $0x38] sm:$0xff]
      %v2344 = vld [vmem:[%s2335 + $0x40] sm:$0xff]
      %v2345 = vld [vmem:[%s2335 + $0x48] sm:$0xff]
      %v2346 = vld [vmem:[%s2335 + $0x50] sm:$0xff]
      %v2347 = vld [vmem:[%s2335 + $0x58] sm:$0xff]
      %v2348 = vld [vmem:[%s2335 + $0x60] sm:$0xf]
      %v2350 = vsel %vm360, %v2263, 0
      %v2353 = vsel %vm360, %v2264, 0
      %v2356 = vsel %vm360, %v2265, 0
      %v2359 = vsel %vm360, %v2266, 0
      %v2362 = vsel %vm360, %v2267, 0
      %v2365 = vsel %vm360, %v2268, 0
      %v2368 = vsel %vm360, %v2269, 0
      %v2371 = vsel %vm360, %v2270, 0
      %v2374 = vsel %vm360, %v2271, 0
      %v2377 = vsel %vm360, %v2272, 0
      %v2380 = vsel %vm360, %v2273, 0
      %v2383 = vsel %vm360, %v2274, 0
      %v2386 = vsel %vm360, %v2275, 0
      %v2389 = vsel %vm360, %v2276, 0
      %v2392 = vsel %vm360, %v2277, 0
      %v2395 = vsel %vm360, %v2278, 0
      %v2398 = vsel %vm360, %v2279, 0
      %v2401 = vsel %vm360, %v2280, 0
      %v2404 = vsel %vm360, %v2281, 0
      %v2407 = vsel %vm360, %v2282, 0
      %v2410 = vsel %vm360, %v2283, 0
      %v2413 = vsel %vm360, %v2284, 0
      %v2416 = vsel %vm360, %v2285, 0
      %v2419 = vsel %vm360, %v2286, 0
      %v2422 = vsel %vm360, %v2287, 0
      %v2425 = vsel %vm360, %v2288, 0
      %v2428 = vsel %vm360, %v2289, 0
      %v2431 = vsel %vm360, %v2290, 0
      %v2434 = vsel %vm360, %v2291, 0
      %v2437 = vsel %vm360, %v2292, 0
      %v2440 = vsel %vm360, %v2293, 0
      %v2443 = vsel %vm360, %v2294, 0
      %v2446 = vsel %vm360, %v2295, 0
      %v2449 = vsel %vm360, %v2296, 0
      %v2452 = vsel %vm360, %v2297, 0
      %v2455 = vsel %vm360, %v2298, 0
      %v2458 = vsel %vm360, %v2299, 0
      %v2461 = vsel %vm360, %v2300, 0
      %v2464 = vsel %vm360, %v2301, 0
      %v2467 = vsel %vm360, %v2302, 0
      %v2470 = vsel %vm360, %v2303, 0
      %v2473 = vsel %vm360, %v2304, 0
      %v2476 = vsel %vm360, %v2305, 0
      %v2479 = vsel %vm360, %v2306, 0
      %v2482 = vsel %vm360, %v2307, 0
      %v2485 = vsel %vm360, %v2308, 0
      %v2488 = vsel %vm360, %v2309, 0
      %v2491 = vsel %vm360, %v2310, 0
      %v2494 = vsel %vm360, %v2311, 0
      %v2497 = vsel %vm360, %v2312, 0
      %v2500 = vsel %vm360, %v2313, 0
      %v2503 = vsel %vm360, %v2314, 0
      %v2506 = vsel %vm360, %v2315, 0
      %v2509 = vsel %vm360, %v2316, 0
      %v2512 = vsel %vm360, %v2317, 0
      %v2515 = vsel %vm360, %v2318, 0
      %v2518 = vsel %vm360, %v2319, 0
      %v2521 = vsel %vm360, %v2320, 0
      %v2524 = vsel %vm360, %v2321, 0
      %v2527 = vsel %vm360, %v2322, 0
      %v2530 = vsel %vm360, %v2323, 0
      %v2533 = vsel %vm360, %v2324, 0
      %v2536 = vsel %vm360, %v2325, 0
      %v2539 = vsel %vm360, %v2326, 0
      %v2542 = vsel %vm360, %v2327, 0
      %v2545 = vsel %vm360, %v2328, 0
      %v2548 = vsel %vm360, %v2329, 0
      %v2551 = vsel %vm360, %v2330, 0
      %v2554 = vsel %vm360, %v2331, 0
      %v2557 = vsel %vm360, %v2332, 0
      %v2560 = vsel %vm360, %v2333, 0
      %v2563 = vsel %vm360, %v2334, 0
      %v2566 = vsel %vm577, %v2348, 0
      %2568 = vmatprep.subr.mxu0 0.0
      %2569 = vmatpush1.msra.mxu0 %v2336
      %2570 = vmatprep.subr.mxu0 0.0
      %2571 = vmatpush1.msra.mxu0 %v2337
      %2572 = vmatprep.subr.mxu0 0.0
      %2573 = vmatpush1.msra.mxu0 %v2338
      %2574 = vmatprep.subr.mxu0 0.0
      %2575 = vmatpush1.msra.mxu0 %v2339
      %2576 = vmatprep.subr.mxu0 0.0
      %2577 = vmatpush1.msra.mxu0 %v2340
      %2578 = vmatprep.subr.mxu0 0.0
      %2579 = vmatpush1.msra.mxu0 %v2341
      %2580 = vmatprep.subr.mxu0 0.0
      %2581 = vmatpush1.msra.mxu0 %v2342
      %2582 = vmatprep.subr.mxu0 0.0
      %2583 = vmatpush1.msra.mxu0 %v2343
      %2584 = vmatprep.subr.mxu0 0.0
      %2585 = vmatpush1.msra.mxu0 %v2344
      %2586 = vmatprep.subr.mxu0 0.0
      %2587 = vmatpush1.msra.mxu0 %v2345
      %2588 = vmatprep.subr.mxu0 0.0
      %2589 = vmatpush1.msra.mxu0 %v2346
      %2590 = vmatprep.subr.mxu0 0.0
      %2591 = vmatpush1.msra.mxu0 %v2347
      %2592 = vmatprep.subr.mxu0 0.0
      %2593 = vmatpush1.msra.mxu0 %v2566
      %2594 = vmatprep.subr.mxu0 0.0
      %2595 = vmatpush1.msra.mxu0 0.0
      %2596 = vmatprep.subr.mxu0 0.0
      %2597 = vmatpush1.msra.mxu0 0.0
      %2598 = vmatprep.subr.mxu0 0.0
      %2599 = vmatpush1.msra.mxu0 0.0
      %2600 = vmatprep.subr.mxu0 0.0
      %2601 = vmatpush1.msra.mxu0 0.0
      %2602 = vmatprep.subr.mxu0 0.0
      %2603 = vmatpush1.msra.mxu0 0.0
      %2604 = vmatprep.subr.mxu0 0.0
      %2605 = vmatpush1.msra.mxu0 0.0
      %2606 = vmatprep.subr.mxu0 0.0
      %2607 = vmatpush1.msra.mxu0 0.0
      %2608 = vmatprep.subr.mxu0 0.0
      %2609 = vmatpush1.msra.mxu0 0.0
      %2610 = vmatprep.subr.mxu0 0.0
      %2611 = vmatpush1.msra.mxu0 0.0
      %2612 = vmatprep.subr.mxu0 0.0
      %2613 = vmatpush1.msra.mxu0 0.0
      %2614 = vmatprep.subr.mxu0 0.0
      %2615 = vmatpush1.msra.mxu0 0.0
      %2616 = vmatprep.subr.mxu0 0.0
      %2617 = vmatpush1.msra.mxu0 0.0
      %2618 = vmatprep.subr.mxu0 0.0
      %2619 = vmatpush1.msra.mxu0 0.0
      %2620 = vmatprep.subr.mxu0 0.0
      %2621 = vmatpush1.msra.mxu0 0.0
      %2622 = vmatprep.subr.mxu0 0.0
      %2623 = vmatpush1.msra.mxu0 0.0
      %2624 = vmatprep.subr.mxu0 0.0
      %2625 = vmatpush1.msra.mxu0 0.0
      %2626 = vmatprep.subr.mxu0 0.0
      %2627 = vmatpush1.msra.mxu0 0.0
      %2628 = vmatprep.subr.mxu0 0.0
      %2629 = vmatpush1.msra.mxu0 0.0
      %2630 = vmatprep.subr.mxu0 0.0
      %2631 = vmatpush1.msra.mxu0 0.0
      %2632 = vmatprep.mubr.f32.mxu0 0.0
      %2633 = vmatmul.mubr.f32.gmra.mrb[0].mxu0 %v2350
      %v2634 = vpop.f32.mrb[0].mxu0
      %v2635 = vadd.f32 0.0, %v2634
      %v2636 = vpop.f32.mrb[0].mxu0
      %2637 = vmatprep.mubr.f32.mxu0 0.0
      %2638 = vmatmul.mubr.f32.gmra.mrb[0].mxu0 %v2353
      %v2639 = vpop.f32.mrb[0].mxu0
      %v2640 = vadd.f32 0.0, %v2639
      %v2641 = vpop.f32.mrb[0].mxu0
      %2642 = vmatprep.mubr.f32.mxu0 0.0
      %2643 = vmatmul.mubr.f32.gmra.mrb[0].mxu0 %v2356
      %v2644 = vpop.f32.mrb[0].mxu0
      %v2645 = vadd.f32 0.0, %v2644
      %v2646 = vpop.f32.mrb[0].mxu0
      %2647 = vmatprep.mubr.f32.mxu0 0.0
      %2648 = vmatmul.mubr.f32.gmra.mrb[0].mxu0 %v2359
      %v2649 = vpop.f32.mrb[0].mxu0
      %v2650 = vadd.f32 0.0, %v2649
      %v2651 = vpop.f32.mrb[0].mxu0
      %2652 = vmatprep.mubr.f32.mxu0 0.0
      %2653 = vmatmul.mubr.f32.gmra.mrb[0].mxu0 %v2362
      %v2654 = vpop.f32.mrb[0].mxu0
      %v2655 = vadd.f32 0.0, %v2654
      %v2656 = vpop.f32.mrb[0].mxu0
      %2657 = vmatprep.mubr.f32.mxu0 0.0
      %2658 = vmatmul.mubr.f32.gmra.mrb[0].mxu0 %v2365
      %v2659 = vpop.f32.mrb[0].mxu0
      %v2660 = vadd.f32 0.0, %v2659
      %v2661 = vpop.f32.mrb[0].mxu0
      %2662 = vmatprep.mubr.f32.mxu0 0.0
      %2663 = vmatmul.mubr.f32.gmra.mrb[0].mxu0 %v2368
      %v2664 = vpop.f32.mrb[0].mxu0
      %v2665 = vadd.f32 0.0, %v2664
      %v2666 = vpop.f32.mrb[0].mxu0
      %2667 = vmatprep.mubr.f32.mxu0 0.0
      %2668 = vmatmul.mubr.f32.gmra.mrb[0].mxu0 %v2371
      %v2669 = vpop.f32.mrb[0].mxu0
      %v2670 = vadd.f32 0.0, %v2669
      %v2671 = vpop.f32.mrb[0].mxu0
      %2672 = vmatprep.mubr.f32.mxu0 0.0
      %2673 = vmatmul.mubr.f32.gmra.mrb[0].mxu0 %v2374
      %v2674 = vpop.f32.mrb[0].mxu0
      %v2675 = vadd.f32 0.0, %v2674
      %v2676 = vpop.f32.mrb[0].mxu0
      %2677 = vmatprep.mubr.f32.mxu0 0.0
      %2678 = vmatmul.mubr.f32.gmra.mrb[0].mxu0 %v2377
      %v2679 = vpop.f32.mrb[0].mxu0
      %v2680 = vadd.f32 0.0, %v2679
      %v2681 = vpop.f32.mrb[0].mxu0
      %2682 = vmatprep.mubr.f32.mxu0 0.0
      %2683 = vmatmul.mubr.f32.gmra.mrb[0].mxu0 %v2380
      %v2684 = vpop.f32.mrb[0].mxu0
      %v2685 = vadd.f32 0.0, %v2684
      %v2686 = vpop.f32.mrb[0].mxu0
      %2687 = vmatprep.mubr.f32.mxu0 0.0
      %2688 = vmatmul.mubr.f32.gmra.mrb[0].mxu0 %v2383
      %v2689 = vpop.f32.mrb[0].mxu0
      %v2690 = vadd.f32 0.0, %v2689
      %v2691 = vpop.f32.mrb[0].mxu0
      %2692 = vmatprep.mubr.f32.mxu0 0.0
      %2693 = vmatmul.mubr.f32.gmra.mrb[0].mxu0 %v2386
      %v2694 = vpop.f32.mrb[0].mxu0
      %v2695 = vadd.f32 0.0, %v2694
      %v2696 = vpop.f32.mrb[0].mxu0
      %2697 = vmatprep.mubr.f32.mxu0 0.0
      %2698 = vmatmul.mubr.f32.gmra.mrb[0].mxu0 %v2389
      %v2699 = vpop.f32.mrb[0].mxu0
      %v2700 = vadd.f32 0.0, %v2699
      %v2701 = vpop.f32.mrb[0].mxu0
      %2702 = vmatprep.mubr.f32.mxu0 0.0
      %2703 = vmatmul.mubr.f32.gmra.mrb[0].mxu0 %v2392
      %v2704 = vpop.f32.mrb[0].mxu0
      %v2705 = vadd.f32 0.0, %v2704
      %v2706 = vpop.f32.mrb[0].mxu0
      %2707 = vmatprep.mubr.f32.mxu0 0.0
      %2708 = vmatmul.mubr.f32.gmra.mrb[0].mxu0 %v2395
      %v2709 = vpop.f32.mrb[0].mxu0
      %v2710 = vadd.f32 0.0, %v2709
      %v2711 = vpop.f32.mrb[0].mxu0
      %2712 = vmatprep.mubr.f32.mxu0 0.0
      %2713 = vmatmul.mubr.f32.gmra.mrb[0].mxu0 %v2398
      %v2714 = vpop.f32.mrb[0].mxu0
      %v2715 = vadd.f32 0.0, %v2714
      %v2716 = vpop.f32.mrb[0].mxu0
      %2717 = vmatprep.mubr.f32.mxu0 0.0
      %2718 = vmatmul.mubr.f32.gmra.mrb[0].mxu0 %v2401
      %v2719 = vpop.f32.mrb[0].mxu0
      %v2720 = vadd.f32 0.0, %v2719
      %v2721 = vpop.f32.mrb[0].mxu0
      %2722 = vmatprep.mubr.f32.mxu0 0.0
      %2723 = vmatmul.mubr.f32.gmra.mrb[0].mxu0 %v2404
      %v2724 = vpop.f32.mrb[0].mxu0
      %v2725 = vadd.f32 0.0, %v2724
      %v2726 = vpop.f32.mrb[0].mxu0
      %2727 = vmatprep.mubr.f32.mxu0 0.0
      %2728 = vmatmul.mubr.f32.gmra.mrb[0].mxu0 %v2407
      %v2729 = vpop.f32.mrb[0].mxu0
      %v2730 = vadd.f32 0.0, %v2729
      %v2731 = vpop.f32.mrb[0].mxu0
      %2732 = vmatprep.mubr.f32.mxu0 0.0
      %2733 = vmatmul.mubr.f32.gmra.mrb[0].mxu0 %v2410
      %v2734 = vpop.f32.mrb[0].mxu0
      %v2735 = vadd.f32 0.0, %v2734
      %v2736 = vpop.f32.mrb[0].mxu0
      %2737 = vmatprep.mubr.f32.mxu0 0.0
      %2738 = vmatmul.mubr.f32.gmra.mrb[0].mxu0 %v2413
      %v2739 = vpop.f32.mrb[0].mxu0
      %v2740 = vadd.f32 0.0, %v2739
      %v2741 = vpop.f32.mrb[0].mxu0
      %2742 = vmatprep.mubr.f32.mxu0 0.0
      %2743 = vmatmul.mubr.f32.gmra.mrb[0].mxu0 %v2416
      %v2744 = vpop.f32.mrb[0].mxu0
      %v2745 = vadd.f32 0.0, %v2744
      %v2746 = vpop.f32.mrb[0].mxu0
      %2747 = vmatprep.mubr.f32.mxu0 0.0
      %2748 = vmatmul.mubr.f32.gmra.mrb[0].mxu0 %v2419
      %v2749 = vpop.f32.mrb[0].mxu0
      %v2750 = vadd.f32 0.0, %v2749
      %v2751 = vpop.f32.mrb[0].mxu0
      %2752 = vmatprep.mubr.f32.mxu0 0.0
      %2753 = vmatmul.mubr.f32.gmra.mrb[0].mxu0 %v2422
      %v2754 = vpop.f32.mrb[0].mxu0
      %v2755 = vadd.f32 0.0, %v2754
      %v2756 = vpop.f32.mrb[0].mxu0
      %2757 = vmatprep.mubr.f32.mxu0 0.0
      %2758 = vmatmul.mubr.f32.gmra.mrb[0].mxu0 %v2425
      %v2759 = vpop.f32.mrb[0].mxu0
      %v2760 = vadd.f32 0.0, %v2759
      %v2761 = vpop.f32.mrb[0].mxu0
      %2762 = vmatprep.mubr.f32.mxu0 0.0
      %2763 = vmatmul.mubr.f32.gmra.mrb[0].mxu0 %v2428
      %v2764 = vpop.f32.mrb[0].mxu0
      %v2765 = vadd.f32 0.0, %v2764
      %v2766 = vpop.f32.mrb[0].mxu0
      %2767 = vmatprep.mubr.f32.mxu0 0.0
      %2768 = vmatmul.mubr.f32.gmra.mrb[0].mxu0 %v2431
      %v2769 = vpop.f32.mrb[0].mxu0
      %v2770 = vadd.f32 0.0, %v2769
      %v2771 = vpop.f32.mrb[0].mxu0
      %2772 = vmatprep.mubr.f32.mxu0 0.0
      %2773 = vmatmul.mubr.f32.gmra.mrb[0].mxu0 %v2434
      %v2774 = vpop.f32.mrb[0].mxu0
      %v2775 = vadd.f32 0.0, %v2774
      %v2776 = vpop.f32.mrb[0].mxu0
      %2777 = vmatprep.mubr.f32.mxu0 0.0
      %2778 = vmatmul.mubr.f32.gmra.mrb[0].mxu0 %v2437
      %v2779 = vpop.f32.mrb[0].mxu0
      %v2780 = vadd.f32 0.0, %v2779
      %v2781 = vpop.f32.mrb[0].mxu0
      %2782 = vmatprep.mubr.f32.mxu0 0.0
      %2783 = vmatmul.mubr.f32.gmra.mrb[0].mxu0 %v2440
      %v2784 = vpop.f32.mrb[0].mxu0
      %v2785 = vadd.f32 0.0, %v2784
      %v2786 = vpop.f32.mrb[0].mxu0
      %2787 = vmatprep.mubr.f32.mxu0 0.0
      %2788 = vmatmul.mubr.f32.gmra.mrb[0].mxu0 %v2443
      %v2789 = vpop.f32.mrb[0].mxu0
      %v2790 = vadd.f32 0.0, %v2789
      %v2791 = vpop.f32.mrb[0].mxu0
      %2792 = vmatprep.mubr.f32.mxu0 0.0
      %2793 = vmatmul.mubr.f32.gmra.mrb[0].mxu0 %v2446
      %v2794 = vpop.f32.mrb[0].mxu0
      %v2795 = vadd.f32 0.0, %v2794
      %v2796 = vpop.f32.mrb[0].mxu0
      %2797 = vmatprep.mubr.f32.mxu0 0.0
      %2798 = vmatmul.mubr.f32.gmra.mrb[0].mxu0 %v2449
      %v2799 = vpop.f32.mrb[0].mxu0
      %v2800 = vadd.f32 0.0, %v2799
      %v2801 = vpop.f32.mrb[0].mxu0
      %2802 = vmatprep.mubr.f32.mxu0 0.0
      %2803 = vmatmul.mubr.f32.gmra.mrb[0].mxu0 %v2452
      %v2804 = vpop.f32.mrb[0].mxu0
      %v2805 = vadd.f32 0.0, %v2804
      %v2806 = vpop.f32.mrb[0].mxu0
      %2807 = vmatprep.mubr.f32.mxu0 0.0
      %2808 = vmatmul.mubr.f32.gmra.mrb[0].mxu0 %v2455
      %v2809 = vpop.f32.mrb[0].mxu0
      %v2810 = vadd.f32 0.0, %v2809
      %v2811 = vpop.f32.mrb[0].mxu0
      %2812 = vmatprep.mubr.f32.mxu0 0.0
      %2813 = vmatmul.mubr.f32.gmra.mrb[0].mxu0 %v2458
      %v2814 = vpop.f32.mrb[0].mxu0
      %v2815 = vadd.f32 0.0, %v2814
      %v2816 = vpop.f32.mrb[0].mxu0
      %2817 = vmatprep.mubr.f32.mxu0 0.0
      %2818 = vmatmul.mubr.f32.gmra.mrb[0].mxu0 %v2461
      %v2819 = vpop.f32.mrb[0].mxu0
      %v2820 = vadd.f32 0.0, %v2819
      %v2821 = vpop.f32.mrb[0].mxu0
      %2822 = vmatprep.mubr.f32.mxu0 0.0
      %2823 = vmatmul.mubr.f32.gmra.mrb[0].mxu0 %v2464
      %v2824 = vpop.f32.mrb[0].mxu0
      %v2825 = vadd.f32 0.0, %v2824
      %v2826 = vpop.f32.mrb[0].mxu0
      %2827 = vmatprep.mubr.f32.mxu0 0.0
      %2828 = vmatmul.mubr.f32.gmra.mrb[0].mxu0 %v2467
      %v2829 = vpop.f32.mrb[0].mxu0
      %v2830 = vadd.f32 0.0, %v2829
      %v2831 = vpop.f32.mrb[0].mxu0
      %2832 = vmatprep.mubr.f32.mxu0 0.0
      %2833 = vmatmul.mubr.f32.gmra.mrb[0].mxu0 %v2470
      %v2834 = vpop.f32.mrb[0].mxu0
      %v2835 = vadd.f32 0.0, %v2834
      %v2836 = vpop.f32.mrb[0].mxu0
      %2837 = vmatprep.mubr.f32.mxu0 0.0
      %2838 = vmatmul.mubr.f32.gmra.mrb[0].mxu0 %v2473
      %v2839 = vpop.f32.mrb[0].mxu0
      %v2840 = vadd.f32 0.0, %v2839
      %v2841 = vpop.f32.mrb[0].mxu0
      %2842 = vmatprep.mubr.f32.mxu0 0.0
      %2843 = vmatmul.mubr.f32.gmra.mrb[0].mxu0 %v2476
      %v2844 = vpop.f32.mrb[0].mxu0
      %v2845 = vadd.f32 0.0, %v2844
      %v2846 = vpop.f32.mrb[0].mxu0
      %2847 = vmatprep.mubr.f32.mxu0 0.0
      %2848 = vmatmul.mubr.f32.gmra.mrb[0].mxu0 %v2479
      %v2849 = vpop.f32.mrb[0].mxu0
      %v2850 = vadd.f32 0.0, %v2849
      %v2851 = vpop.f32.mrb[0].mxu0
      %2852 = vmatprep.mubr.f32.mxu0 0.0
      %2853 = vmatmul.mubr.f32.gmra.mrb[0].mxu0 %v2482
      %v2854 = vpop.f32.mrb[0].mxu0
      %v2855 = vadd.f32 0.0, %v2854
      %v2856 = vpop.f32.mrb[0].mxu0
      %2857 = vmatprep.mubr.f32.mxu0 0.0
      %2858 = vmatmul.mubr.f32.gmra.mrb[0].mxu0 %v2485
      %v2859 = vpop.f32.mrb[0].mxu0
      %v2860 = vadd.f32 0.0, %v2859
      %v2861 = vpop.f32.mrb[0].mxu0
      %2862 = vmatprep.mubr.f32.mxu0 0.0
      %2863 = vmatmul.mubr.f32.gmra.mrb[0].mxu0 %v2488
      %v2864 = vpop.f32.mrb[0].mxu0
      %v2865 = vadd.f32 0.0, %v2864
      %v2866 = vpop.f32.mrb[0].mxu0
      %2867 = vmatprep.mubr.f32.mxu0 0.0
      %2868 = vmatmul.mubr.f32.gmra.mrb[0].mxu0 %v2491
      %v2869 = vpop.f32.mrb[0].mxu0
      %v2870 = vadd.f32 0.0, %v2869
      %v2871 = vpop.f32.mrb[0].mxu0
      %2872 = vmatprep.mubr.f32.mxu0 0.0
      %2873 = vmatmul.mubr.f32.gmra.mrb[0].mxu0 %v2494
      %v2874 = vpop.f32.mrb[0].mxu0
      %v2875 = vadd.f32 0.0, %v2874
      %v2876 = vpop.f32.mrb[0].mxu0
      %2877 = vmatprep.mubr.f32.mxu0 0.0
      %2878 = vmatmul.mubr.f32.gmra.mrb[0].mxu0 %v2497
      %v2879 = vpop.f32.mrb[0].mxu0
      %v2880 = vadd.f32 0.0, %v2879
      %v2881 = vpop.f32.mrb[0].mxu0
      %2882 = vmatprep.mubr.f32.mxu0 0.0
      %2883 = vmatmul.mubr.f32.gmra.mrb[0].mxu0 %v2500
      %v2884 = vpop.f32.mrb[0].mxu0
      %v2885 = vadd.f32 0.0, %v2884
      %v2886 = vpop.f32.mrb[0].mxu0
      %2887 = vmatprep.mubr.f32.mxu0 0.0
      %2888 = vmatmul.mubr.f32.gmra.mrb[0].mxu0 %v2503
      %v2889 = vpop.f32.mrb[0].mxu0
      %v2890 = vadd.f32 0.0, %v2889
      %v2891 = vpop.f32.mrb[0].mxu0
      %2892 = vmatprep.mubr.f32.mxu0 0.0
      %2893 = vmatmul.mubr.f32.gmra.mrb[0].mxu0 %v2506
      %v2894 = vpop.f32.mrb[0].mxu0
      %v2895 = vadd.f32 0.0, %v2894
      %v2896 = vpop.f32.mrb[0].mxu0
      %2897 = vmatprep.mubr.f32.mxu0 0.0
      %2898 = vmatmul.mubr.f32.gmra.mrb[0].mxu0 %v2509
      %v2899 = vpop.f32.mrb[0].mxu0
      %v2900 = vadd.f32 0.0, %v2899
      %v2901 = vpop.f32.mrb[0].mxu0
      %2902 = vmatprep.mubr.f32.mxu0 0.0
      %2903 = vmatmul.mubr.f32.gmra.mrb[0].mxu0 %v2512
      %v2904 = vpop.f32.mrb[0].mxu0
      %v2905 = vadd.f32 0.0, %v2904
      %v2906 = vpop.f32.mrb[0].mxu0
      %2907 = vmatprep.mubr.f32.mxu0 0.0
      %2908 = vmatmul.mubr.f32.gmra.mrb[0].mxu0 %v2515
      %v2909 = vpop.f32.mrb[0].mxu0
      %v2910 = vadd.f32 0.0, %v2909
      %v2911 = vpop.f32.mrb[0].mxu0
      %2912 = vmatprep.mubr.f32.mxu0 0.0
      %2913 = vmatmul.mubr.f32.gmra.mrb[0].mxu0 %v2518
      %v2914 = vpop.f32.mrb[0].mxu0
      %v2915 = vadd.f32 0.0, %v2914
      %v2916 = vpop.f32.mrb[0].mxu0
      %2917 = vmatprep.mubr.f32.mxu0 0.0
      %2918 = vmatmul.mubr.f32.gmra.mrb[0].mxu0 %v2521
      %v2919 = vpop.f32.mrb[0].mxu0
      %v2920 = vadd.f32 0.0, %v2919
      %v2921 = vpop.f32.mrb[0].mxu0
      %2922 = vmatprep.mubr.f32.mxu0 0.0
      %2923 = vmatmul.mubr.f32.gmra.mrb[0].mxu0 %v2524
      %v2924 = vpop.f32.mrb[0].mxu0
      %v2925 = vadd.f32 0.0, %v2924
      %v2926 = vpop.f32.mrb[0].mxu0
      %2927 = vmatprep.mubr.f32.mxu0 0.0
      %2928 = vmatmul.mubr.f32.gmra.mrb[0].mxu0 %v2527
      %v2929 = vpop.f32.mrb[0].mxu0
      %v2930 = vadd.f32 0.0, %v2929
      %v2931 = vpop.f32.mrb[0].mxu0
      %2932 = vmatprep.mubr.f32.mxu0 0.0
      %2933 = vmatmul.mubr.f32.gmra.mrb[0].mxu0 %v2530
      %v2934 = vpop.f32.mrb[0].mxu0
      %v2935 = vadd.f32 0.0, %v2934
      %v2936 = vpop.f32.mrb[0].mxu0
      %2937 = vmatprep.mubr.f32.mxu0 0.0
      %2938 = vmatmul.mubr.f32.gmra.mrb[0].mxu0 %v2533
      %v2939 = vpop.f32.mrb[0].mxu0
      %v2940 = vadd.f32 0.0, %v2939
      %v2941 = vpop.f32.mrb[0].mxu0
      %2942 = vmatprep.mubr.f32.mxu0 0.0
      %2943 = vmatmul.mubr.f32.gmra.mrb[0].mxu0 %v2536
      %v2944 = vpop.f32.mrb[0].mxu0
      %v2945 = vadd.f32 0.0, %v2944
      %v2946 = vpop.f32.mrb[0].mxu0
      %2947 = vmatprep.mubr.f32.mxu0 0.0
      %2948 = vmatmul.mubr.f32.gmra.mrb[0].mxu0 %v2539
      %v2949 = vpop.f32.mrb[0].mxu0
      %v2950 = vadd.f32 0.0, %v2949
      %v2951 = vpop.f32.mrb[0].mxu0
      %2952 = vmatprep.mubr.f32.mxu0 0.0
      %2953 = vmatmul.mubr.f32.gmra.mrb[0].mxu0 %v2542
      %v2954 = vpop.f32.mrb[0].mxu0
      %v2955 = vadd.f32 0.0, %v2954
      %v2956 = vpop.f32.mrb[0].mxu0
      %2957 = vmatprep.mubr.f32.mxu0 0.0
      %2958 = vmatmul.mubr.f32.gmra.mrb[0].mxu0 %v2545
      %v2959 = vpop.f32.mrb[0].mxu0
      %v2960 = vadd.f32 0.0, %v2959
      %v2961 = vpop.f32.mrb[0].mxu0
      %2962 = vmatprep.mubr.f32.mxu0 0.0
      %2963 = vmatmul.mubr.f32.gmra.mrb[0].mxu0 %v2548
      %v2964 = vpop.f32.mrb[0].mxu0
      %v2965 = vadd.f32 0.0, %v2964
      %v2966 = vpop.f32.mrb[0].mxu0
      %2967 = vmatprep.mubr.f32.mxu0 0.0
      %2968 = vmatmul.mubr.f32.gmra.mrb[0].mxu0 %v2551
      %v2969 = vpop.f32.mrb[0].mxu0
      %v2970 = vadd.f32 0.0, %v2969
      %v2971 = vpop.f32.mrb[0].mxu0
      %2972 = vmatprep.mubr.f32.mxu0 0.0
      %2973 = vmatmul.mubr.f32.gmra.mrb[0].mxu0 %v2554
      %v2974 = vpop.f32.mrb[0].mxu0
      %v2975 = vadd.f32 0.0, %v2974
      %v2976 = vpop.f32.mrb[0].mxu0
      %2977 = vmatprep.mubr.f32.mxu0 0.0
      %2978 = vmatmul.mubr.f32.gmra.mrb[0].mxu0 %v2557
      %v2979 = vpop.f32.mrb[0].mxu0
      %v2980 = vadd.f32 0.0, %v2979
      %v2981 = vpop.f32.mrb[0].mxu0
      %2982 = vmatprep.mubr.f32.mxu0 0.0
      %2983 = vmatmul.mubr.f32.gmra.mrb[0].mxu0 %v2560
      %v2984 = vpop.f32.mrb[0].mxu0
      %v2985 = vadd.f32 0.0, %v2984
      %v2986 = vpop.f32.mrb[0].mxu0
      %2987 = vmatprep.mubr.f32.mxu0 0.0
      %2988 = vmatmul.mubr.f32.gmra.mrb[0].mxu0 %v2563
      %v2989 = vpop.f32.mrb[0].mxu0
      %v2990 = vadd.f32 0.0, %v2989
      %v2991 = vpop.f32.mrb[0].mxu0
      %2992 = vdwg.mxu0
      %v2993 = vadd.f32 %v2191, %v2635
      %v2994 = vadd.f32 %v2192, %v2640
      %v2995 = vadd.f32 %v2193, %v2645
      %v2996 = vadd.f32 %v2194, %v2650
      %v2997 = vadd.f32 %v2195, %v2655
      %v2998 = vadd.f32 %v2196, %v2660
      %v2999 = vadd.f32 %v2197, %v2665
      %v3000 = vadd.f32 %v2198, %v2670
      %v3001 = vadd.f32 %v2199, %v2675
      %v3002 = vadd.f32 %v2200, %v2680
      %v3003 = vadd.f32 %v2201, %v2685
      %v3004 = vadd.f32 %v2202, %v2690
      %v3005 = vadd.f32 %v2203, %v2695
      %v3006 = vadd.f32 %v2204, %v2700
      %v3007 = vadd.f32 %v2205, %v2705
      %v3008 = vadd.f32 %v2206, %v2710
      %v3009 = vadd.f32 %v2207, %v2715
      %v3010 = vadd.f32 %v2208, %v2720
      %v3011 = vadd.f32 %v2209, %v2725
      %v3012 = vadd.f32 %v2210, %v2730
      %v3013 = vadd.f32 %v2211, %v2735
      %v3014 = vadd.f32 %v2212, %v2740
      %v3015 = vadd.f32 %v2213, %v2745
      %v3016 = vadd.f32 %v2214, %v2750
      %v3017 = vadd.f32 %v2215, %v2755
      %v3018 = vadd.f32 %v2216, %v2760
      %v3019 = vadd.f32 %v2217, %v2765
      %v3020 = vadd.f32 %v2218, %v2770
      %v3021 = vadd.f32 %v2219, %v2775
      %v3022 = vadd.f32 %v2220, %v2780
      %v3023 = vadd.f32 %v2221, %v2785
      %v3024 = vadd.f32 %v2222, %v2790
      %v3025 = vadd.f32 %v2223, %v2795
      %v3026 = vadd.f32 %v2224, %v2800
      %v3027 = vadd.f32 %v2225, %v2805
      %v3028 = vadd.f32 %v2226, %v2810
      %v3029 = vadd.f32 %v2227, %v2815
      %v3030 = vadd.f32 %v2228, %v2820
      %v3031 = vadd.f32 %v2229, %v2825
      %v3032 = vadd.f32 %v2230, %v2830
      %v3033 = vadd.f32 %v2231, %v2835
      %v3034 = vadd.f32 %v2232, %v2840
      %v3035 = vadd.f32 %v2233, %v2845
      %v3036 = vadd.f32 %v2234, %v2850
      %v3037 = vadd.f32 %v2235, %v2855
      %v3038 = vadd.f32 %v2236, %v2860
      %v3039 = vadd.f32 %v2237, %v2865
      %v3040 = vadd.f32 %v2238, %v2870
      %v3041 = vadd.f32 %v2239, %v2875
      %v3042 = vadd.f32 %v2240, %v2880
      %v3043 = vadd.f32 %v2241, %v2885
      %v3044 = vadd.f32 %v2242, %v2890
      %v3045 = vadd.f32 %v2243, %v2895
      %v3046 = vadd.f32 %v2244, %v2900
      %v3047 = vadd.f32 %v2245, %v2905
      %v3048 = vadd.f32 %v2246, %v2910
      %v3049 = vadd.f32 %v2247, %v2915
      %v3050 = vadd.f32 %v2248, %v2920
      %v3051 = vadd.f32 %v2249, %v2925
      %v3052 = vadd.f32 %v2250, %v2930
      %v3053 = vadd.f32 %v2251, %v2935
      %v3054 = vadd.f32 %v2252, %v2940
      %v3055 = vadd.f32 %v2253, %v2945
      %v3056 = vadd.f32 %v2254, %v2950
      %v3057 = vadd.f32 %v2255, %v2955
      %v3058 = vadd.f32 %v2256, %v2960
      %v3059 = vadd.f32 %v2257, %v2965
      %v3060 = vadd.f32 %v2258, %v2970
      %v3061 = vadd.f32 %v2259, %v2975
      %v3062 = vadd.f32 %v2260, %v2980
      %v3063 = vadd.f32 %v2261, %v2985
      %v3064 = vadd.f32 %v2262, %v2990
      %v3065 = vld [vmem:[%s246 + $0x120] sm:$0xff]
      %v3066 = vld [vmem:[%s246 + $0x128] sm:$0xff]
      %v3067 = vld [vmem:[%s246 + $0x130] sm:$0xff]
      %v3068 = vld [vmem:[%s246 + $0x138] sm:$0xff]
      %v3069 = vld [vmem:[%s246 + $0x140] sm:$0xff]
      %v3070 = vld [vmem:[%s246 + $0x148] sm:$0xff]
      %v3071 = vld [vmem:[%s246 + $0x150] sm:$0xff]
      %v3072 = vld [vmem:[%s246 + $0x158] sm:$0xff]
      %v3073 = vld [vmem:[%s246 + $0x160] sm:$0xff]
      %v3074 = vld [vmem:[%s246 + $0x168] sm:$0xff]
      %v3075 = vld [vmem:[%s246 + $0x170] sm:$0xff]
      %v3076 = vld [vmem:[%s246 + $0x178] sm:$0xff]
      %v3077 = vld [vmem:[%s246 + $0x180] sm:$0xff]
      %v3078 = vld [vmem:[%s246 + $0x188] sm:$0xff]
      %v3079 = vld [vmem:[%s246 + $0x190] sm:$0xff]
      %v3080 = vld [vmem:[%s246 + $0x198] sm:$0xff]
      %v3081 = vld [vmem:[%s246 + $0x1a0] sm:$0xff]
      %v3082 = vld [vmem:[%s246 + $0x1a8] sm:$0xff]
      %v3083 = vld [vmem:[%s246 + $0x1b0] sm:$0xff]
      %v3084 = vld [vmem:[%s246 + $0x1b8] sm:$0xff]
      %v3085 = vld [vmem:[%s246 + $0x1c0] sm:$0xff]
      %v3086 = vld [vmem:[%s246 + $0x1c8] sm:$0xff]
      %v3087 = vld [vmem:[%s246 + $0x1d0] sm:$0xff]
      %v3088 = vld [vmem:[%s246 + $0x1d8] sm:$0xff]
      %v3089 = vld [vmem:[%s246 + $0x1e0] sm:$0xff]
      %v3090 = vld [vmem:[%s246 + $0x1e8] sm:$0xff]
      %v3091 = vld [vmem:[%s246 + $0x1f0] sm:$0xff]
      %v3092 = vld [vmem:[%s246 + $0x1f8] sm:$0xff]
      %v3093 = vld [vmem:[%s246 + $0x200] sm:$0xff]
      %v3094 = vld [vmem:[%s246 + $0x208] sm:$0xff]
      %v3095 = vld [vmem:[%s246 + $0x210] sm:$0xff]
      %v3096 = vld [vmem:[%s246 + $0x218] sm:$0xff]
      %v3097 = vld [vmem:[%s246 + $0x220] sm:$0xff]
      %v3098 = vld [vmem:[%s246 + $0x228] sm:$0xff]
      %v3099 = vld [vmem:[%s246 + $0x230] sm:$0xff]
      %v3100 = vld [vmem:[%s246 + $0x238] sm:$0xff]
      %v3101 = vld [vmem:[%s246 + $0x240] sm:$0xff]
      %v3102 = vld [vmem:[%s246 + $0x248] sm:$0xff]
      %v3103 = vld [vmem:[%s246 + $0x250] sm:$0xff]
      %v3104 = vld [vmem:[%s246 + $0x258] sm:$0xff]
      %v3105 = vld [vmem:[%s246 + $0x260] sm:$0xff]
      %v3106 = vld [vmem:[%s246 + $0x268] sm:$0xff]
      %v3107 = vld [vmem:[%s246 + $0x270] sm:$0xff]
      %v3108 = vld [vmem:[%s246 + $0x278] sm:$0xff]
      %v3109 = vld [vmem:[%s246 + $0x280] sm:$0xff]
      %v3110 = vld [vmem:[%s246 + $0x288] sm:$0xff]
      %v3111 = vld [vmem:[%s246 + $0x290] sm:$0xff]
      %v3112 = vld [vmem:[%s246 + $0x298] sm:$0xff]
      %v3113 = vld [vmem:[%s246 + $0x2a0] sm:$0xff]
      %v3114 = vld [vmem:[%s246 + $0x2a8] sm:$0xff]
      %v3115 = vld [vmem:[%s246 + $0x2b0] sm:$0xff]
      %v3116 = vld [vmem:[%s246 + $0x2b8] sm:$0xff]
      %v3117 = vld [vmem:[%s246 + $0x2c0] sm:$0xff]
      %v3118 = vld [vmem:[%s246 + $0x2c8] sm:$0xff]
      %v3119 = vld [vmem:[%s246 + $0x2d0] sm:$0xff]
      %v3120 = vld [vmem:[%s246 + $0x2d8] sm:$0xff]
      %v3121 = vld [vmem:[%s246 + $0x2e0] sm:$0xff]
      %v3122 = vld [vmem:[%s246 + $0x2e8] sm:$0xff]
      %v3123 = vld [vmem:[%s246 + $0x2f0] sm:$0xff]
      %v3124 = vld [vmem:[%s246 + $0x2f8] sm:$0xff]
      %v3125 = vld [vmem:[%s246 + $0x300] sm:$0xff]
      %v3126 = vld [vmem:[%s246 + $0x308] sm:$0xff]
      %v3127 = vld [vmem:[%s246 + $0x310] sm:$0xff]
      %v3128 = vld [vmem:[%s246 + $0x318] sm:$0xff]
      %v3129 = vld [vmem:[%s246 + $0x320] sm:$0xff]
      %v3130 = vld [vmem:[%s246 + $0x328] sm:$0xff]
      %v3131 = vld [vmem:[%s246 + $0x330] sm:$0xff]
      %v3132 = vld [vmem:[%s246 + $0x338] sm:$0xff]
      %v3133 = vld [vmem:[%s246 + $0x340] sm:$0xff]
      %v3134 = vld [vmem:[%s246 + $0x348] sm:$0xff]
      %v3135 = vld [vmem:[%s246 + $0x350] sm:$0xff]
      %v3136 = vld [vmem:[%s246 + $0x358] sm:$0xff]
      %s3137 = scalar_lea.vmem %s1, 416
      %v3138 = vld [vmem:[%s3137] sm:$0xff]
      %v3139 = vld [vmem:[%s3137 + $0x8] sm:$0xff]
      %v3140 = vld [vmem:[%s3137 + $0x10] sm:$0xff]
      %v3141 = vld [vmem:[%s3137 + $0x18] sm:$0xff]
      %v3142 = vld [vmem:[%s3137 + $0x20] sm:$0xff]
      %v3143 = vld [vmem:[%s3137 + $0x28] sm:$0xff]
      %v3144 = vld [vmem:[%s3137 + $0x30] sm:$0xff]
      %v3145 = vld [vmem:[%s3137 + $0x38] sm:$0xff]
      %v3146 = vld [vmem:[%s3137 + $0x40] sm:$0xff]
      %v3147 = vld [vmem:[%s3137 + $0x48] sm:$0xff]
      %v3148 = vld [vmem:[%s3137 + $0x50] sm:$0xff]
      %v3149 = vld [vmem:[%s3137 + $0x58] sm:$0xff]
      %v3150 = vld [vmem:[%s3137 + $0x60] sm:$0xf]
      %v3152 = vsel %vm360, %v3065, 0
      %v3155 = vsel %vm360, %v3066, 0
      %v3158 = vsel %vm360, %v3067, 0
      %v3161 = vsel %vm360, %v3068, 0
      %v3164 = vsel %vm360, %v3069, 0
      %v3167 = vsel %vm360, %v3070, 0
      %v3170 = vsel %vm360, %v3071, 0
      %v3173 = vsel %vm360, %v3072, 0
      %v3176 = vsel %vm360, %v3073, 0
      %v3179 = vsel %vm360, %v3074, 0
      %v3182 = vsel %vm360, %v3075, 0
      %v3185 = vsel %vm360, %v3076, 0
      %v3188 = vsel %vm360, %v3077, 0
      %v3191 = vsel %vm360, %v3078, 0
      %v3194 = vsel %vm360, %v3079, 0
      %v3197 = vsel %vm360, %v3080, 0
      %v3200 = vsel %vm360, %v3081, 0
      %v3203 = vsel %vm360, %v3082, 0
      %v3206 = vsel %vm360, %v3083, 0
      %v3209 = vsel %vm360, %v3084, 0
      %v3212 = vsel %vm360, %v3085, 0
      %v3215 = vsel %vm360, %v3086, 0
      %v3218 = vsel %vm360, %v3087, 0
      %v3221 = vsel %vm360, %v3088, 0
      %v3224 = vsel %vm360, %v3089, 0
      %v3227 = vsel %vm360, %v3090, 0
      %v3230 = vsel %vm360, %v3091, 0
      %v3233 = vsel %vm360, %v3092, 0
      %v3236 = vsel %vm360, %v3093, 0
      %v3239 = vsel %vm360, %v3094, 0
      %v3242 = vsel %vm360, %v3095, 0
      %v3245 = vsel %vm360, %v3096, 0
      %v3248 = vsel %vm360, %v3097, 0
      %v3251 = vsel %vm360, %v3098, 0
      %v3254 = vsel %vm360, %v3099, 0
      %v3257 = vsel %vm360, %v3100, 0
      %v3260 = vsel %vm360, %v3101, 0
      %v3263 = vsel %vm360, %v3102, 0
      %v3266 = vsel %vm360, %v3103, 0
      %v3269 = vsel %vm360, %v3104, 0
      %v3272 = vsel %vm360, %v3105, 0
      %v3275 = vsel %vm360, %v3106, 0
      %v3278 = vsel %vm360, %v3107, 0
      %v3281 = vsel %vm360, %v3108, 0
      %v3284 = vsel %vm360, %v3109, 0
      %v3287 = vsel %vm360, %v3110, 0
      %v3290 = vsel %vm360, %v3111, 0
      %v3293 = vsel %vm360, %v3112, 0
      %v3296 = vsel %vm360, %v3113, 0
      %v3299 = vsel %vm360, %v3114, 0
      %v3302 = vsel %vm360, %v3115, 0
      %v3305 = vsel %vm360, %v3116, 0
      %v3308 = vsel %vm360, %v3117, 0
      %v3311 = vsel %vm360, %v3118, 0
      %v3314 = vsel %vm360, %v3119, 0
      %v3317 = vsel %vm360, %v3120, 0
      %v3320 = vsel %vm360, %v3121, 0
      %v3323 = vsel %vm360, %v3122, 0
      %v3326 = vsel %vm360, %v3123, 0
      %v3329 = vsel %vm360, %v3124, 0
      %v3332 = vsel %vm360, %v3125, 0
      %v3335 = vsel %vm360, %v3126, 0
      %v3338 = vsel %vm360, %v3127, 0
      %v3341 = vsel %vm360, %v3128, 0
      %v3344 = vsel %vm360, %v3129, 0
      %v3347 = vsel %vm360, %v3130, 0
      %v3350 = vsel %vm360, %v3131, 0
      %v3353 = vsel %vm360, %v3132, 0
      %v3356 = vsel %vm360, %v3133, 0
      %v3359 = vsel %vm360, %v3134, 0
      %v3362 = vsel %vm360, %v3135, 0
      %v3365 = vsel %vm360, %v3136, 0
      %v3368 = vsel %vm577, %v3150, 0
      %3370 = vmatprep.subr.mxu0 0.0
      %3371 = vmatpush1.msra.mxu0 %v3138
      %3372 = vmatprep.subr.mxu0 0.0
      %3373 = vmatpush1.msra.mxu0 %v3139
      %3374 = vmatprep.subr.mxu0 0.0
      %3375 = vmatpush1.msra.mxu0 %v3140
      %3376 = vmatprep.subr.mxu0 0.0
      %3377 = vmatpush1.msra.mxu0 %v3141
      %3378 = vmatprep.subr.mxu0 0.0
      %3379 = vmatpush1.msra.mxu0 %v3142
      %3380 = vmatprep.subr.mxu0 0.0
      %3381 = vmatpush1.msra.mxu0 %v3143
      %3382 = vmatprep.subr.mxu0 0.0
      %3383 = vmatpush1.msra.mxu0 %v3144
      %3384 = vmatprep.subr.mxu0 0.0
      %3385 = vmatpush1.msra.mxu0 %v3145
      %3386 = vmatprep.subr.mxu0 0.0
      %3387 = vmatpush1.msra.mxu0 %v3146
      %3388 = vmatprep.subr.mxu0 0.0
      %3389 = vmatpush1.msra.mxu0 %v3147
      %3390 = vmatprep.subr.mxu0 0.0
      %3391 = vmatpush1.msra.mxu0 %v3148
      %3392 = vmatprep.subr.mxu0 0.0
      %3393 = vmatpush1.msra.mxu0 %v3149
      %3394 = vmatprep.subr.mxu0 0.0
      %3395 = vmatpush1.msra.mxu0 %v3368
      %3396 = vmatprep.subr.mxu0 0.0
      %3397 = vmatpush1.msra.mxu0 0.0
      %3398 = vmatprep.subr.mxu0 0.0
      %3399 = vmatpush1.msra.mxu0 0.0
      %3400 = vmatprep.subr.mxu0 0.0
      %3401 = vmatpush1.msra.mxu0 0.0
      %3402 = vmatprep.subr.mxu0 0.0
      %3403 = vmatpush1.msra.mxu0 0.0
      %3404 = vmatprep.subr.mxu0 0.0
      %3405 = vmatpush1.msra.mxu0 0.0
      %3406 = vmatprep.subr.mxu0 0.0
      %3407 = vmatpush1.msra.mxu0 0.0
      %3408 = vmatprep.subr.mxu0 0.0
      %3409 = vmatpush1.msra.mxu0 0.0
      %3410 = vmatprep.subr.mxu0 0.0
      %3411 = vmatpush1.msra.mxu0 0.0
      %3412 = vmatprep.subr.mxu0 0.0
      %3413 = vmatpush1.msra.mxu0 0.0
      %3414 = vmatprep.subr.mxu0 0.0
      %3415 = vmatpush1.msra.mxu0 0.0
      %3416 = vmatprep.subr.mxu0 0.0
      %3417 = vmatpush1.msra.mxu0 0.0
      %3418 = vmatprep.subr.mxu0 0.0
      %3419 = vmatpush1.msra.mxu0 0.0
      %3420 = vmatprep.subr.mxu0 0.0
      %3421 = vmatpush1.msra.mxu0 0.0
      %3422 = vmatprep.subr.mxu0 0.0
      %3423 = vmatpush1.msra.mxu0 0.0
      %3424 = vmatprep.subr.mxu0 0.0
      %3425 = vmatpush1.msra.mxu0 0.0
      %3426 = vmatprep.subr.mxu0 0.0
      %3427 = vmatpush1.msra.mxu0 0.0
      %3428 = vmatprep.subr.mxu0 0.0
      %3429 = vmatpush1.msra.mxu0 0.0
      %3430 = vmatprep.subr.mxu0 0.0
      %3431 = vmatpush1.msra.mxu0 0.0
      %3432 = vmatprep.subr.mxu0 0.0
      %3433 = vmatpush1.msra.mxu0 0.0
      %3434 = vmatprep.mubr.f32.mxu0 0.0
      %3435 = vmatmul.mubr.f32.gmra.mrb[0].mxu0 %v3152
      %v3436 = vpop.f32.mrb[0].mxu0
      %v3437 = vadd.f32 0.0, %v3436
      %v3438 = vpop.f32.mrb[0].mxu0
      %3439 = vmatprep.mubr.f32.mxu0 0.0
      %3440 = vmatmul.mubr.f32.gmra.mrb[0].mxu0 %v3155
      %v3441 = vpop.f32.mrb[0].mxu0
      %v3442 = vadd.f32 0.0, %v3441
      %v3443 = vpop.f32.mrb[0].mxu0
      %3444 = vmatprep.mubr.f32.mxu0 0.0
      %3445 = vmatmul.mubr.f32.gmra.mrb[0].mxu0 %v3158
      %v3446 = vpop.f32.mrb[0].mxu0
      %v3447 = vadd.f32 0.0, %v3446
      %v3448 = vpop.f32.mrb[0].mxu0
      %3449 = vmatprep.mubr.f32.mxu0 0.0
      %3450 = vmatmul.mubr.f32.gmra.mrb[0].mxu0 %v3161
      %v3451 = vpop.f32.mrb[0].mxu0
      %v3452 = vadd.f32 0.0, %v3451
      %v3453 = vpop.f32.mrb[0].mxu0
      %3454 = vmatprep.mubr.f32.mxu0 0.0
      %3455 = vmatmul.mubr.f32.gmra.mrb[0].mxu0 %v3164
      %v3456 = vpop.f32.mrb[0].mxu0
      %v3457 = vadd.f32 0.0, %v3456
      %v3458 = vpop.f32.mrb[0].mxu0
      %3459 = vmatprep.mubr.f32.mxu0 0.0
      %3460 = vmatmul.mubr.f32.gmra.mrb[0].mxu0 %v3167
      %v3461 = vpop.f32.mrb[0].mxu0
      %v3462 = vadd.f32 0.0, %v3461
      %v3463 = vpop.f32.mrb[0].mxu0
      %3464 = vmatprep.mubr.f32.mxu0 0.0
      %3465 = vmatmul.mubr.f32.gmra.mrb[0].mxu0 %v3170
      %v3466 = vpop.f32.mrb[0].mxu0
      %v3467 = vadd.f32 0.0, %v3466
      %v3468 = vpop.f32.mrb[0].mxu0
      %3469 = vmatprep.mubr.f32.mxu0 0.0
      %3470 = vmatmul.mubr.f32.gmra.mrb[0].mxu0 %v3173
      %v3471 = vpop.f32.mrb[0].mxu0
      %v3472 = vadd.f32 0.0, %v3471
      %v3473 = vpop.f32.mrb[0].mxu0
      %3474 = vmatprep.mubr.f32.mxu0 0.0
      %3475 = vmatmul.mubr.f32.gmra.mrb[0].mxu0 %v3176
      %v3476 = vpop.f32.mrb[0].mxu0
      %v3477 = vadd.f32 0.0, %v3476
      %v3478 = vpop.f32.mrb[0].mxu0
      %3479 = vmatprep.mubr.f32.mxu0 0.0
      %3480 = vmatmul.mubr.f32.gmra.mrb[0].mxu0 %v3179
      %v3481 = vpop.f32.mrb[0].mxu0
      %v3482 = vadd.f32 0.0, %v3481
      %v3483 = vpop.f32.mrb[0].mxu0
      %3484 = vmatprep.mubr.f32.mxu0 0.0
      %3485 = vmatmul.mubr.f32.gmra.mrb[0].mxu0 %v3182
      %v3486 = vpop.f32.mrb[0].mxu0
      %v3487 = vadd.f32 0.0, %v3486
      %v3488 = vpop.f32.mrb[0].mxu0
      %3489 = vmatprep.mubr.f32.mxu0 0.0
      %3490 = vmatmul.mubr.f32.gmra.mrb[0].mxu0 %v3185
      %v3491 = vpop.f32.mrb[0].mxu0
      %v3492 = vadd.f32 0.0, %v3491
      %v3493 = vpop.f32.mrb[0].mxu0
      %3494 = vmatprep.mubr.f32.mxu0 0.0
      %3495 = vmatmul.mubr.f32.gmra.mrb[0].mxu0 %v3188
      %v3496 = vpop.f32.mrb[0].mxu0
      %v3497 = vadd.f32 0.0, %v3496
      %v3498 = vpop.f32.mrb[0].mxu0
      %3499 = vmatprep.mubr.f32.mxu0 0.0
      %3500 = vmatmul.mubr.f32.gmra.mrb[0].mxu0 %v3191
      %v3501 = vpop.f32.mrb[0].mxu0
      %v3502 = vadd.f32 0.0, %v3501
      %v3503 = vpop.f32.mrb[0].mxu0
      %3504 = vmatprep.mubr.f32.mxu0 0.0
      %3505 = vmatmul.mubr.f32.gmra.mrb[0].mxu0 %v3194
      %v3506 = vpop.f32.mrb[0].mxu0
      %v3507 = vadd.f32 0.0, %v3506
      %v3508 = vpop.f32.mrb[0].mxu0
      %3509 = vmatprep.mubr.f32.mxu0 0.0
      %3510 = vmatmul.mubr.f32.gmra.mrb[0].mxu0 %v3197
      %v3511 = vpop.f32.mrb[0].mxu0
      %v3512 = vadd.f32 0.0, %v3511
      %v3513 = vpop.f32.mrb[0].mxu0
      %3514 = vmatprep.mubr.f32.mxu0 0.0
      %3515 = vmatmul.mubr.f32.gmra.mrb[0].mxu0 %v3200
      %v3516 = vpop.f32.mrb[0].mxu0
      %v3517 = vadd.f32 0.0, %v3516
      %v3518 = vpop.f32.mrb[0].mxu0
      %3519 = vmatprep.mubr.f32.mxu0 0.0
      %3520 = vmatmul.mubr.f32.gmra.mrb[0].mxu0 %v3203
      %v3521 = vpop.f32.mrb[0].mxu0
      %v3522 = vadd.f32 0.0, %v3521
      %v3523 = vpop.f32.mrb[0].mxu0
      %3524 = vmatprep.mubr.f32.mxu0 0.0
      %3525 = vmatmul.mubr.f32.gmra.mrb[0].mxu0 %v3206
      %v3526 = vpop.f32.mrb[0].mxu0
      %v3527 = vadd.f32 0.0, %v3526
      %v3528 = vpop.f32.mrb[0].mxu0
      %3529 = vmatprep.mubr.f32.mxu0 0.0
      %3530 = vmatmul.mubr.f32.gmra.mrb[0].mxu0 %v3209
      %v3531 = vpop.f32.mrb[0].mxu0
      %v3532 = vadd.f32 0.0, %v3531
      %v3533 = vpop.f32.mrb[0].mxu0
      %3534 = vmatprep.mubr.f32.mxu0 0.0
      %3535 = vmatmul.mubr.f32.gmra.mrb[0].mxu0 %v3212
      %v3536 = vpop.f32.mrb[0].mxu0
      %v3537 = vadd.f32 0.0, %v3536
      %v3538 = vpop.f32.mrb[0].mxu0
      %3539 = vmatprep.mubr.f32.mxu0 0.0
      %3540 = vmatmul.mubr.f32.gmra.mrb[0].mxu0 %v3215
      %v3541 = vpop.f32.mrb[0].mxu0
      %v3542 = vadd.f32 0.0, %v3541
      %v3543 = vpop.f32.mrb[0].mxu0
      %3544 = vmatprep.mubr.f32.mxu0 0.0
      %3545 = vmatmul.mubr.f32.gmra.mrb[0].mxu0 %v3218
      %v3546 = vpop.f32.mrb[0].mxu0
      %v3547 = vadd.f32 0.0, %v3546
      %v3548 = vpop.f32.mrb[0].mxu0
      %3549 = vmatprep.mubr.f32.mxu0 0.0
      %3550 = vmatmul.mubr.f32.gmra.mrb[0].mxu0 %v3221
      %v3551 = vpop.f32.mrb[0].mxu0
      %v3552 = vadd.f32 0.0, %v3551
      %v3553 = vpop.f32.mrb[0].mxu0
      %3554 = vmatprep.mubr.f32.mxu0 0.0
      %3555 = vmatmul.mubr.f32.gmra.mrb[0].mxu0 %v3224
      %v3556 = vpop.f32.mrb[0].mxu0
      %v3557 = vadd.f32 0.0, %v3556
      %v3558 = vpop.f32.mrb[0].mxu0
      %3559 = vmatprep.mubr.f32.mxu0 0.0
      %3560 = vmatmul.mubr.f32.gmra.mrb[0].mxu0 %v3227
      %v3561 = vpop.f32.mrb[0].mxu0
      %v3562 = vadd.f32 0.0, %v3561
      %v3563 = vpop.f32.mrb[0].mxu0
      %3564 = vmatprep.mubr.f32.mxu0 0.0
      %3565 = vmatmul.mubr.f32.gmra.mrb[0].mxu0 %v3230
      %v3566 = vpop.f32.mrb[0].mxu0
      %v3567 = vadd.f32 0.0, %v3566
      %v3568 = vpop.f32.mrb[0].mxu0
      %3569 = vmatprep.mubr.f32.mxu0 0.0
      %3570 = vmatmul.mubr.f32.gmra.mrb[0].mxu0 %v3233
      %v3571 = vpop.f32.mrb[0].mxu0
      %v3572 = vadd.f32 0.0, %v3571
      %v3573 = vpop.f32.mrb[0].mxu0
      %3574 = vmatprep.mubr.f32.mxu0 0.0
      %3575 = vmatmul.mubr.f32.gmra.mrb[0].mxu0 %v3236
      %v3576 = vpop.f32.mrb[0].mxu0
      %v3577 = vadd.f32 0.0, %v3576
      %v3578 = vpop.f32.mrb[0].mxu0
      %3579 = vmatprep.mubr.f32.mxu0 0.0
      %3580 = vmatmul.mubr.f32.gmra.mrb[0].mxu0 %v3239
      %v3581 = vpop.f32.mrb[0].mxu0
      %v3582 = vadd.f32 0.0, %v3581
      %v3583 = vpop.f32.mrb[0].mxu0
      %3584 = vmatprep.mubr.f32.mxu0 0.0
      %3585 = vmatmul.mubr.f32.gmra.mrb[0].mxu0 %v3242
      %v3586 = vpop.f32.mrb[0].mxu0
      %v3587 = vadd.f32 0.0, %v3586
      %v3588 = vpop.f32.mrb[0].mxu0
      %3589 = vmatprep.mubr.f32.mxu0 0.0
      %3590 = vmatmul.mubr.f32.gmra.mrb[0].mxu0 %v3245
      %v3591 = vpop.f32.mrb[0].mxu0
      %v3592 = vadd.f32 0.0, %v3591
      %v3593 = vpop.f32.mrb[0].mxu0
      %3594 = vmatprep.mubr.f32.mxu0 0.0
      %3595 = vmatmul.mubr.f32.gmra.mrb[0].mxu0 %v3248
      %v3596 = vpop.f32.mrb[0].mxu0
      %v3597 = vadd.f32 0.0, %v3596
      %v3598 = vpop.f32.mrb[0].mxu0
      %3599 = vmatprep.mubr.f32.mxu0 0.0
      %3600 = vmatmul.mubr.f32.gmra.mrb[0].mxu0 %v3251
      %v3601 = vpop.f32.mrb[0].mxu0
      %v3602 = vadd.f32 0.0, %v3601
      %v3603 = vpop.f32.mrb[0].mxu0
      %3604 = vmatprep.mubr.f32.mxu0 0.0
      %3605 = vmatmul.mubr.f32.gmra.mrb[0].mxu0 %v3254
      %v3606 = vpop.f32.mrb[0].mxu0
      %v3607 = vadd.f32 0.0, %v3606
      %v3608 = vpop.f32.mrb[0].mxu0
      %3609 = vmatprep.mubr.f32.mxu0 0.0
      %3610 = vmatmul.mubr.f32.gmra.mrb[0].mxu0 %v3257
      %v3611 = vpop.f32.mrb[0].mxu0
      %v3612 = vadd.f32 0.0, %v3611
      %v3613 = vpop.f32.mrb[0].mxu0
      %3614 = vmatprep.mubr.f32.mxu0 0.0
      %3615 = vmatmul.mubr.f32.gmra.mrb[0].mxu0 %v3260
      %v3616 = vpop.f32.mrb[0].mxu0
      %v3617 = vadd.f32 0.0, %v3616
      %v3618 = vpop.f32.mrb[0].mxu0
      %3619 = vmatprep.mubr.f32.mxu0 0.0
      %3620 = vmatmul.mubr.f32.gmra.mrb[0].mxu0 %v3263
      %v3621 = vpop.f32.mrb[0].mxu0
      %v3622 = vadd.f32 0.0, %v3621
      %v3623 = vpop.f32.mrb[0].mxu0
      %3624 = vmatprep.mubr.f32.mxu0 0.0
      %3625 = vmatmul.mubr.f32.gmra.mrb[0].mxu0 %v3266
      %v3626 = vpop.f32.mrb[0].mxu0
      %v3627 = vadd.f32 0.0, %v3626
      %v3628 = vpop.f32.mrb[0].mxu0
      %3629 = vmatprep.mubr.f32.mxu0 0.0
      %3630 = vmatmul.mubr.f32.gmra.mrb[0].mxu0 %v3269
      %v3631 = vpop.f32.mrb[0].mxu0
      %v3632 = vadd.f32 0.0, %v3631
      %v3633 = vpop.f32.mrb[0].mxu0
      %3634 = vmatprep.mubr.f32.mxu0 0.0
      %3635 = vmatmul.mubr.f32.gmra.mrb[0].mxu0 %v3272
      %v3636 = vpop.f32.mrb[0].mxu0
      %v3637 = vadd.f32 0.0, %v3636
      %v3638 = vpop.f32.mrb[0].mxu0
      %3639 = vmatprep.mubr.f32.mxu0 0.0
      %3640 = vmatmul.mubr.f32.gmra.mrb[0].mxu0 %v3275
      %v3641 = vpop.f32.mrb[0].mxu0
      %v3642 = vadd.f32 0.0, %v3641
      %v3643 = vpop.f32.mrb[0].mxu0
      %3644 = vmatprep.mubr.f32.mxu0 0.0
      %3645 = vmatmul.mubr.f32.gmra.mrb[0].mxu0 %v3278
      %v3646 = vpop.f32.mrb[0].mxu0
      %v3647 = vadd.f32 0.0, %v3646
      %v3648 = vpop.f32.mrb[0].mxu0
      %3649 = vmatprep.mubr.f32.mxu0 0.0
      %3650 = vmatmul.mubr.f32.gmra.mrb[0].mxu0 %v3281
      %v3651 = vpop.f32.mrb[0].mxu0
      %v3652 = vadd.f32 0.0, %v3651
      %v3653 = vpop.f32.mrb[0].mxu0
      %3654 = vmatprep.mubr.f32.mxu0 0.0
      %3655 = vmatmul.mubr.f32.gmra.mrb[0].mxu0 %v3284
      %v3656 = vpop.f32.mrb[0].mxu0
      %v3657 = vadd.f32 0.0, %v3656
      %v3658 = vpop.f32.mrb[0].mxu0
      %3659 = vmatprep.mubr.f32.mxu0 0.0
      %3660 = vmatmul.mubr.f32.gmra.mrb[0].mxu0 %v3287
      %v3661 = vpop.f32.mrb[0].mxu0
      %v3662 = vadd.f32 0.0, %v3661
      %v3663 = vpop.f32.mrb[0].mxu0
      %3664 = vmatprep.mubr.f32.mxu0 0.0
      %3665 = vmatmul.mubr.f32.gmra.mrb[0].mxu0 %v3290
      %v3666 = vpop.f32.mrb[0].mxu0
      %v3667 = vadd.f32 0.0, %v3666
      %v3668 = vpop.f32.mrb[0].mxu0
      %3669 = vmatprep.mubr.f32.mxu0 0.0
      %3670 = vmatmul.mubr.f32.gmra.mrb[0].mxu0 %v3293
      %v3671 = vpop.f32.mrb[0].mxu0
      %v3672 = vadd.f32 0.0, %v3671
      %v3673 = vpop.f32.mrb[0].mxu0
      %3674 = vmatprep.mubr.f32.mxu0 0.0
      %3675 = vmatmul.mubr.f32.gmra.mrb[0].mxu0 %v3296
      %v3676 = vpop.f32.mrb[0].mxu0
      %v3677 = vadd.f32 0.0, %v3676
      %v3678 = vpop.f32.mrb[0].mxu0
      %3679 = vmatprep.mubr.f32.mxu0 0.0
      %3680 = vmatmul.mubr.f32.gmra.mrb[0].mxu0 %v3299
      %v3681 = vpop.f32.mrb[0].mxu0
      %v3682 = vadd.f32 0.0, %v3681
      %v3683 = vpop.f32.mrb[0].mxu0
      %3684 = vmatprep.mubr.f32.mxu0 0.0
      %3685 = vmatmul.mubr.f32.gmra.mrb[0].mxu0 %v3302
      %v3686 = vpop.f32.mrb[0].mxu0
      %v3687 = vadd.f32 0.0, %v3686
      %v3688 = vpop.f32.mrb[0].mxu0
      %3689 = vmatprep.mubr.f32.mxu0 0.0
      %3690 = vmatmul.mubr.f32.gmra.mrb[0].mxu0 %v3305
      %v3691 = vpop.f32.mrb[0].mxu0
      %v3692 = vadd.f32 0.0, %v3691
      %v3693 = vpop.f32.mrb[0].mxu0
      %3694 = vmatprep.mubr.f32.mxu0 0.0
      %3695 = vmatmul.mubr.f32.gmra.mrb[0].mxu0 %v3308
      %v3696 = vpop.f32.mrb[0].mxu0
      %v3697 = vadd.f32 0.0, %v3696
      %v3698 = vpop.f32.mrb[0].mxu0
      %3699 = vmatprep.mubr.f32.mxu0 0.0
      %3700 = vmatmul.mubr.f32.gmra.mrb[0].mxu0 %v3311
      %v3701 = vpop.f32.mrb[0].mxu0
      %v3702 = vadd.f32 0.0, %v3701
      %v3703 = vpop.f32.mrb[0].mxu0
      %3704 = vmatprep.mubr.f32.mxu0 0.0
      %3705 = vmatmul.mubr.f32.gmra.mrb[0].mxu0 %v3314
      %v3706 = vpop.f32.mrb[0].mxu0
      %v3707 = vadd.f32 0.0, %v3706
      %v3708 = vpop.f32.mrb[0].mxu0
      %3709 = vmatprep.mubr.f32.mxu0 0.0
      %3710 = vmatmul.mubr.f32.gmra.mrb[0].mxu0 %v3317
      %v3711 = vpop.f32.mrb[0].mxu0
      %v3712 = vadd.f32 0.0, %v3711
      %v3713 = vpop.f32.mrb[0].mxu0
      %3714 = vmatprep.mubr.f32.mxu0 0.0
      %3715 = vmatmul.mubr.f32.gmra.mrb[0].mxu0 %v3320
      %v3716 = vpop.f32.mrb[0].mxu0
      %v3717 = vadd.f32 0.0, %v3716
      %v3718 = vpop.f32.mrb[0].mxu0
      %3719 = vmatprep.mubr.f32.mxu0 0.0
      %3720 = vmatmul.mubr.f32.gmra.mrb[0].mxu0 %v3323
      %v3721 = vpop.f32.mrb[0].mxu0
      %v3722 = vadd.f32 0.0, %v3721
      %v3723 = vpop.f32.mrb[0].mxu0
      %3724 = vmatprep.mubr.f32.mxu0 0.0
      %3725 = vmatmul.mubr.f32.gmra.mrb[0].mxu0 %v3326
      %v3726 = vpop.f32.mrb[0].mxu0
      %v3727 = vadd.f32 0.0, %v3726
      %v3728 = vpop.f32.mrb[0].mxu0
      %3729 = vmatprep.mubr.f32.mxu0 0.0
      %3730 = vmatmul.mubr.f32.gmra.mrb[0].mxu0 %v3329
      %v3731 = vpop.f32.mrb[0].mxu0
      %v3732 = vadd.f32 0.0, %v3731
      %v3733 = vpop.f32.mrb[0].mxu0
      %3734 = vmatprep.mubr.f32.mxu0 0.0
      %3735 = vmatmul.mubr.f32.gmra.mrb[0].mxu0 %v3332
      %v3736 = vpop.f32.mrb[0].mxu0
      %v3737 = vadd.f32 0.0, %v3736
      %v3738 = vpop.f32.mrb[0].mxu0
      %3739 = vmatprep.mubr.f32.mxu0 0.0
      %3740 = vmatmul.mubr.f32.gmra.mrb[0].mxu0 %v3335
      %v3741 = vpop.f32.mrb[0].mxu0
      %v3742 = vadd.f32 0.0, %v3741
      %v3743 = vpop.f32.mrb[0].mxu0
      %3744 = vmatprep.mubr.f32.mxu0 0.0
      %3745 = vmatmul.mubr.f32.gmra.mrb[0].mxu0 %v3338
      %v3746 = vpop.f32.mrb[0].mxu0
      %v3747 = vadd.f32 0.0, %v3746
      %v3748 = vpop.f32.mrb[0].mxu0
      %3749 = vmatprep.mubr.f32.mxu0 0.0
      %3750 = vmatmul.mubr.f32.gmra.mrb[0].mxu0 %v3341
      %v3751 = vpop.f32.mrb[0].mxu0
      %v3752 = vadd.f32 0.0, %v3751
      %v3753 = vpop.f32.mrb[0].mxu0
      %3754 = vmatprep.mubr.f32.mxu0 0.0
      %3755 = vmatmul.mubr.f32.gmra.mrb[0].mxu0 %v3344
      %v3756 = vpop.f32.mrb[0].mxu0
      %v3757 = vadd.f32 0.0, %v3756
      %v3758 = vpop.f32.mrb[0].mxu0
      %3759 = vmatprep.mubr.f32.mxu0 0.0
      %3760 = vmatmul.mubr.f32.gmra.mrb[0].mxu0 %v3347
      %v3761 = vpop.f32.mrb[0].mxu0
      %v3762 = vadd.f32 0.0, %v3761
      %v3763 = vpop.f32.mrb[0].mxu0
      %3764 = vmatprep.mubr.f32.mxu0 0.0
      %3765 = vmatmul.mubr.f32.gmra.mrb[0].mxu0 %v3350
      %v3766 = vpop.f32.mrb[0].mxu0
      %v3767 = vadd.f32 0.0, %v3766
      %v3768 = vpop.f32.mrb[0].mxu0
      %3769 = vmatprep.mubr.f32.mxu0 0.0
      %3770 = vmatmul.mubr.f32.gmra.mrb[0].mxu0 %v3353
      %v3771 = vpop.f32.mrb[0].mxu0
      %v3772 = vadd.f32 0.0, %v3771
      %v3773 = vpop.f32.mrb[0].mxu0
      %3774 = vmatprep.mubr.f32.mxu0 0.0
      %3775 = vmatmul.mubr.f32.gmra.mrb[0].mxu0 %v3356
      %v3776 = vpop.f32.mrb[0].mxu0
      %v3777 = vadd.f32 0.0, %v3776
      %v3778 = vpop.f32.mrb[0].mxu0
      %3779 = vmatprep.mubr.f32.mxu0 0.0
      %3780 = vmatmul.mubr.f32.gmra.mrb[0].mxu0 %v3359
      %v3781 = vpop.f32.mrb[0].mxu0
      %v3782 = vadd.f32 0.0, %v3781
      %v3783 = vpop.f32.mrb[0].mxu0
      %3784 = vmatprep.mubr.f32.mxu0 0.0
      %3785 = vmatmul.mubr.f32.gmra.mrb[0].mxu0 %v3362
      %v3786 = vpop.f32.mrb[0].mxu0
      %v3787 = vadd.f32 0.0, %v3786
      %v3788 = vpop.f32.mrb[0].mxu0
      %3789 = vmatprep.mubr.f32.mxu0 0.0
      %3790 = vmatmul.mubr.f32.gmra.mrb[0].mxu0 %v3365
      %v3791 = vpop.f32.mrb[0].mxu0
      %v3792 = vadd.f32 0.0, %v3791
      %v3793 = vpop.f32.mrb[0].mxu0
      %3794 = vdwg.mxu0
      %v3795 = vadd.f32 %v2993, %v3437
      %v3796 = vadd.f32 %v2994, %v3442
      %v3797 = vadd.f32 %v2995, %v3447
      %v3798 = vadd.f32 %v2996, %v3452
      %v3799 = vadd.f32 %v2997, %v3457
      %v3800 = vadd.f32 %v2998, %v3462
      %v3801 = vadd.f32 %v2999, %v3467
      %v3802 = vadd.f32 %v3000, %v3472
      %v3803 = vadd.f32 %v3001, %v3477
      %v3804 = vadd.f32 %v3002, %v3482
      %v3805 = vadd.f32 %v3003, %v3487
      %v3806 = vadd.f32 %v3004, %v3492
      %v3807 = vadd.f32 %v3005, %v3497
      %v3808 = vadd.f32 %v3006, %v3502
      %v3809 = vadd.f32 %v3007, %v3507
      %v3810 = vadd.f32 %v3008, %v3512
      %v3811 = vadd.f32 %v3009, %v3517
      %v3812 = vadd.f32 %v3010, %v3522
      %v3813 = vadd.f32 %v3011, %v3527
      %v3814 = vadd.f32 %v3012, %v3532
      %v3815 = vadd.f32 %v3013, %v3537
      %v3816 = vadd.f32 %v3014, %v3542
      %v3817 = vadd.f32 %v3015, %v3547
      %v3818 = vadd.f32 %v3016, %v3552
      %v3819 = vadd.f32 %v3017, %v3557
      %v3820 = vadd.f32 %v3018, %v3562
      %v3821 = vadd.f32 %v3019, %v3567
      %v3822 = vadd.f32 %v3020, %v3572
      %v3823 = vadd.f32 %v3021, %v3577
      %v3824 = vadd.f32 %v3022, %v3582
      %v3825 = vadd.f32 %v3023, %v3587
      %v3826 = vadd.f32 %v3024, %v3592
      %v3827 = vadd.f32 %v3025, %v3597
      %v3828 = vadd.f32 %v3026, %v3602
      %v3829 = vadd.f32 %v3027, %v3607
      %v3830 = vadd.f32 %v3028, %v3612
      %v3831 = vadd.f32 %v3029, %v3617
      %v3832 = vadd.f32 %v3030, %v3622
      %v3833 = vadd.f32 %v3031, %v3627
      %v3834 = vadd.f32 %v3032, %v3632
      %v3835 = vadd.f32 %v3033, %v3637
      %v3836 = vadd.f32 %v3034, %v3642
      %v3837 = vadd.f32 %v3035, %v3647
      %v3838 = vadd.f32 %v3036, %v3652
      %v3839 = vadd.f32 %v3037, %v3657
      %v3840 = vadd.f32 %v3038, %v3662
      %v3841 = vadd.f32 %v3039, %v3667
      %v3842 = vadd.f32 %v3040, %v3672
      %v3843 = vadd.f32 %v3041, %v3677
      %v3844 = vadd.f32 %v3042, %v3682
      %v3845 = vadd.f32 %v3043, %v3687
      %v3846 = vadd.f32 %v3044, %v3692
      %v3847 = vadd.f32 %v3045, %v3697
      %v3848 = vadd.f32 %v3046, %v3702
      %v3849 = vadd.f32 %v3047, %v3707
      %v3850 = vadd.f32 %v3048, %v3712
      %v3851 = vadd.f32 %v3049, %v3717
      %v3852 = vadd.f32 %v3050, %v3722
      %v3853 = vadd.f32 %v3051, %v3727
      %v3854 = vadd.f32 %v3052, %v3732
      %v3855 = vadd.f32 %v3053, %v3737
      %v3856 = vadd.f32 %v3054, %v3742
      %v3857 = vadd.f32 %v3055, %v3747
      %v3858 = vadd.f32 %v3056, %v3752
      %v3859 = vadd.f32 %v3057, %v3757
      %v3860 = vadd.f32 %v3058, %v3762
      %v3861 = vadd.f32 %v3059, %v3767
      %v3862 = vadd.f32 %v3060, %v3772
      %v3863 = vadd.f32 %v3061, %v3777
      %v3864 = vadd.f32 %v3062, %v3782
      %v3865 = vadd.f32 %v3063, %v3787
      %v3866 = vadd.f32 %v3064, %v3792
      %v3867 = vld [vmem:[%s2] sm:$0x1]
      %v3869 = vlaneseq
      %v3870 = vshrl.u32 %v3869, 7
      %v3871 = vsub.s32 0, %v3870
      %v3872 = vrot.slane %v3867, %v3871
      %v3874 = vadd.f32 %v3795, %v3872
      %v3875 = vadd.f32 %v3796, %v3872
      %v3876 = vadd.f32 %v3797, %v3872
      %v3877 = vadd.f32 %v3798, %v3872
      %v3878 = vadd.f32 %v3799, %v3872
      %v3879 = vadd.f32 %v3800, %v3872
      %v3880 = vadd.f32 %v3801, %v3872
      %v3881 = vadd.f32 %v3802, %v3872
      %v3882 = vadd.f32 %v3803, %v3872
      %v3883 = vadd.f32 %v3804, %v3872
      %v3884 = vadd.f32 %v3805, %v3872
      %v3885 = vadd.f32 %v3806, %v3872
      %v3886 = vadd.f32 %v3807, %v3872
      %v3887 = vadd.f32 %v3808, %v3872
      %v3888 = vadd.f32 %v3809, %v3872
      %v3889 = vadd.f32 %v3810, %v3872
      %v3890 = vadd.f32 %v3811, %v3872
      %v3891 = vadd.f32 %v3812, %v3872
      %v3892 = vadd.f32 %v3813, %v3872
      %v3893 = vadd.f32 %v3814, %v3872
      %v3894 = vadd.f32 %v3815, %v3872
      %v3895 = vadd.f32 %v3816, %v3872
      %v3896 = vadd.f32 %v3817, %v3872
      %v3897 = vadd.f32 %v3818, %v3872
      %v3898 = vadd.f32 %v3819, %v3872
      %v3899 = vadd.f32 %v3820, %v3872
      %v3900 = vadd.f32 %v3821, %v3872
      %v3901 = vadd.f32 %v3822, %v3872
      %v3902 = vadd.f32 %v3823, %v3872
      %v3903 = vadd.f32 %v3824, %v3872
      %v3904 = vadd.f32 %v3825, %v3872
      %v3905 = vadd.f32 %v3826, %v3872
      %v3906 = vadd.f32 %v3827, %v3872
      %v3907 = vadd.f32 %v3828, %v3872
      %v3908 = vadd.f32 %v3829, %v3872
      %v3909 = vadd.f32 %v3830, %v3872
      %v3910 = vadd.f32 %v3831, %v3872
      %v3911 = vadd.f32 %v3832, %v3872
      %v3912 = vadd.f32 %v3833, %v3872
      %v3913 = vadd.f32 %v3834, %v3872
      %v3914 = vadd.f32 %v3835, %v3872
      %v3915 = vadd.f32 %v3836, %v3872
      %v3916 = vadd.f32 %v3837, %v3872
      %v3917 = vadd.f32 %v3838, %v3872
      %v3918 = vadd.f32 %v3839, %v3872
      %v3919 = vadd.f32 %v3840, %v3872
      %v3920 = vadd.f32 %v3841, %v3872
      %v3921 = vadd.f32 %v3842, %v3872
      %v3922 = vadd.f32 %v3843, %v3872
      %v3923 = vadd.f32 %v3844, %v3872
      %v3924 = vadd.f32 %v3845, %v3872
      %v3925 = vadd.f32 %v3846, %v3872
      %v3926 = vadd.f32 %v3847, %v3872
      %v3927 = vadd.f32 %v3848, %v3872
      %v3928 = vadd.f32 %v3849, %v3872
      %v3929 = vadd.f32 %v3850, %v3872
      %v3930 = vadd.f32 %v3851, %v3872
      %v3931 = vadd.f32 %v3852, %v3872
      %v3932 = vadd.f32 %v3853, %v3872
      %v3933 = vadd.f32 %v3854, %v3872
      %v3934 = vadd.f32 %v3855, %v3872
      %v3935 = vadd.f32 %v3856, %v3872
      %v3936 = vadd.f32 %v3857, %v3872
      %v3937 = vadd.f32 %v3858, %v3872
      %v3938 = vadd.f32 %v3859, %v3872
      %v3939 = vadd.f32 %v3860, %v3872
      %v3940 = vadd.f32 %v3861, %v3872
      %v3941 = vadd.f32 %v3862, %v3872
      %v3942 = vadd.f32 %v3863, %v3872
      %v3943 = vadd.f32 %v3864, %v3872
      %v3944 = vadd.f32 %v3865, %v3872
      %v3945 = vadd.f32 %v3866, %v3872
      %vm3946 = vcmp.gt.f32.partialorder %v3874, 0.0
      %vm3947 = vcmp.gt.f32.partialorder %v3875, 0.0
      %vm3948 = vcmp.gt.f32.partialorder %v3876, 0.0
      %vm3949 = vcmp.gt.f32.partialorder %v3877, 0.0
      %vm3950 = vcmp.gt.f32.partialorder %v3878, 0.0
      %vm3951 = vcmp.gt.f32.partialorder %v3879, 0.0
      %vm3952 = vcmp.gt.f32.partialorder %v3880, 0.0
      %vm3953 = vcmp.gt.f32.partialorder %v3881, 0.0
      %vm3954 = vcmp.gt.f32.partialorder %v3882, 0.0
      %vm3955 = vcmp.gt.f32.partialorder %v3883, 0.0
      %vm3956 = vcmp.gt.f32.partialorder %v3884, 0.0
      %vm3957 = vcmp.gt.f32.partialorder %v3885, 0.0
      %vm3958 = vcmp.gt.f32.partialorder %v3886, 0.0
      %vm3959 = vcmp.gt.f32.partialorder %v3887, 0.0
      %vm3960 = vcmp.gt.f32.partialorder %v3888, 0.0
      %vm3961 = vcmp.gt.f32.partialorder %v3889, 0.0
      %vm3962 = vcmp.gt.f32.partialorder %v3890, 0.0
      %vm3963 = vcmp.gt.f32.partialorder %v3891, 0.0
      %vm3964 = vcmp.gt.f32.partialorder %v3892, 0.0
      %vm3965 = vcmp.gt.f32.partialorder %v3893, 0.0
      %vm3966 = vcmp.gt.f32.partialorder %v3894, 0.0
      %vm3967 = vcmp.gt.f32.partialorder %v3895, 0.0
      %vm3968 = vcmp.gt.f32.partialorder %v3896, 0.0
      %vm3969 = vcmp.gt.f32.partialorder %v3897, 0.0
      %vm3970 = vcmp.gt.f32.partialorder %v3898, 0.0
      %vm3971 = vcmp.gt.f32.partialorder %v3899, 0.0
      %vm3972 = vcmp.gt.f32.partialorder %v3900, 0.0
      %vm3973 = vcmp.gt.f32.partialorder %v3901, 0.0
      %vm3974 = vcmp.gt.f32.partialorder %v3902, 0.0
      %vm3975 = vcmp.gt.f32.partialorder %v3903, 0.0
      %vm3976 = vcmp.gt.f32.partialorder %v3904, 0.0
      %vm3977 = vcmp.gt.f32.partialorder %v3905, 0.0
      %vm3978 = vcmp.gt.f32.partialorder %v3906, 0.0
      %vm3979 = vcmp.gt.f32.partialorder %v3907, 0.0
      %vm3980 = vcmp.gt.f32.partialorder %v3908, 0.0
      %vm3981 = vcmp.gt.f32.partialorder %v3909, 0.0
      %vm3982 = vcmp.gt.f32.partialorder %v3910, 0.0
      %vm3983 = vcmp.gt.f32.partialorder %v3911, 0.0
      %vm3984 = vcmp.gt.f32.partialorder %v3912, 0.0
      %vm3985 = vcmp.gt.f32.partialorder %v3913, 0.0
      %vm3986 = vcmp.gt.f32.partialorder %v3914, 0.0
      %vm3987 = vcmp.gt.f32.partialorder %v3915, 0.0
      %vm3988 = vcmp.gt.f32.partialorder %v3916, 0.0
      %vm3989 = vcmp.gt.f32.partialorder %v3917, 0.0
      %vm3990 = vcmp.gt.f32.partialorder %v3918, 0.0
      %vm3991 = vcmp.gt.f32.partialorder %v3919, 0.0
      %vm3992 = vcmp.gt.f32.partialorder %v3920, 0.0
      %vm3993 = vcmp.gt.f32.partialorder %v3921, 0.0
      %vm3994 = vcmp.gt.f32.partialorder %v3922, 0.0
      %vm3995 = vcmp.gt.f32.partialorder %v3923, 0.0
      %vm3996 = vcmp.gt.f32.partialorder %v3924, 0.0
      %vm3997 = vcmp.gt.f32.partialorder %v3925, 0.0
      %vm3998 = vcmp.gt.f32.partialorder %v3926, 0.0
      %vm3999 = vcmp.gt.f32.partialorder %v3927, 0.0
      %vm4000 = vcmp.gt.f32.partialorder %v3928, 0.0
      %vm4001 = vcmp.gt.f32.partialorder %v3929, 0.0
      %vm4002 = vcmp.gt.f32.partialorder %v3930, 0.0
      %vm4003 = vcmp.gt.f32.partialorder %v3931, 0.0
      %vm4004 = vcmp.gt.f32.partialorder %v3932, 0.0
      %vm4005 = vcmp.gt.f32.partialorder %v3933, 0.0
      %vm4006 = vcmp.gt.f32.partialorder %v3934, 0.0
      %vm4007 = vcmp.gt.f32.partialorder %v3935, 0.0
      %vm4008 = vcmp.gt.f32.partialorder %v3936, 0.0
      %vm4009 = vcmp.gt.f32.partialorder %v3937, 0.0
      %vm4010 = vcmp.gt.f32.partialorder %v3938, 0.0
      %vm4011 = vcmp.gt.f32.partialorder %v3939, 0.0
      %vm4012 = vcmp.gt.f32.partialorder %v3940, 0.0
      %vm4013 = vcmp.gt.f32.partialorder %v3941, 0.0
      %vm4014 = vcmp.gt.f32.partialorder %v3942, 0.0
      %vm4015 = vcmp.gt.f32.partialorder %v3943, 0.0
      %vm4016 = vcmp.gt.f32.partialorder %v3944, 0.0
      %vm4017 = vcmp.gt.f32.partialorder %v3945, 0.0
      %v4018 = vmul.f32 %v3874, -0.3
      %v4019 = vmul.f32 %v3875, -0.3
      %v4020 = vmul.f32 %v3876, -0.3
      %v4021 = vmul.f32 %v3877, -0.3
      %v4022 = vmul.f32 %v3878, -0.3
      %v4023 = vmul.f32 %v3879, -0.3
      %v4024 = vmul.f32 %v3880, -0.3
      %v4025 = vmul.f32 %v3881, -0.3
      %v4026 = vmul.f32 %v3882, -0.3
      %v4027 = vmul.f32 %v3883, -0.3
      %v4028 = vmul.f32 %v3884, -0.3
      %v4029 = vmul.f32 %v3885, -0.3
      %v4030 = vmul.f32 %v3886, -0.3
      %v4031 = vmul.f32 %v3887, -0.3
      %v4032 = vmul.f32 %v3888, -0.3
      %v4033 = vmul.f32 %v3889, -0.3
      %v4034 = vmul.f32 %v3890, -0.3
      %v4035 = vmul.f32 %v3891, -0.3
      %v4036 = vmul.f32 %v3892, -0.3
      %v4037 = vmul.f32 %v3893, -0.3
      %v4038 = vmul.f32 %v3894, -0.3
      %v4039 = vmul.f32 %v3895, -0.3
      %v4040 = vmul.f32 %v3896, -0.3
      %v4041 = vmul.f32 %v3897, -0.3
      %v4042 = vmul.f32 %v3898, -0.3
      %v4043 = vmul.f32 %v3899, -0.3
      %v4044 = vmul.f32 %v3900, -0.3
      %v4045 = vmul.f32 %v3901, -0.3
      %v4046 = vmul.f32 %v3902, -0.3
      %v4047 = vmul.f32 %v3903, -0.3
      %v4048 = vmul.f32 %v3904, -0.3
      %v4049 = vmul.f32 %v3905, -0.3
      %v4050 = vmul.f32 %v3906, -0.3
      %v4051 = vmul.f32 %v3907, -0.3
      %v4052 = vmul.f32 %v3908, -0.3
      %v4053 = vmul.f32 %v3909, -0.3
      %v4054 = vmul.f32 %v3910, -0.3
      %v4055 = vmul.f32 %v3911, -0.3
      %v4056 = vmul.f32 %v3912, -0.3
      %v4057 = vmul.f32 %v3913, -0.3
      %v4058 = vmul.f32 %v3914, -0.3
      %v4059 = vmul.f32 %v3915, -0.3
      %v4060 = vmul.f32 %v3916, -0.3
      %v4061 = vmul.f32 %v3917, -0.3
      %v4062 = vmul.f32 %v3918, -0.3
      %v4063 = vmul.f32 %v3919, -0.3
      %v4064 = vmul.f32 %v3920, -0.3
      %v4065 = vmul.f32 %v3921, -0.3
      %v4066 = vmul.f32 %v3922, -0.3
      %v4067 = vmul.f32 %v3923, -0.3
      %v4068 = vmul.f32 %v3924, -0.3
      %v4069 = vmul.f32 %v3925, -0.3
      %v4070 = vmul.f32 %v3926, -0.3
      %v4071 = vmul.f32 %v3927, -0.3
      %v4072 = vmul.f32 %v3928, -0.3
      %v4073 = vmul.f32 %v3929, -0.3
      %v4074 = vmul.f32 %v3930, -0.3
      %v4075 = vmul.f32 %v3931, -0.3
      %v4076 = vmul.f32 %v3932, -0.3
      %v4077 = vmul.f32 %v3933, -0.3
      %v4078 = vmul.f32 %v3934, -0.3
      %v4079 = vmul.f32 %v3935, -0.3
      %v4080 = vmul.f32 %v3936, -0.3
      %v4081 = vmul.f32 %v3937, -0.3
      %v4082 = vmul.f32 %v3938, -0.3
      %v4083 = vmul.f32 %v3939, -0.3
      %v4084 = vmul.f32 %v3940, -0.3
      %v4085 = vmul.f32 %v3941, -0.3
      %v4086 = vmul.f32 %v3942, -0.3
      %v4087 = vmul.f32 %v3943, -0.3
      %v4088 = vmul.f32 %v3944, -0.3
      %v4089 = vmul.f32 %v3945, -0.3
      %v4090 = vsel %vm3946, %v3874, %v4018
      %v4091 = vsel %vm3947, %v3875, %v4019
      %v4092 = vsel %vm3948, %v3876, %v4020
      %v4093 = vsel %vm3949, %v3877, %v4021
      %v4094 = vsel %vm3950, %v3878, %v4022
      %v4095 = vsel %vm3951, %v3879, %v4023
      %v4096 = vsel %vm3952, %v3880, %v4024
      %v4097 = vsel %vm3953, %v3881, %v4025
      %v4098 = vsel %vm3954, %v3882, %v4026
      %v4099 = vsel %vm3955, %v3883, %v4027
      %v4100 = vsel %vm3956, %v3884, %v4028
      %v4101 = vsel %vm3957, %v3885, %v4029
      %v4102 = vsel %vm3958, %v3886, %v4030
      %v4103 = vsel %vm3959, %v3887, %v4031
      %v4104 = vsel %vm3960, %v3888, %v4032
      %v4105 = vsel %vm3961, %v3889, %v4033
      %v4106 = vsel %vm3962, %v3890, %v4034
      %v4107 = vsel %vm3963, %v3891, %v4035
      %v4108 = vsel %vm3964, %v3892, %v4036
      %v4109 = vsel %vm3965, %v3893, %v4037
      %v4110 = vsel %vm3966, %v3894, %v4038
      %v4111 = vsel %vm3967, %v3895, %v4039
      %v4112 = vsel %vm3968, %v3896, %v4040
      %v4113 = vsel %vm3969, %v3897, %v4041
      %v4114 = vsel %vm3970, %v3898, %v4042
      %v4115 = vsel %vm3971, %v3899, %v4043
      %v4116 = vsel %vm3972, %v3900, %v4044
      %v4117 = vsel %vm3973, %v3901, %v4045
      %v4118 = vsel %vm3974, %v3902, %v4046
      %v4119 = vsel %vm3975, %v3903, %v4047
      %v4120 = vsel %vm3976, %v3904, %v4048
      %v4121 = vsel %vm3977, %v3905, %v4049
      %v4122 = vsel %vm3978, %v3906, %v4050
      %v4123 = vsel %vm3979, %v3907, %v4051
      %v4124 = vsel %vm3980, %v3908, %v4052
      %v4125 = vsel %vm3981, %v3909, %v4053
      %v4126 = vsel %vm3982, %v3910, %v4054
      %v4127 = vsel %vm3983, %v3911, %v4055
      %v4128 = vsel %vm3984, %v3912, %v4056
      %v4129 = vsel %vm3985, %v3913, %v4057
      %v4130 = vsel %vm3986, %v3914, %v4058
      %v4131 = vsel %vm3987, %v3915, %v4059
      %v4132 = vsel %vm3988, %v3916, %v4060
      %v4133 = vsel %vm3989, %v3917, %v4061
      %v4134 = vsel %vm3990, %v3918, %v4062
      %v4135 = vsel %vm3991, %v3919, %v4063
      %v4136 = vsel %vm3992, %v3920, %v4064
      %v4137 = vsel %vm3993, %v3921, %v4065
      %v4138 = vsel %vm3994, %v3922, %v4066
      %v4139 = vsel %vm3995, %v3923, %v4067
      %v4140 = vsel %vm3996, %v3924, %v4068
      %v4141 = vsel %vm3997, %v3925, %v4069
      %v4142 = vsel %vm3998, %v3926, %v4070
      %v4143 = vsel %vm3999, %v3927, %v4071
      %v4144 = vsel %vm4000, %v3928, %v4072
      %v4145 = vsel %vm4001, %v3929, %v4073
      %v4146 = vsel %vm4002, %v3930, %v4074
      %v4147 = vsel %vm4003, %v3931, %v4075
      %v4148 = vsel %vm4004, %v3932, %v4076
      %v4149 = vsel %vm4005, %v3933, %v4077
      %v4150 = vsel %vm4006, %v3934, %v4078
      %v4151 = vsel %vm4007, %v3935, %v4079
      %v4152 = vsel %vm4008, %v3936, %v4080
      %v4153 = vsel %vm4009, %v3937, %v4081
      %v4154 = vsel %vm4010, %v3938, %v4082
      %v4155 = vsel %vm4011, %v3939, %v4083
      %v4156 = vsel %vm4012, %v3940, %v4084
      %v4157 = vsel %vm4013, %v3941, %v4085
      %v4158 = vsel %vm4014, %v3942, %v4086
      %v4159 = vsel %vm4015, %v3943, %v4087
      %v4160 = vsel %vm4016, %v3944, %v4088
      %v4161 = vsel %vm4017, %v3945, %v4089
      %v4162 = vld [vmem:[%s3] sm:$0xff]
      %v4163 = vld [vmem:[%s3 + $0x8] sm:$0xff]
      %v4164 = vld [vmem:[%s3 + $0x10] sm:$0xff]
      %v4165 = vld [vmem:[%s3 + $0x18] sm:$0xff]
      %v4166 = vld [vmem:[%s3 + $0x20] sm:$0xff]
      %v4167 = vld [vmem:[%s3 + $0x28] sm:$0xff]
      %v4168 = vld [vmem:[%s3 + $0x30] sm:$0xff]
      %v4169 = vld [vmem:[%s3 + $0x38] sm:$0xff]
      %v4170 = vld [vmem:[%s3 + $0x40] sm:$0xff]
      %v4171 = vld [vmem:[%s3 + $0x48] sm:$0xff]
      %v4172 = vld [vmem:[%s3 + $0x50] sm:$0xff]
      %v4173 = vld [vmem:[%s3 + $0x58] sm:$0xff]
      %v4174 = vld [vmem:[%s3 + $0x60] sm:$0xff]
      %v4175 = vld [vmem:[%s3 + $0x68] sm:$0xff]
      %v4176 = vld [vmem:[%s3 + $0x70] sm:$0xff]
      %v4177 = vld [vmem:[%s3 + $0x78] sm:$0xff]
      %v4178 = vld [vmem:[%s3 + $0x80] sm:$0xff]
      %v4179 = vld [vmem:[%s3 + $0x88] sm:$0xff]
      %v4180 = vld [vmem:[%s3 + $0x90] sm:$0xff]
      %v4181 = vld [vmem:[%s3 + $0x98] sm:$0xff]
      %v4182 = vld [vmem:[%s3 + $0xa0] sm:$0xff]
      %v4183 = vld [vmem:[%s3 + $0xa8] sm:$0xff]
      %v4184 = vld [vmem:[%s3 + $0xb0] sm:$0xff]
      %v4185 = vld [vmem:[%s3 + $0xb8] sm:$0xff]
      %v4186 = vld [vmem:[%s3 + $0xc0] sm:$0xff]
      %v4187 = vld [vmem:[%s3 + $0xc8] sm:$0xff]
      %v4188 = vld [vmem:[%s3 + $0xd0] sm:$0xff]
      %v4189 = vld [vmem:[%s3 + $0xd8] sm:$0xff]
      %v4190 = vld [vmem:[%s3 + $0xe0] sm:$0xff]
      %v4191 = vld [vmem:[%s3 + $0xe8] sm:$0xff]
      %v4192 = vld [vmem:[%s3 + $0xf0] sm:$0xff]
      %v4193 = vld [vmem:[%s3 + $0xf8] sm:$0xff]
      %v4194 = vld [vmem:[%s3 + $0x100] sm:$0xff]
      %v4195 = vld [vmem:[%s3 + $0x108] sm:$0xff]
      %v4196 = vld [vmem:[%s3 + $0x110] sm:$0xff]
      %v4197 = vld [vmem:[%s3 + $0x118] sm:$0xff]
      %v4198 = vld [vmem:[%s3 + $0x120] sm:$0xff]
      %v4199 = vld [vmem:[%s3 + $0x128] sm:$0xff]
      %v4200 = vld [vmem:[%s3 + $0x130] sm:$0xff]
      %v4201 = vld [vmem:[%s3 + $0x138] sm:$0xff]
      %v4202 = vld [vmem:[%s3 + $0x140] sm:$0xff]
      %v4203 = vld [vmem:[%s3 + $0x148] sm:$0xff]
      %v4204 = vld [vmem:[%s3 + $0x150] sm:$0xff]
      %v4205 = vld [vmem:[%s3 + $0x158] sm:$0xff]
      %v4206 = vld [vmem:[%s3 + $0x160] sm:$0xff]
      %v4207 = vld [vmem:[%s3 + $0x168] sm:$0xff]
      %v4208 = vld [vmem:[%s3 + $0x170] sm:$0xff]
      %v4209 = vld [vmem:[%s3 + $0x178] sm:$0xff]
      %v4210 = vld [vmem:[%s3 + $0x180] sm:$0xff]
      %v4211 = vld [vmem:[%s3 + $0x188] sm:$0xff]
      %v4212 = vld [vmem:[%s3 + $0x190] sm:$0xff]
      %v4213 = vld [vmem:[%s3 + $0x198] sm:$0xff]
      %v4214 = vld [vmem:[%s3 + $0x1a0] sm:$0xff]
      %v4215 = vld [vmem:[%s3 + $0x1a8] sm:$0xff]
      %v4216 = vld [vmem:[%s3 + $0x1b0] sm:$0xff]
      %v4217 = vld [vmem:[%s3 + $0x1b8] sm:$0xff]
      %v4218 = vld [vmem:[%s3 + $0x1c0] sm:$0xff]
      %v4219 = vld [vmem:[%s3 + $0x1c8] sm:$0xff]
      %v4220 = vld [vmem:[%s3 + $0x1d0] sm:$0xff]
      %v4221 = vld [vmem:[%s3 + $0x1d8] sm:$0xff]
      %v4222 = vld [vmem:[%s3 + $0x1e0] sm:$0xff]
      %v4223 = vld [vmem:[%s3 + $0x1e8] sm:$0xff]
      %v4224 = vld [vmem:[%s3 + $0x1f0] sm:$0xff]
      %v4225 = vld [vmem:[%s3 + $0x1f8] sm:$0xff]
      %v4226 = vld [vmem:[%s3 + $0x200] sm:$0xff]
      %v4227 = vld [vmem:[%s3 + $0x208] sm:$0xff]
      %v4228 = vld [vmem:[%s3 + $0x210] sm:$0xff]
      %v4229 = vld [vmem:[%s3 + $0x218] sm:$0xff]
      %v4230 = vld [vmem:[%s3 + $0x220] sm:$0xff]
      %v4231 = vld [vmem:[%s3 + $0x228] sm:$0xff]
      %v4232 = vld [vmem:[%s3 + $0x230] sm:$0xff]
      %v4233 = vld [vmem:[%s3 + $0x238] sm:$0xff]
      %4235 = vset.pattern.permute.xlu0 0
      %4236 = vperm.xlu0 %4235, %v4162
      %v4237 = vpop.permute.xlu0 %4236
      %4240 = vset.pattern.permute.xlu0 0
      %4241 = vperm.xlu0 %4240, %v4163
      %v4242 = vpop.permute.xlu0 %4241
      %4245 = vset.pattern.permute.xlu0 0
      %4246 = vperm.xlu0 %4245, %v4164
      %v4247 = vpop.permute.xlu0 %4246
      %4250 = vset.pattern.permute.xlu0 0
      %4251 = vperm.xlu0 %4250, %v4165
      %v4252 = vpop.permute.xlu0 %4251
      %4255 = vset.pattern.permute.xlu0 0
      %4256 = vperm.xlu0 %4255, %v4166
      %v4257 = vpop.permute.xlu0 %4256
      %4260 = vset.pattern.permute.xlu0 0
      %4261 = vperm.xlu0 %4260, %v4167
      %v4262 = vpop.permute.xlu0 %4261
      %4265 = vset.pattern.permute.xlu0 0
      %4266 = vperm.xlu0 %4265, %v4168
      %v4267 = vpop.permute.xlu0 %4266
      %4270 = vset.pattern.permute.xlu0 0
      %4271 = vperm.xlu0 %4270, %v4169
      %v4272 = vpop.permute.xlu0 %4271
      %4275 = vset.pattern.permute.xlu0 0
      %4276 = vperm.xlu0 %4275, %v4170
      %v4277 = vpop.permute.xlu0 %4276
      %4280 = vset.pattern.permute.xlu0 0
      %4281 = vperm.xlu0 %4280, %v4171
      %v4282 = vpop.permute.xlu0 %4281
      %4285 = vset.pattern.permute.xlu0 0
      %4286 = vperm.xlu0 %4285, %v4172
      %v4287 = vpop.permute.xlu0 %4286
      %4290 = vset.pattern.permute.xlu0 0
      %4291 = vperm.xlu0 %4290, %v4173
      %v4292 = vpop.permute.xlu0 %4291
      %4295 = vset.pattern.permute.xlu0 0
      %4296 = vperm.xlu0 %4295, %v4174
      %v4297 = vpop.permute.xlu0 %4296
      %4300 = vset.pattern.permute.xlu0 0
      %4301 = vperm.xlu0 %4300, %v4175
      %v4302 = vpop.permute.xlu0 %4301
      %4305 = vset.pattern.permute.xlu0 0
      %4306 = vperm.xlu0 %4305, %v4176
      %v4307 = vpop.permute.xlu0 %4306
      %4310 = vset.pattern.permute.xlu0 0
      %4311 = vperm.xlu0 %4310, %v4177
      %v4312 = vpop.permute.xlu0 %4311
      %4315 = vset.pattern.permute.xlu0 0
      %4316 = vperm.xlu0 %4315, %v4178
      %v4317 = vpop.permute.xlu0 %4316
      %4320 = vset.pattern.permute.xlu0 0
      %4321 = vperm.xlu0 %4320, %v4179
      %v4322 = vpop.permute.xlu0 %4321
      %4325 = vset.pattern.permute.xlu0 0
      %4326 = vperm.xlu0 %4325, %v4180
      %v4327 = vpop.permute.xlu0 %4326
      %4330 = vset.pattern.permute.xlu0 0
      %4331 = vperm.xlu0 %4330, %v4181
      %v4332 = vpop.permute.xlu0 %4331
      %4335 = vset.pattern.permute.xlu0 0
      %4336 = vperm.xlu0 %4335, %v4182
      %v4337 = vpop.permute.xlu0 %4336
      %4340 = vset.pattern.permute.xlu0 0
      %4341 = vperm.xlu0 %4340, %v4183
      %v4342 = vpop.permute.xlu0 %4341
      %4345 = vset.pattern.permute.xlu0 0
      %4346 = vperm.xlu0 %4345, %v4184
      %v4347 = vpop.permute.xlu0 %4346
      %4350 = vset.pattern.permute.xlu0 0
      %4351 = vperm.xlu0 %4350, %v4185
      %v4352 = vpop.permute.xlu0 %4351
      %4355 = vset.pattern.permute.xlu0 0
      %4356 = vperm.xlu0 %4355, %v4186
      %v4357 = vpop.permute.xlu0 %4356
      %4360 = vset.pattern.permute.xlu0 0
      %4361 = vperm.xlu0 %4360, %v4187
      %v4362 = vpop.permute.xlu0 %4361
      %4365 = vset.pattern.permute.xlu0 0
      %4366 = vperm.xlu0 %4365, %v4188
      %v4367 = vpop.permute.xlu0 %4366
      %4370 = vset.pattern.permute.xlu0 0
      %4371 = vperm.xlu0 %4370, %v4189
      %v4372 = vpop.permute.xlu0 %4371
      %4375 = vset.pattern.permute.xlu0 0
      %4376 = vperm.xlu0 %4375, %v4190
      %v4377 = vpop.permute.xlu0 %4376
      %4380 = vset.pattern.permute.xlu0 0
      %4381 = vperm.xlu0 %4380, %v4191
      %v4382 = vpop.permute.xlu0 %4381
      %4385 = vset.pattern.permute.xlu0 0
      %4386 = vperm.xlu0 %4385, %v4192
      %v4387 = vpop.permute.xlu0 %4386
      %4390 = vset.pattern.permute.xlu0 0
      %4391 = vperm.xlu0 %4390, %v4193
      %v4392 = vpop.permute.xlu0 %4391
      %4395 = vset.pattern.permute.xlu0 0
      %4396 = vperm.xlu0 %4395, %v4194
      %v4397 = vpop.permute.xlu0 %4396
      %4400 = vset.pattern.permute.xlu0 0
      %4401 = vperm.xlu0 %4400, %v4195
      %v4402 = vpop.permute.xlu0 %4401
      %4405 = vset.pattern.permute.xlu0 0
      %4406 = vperm.xlu0 %4405, %v4196
      %v4407 = vpop.permute.xlu0 %4406
      %4410 = vset.pattern.permute.xlu0 0
      %4411 = vperm.xlu0 %4410, %v4197
      %v4412 = vpop.permute.xlu0 %4411
      %4415 = vset.pattern.permute.xlu0 0
      %4416 = vperm.xlu0 %4415, %v4198
      %v4417 = vpop.permute.xlu0 %4416
      %4420 = vset.pattern.permute.xlu0 0
      %4421 = vperm.xlu0 %4420, %v4199
      %v4422 = vpop.permute.xlu0 %4421
      %4425 = vset.pattern.permute.xlu0 0
      %4426 = vperm.xlu0 %4425, %v4200
      %v4427 = vpop.permute.xlu0 %4426
      %4430 = vset.pattern.permute.xlu0 0
      %4431 = vperm.xlu0 %4430, %v4201
      %v4432 = vpop.permute.xlu0 %4431
      %4435 = vset.pattern.permute.xlu0 0
      %4436 = vperm.xlu0 %4435, %v4202
      %v4437 = vpop.permute.xlu0 %4436
      %4440 = vset.pattern.permute.xlu0 0
      %4441 = vperm.xlu0 %4440, %v4203
      %v4442 = vpop.permute.xlu0 %4441
      %4445 = vset.pattern.permute.xlu0 0
      %4446 = vperm.xlu0 %4445, %v4204
      %v4447 = vpop.permute.xlu0 %4446
      %4450 = vset.pattern.permute.xlu0 0
      %4451 = vperm.xlu0 %4450, %v4205
      %v4452 = vpop.permute.xlu0 %4451
      %4455 = vset.pattern.permute.xlu0 0
      %4456 = vperm.xlu0 %4455, %v4206
      %v4457 = vpop.permute.xlu0 %4456
      %4460 = vset.pattern.permute.xlu0 0
      %4461 = vperm.xlu0 %4460, %v4207
      %v4462 = vpop.permute.xlu0 %4461
      %4465 = vset.pattern.permute.xlu0 0
      %4466 = vperm.xlu0 %4465, %v4208
      %v4467 = vpop.permute.xlu0 %4466
      %4470 = vset.pattern.permute.xlu0 0
      %4471 = vperm.xlu0 %4470, %v4209
      %v4472 = vpop.permute.xlu0 %4471
      %4475 = vset.pattern.permute.xlu0 0
      %4476 = vperm.xlu0 %4475, %v4210
      %v4477 = vpop.permute.xlu0 %4476
      %4480 = vset.pattern.permute.xlu0 0
      %4481 = vperm.xlu0 %4480, %v4211
      %v4482 = vpop.permute.xlu0 %4481
      %4485 = vset.pattern.permute.xlu0 0
      %4486 = vperm.xlu0 %4485, %v4212
      %v4487 = vpop.permute.xlu0 %4486
      %4490 = vset.pattern.permute.xlu0 0
      %4491 = vperm.xlu0 %4490, %v4213
      %v4492 = vpop.permute.xlu0 %4491
      %4495 = vset.pattern.permute.xlu0 0
      %4496 = vperm.xlu0 %4495, %v4214
      %v4497 = vpop.permute.xlu0 %4496
      %4500 = vset.pattern.permute.xlu0 0
      %4501 = vperm.xlu0 %4500, %v4215
      %v4502 = vpop.permute.xlu0 %4501
      %4505 = vset.pattern.permute.xlu0 0
      %4506 = vperm.xlu0 %4505, %v4216
      %v4507 = vpop.permute.xlu0 %4506
      %4510 = vset.pattern.permute.xlu0 0
      %4511 = vperm.xlu0 %4510, %v4217
      %v4512 = vpop.permute.xlu0 %4511
      %4515 = vset.pattern.permute.xlu0 0
      %4516 = vperm.xlu0 %4515, %v4218
      %v4517 = vpop.permute.xlu0 %4516
      %4520 = vset.pattern.permute.xlu0 0
      %4521 = vperm.xlu0 %4520, %v4219
      %v4522 = vpop.permute.xlu0 %4521
      %4525 = vset.pattern.permute.xlu0 0
      %4526 = vperm.xlu0 %4525, %v4220
      %v4527 = vpop.permute.xlu0 %4526
      %4530 = vset.pattern.permute.xlu0 0
      %4531 = vperm.xlu0 %4530, %v4221
      %v4532 = vpop.permute.xlu0 %4531
      %4535 = vset.pattern.permute.xlu0 0
      %4536 = vperm.xlu0 %4535, %v4222
      %v4537 = vpop.permute.xlu0 %4536
      %4540 = vset.pattern.permute.xlu0 0
      %4541 = vperm.xlu0 %4540, %v4223
      %v4542 = vpop.permute.xlu0 %4541
      %4545 = vset.pattern.permute.xlu0 0
      %4546 = vperm.xlu0 %4545, %v4224
      %v4547 = vpop.permute.xlu0 %4546
      %4550 = vset.pattern.permute.xlu0 0
      %4551 = vperm.xlu0 %4550, %v4225
      %v4552 = vpop.permute.xlu0 %4551
      %4555 = vset.pattern.permute.xlu0 0
      %4556 = vperm.xlu0 %4555, %v4226
      %v4557 = vpop.permute.xlu0 %4556
      %4560 = vset.pattern.permute.xlu0 0
      %4561 = vperm.xlu0 %4560, %v4227
      %v4562 = vpop.permute.xlu0 %4561
      %4565 = vset.pattern.permute.xlu0 0
      %4566 = vperm.xlu0 %4565, %v4228
      %v4567 = vpop.permute.xlu0 %4566
      %4570 = vset.pattern.permute.xlu0 0
      %4571 = vperm.xlu0 %4570, %v4229
      %v4572 = vpop.permute.xlu0 %4571
      %4575 = vset.pattern.permute.xlu0 0
      %4576 = vperm.xlu0 %4575, %v4230
      %v4577 = vpop.permute.xlu0 %4576
      %4580 = vset.pattern.permute.xlu0 0
      %4581 = vperm.xlu0 %4580, %v4231
      %v4582 = vpop.permute.xlu0 %4581
      %4585 = vset.pattern.permute.xlu0 0
      %4586 = vperm.xlu0 %4585, %v4232
      %v4587 = vpop.permute.xlu0 %4586
      %4590 = vset.pattern.permute.xlu0 0
      %4591 = vperm.xlu0 %4590, %v4233
      %v4592 = vpop.permute.xlu0 %4591
      %v4594 = vmul.f32 %v4090, %v4237
      %v4595 = vmul.f32 %v4091, %v4242
      %v4596 = vmul.f32 %v4092, %v4247
      %v4597 = vmul.f32 %v4093, %v4252
      %v4598 = vmul.f32 %v4094, %v4257
      %v4599 = vmul.f32 %v4095, %v4262
      %v4600 = vmul.f32 %v4096, %v4267
      %v4601 = vmul.f32 %v4097, %v4272
      %v4602 = vmul.f32 %v4098, %v4277
      %v4603 = vmul.f32 %v4099, %v4282
      %v4604 = vmul.f32 %v4100, %v4287
      %v4605 = vmul.f32 %v4101, %v4292
      %v4606 = vmul.f32 %v4102, %v4297
      %v4607 = vmul.f32 %v4103, %v4302
      %v4608 = vmul.f32 %v4104, %v4307
      %v4609 = vmul.f32 %v4105, %v4312
      %v4610 = vmul.f32 %v4106, %v4317
      %v4611 = vmul.f32 %v4107, %v4322
      %v4612 = vmul.f32 %v4108, %v4327
      %v4613 = vmul.f32 %v4109, %v4332
      %v4614 = vmul.f32 %v4110, %v4337
      %v4615 = vmul.f32 %v4111, %v4342
      %v4616 = vmul.f32 %v4112, %v4347
      %v4617 = vmul.f32 %v4113, %v4352
      %v4618 = vmul.f32 %v4114, %v4357
      %v4619 = vmul.f32 %v4115, %v4362
      %v4620 = vmul.f32 %v4116, %v4367
      %v4621 = vmul.f32 %v4117, %v4372
      %v4622 = vmul.f32 %v4118, %v4377
      %v4623 = vmul.f32 %v4119, %v4382
      %v4624 = vmul.f32 %v4120, %v4387
      %v4625 = vmul.f32 %v4121, %v4392
      %v4626 = vmul.f32 %v4122, %v4397
      %v4627 = vmul.f32 %v4123, %v4402
      %v4628 = vmul.f32 %v4124, %v4407
      %v4629 = vmul.f32 %v4125, %v4412
      %v4630 = vmul.f32 %v4126, %v4417
      %v4631 = vmul.f32 %v4127, %v4422
      %v4632 = vmul.f32 %v4128, %v4427
      %v4633 = vmul.f32 %v4129, %v4432
      %v4634 = vmul.f32 %v4130, %v4437
      %v4635 = vmul.f32 %v4131, %v4442
      %v4636 = vmul.f32 %v4132, %v4447
      %v4637 = vmul.f32 %v4133, %v4452
      %v4638 = vmul.f32 %v4134, %v4457
      %v4639 = vmul.f32 %v4135, %v4462
      %v4640 = vmul.f32 %v4136, %v4467
      %v4641 = vmul.f32 %v4137, %v4472
      %v4642 = vmul.f32 %v4138, %v4477
      %v4643 = vmul.f32 %v4139, %v4482
      %v4644 = vmul.f32 %v4140, %v4487
      %v4645 = vmul.f32 %v4141, %v4492
      %v4646 = vmul.f32 %v4142, %v4497
      %v4647 = vmul.f32 %v4143, %v4502
      %v4648 = vmul.f32 %v4144, %v4507
      %v4649 = vmul.f32 %v4145, %v4512
      %v4650 = vmul.f32 %v4146, %v4517
      %v4651 = vmul.f32 %v4147, %v4522
      %v4652 = vmul.f32 %v4148, %v4527
      %v4653 = vmul.f32 %v4149, %v4532
      %v4654 = vmul.f32 %v4150, %v4537
      %v4655 = vmul.f32 %v4151, %v4542
      %v4656 = vmul.f32 %v4152, %v4547
      %v4657 = vmul.f32 %v4153, %v4552
      %v4658 = vmul.f32 %v4154, %v4557
      %v4659 = vmul.f32 %v4155, %v4562
      %v4660 = vmul.f32 %v4156, %v4567
      %v4661 = vmul.f32 %v4157, %v4572
      %v4662 = vmul.f32 %v4158, %v4577
      %v4663 = vmul.f32 %v4159, %v4582
      %v4664 = vmul.f32 %v4160, %v4587
      %v4665 = vmul.f32 %v4161, %v4592
      %vm4666 = vcmask 326656
      %4667 = vst.msk [vmem:[#allocation2] sm:$0xff] %vm4666, %v4594
      %4668 = vst.msk [vmem:[#allocation2 + $0x8] sm:$0xff] %vm4666, %v4595
      %4669 = vst.msk [vmem:[#allocation2 + $0x10] sm:$0xff] %vm4666, %v4596
      %4670 = vst.msk [vmem:[#allocation2 + $0x18] sm:$0xff] %vm4666, %v4597
      %4671 = vst.msk [vmem:[#allocation2 + $0x20] sm:$0xff] %vm4666, %v4598
      %4672 = vst.msk [vmem:[#allocation2 + $0x28] sm:$0xff] %vm4666, %v4599
      %4673 = vst.msk [vmem:[#allocation2 + $0x30] sm:$0xff] %vm4666, %v4600
      %4674 = vst.msk [vmem:[#allocation2 + $0x38] sm:$0xff] %vm4666, %v4601
      %4675 = vst.msk [vmem:[#allocation2 + $0x40] sm:$0xff] %vm4666, %v4602
      %4676 = vst.msk [vmem:[#allocation2 + $0x48] sm:$0xff] %vm4666, %v4603
      %4677 = vst.msk [vmem:[#allocation2 + $0x50] sm:$0xff] %vm4666, %v4604
      %4678 = vst.msk [vmem:[#allocation2 + $0x58] sm:$0xff] %vm4666, %v4605
      %4679 = vst.msk [vmem:[#allocation2 + $0x60] sm:$0xff] %vm4666, %v4606
      %4680 = vst.msk [vmem:[#allocation2 + $0x68] sm:$0xff] %vm4666, %v4607
      %4681 = vst.msk [vmem:[#allocation2 + $0x70] sm:$0xff] %vm4666, %v4608
      %4682 = vst.msk [vmem:[#allocation2 + $0x78] sm:$0xff] %vm4666, %v4609
      %4683 = vst.msk [vmem:[#allocation2 + $0x80] sm:$0xff] %vm4666, %v4610
      %4684 = vst.msk [vmem:[#allocation2 + $0x88] sm:$0xff] %vm4666, %v4611
      %4685 = vst.msk [vmem:[#allocation2 + $0x90] sm:$0xff] %vm4666, %v4612
      %4686 = vst.msk [vmem:[#allocation2 + $0x98] sm:$0xff] %vm4666, %v4613
      %4687 = vst.msk [vmem:[#allocation2 + $0xa0] sm:$0xff] %vm4666, %v4614
      %4688 = vst.msk [vmem:[#allocation2 + $0xa8] sm:$0xff] %vm4666, %v4615
      %4689 = vst.msk [vmem:[#allocation2 + $0xb0] sm:$0xff] %vm4666, %v4616
      %4690 = vst.msk [vmem:[#allocation2 + $0xb8] sm:$0xff] %vm4666, %v4617
      %4691 = vst.msk [vmem:[#allocation2 + $0xc0] sm:$0xff] %vm4666, %v4618
      %4692 = vst.msk [vmem:[#allocation2 + $0xc8] sm:$0xff] %vm4666, %v4619
      %4693 = vst.msk [vmem:[#allocation2 + $0xd0] sm:$0xff] %vm4666, %v4620
      %4694 = vst.msk [vmem:[#allocation2 + $0xd8] sm:$0xff] %vm4666, %v4621
      %4695 = vst.msk [vmem:[#allocation2 + $0xe0] sm:$0xff] %vm4666, %v4622
      %4696 = vst.msk [vmem:[#allocation2 + $0xe8] sm:$0xff] %vm4666, %v4623
      %4697 = vst.msk [vmem:[#allocation2 + $0xf0] sm:$0xff] %vm4666, %v4624
      %4698 = vst.msk [vmem:[#allocation2 + $0xf8] sm:$0xff] %vm4666, %v4625
      %4699 = vst.msk [vmem:[#allocation2 + $0x100] sm:$0xff] %vm4666, %v4626
      %4700 = vst.msk [vmem:[#allocation2 + $0x108] sm:$0xff] %vm4666, %v4627
      %4701 = vst.msk [vmem:[#allocation2 + $0x110] sm:$0xff] %vm4666, %v4628
      %4702 = vst.msk [vmem:[#allocation2 + $0x118] sm:$0xff] %vm4666, %v4629
      %4703 = vst.msk [vmem:[#allocation2 + $0x120] sm:$0xff] %vm4666, %v4630
      %4704 = vst.msk [vmem:[#allocation2 + $0x128] sm:$0xff] %vm4666, %v4631
      %4705 = vst.msk [vmem:[#allocation2 + $0x130] sm:$0xff] %vm4666, %v4632
      %4706 = vst.msk [vmem:[#allocation2 + $0x138] sm:$0xff] %vm4666, %v4633
      %4707 = vst.msk [vmem:[#allocation2 + $0x140] sm:$0xff] %vm4666, %v4634
      %4708 = vst.msk [vmem:[#allocation2 + $0x148] sm:$0xff] %vm4666, %v4635
      %4709 = vst.msk [vmem:[#allocation2 + $0x150] sm:$0xff] %vm4666, %v4636
      %4710 = vst.msk [vmem:[#allocation2 + $0x158] sm:$0xff] %vm4666, %v4637
      %4711 = vst.msk [vmem:[#allocation2 + $0x160] sm:$0xff] %vm4666, %v4638
      %4712 = vst.msk [vmem:[#allocation2 + $0x168] sm:$0xff] %vm4666, %v4639
      %4713 = vst.msk [vmem:[#allocation2 + $0x170] sm:$0xff] %vm4666, %v4640
      %4714 = vst.msk [vmem:[#allocation2 + $0x178] sm:$0xff] %vm4666, %v4641
      %4715 = vst.msk [vmem:[#allocation2 + $0x180] sm:$0xff] %vm4666, %v4642
      %4716 = vst.msk [vmem:[#allocation2 + $0x188] sm:$0xff] %vm4666, %v4643
      %4717 = vst.msk [vmem:[#allocation2 + $0x190] sm:$0xff] %vm4666, %v4644
      %4718 = vst.msk [vmem:[#allocation2 + $0x198] sm:$0xff] %vm4666, %v4645
      %4719 = vst.msk [vmem:[#allocation2 + $0x1a0] sm:$0xff] %vm4666, %v4646
      %4720 = vst.msk [vmem:[#allocation2 + $0x1a8] sm:$0xff] %vm4666, %v4647
      %4721 = vst.msk [vmem:[#allocation2 + $0x1b0] sm:$0xff] %vm4666, %v4648
      %4722 = vst.msk [vmem:[#allocation2 + $0x1b8] sm:$0xff] %vm4666, %v4649
      %4723 = vst.msk [vmem:[#allocation2 + $0x1c0] sm:$0xff] %vm4666, %v4650
      %4724 = vst.msk [vmem:[#allocation2 + $0x1c8] sm:$0xff] %vm4666, %v4651
      %4725 = vst.msk [vmem:[#allocation2 + $0x1d0] sm:$0xff] %vm4666, %v4652
      %4726 = vst.msk [vmem:[#allocation2 + $0x1d8] sm:$0xff] %vm4666, %v4653
      %4727 = vst.msk [vmem:[#allocation2 + $0x1e0] sm:$0xff] %vm4666, %v4654
      %4728 = vst.msk [vmem:[#allocation2 + $0x1e8] sm:$0xff] %vm4666, %v4655
      %4729 = vst.msk [vmem:[#allocation2 + $0x1f0] sm:$0xff] %vm4666, %v4656
      %4730 = vst.msk [vmem:[#allocation2 + $0x1f8] sm:$0xff] %vm4666, %v4657
      %4731 = vst.msk [vmem:[#allocation2 + $0x200] sm:$0xff] %vm4666, %v4658
      %4732 = vst.msk [vmem:[#allocation2 + $0x208] sm:$0xff] %vm4666, %v4659
      %4733 = vst.msk [vmem:[#allocation2 + $0x210] sm:$0xff] %vm4666, %v4660
      %4734 = vst.msk [vmem:[#allocation2 + $0x218] sm:$0xff] %vm4666, %v4661
      %4735 = vst.msk [vmem:[#allocation2 + $0x220] sm:$0xff] %vm4666, %v4662
      %4736 = vst.msk [vmem:[#allocation2 + $0x228] sm:$0xff] %vm4666, %v4663
      %4737 = vst.msk [vmem:[#allocation2 + $0x230] sm:$0xff] %vm4666, %v4664
      %4738 = vst.msk [vmem:[#allocation2 + $0x238] sm:$0xff] %vm4666, %v4665
      %4739 = vst.msk [vmem:[#allocation2 + $0x240] sm:$0xff] %vm4666, 0.0
      %4740 = vst.msk [vmem:[#allocation2 + $0x248] sm:$0xff] %vm4666, 0.0
      %4741 = vst.msk [vmem:[#allocation2 + $0x250] sm:$0xff] %vm4666, 0.0
      %4742 = vst.msk [vmem:[#allocation2 + $0x258] sm:$0xff] %vm4666, 0.0
      %4743 = vst.msk [vmem:[#allocation2 + $0x260] sm:$0xff] %vm4666, 0.0
      %4744 = vst.msk [vmem:[#allocation2 + $0x268] sm:$0xff] %vm4666, 0.0
      %4745 = vst.msk [vmem:[#allocation2 + $0x270] sm:$0xff] %vm4666, 0.0
      %4746 = vst.msk [vmem:[#allocation2 + $0x278] sm:$0xff] %vm4666, 0.0
      %4747 = vst.msk [vmem:[#allocation2 + $0x280] sm:$0xff] %vm4666, 0.0
      %v4748 = vld [vmem:[#allocation2 + $0x1] sm:$0xff]
      %v4749 = vld [vmem:[#allocation2 + $0x9] sm:$0xff]
      %v4750 = vld [vmem:[#allocation2 + $0x11] sm:$0xff]
      %v4751 = vld [vmem:[#allocation2 + $0x19] sm:$0xff]
      %v4752 = vld [vmem:[#allocation2 + $0x21] sm:$0xff]
      %v4753 = vld [vmem:[#allocation2 + $0x29] sm:$0xff]
      %v4754 = vld [vmem:[#allocation2 + $0x31] sm:$0xff]
      %v4755 = vld [vmem:[#allocation2 + $0x39] sm:$0xff]
      %v4756 = vld [vmem:[#allocation2 + $0x41] sm:$0xff]
      %v4757 = vld [vmem:[#allocation2 + $0x49] sm:$0xff]
      %v4758 = vld [vmem:[#allocation2 + $0x51] sm:$0xff]
      %v4759 = vld [vmem:[#allocation2 + $0x59] sm:$0xff]
      %v4760 = vld [vmem:[#allocation2 + $0x61] sm:$0xff]
      %v4761 = vld [vmem:[#allocation2 + $0x69] sm:$0xff]
      %v4762 = vld [vmem:[#allocation2 + $0x71] sm:$0xff]
      %v4763 = vld [vmem:[#allocation2 + $0x79] sm:$0xff]
      %v4764 = vld [vmem:[#allocation2 + $0x81] sm:$0xff]
      %v4765 = vld [vmem:[#allocation2 + $0x89] sm:$0xff]
      %v4766 = vld [vmem:[#allocation2 + $0x91] sm:$0xff]
      %v4767 = vld [vmem:[#allocation2 + $0x99] sm:$0xff]
      %v4768 = vld [vmem:[#allocation2 + $0xa1] sm:$0xff]
      %v4769 = vld [vmem:[#allocation2 + $0xa9] sm:$0xff]
      %v4770 = vld [vmem:[#allocation2 + $0xb1] sm:$0xff]
      %v4771 = vld [vmem:[#allocation2 + $0xb9] sm:$0xff]
      %v4772 = vld [vmem:[#allocation2 + $0xc1] sm:$0xff]
      %v4773 = vld [vmem:[#allocation2 + $0xc9] sm:$0xff]
      %v4774 = vld [vmem:[#allocation2 + $0xd1] sm:$0xff]
      %v4775 = vld [vmem:[#allocation2 + $0xd9] sm:$0xff]
      %v4776 = vld [vmem:[#allocation2 + $0xe1] sm:$0xff]
      %v4777 = vld [vmem:[#allocation2 + $0xe9] sm:$0xff]
      %v4778 = vld [vmem:[#allocation2 + $0xf1] sm:$0xff]
      %v4779 = vld [vmem:[#allocation2 + $0xf9] sm:$0xff]
      %v4780 = vld [vmem:[#allocation2 + $0x101] sm:$0xff]
      %v4781 = vld [vmem:[#allocation2 + $0x109] sm:$0xff]
      %v4782 = vld [vmem:[#allocation2 + $0x111] sm:$0xff]
      %v4783 = vld [vmem:[#allocation2 + $0x119] sm:$0xff]
      %v4784 = vld [vmem:[#allocation2 + $0x121] sm:$0xff]
      %v4785 = vld [vmem:[#allocation2 + $0x129] sm:$0xff]
      %v4786 = vld [vmem:[#allocation2 + $0x131] sm:$0xff]
      %v4787 = vld [vmem:[#allocation2 + $0x139] sm:$0xff]
      %v4788 = vld [vmem:[#allocation2 + $0x141] sm:$0xff]
      %v4789 = vld [vmem:[#allocation2 + $0x149] sm:$0xff]
      %v4790 = vld [vmem:[#allocation2 + $0x151] sm:$0xff]
      %v4791 = vld [vmem:[#allocation2 + $0x159] sm:$0xff]
      %v4792 = vld [vmem:[#allocation2 + $0x161] sm:$0xff]
      %v4793 = vld [vmem:[#allocation2 + $0x169] sm:$0xff]
      %v4794 = vld [vmem:[#allocation2 + $0x171] sm:$0xff]
      %v4795 = vld [vmem:[#allocation2 + $0x179] sm:$0xff]
      %v4796 = vld [vmem:[#allocation2 + $0x181] sm:$0xff]
      %v4797 = vld [vmem:[#allocation2 + $0x189] sm:$0xff]
      %v4798 = vld [vmem:[#allocation2 + $0x191] sm:$0xff]
      %v4799 = vld [vmem:[#allocation2 + $0x199] sm:$0xff]
      %v4800 = vld [vmem:[#allocation2 + $0x1a1] sm:$0xff]
      %v4801 = vld [vmem:[#allocation2 + $0x1a9] sm:$0xff]
      %v4802 = vld [vmem:[#allocation2 + $0x1b1] sm:$0xff]
      %v4803 = vld [vmem:[#allocation2 + $0x1b9] sm:$0xff]
      %v4804 = vld [vmem:[#allocation2 + $0x1c1] sm:$0xff]
      %v4805 = vld [vmem:[#allocation2 + $0x1c9] sm:$0xff]
      %v4806 = vld [vmem:[#allocation2 + $0x1d1] sm:$0xff]
      %v4807 = vld [vmem:[#allocation2 + $0x1d9] sm:$0xff]
      %v4808 = vld [vmem:[#allocation2 + $0x1e1] sm:$0xff]
      %v4809 = vld [vmem:[#allocation2 + $0x1e9] sm:$0xff]
      %v4810 = vld [vmem:[#allocation2 + $0x1f1] sm:$0xff]
      %v4811 = vld [vmem:[#allocation2 + $0x1f9] sm:$0xff]
      %v4812 = vld [vmem:[#allocation2 + $0x201] sm:$0xff]
      %v4813 = vld [vmem:[#allocation2 + $0x209] sm:$0xff]
      %v4814 = vld [vmem:[#allocation2 + $0x211] sm:$0xff]
      %v4815 = vld [vmem:[#allocation2 + $0x219] sm:$0xff]
      %v4816 = vld [vmem:[#allocation2 + $0x221] sm:$0xff]
      %v4817 = vld [vmem:[#allocation2 + $0x229] sm:$0xff]
      %v4818 = vld [vmem:[#allocation2 + $0x231] sm:$0xff]
      %v4819 = vld [vmem:[#allocation2 + $0x239] sm:$0xff]
      %v4820 = vld [vmem:[#allocation2] sm:$0xff]
      %v4821 = vld [vmem:[#allocation2 + $0x8] sm:$0xff]
      %v4822 = vld [vmem:[#allocation2 + $0x10] sm:$0xff]
      %v4823 = vld [vmem:[#allocation2 + $0x18] sm:$0xff]
      %v4824 = vld [vmem:[#allocation2 + $0x20] sm:$0xff]
      %v4825 = vld [vmem:[#allocation2 + $0x28] sm:$0xff]
      %v4826 = vld [vmem:[#allocation2 + $0x30] sm:$0xff]
      %v4827 = vld [vmem:[#allocation2 + $0x38] sm:$0xff]
      %v4828 = vld [vmem:[#allocation2 + $0x40] sm:$0xff]
      %v4829 = vld [vmem:[#allocation2 + $0x48] sm:$0xff]
      %v4830 = vld [vmem:[#allocation2 + $0x50] sm:$0xff]
      %v4831 = vld [vmem:[#allocation2 + $0x58] sm:$0xff]
      %v4832 = vld [vmem:[#allocation2 + $0x60] sm:$0xff]
      %v4833 = vld [vmem:[#allocation2 + $0x68] sm:$0xff]
      %v4834 = vld [vmem:[#allocation2 + $0x70] sm:$0xff]
      %v4835 = vld [vmem:[#allocation2 + $0x78] sm:$0xff]
      %v4836 = vld [vmem:[#allocation2 + $0x80] sm:$0xff]
      %v4837 = vld [vmem:[#allocation2 + $0x88] sm:$0xff]
      %v4838 = vld [vmem:[#allocation2 + $0x90] sm:$0xff]
      %v4839 = vld [vmem:[#allocation2 + $0x98] sm:$0xff]
      %v4840 = vld [vmem:[#allocation2 + $0xa0] sm:$0xff]
      %v4841 = vld [vmem:[#allocation2 + $0xa8] sm:$0xff]
      %v4842 = vld [vmem:[#allocation2 + $0xb0] sm:$0xff]
      %v4843 = vld [vmem:[#allocation2 + $0xb8] sm:$0xff]
      %v4844 = vld [vmem:[#allocation2 + $0xc0] sm:$0xff]
      %v4845 = vld [vmem:[#allocation2 + $0xc8] sm:$0xff]
      %v4846 = vld [vmem:[#allocation2 + $0xd0] sm:$0xff]
      %v4847 = vld [vmem:[#allocation2 + $0xd8] sm:$0xff]
      %v4848 = vld [vmem:[#allocation2 + $0xe0] sm:$0xff]
      %v4849 = vld [vmem:[#allocation2 + $0xe8] sm:$0xff]
      %v4850 = vld [vmem:[#allocation2 + $0xf0] sm:$0xff]
      %v4851 = vld [vmem:[#allocation2 + $0xf8] sm:$0xff]
      %v4852 = vld [vmem:[#allocation2 + $0x100] sm:$0xff]
      %v4853 = vld [vmem:[#allocation2 + $0x108] sm:$0xff]
      %v4854 = vld [vmem:[#allocation2 + $0x110] sm:$0xff]
      %v4855 = vld [vmem:[#allocation2 + $0x118] sm:$0xff]
      %v4856 = vld [vmem:[#allocation2 + $0x120] sm:$0xff]
      %v4857 = vld [vmem:[#allocation2 + $0x128] sm:$0xff]
      %v4858 = vld [vmem:[#allocation2 + $0x130] sm:$0xff]
      %v4859 = vld [vmem:[#allocation2 + $0x138] sm:$0xff]
      %v4860 = vld [vmem:[#allocation2 + $0x140] sm:$0xff]
      %v4861 = vld [vmem:[#allocation2 + $0x148] sm:$0xff]
      %v4862 = vld [vmem:[#allocation2 + $0x150] sm:$0xff]
      %v4863 = vld [vmem:[#allocation2 + $0x158] sm:$0xff]
      %v4864 = vld [vmem:[#allocation2 + $0x160] sm:$0xff]
      %v4865 = vld [vmem:[#allocation2 + $0x168] sm:$0xff]
      %v4866 = vld [vmem:[#allocation2 + $0x170] sm:$0xff]
      %v4867 = vld [vmem:[#allocation2 + $0x178] sm:$0xff]
      %v4868 = vld [vmem:[#allocation2 + $0x180] sm:$0xff]
      %v4869 = vld [vmem:[#allocation2 + $0x188] sm:$0xff]
      %v4870 = vld [vmem:[#allocation2 + $0x190] sm:$0xff]
      %v4871 = vld [vmem:[#allocation2 + $0x198] sm:$0xff]
      %v4872 = vld [vmem:[#allocation2 + $0x1a0] sm:$0xff]
      %v4873 = vld [vmem:[#allocation2 + $0x1a8] sm:$0xff]
      %v4874 = vld [vmem:[#allocation2 + $0x1b0] sm:$0xff]
      %v4875 = vld [vmem:[#allocation2 + $0x1b8] sm:$0xff]
      %v4876 = vld [vmem:[#allocation2 + $0x1c0] sm:$0xff]
      %v4877 = vld [vmem:[#allocation2 + $0x1c8] sm:$0xff]
      %v4878 = vld [vmem:[#allocation2 + $0x1d0] sm:$0xff]
      %v4879 = vld [vmem:[#allocation2 + $0x1d8] sm:$0xff]
      %v4880 = vld [vmem:[#allocation2 + $0x1e0] sm:$0xff]
      %v4881 = vld [vmem:[#allocation2 + $0x1e8] sm:$0xff]
      %v4882 = vld [vmem:[#allocation2 + $0x1f0] sm:$0xff]
      %v4883 = vld [vmem:[#allocation2 + $0x1f8] sm:$0xff]
      %v4884 = vld [vmem:[#allocation2 + $0x200] sm:$0xff]
      %v4885 = vld [vmem:[#allocation2 + $0x208] sm:$0xff]
      %v4886 = vld [vmem:[#allocation2 + $0x210] sm:$0xff]
      %v4887 = vld [vmem:[#allocation2 + $0x218] sm:$0xff]
      %v4888 = vld [vmem:[#allocation2 + $0x220] sm:$0xff]
      %v4889 = vld [vmem:[#allocation2 + $0x228] sm:$0xff]
      %v4890 = vld [vmem:[#allocation2 + $0x230] sm:$0xff]
      %v4891 = vld [vmem:[#allocation2 + $0x238] sm:$0xff]
      %v4892 = vld [vmem:[#allocation2 + $0x3] sm:$0xff]
      %v4893 = vld [vmem:[#allocation2 + $0xb] sm:$0xff]
      %v4894 = vld [vmem:[#allocation2 + $0x13] sm:$0xff]
      %v4895 = vld [vmem:[#allocation2 + $0x1b] sm:$0xff]
      %v4896 = vld [vmem:[#allocation2 + $0x23] sm:$0xff]
      %v4897 = vld [vmem:[#allocation2 + $0x2b] sm:$0xff]
      %v4898 = vld [vmem:[#allocation2 + $0x33] sm:$0xff]
      %v4899 = vld [vmem:[#allocation2 + $0x3b] sm:$0xff]
      %v4900 = vld [vmem:[#allocation2 + $0x43] sm:$0xff]
      %v4901 = vld [vmem:[#allocation2 + $0x4b] sm:$0xff]
      %v4902 = vld [vmem:[#allocation2 + $0x53] sm:$0xff]
      %v4903 = vld [vmem:[#allocation2 + $0x5b] sm:$0xff]
      %v4904 = vld [vmem:[#allocation2 + $0x63] sm:$0xff]
      %v4905 = vld [vmem:[#allocation2 + $0x6b] sm:$0xff]
      %v4906 = vld [vmem:[#allocation2 + $0x73] sm:$0xff]
      %v4907 = vld [vmem:[#allocation2 + $0x7b] sm:$0xff]
      %v4908 = vld [vmem:[#allocation2 + $0x83] sm:$0xff]
      %v4909 = vld [vmem:[#allocation2 + $0x8b] sm:$0xff]
      %v4910 = vld [vmem:[#allocation2 + $0x93] sm:$0xff]
      %v4911 = vld [vmem:[#allocation2 + $0x9b] sm:$0xff]
      %v4912 = vld [vmem:[#allocation2 + $0xa3] sm:$0xff]
      %v4913 = vld [vmem:[#allocation2 + $0xab] sm:$0xff]
      %v4914 = vld [vmem:[#allocation2 + $0xb3] sm:$0xff]
      %v4915 = vld [vmem:[#allocation2 + $0xbb] sm:$0xff]
      %v4916 = vld [vmem:[#allocation2 + $0xc3] sm:$0xff]
      %v4917 = vld [vmem:[#allocation2 + $0xcb] sm:$0xff]
      %v4918 = vld [vmem:[#allocation2 + $0xd3] sm:$0xff]
      %v4919 = vld [vmem:[#allocation2 + $0xdb] sm:$0xff]
      %v4920 = vld [vmem:[#allocation2 + $0xe3] sm:$0xff]
      %v4921 = vld [vmem:[#allocation2 + $0xeb] sm:$0xff]
      %v4922 = vld [vmem:[#allocation2 + $0xf3] sm:$0xff]
      %v4923 = vld [vmem:[#allocation2 + $0xfb] sm:$0xff]
      %v4924 = vld [vmem:[#allocation2 + $0x103] sm:$0xff]
      %v4925 = vld [vmem:[#allocation2 + $0x10b] sm:$0xff]
      %v4926 = vld [vmem:[#allocation2 + $0x113] sm:$0xff]
      %v4927 = vld [vmem:[#allocation2 + $0x11b] sm:$0xff]
      %v4928 = vld [vmem:[#allocation2 + $0x123] sm:$0xff]
      %v4929 = vld [vmem:[#allocation2 + $0x12b] sm:$0xff]
      %v4930 = vld [vmem:[#allocation2 + $0x133] sm:$0xff]
      %v4931 = vld [vmem:[#allocation2 + $0x13b] sm:$0xff]
      %v4932 = vld [vmem:[#allocation2 + $0x143] sm:$0xff]
      %v4933 = vld [vmem:[#allocation2 + $0x14b] sm:$0xff]
      %v4934 = vld [vmem:[#allocation2 + $0x153] sm:$0xff]
      %v4935 = vld [vmem:[#allocation2 + $0x15b] sm:$0xff]
      %v4936 = vld [vmem:[#allocation2 + $0x163] sm:$0xff]
      %v4937 = vld [vmem:[#allocation2 + $0x16b] sm:$0xff]
      %v4938 = vld [vmem:[#allocation2 + $0x173] sm:$0xff]
      %v4939 = vld [vmem:[#allocation2 + $0x17b] sm:$0xff]
      %v4940 = vld [vmem:[#allocation2 + $0x183] sm:$0xff]
      %v4941 = vld [vmem:[#allocation2 + $0x18b] sm:$0xff]
      %v4942 = vld [vmem:[#allocation2 + $0x193] sm:$0xff]
      %v4943 = vld [vmem:[#allocation2 + $0x19b] sm:$0xff]
      %v4944 = vld [vmem:[#allocation2 + $0x1a3] sm:$0xff]
      %v4945 = vld [vmem:[#allocation2 + $0x1ab] sm:$0xff]
      %v4946 = vld [vmem:[#allocation2 + $0x1b3] sm:$0xff]
      %v4947 = vld [vmem:[#allocation2 + $0x1bb] sm:$0xff]
      %v4948 = vld [vmem:[#allocation2 + $0x1c3] sm:$0xff]
      %v4949 = vld [vmem:[#allocation2 + $0x1cb] sm:$0xff]
      %v4950 = vld [vmem:[#allocation2 + $0x1d3] sm:$0xff]
      %v4951 = vld [vmem:[#allocation2 + $0x1db] sm:$0xff]
      %v4952 = vld [vmem:[#allocation2 + $0x1e3] sm:$0xff]
      %v4953 = vld [vmem:[#allocation2 + $0x1eb] sm:$0xff]
      %v4954 = vld [vmem:[#allocation2 + $0x1f3] sm:$0xff]
      %v4955 = vld [vmem:[#allocation2 + $0x1fb] sm:$0xff]
      %v4956 = vld [vmem:[#allocation2 + $0x203] sm:$0xff]
      %v4957 = vld [vmem:[#allocation2 + $0x20b] sm:$0xff]
      %v4958 = vld [vmem:[#allocation2 + $0x213] sm:$0xff]
      %v4959 = vld [vmem:[#allocation2 + $0x21b] sm:$0xff]
      %v4960 = vld [vmem:[#allocation2 + $0x223] sm:$0xff]
      %v4961 = vld [vmem:[#allocation2 + $0x22b] sm:$0xff]
      %v4962 = vld [vmem:[#allocation2 + $0x233] sm:$0xff]
      %v4963 = vld [vmem:[#allocation2 + $0x23b] sm:$0xff]
      %5036 = vrot.lane.b32.xlu0 %v4820, 40
      %v5037 = vpop.permute.xlu0 %5036
      %5038 = vrot.lane.b32.xlu0 %v4821, 40
      %v5039 = vpop.permute.xlu0 %5038
      %5040 = vrot.lane.b32.xlu0 %v4822, 40
      %v5041 = vpop.permute.xlu0 %5040
      %5042 = vrot.lane.b32.xlu0 %v4823, 40
      %v5043 = vpop.permute.xlu0 %5042
      %5044 = vrot.lane.b32.xlu0 %v4824, 40
      %v5045 = vpop.permute.xlu0 %5044
      %5046 = vrot.lane.b32.xlu0 %v4825, 40
      %v5047 = vpop.permute.xlu0 %5046
      %5048 = vrot.lane.b32.xlu0 %v4826, 40
      %v5049 = vpop.permute.xlu0 %5048
      %5050 = vrot.lane.b32.xlu0 %v4827, 40
      %v5051 = vpop.permute.xlu0 %5050
      %5052 = vrot.lane.b32.xlu0 %v4828, 40
      %v5053 = vpop.permute.xlu0 %5052
      %5054 = vrot.lane.b32.xlu0 %v4829, 40
      %v5055 = vpop.permute.xlu0 %5054
      %5056 = vrot.lane.b32.xlu0 %v4830, 40
      %v5057 = vpop.permute.xlu0 %5056
      %5058 = vrot.lane.b32.xlu0 %v4831, 40
      %v5059 = vpop.permute.xlu0 %5058
      %5060 = vrot.lane.b32.xlu0 %v4832, 40
      %v5061 = vpop.permute.xlu0 %5060
      %5062 = vrot.lane.b32.xlu0 %v4833, 40
      %v5063 = vpop.permute.xlu0 %5062
      %5064 = vrot.lane.b32.xlu0 %v4834, 40
      %v5065 = vpop.permute.xlu0 %5064
      %5066 = vrot.lane.b32.xlu0 %v4835, 40
      %v5067 = vpop.permute.xlu0 %5066
      %5068 = vrot.lane.b32.xlu0 %v4836, 40
      %v5069 = vpop.permute.xlu0 %5068
      %5070 = vrot.lane.b32.xlu0 %v4837, 40
      %v5071 = vpop.permute.xlu0 %5070
      %5072 = vrot.lane.b32.xlu0 %v4838, 40
      %v5073 = vpop.permute.xlu0 %5072
      %5074 = vrot.lane.b32.xlu0 %v4839, 40
      %v5075 = vpop.permute.xlu0 %5074
      %5076 = vrot.lane.b32.xlu0 %v4840, 40
      %v5077 = vpop.permute.xlu0 %5076
      %5078 = vrot.lane.b32.xlu0 %v4841, 40
      %v5079 = vpop.permute.xlu0 %5078
      %5080 = vrot.lane.b32.xlu0 %v4842, 40
      %v5081 = vpop.permute.xlu0 %5080
      %5082 = vrot.lane.b32.xlu0 %v4843, 40
      %v5083 = vpop.permute.xlu0 %5082
      %5084 = vrot.lane.b32.xlu0 %v4844, 40
      %v5085 = vpop.permute.xlu0 %5084
      %5086 = vrot.lane.b32.xlu0 %v4845, 40
      %v5087 = vpop.permute.xlu0 %5086
      %5088 = vrot.lane.b32.xlu0 %v4846, 40
      %v5089 = vpop.permute.xlu0 %5088
      %5090 = vrot.lane.b32.xlu0 %v4847, 40
      %v5091 = vpop.permute.xlu0 %5090
      %5092 = vrot.lane.b32.xlu0 %v4848, 40
      %v5093 = vpop.permute.xlu0 %5092
      %5094 = vrot.lane.b32.xlu0 %v4849, 40
      %v5095 = vpop.permute.xlu0 %5094
      %5096 = vrot.lane.b32.xlu0 %v4850, 40
      %v5097 = vpop.permute.xlu0 %5096
      %5098 = vrot.lane.b32.xlu0 %v4851, 40
      %v5099 = vpop.permute.xlu0 %5098
      %5100 = vrot.lane.b32.xlu0 %v4852, 40
      %v5101 = vpop.permute.xlu0 %5100
      %5102 = vrot.lane.b32.xlu0 %v4853, 40
      %v5103 = vpop.permute.xlu0 %5102
      %5104 = vrot.lane.b32.xlu0 %v4854, 40
      %v5105 = vpop.permute.xlu0 %5104
      %5106 = vrot.lane.b32.xlu0 %v4855, 40
      %v5107 = vpop.permute.xlu0 %5106
      %5108 = vrot.lane.b32.xlu0 %v4856, 40
      %v5109 = vpop.permute.xlu0 %5108
      %5110 = vrot.lane.b32.xlu0 %v4857, 40
      %v5111 = vpop.permute.xlu0 %5110
      %5112 = vrot.lane.b32.xlu0 %v4858, 40
      %v5113 = vpop.permute.xlu0 %5112
      %5114 = vrot.lane.b32.xlu0 %v4859, 40
      %v5115 = vpop.permute.xlu0 %5114
      %5116 = vrot.lane.b32.xlu0 %v4860, 40
      %v5117 = vpop.permute.xlu0 %5116
      %5118 = vrot.lane.b32.xlu0 %v4861, 40
      %v5119 = vpop.permute.xlu0 %5118
      %5120 = vrot.lane.b32.xlu0 %v4862, 40
      %v5121 = vpop.permute.xlu0 %5120
      %5122 = vrot.lane.b32.xlu0 %v4863, 40
      %v5123 = vpop.permute.xlu0 %5122
      %5124 = vrot.lane.b32.xlu0 %v4864, 40
      %v5125 = vpop.permute.xlu0 %5124
      %5126 = vrot.lane.b32.xlu0 %v4865, 40
      %v5127 = vpop.permute.xlu0 %5126
      %5128 = vrot.lane.b32.xlu0 %v4866, 40
      %v5129 = vpop.permute.xlu0 %5128
      %5130 = vrot.lane.b32.xlu0 %v4867, 40
      %v5131 = vpop.permute.xlu0 %5130
      %5132 = vrot.lane.b32.xlu0 %v4868, 40
      %v5133 = vpop.permute.xlu0 %5132
      %5134 = vrot.lane.b32.xlu0 %v4869, 40
      %v5135 = vpop.permute.xlu0 %5134
      %5136 = vrot.lane.b32.xlu0 %v4870, 40
      %v5137 = vpop.permute.xlu0 %5136
      %5138 = vrot.lane.b32.xlu0 %v4871, 40
      %v5139 = vpop.permute.xlu0 %5138
      %5140 = vrot.lane.b32.xlu0 %v4872, 40
      %v5141 = vpop.permute.xlu0 %5140
      %5142 = vrot.lane.b32.xlu0 %v4873, 40
      %v5143 = vpop.permute.xlu0 %5142
      %5144 = vrot.lane.b32.xlu0 %v4874, 40
      %v5145 = vpop.permute.xlu0 %5144
      %5146 = vrot.lane.b32.xlu0 %v4875, 40
      %v5147 = vpop.permute.xlu0 %5146
      %5148 = vrot.lane.b32.xlu0 %v4876, 40
      %v5149 = vpop.permute.xlu0 %5148
      %5150 = vrot.lane.b32.xlu0 %v4877, 40
      %v5151 = vpop.permute.xlu0 %5150
      %5152 = vrot.lane.b32.xlu0 %v4878, 40
      %v5153 = vpop.permute.xlu0 %5152
      %5154 = vrot.lane.b32.xlu0 %v4879, 40
      %v5155 = vpop.permute.xlu0 %5154
      %5156 = vrot.lane.b32.xlu0 %v4880, 40
      %v5157 = vpop.permute.xlu0 %5156
      %5158 = vrot.lane.b32.xlu0 %v4881, 40
      %v5159 = vpop.permute.xlu0 %5158
      %5160 = vrot.lane.b32.xlu0 %v4882, 40
      %v5161 = vpop.permute.xlu0 %5160
      %5162 = vrot.lane.b32.xlu0 %v4883, 40
      %v5163 = vpop.permute.xlu0 %5162
      %5164 = vrot.lane.b32.xlu0 %v4884, 40
      %v5165 = vpop.permute.xlu0 %5164
      %5166 = vrot.lane.b32.xlu0 %v4885, 40
      %v5167 = vpop.permute.xlu0 %5166
      %5168 = vrot.lane.b32.xlu0 %v4886, 40
      %v5169 = vpop.permute.xlu0 %5168
      %5170 = vrot.lane.b32.xlu0 %v4887, 40
      %v5171 = vpop.permute.xlu0 %5170
      %5172 = vrot.lane.b32.xlu0 %v4888, 40
      %v5173 = vpop.permute.xlu0 %5172
      %5174 = vrot.lane.b32.xlu0 %v4889, 40
      %v5175 = vpop.permute.xlu0 %5174
      %5176 = vrot.lane.b32.xlu0 %v4890, 40
      %v5177 = vpop.permute.xlu0 %5176
      %5178 = vrot.lane.b32.xlu0 %v4891, 40
      %v5179 = vpop.permute.xlu0 %5178
      %5324 = vrot.lane.b32.xlu0 %v4892, 80
      %v5325 = vpop.permute.xlu0 %5324
      %5326 = vrot.lane.b32.xlu0 %v4893, 80
      %v5327 = vpop.permute.xlu0 %5326
      %5328 = vrot.lane.b32.xlu0 %v4894, 80
      %v5329 = vpop.permute.xlu0 %5328
      %5330 = vrot.lane.b32.xlu0 %v4895, 80
      %v5331 = vpop.permute.xlu0 %5330
      %5332 = vrot.lane.b32.xlu0 %v4896, 80
      %v5333 = vpop.permute.xlu0 %5332
      %5334 = vrot.lane.b32.xlu0 %v4897, 80
      %v5335 = vpop.permute.xlu0 %5334
      %5336 = vrot.lane.b32.xlu0 %v4898, 80
      %v5337 = vpop.permute.xlu0 %5336
      %5338 = vrot.lane.b32.xlu0 %v4899, 80
      %v5339 = vpop.permute.xlu0 %5338
      %5340 = vrot.lane.b32.xlu0 %v4900, 80
      %v5341 = vpop.permute.xlu0 %5340
      %5342 = vrot.lane.b32.xlu0 %v4901, 80
      %v5343 = vpop.permute.xlu0 %5342
      %5344 = vrot.lane.b32.xlu0 %v4902, 80
      %v5345 = vpop.permute.xlu0 %5344
      %5346 = vrot.lane.b32.xlu0 %v4903, 80
      %v5347 = vpop.permute.xlu0 %5346
      %5348 = vrot.lane.b32.xlu0 %v4904, 80
      %v5349 = vpop.permute.xlu0 %5348
      %5350 = vrot.lane.b32.xlu0 %v4905, 80
      %v5351 = vpop.permute.xlu0 %5350
      %5352 = vrot.lane.b32.xlu0 %v4906, 80
      %v5353 = vpop.permute.xlu0 %5352
      %5354 = vrot.lane.b32.xlu0 %v4907, 80
      %v5355 = vpop.permute.xlu0 %5354
      %5356 = vrot.lane.b32.xlu0 %v4908, 80
      %v5357 = vpop.permute.xlu0 %5356
      %5358 = vrot.lane.b32.xlu0 %v4909, 80
      %v5359 = vpop.permute.xlu0 %5358
      %5360 = vrot.lane.b32.xlu0 %v4910, 80
      %v5361 = vpop.permute.xlu0 %5360
      %5362 = vrot.lane.b32.xlu0 %v4911, 80
      %v5363 = vpop.permute.xlu0 %5362
      %5364 = vrot.lane.b32.xlu0 %v4912, 80
      %v5365 = vpop.permute.xlu0 %5364
      %5366 = vrot.lane.b32.xlu0 %v4913, 80
      %v5367 = vpop.permute.xlu0 %5366
      %5368 = vrot.lane.b32.xlu0 %v4914, 80
      %v5369 = vpop.permute.xlu0 %5368
      %5370 = vrot.lane.b32.xlu0 %v4915, 80
      %v5371 = vpop.permute.xlu0 %5370
      %5372 = vrot.lane.b32.xlu0 %v4916, 80
      %v5373 = vpop.permute.xlu0 %5372
      %5374 = vrot.lane.b32.xlu0 %v4917, 80
      %v5375 = vpop.permute.xlu0 %5374
      %5376 = vrot.lane.b32.xlu0 %v4918, 80
      %v5377 = vpop.permute.xlu0 %5376
      %5378 = vrot.lane.b32.xlu0 %v4919, 80
      %v5379 = vpop.permute.xlu0 %5378
      %5380 = vrot.lane.b32.xlu0 %v4920, 80
      %v5381 = vpop.permute.xlu0 %5380
      %5382 = vrot.lane.b32.xlu0 %v4921, 80
      %v5383 = vpop.permute.xlu0 %5382
      %5384 = vrot.lane.b32.xlu0 %v4922, 80
      %v5385 = vpop.permute.xlu0 %5384
      %5386 = vrot.lane.b32.xlu0 %v4923, 80
      %v5387 = vpop.permute.xlu0 %5386
      %5388 = vrot.lane.b32.xlu0 %v4924, 80
      %v5389 = vpop.permute.xlu0 %5388
      %5390 = vrot.lane.b32.xlu0 %v4925, 80
      %v5391 = vpop.permute.xlu0 %5390
      %5392 = vrot.lane.b32.xlu0 %v4926, 80
      %v5393 = vpop.permute.xlu0 %5392
      %5394 = vrot.lane.b32.xlu0 %v4927, 80
      %v5395 = vpop.permute.xlu0 %5394
      %5396 = vrot.lane.b32.xlu0 %v4928, 80
      %v5397 = vpop.permute.xlu0 %5396
      %5398 = vrot.lane.b32.xlu0 %v4929, 80
      %v5399 = vpop.permute.xlu0 %5398
      %5400 = vrot.lane.b32.xlu0 %v4930, 80
      %v5401 = vpop.permute.xlu0 %5400
      %5402 = vrot.lane.b32.xlu0 %v4931, 80
      %v5403 = vpop.permute.xlu0 %5402
      %5404 = vrot.lane.b32.xlu0 %v4932, 80
      %v5405 = vpop.permute.xlu0 %5404
      %5406 = vrot.lane.b32.xlu0 %v4933, 80
      %v5407 = vpop.permute.xlu0 %5406
      %5408 = vrot.lane.b32.xlu0 %v4934, 80
      %v5409 = vpop.permute.xlu0 %5408
      %5410 = vrot.lane.b32.xlu0 %v4935, 80
      %v5411 = vpop.permute.xlu0 %5410
      %5412 = vrot.lane.b32.xlu0 %v4936, 80
      %v5413 = vpop.permute.xlu0 %5412
      %5414 = vrot.lane.b32.xlu0 %v4937, 80
      %v5415 = vpop.permute.xlu0 %5414
      %5416 = vrot.lane.b32.xlu0 %v4938, 80
      %v5417 = vpop.permute.xlu0 %5416
      %5418 = vrot.lane.b32.xlu0 %v4939, 80
      %v5419 = vpop.permute.xlu0 %5418
      %5420 = vrot.lane.b32.xlu0 %v4940, 80
      %v5421 = vpop.permute.xlu0 %5420
      %5422 = vrot.lane.b32.xlu0 %v4941, 80
      %v5423 = vpop.permute.xlu0 %5422
      %5424 = vrot.lane.b32.xlu0 %v4942, 80
      %v5425 = vpop.permute.xlu0 %5424
      %5426 = vrot.lane.b32.xlu0 %v4943, 80
      %v5427 = vpop.permute.xlu0 %5426
      %5428 = vrot.lane.b32.xlu0 %v4944, 80
      %v5429 = vpop.permute.xlu0 %5428
      %5430 = vrot.lane.b32.xlu0 %v4945, 80
      %v5431 = vpop.permute.xlu0 %5430
      %5432 = vrot.lane.b32.xlu0 %v4946, 80
      %v5433 = vpop.permute.xlu0 %5432
      %5434 = vrot.lane.b32.xlu0 %v4947, 80
      %v5435 = vpop.permute.xlu0 %5434
      %5436 = vrot.lane.b32.xlu0 %v4948, 80
      %v5437 = vpop.permute.xlu0 %5436
      %5438 = vrot.lane.b32.xlu0 %v4949, 80
      %v5439 = vpop.permute.xlu0 %5438
      %5440 = vrot.lane.b32.xlu0 %v4950, 80
      %v5441 = vpop.permute.xlu0 %5440
      %5442 = vrot.lane.b32.xlu0 %v4951, 80
      %v5443 = vpop.permute.xlu0 %5442
      %5444 = vrot.lane.b32.xlu0 %v4952, 80
      %v5445 = vpop.permute.xlu0 %5444
      %5446 = vrot.lane.b32.xlu0 %v4953, 80
      %v5447 = vpop.permute.xlu0 %5446
      %5448 = vrot.lane.b32.xlu0 %v4954, 80
      %v5449 = vpop.permute.xlu0 %5448
      %5450 = vrot.lane.b32.xlu0 %v4955, 80
      %v5451 = vpop.permute.xlu0 %5450
      %5452 = vrot.lane.b32.xlu0 %v4956, 80
      %v5453 = vpop.permute.xlu0 %5452
      %5454 = vrot.lane.b32.xlu0 %v4957, 80
      %v5455 = vpop.permute.xlu0 %5454
      %5456 = vrot.lane.b32.xlu0 %v4958, 80
      %v5457 = vpop.permute.xlu0 %5456
      %5458 = vrot.lane.b32.xlu0 %v4959, 80
      %v5459 = vpop.permute.xlu0 %5458
      %5460 = vrot.lane.b32.xlu0 %v4960, 80
      %v5461 = vpop.permute.xlu0 %5460
      %5462 = vrot.lane.b32.xlu0 %v4961, 80
      %v5463 = vpop.permute.xlu0 %5462
      %5464 = vrot.lane.b32.xlu0 %v4962, 80
      %v5465 = vpop.permute.xlu0 %5464
      %5466 = vrot.lane.b32.xlu0 %v4963, 80
      %v5467 = vpop.permute.xlu0 %5466
      %v5540 = vsel %vm4666, %v4748, %v5037
      %v5541 = vsel %vm4666, %v4749, %v5039
      %v5542 = vsel %vm4666, %v4750, %v5041
      %v5543 = vsel %vm4666, %v4751, %v5043
      %v5544 = vsel %vm4666, %v4752, %v5045
      %v5545 = vsel %vm4666, %v4753, %v5047
      %v5546 = vsel %vm4666, %v4754, %v5049
      %v5547 = vsel %vm4666, %v4755, %v5051
      %v5548 = vsel %vm4666, %v4756, %v5053
      %v5549 = vsel %vm4666, %v4757, %v5055
      %v5550 = vsel %vm4666, %v4758, %v5057
      %v5551 = vsel %vm4666, %v4759, %v5059
      %v5552 = vsel %vm4666, %v4760, %v5061
      %v5553 = vsel %vm4666, %v4761, %v5063
      %v5554 = vsel %vm4666, %v4762, %v5065
      %v5555 = vsel %vm4666, %v4763, %v5067
      %v5556 = vsel %vm4666, %v4764, %v5069
      %v5557 = vsel %vm4666, %v4765, %v5071
      %v5558 = vsel %vm4666, %v4766, %v5073
      %v5559 = vsel %vm4666, %v4767, %v5075
      %v5560 = vsel %vm4666, %v4768, %v5077
      %v5561 = vsel %vm4666, %v4769, %v5079
      %v5562 = vsel %vm4666, %v4770, %v5081
      %v5563 = vsel %vm4666, %v4771, %v5083
      %v5564 = vsel %vm4666, %v4772, %v5085
      %v5565 = vsel %vm4666, %v4773, %v5087
      %v5566 = vsel %vm4666, %v4774, %v5089
      %v5567 = vsel %vm4666, %v4775, %v5091
      %v5568 = vsel %vm4666, %v4776, %v5093
      %v5569 = vsel %vm4666, %v4777, %v5095
      %v5570 = vsel %vm4666, %v4778, %v5097
      %v5571 = vsel %vm4666, %v4779, %v5099
      %v5572 = vsel %vm4666, %v4780, %v5101
      %v5573 = vsel %vm4666, %v4781, %v5103
      %v5574 = vsel %vm4666, %v4782, %v5105
      %v5575 = vsel %vm4666, %v4783, %v5107
      %v5576 = vsel %vm4666, %v4784, %v5109
      %v5577 = vsel %vm4666, %v4785, %v5111
      %v5578 = vsel %vm4666, %v4786, %v5113
      %v5579 = vsel %vm4666, %v4787, %v5115
      %v5580 = vsel %vm4666, %v4788, %v5117
      %v5581 = vsel %vm4666, %v4789, %v5119
      %v5582 = vsel %vm4666, %v4790, %v5121
      %v5583 = vsel %vm4666, %v4791, %v5123
      %v5584 = vsel %vm4666, %v4792, %v5125
      %v5585 = vsel %vm4666, %v4793, %v5127
      %v5586 = vsel %vm4666, %v4794, %v5129
      %v5587 = vsel %vm4666, %v4795, %v5131
      %v5588 = vsel %vm4666, %v4796, %v5133
      %v5589 = vsel %vm4666, %v4797, %v5135
      %v5590 = vsel %vm4666, %v4798, %v5137
      %v5591 = vsel %vm4666, %v4799, %v5139
      %v5592 = vsel %vm4666, %v4800, %v5141
      %v5593 = vsel %vm4666, %v4801, %v5143
      %v5594 = vsel %vm4666, %v4802, %v5145
      %v5595 = vsel %vm4666, %v4803, %v5147
      %v5596 = vsel %vm4666, %v4804, %v5149
      %v5597 = vsel %vm4666, %v4805, %v5151
      %v5598 = vsel %vm4666, %v4806, %v5153
      %v5599 = vsel %vm4666, %v4807, %v5155
      %v5600 = vsel %vm4666, %v4808, %v5157
      %v5601 = vsel %vm4666, %v4809, %v5159
      %v5602 = vsel %vm4666, %v4810, %v5161
      %v5603 = vsel %vm4666, %v4811, %v5163
      %v5604 = vsel %vm4666, %v4812, %v5165
      %v5605 = vsel %vm4666, %v4813, %v5167
      %v5606 = vsel %vm4666, %v4814, %v5169
      %v5607 = vsel %vm4666, %v4815, %v5171
      %v5608 = vsel %vm4666, %v4816, %v5173
      %v5609 = vsel %vm4666, %v4817, %v5175
      %v5610 = vsel %vm4666, %v4818, %v5177
      %v5611 = vsel %vm4666, %v4819, %v5179
      %vm5612 = vcmask 654336
      %v5613 = vsel %vm5612, %v5540, %v5325
      %v5614 = vsel %vm5612, %v5541, %v5327
      %v5615 = vsel %vm5612, %v5542, %v5329
      %v5616 = vsel %vm5612, %v5543, %v5331
      %v5617 = vsel %vm5612, %v5544, %v5333
      %v5618 = vsel %vm5612, %v5545, %v5335
      %v5619 = vsel %vm5612, %v5546, %v5337
      %v5620 = vsel %vm5612, %v5547, %v5339
      %v5621 = vsel %vm5612, %v5548, %v5341
      %v5622 = vsel %vm5612, %v5549, %v5343
      %v5623 = vsel %vm5612, %v5550, %v5345
      %v5624 = vsel %vm5612, %v5551, %v5347
      %v5625 = vsel %vm5612, %v5552, %v5349
      %v5626 = vsel %vm5612, %v5553, %v5351
      %v5627 = vsel %vm5612, %v5554, %v5353
      %v5628 = vsel %vm5612, %v5555, %v5355
      %v5629 = vsel %vm5612, %v5556, %v5357
      %v5630 = vsel %vm5612, %v5557, %v5359
      %v5631 = vsel %vm5612, %v5558, %v5361
      %v5632 = vsel %vm5612, %v5559, %v5363
      %v5633 = vsel %vm5612, %v5560, %v5365
      %v5634 = vsel %vm5612, %v5561, %v5367
      %v5635 = vsel %vm5612, %v5562, %v5369
      %v5636 = vsel %vm5612, %v5563, %v5371
      %v5637 = vsel %vm5612, %v5564, %v5373
      %v5638 = vsel %vm5612, %v5565, %v5375
      %v5639 = vsel %vm5612, %v5566, %v5377
      %v5640 = vsel %vm5612, %v5567, %v5379
      %v5641 = vsel %vm5612, %v5568, %v5381
      %v5642 = vsel %vm5612, %v5569, %v5383
      %v5643 = vsel %vm5612, %v5570, %v5385
      %v5644 = vsel %vm5612, %v5571, %v5387
      %v5645 = vsel %vm5612, %v5572, %v5389
      %v5646 = vsel %vm5612, %v5573, %v5391
      %v5647 = vsel %vm5612, %v5574, %v5393
      %v5648 = vsel %vm5612, %v5575, %v5395
      %v5649 = vsel %vm5612, %v5576, %v5397
      %v5650 = vsel %vm5612, %v5577, %v5399
      %v5651 = vsel %vm5612, %v5578, %v5401
      %v5652 = vsel %vm5612, %v5579, %v5403
      %v5653 = vsel %vm5612, %v5580, %v5405
      %v5654 = vsel %vm5612, %v5581, %v5407
      %v5655 = vsel %vm5612, %v5582, %v5409
      %v5656 = vsel %vm5612, %v5583, %v5411
      %v5657 = vsel %vm5612, %v5584, %v5413
      %v5658 = vsel %vm5612, %v5585, %v5415
      %v5659 = vsel %vm5612, %v5586, %v5417
      %v5660 = vsel %vm5612, %v5587, %v5419
      %v5661 = vsel %vm5612, %v5588, %v5421
      %v5662 = vsel %vm5612, %v5589, %v5423
      %v5663 = vsel %vm5612, %v5590, %v5425
      %v5664 = vsel %vm5612, %v5591, %v5427
      %v5665 = vsel %vm5612, %v5592, %v5429
      %v5666 = vsel %vm5612, %v5593, %v5431
      %v5667 = vsel %vm5612, %v5594, %v5433
      %v5668 = vsel %vm5612, %v5595, %v5435
      %v5669 = vsel %vm5612, %v5596, %v5437
      %v5670 = vsel %vm5612, %v5597, %v5439
      %v5671 = vsel %vm5612, %v5598, %v5441
      %v5672 = vsel %vm5612, %v5599, %v5443
      %v5673 = vsel %vm5612, %v5600, %v5445
      %v5674 = vsel %vm5612, %v5601, %v5447
      %v5675 = vsel %vm5612, %v5602, %v5449
      %v5676 = vsel %vm5612, %v5603, %v5451
      %v5677 = vsel %vm5612, %v5604, %v5453
      %v5678 = vsel %vm5612, %v5605, %v5455
      %v5679 = vsel %vm5612, %v5606, %v5457
      %v5680 = vsel %vm5612, %v5607, %v5459
      %v5681 = vsel %vm5612, %v5608, %v5461
      %v5682 = vsel %vm5612, %v5609, %v5463
      %v5683 = vsel %vm5612, %v5610, %v5465
      %v5684 = vsel %vm5612, %v5611, %v5467
      %vm5685 = vcmask 982016
      %5686 = vst.msk [vmem:[#allocation3] sm:$0xff] %vm5685, %v5613
      %5687 = vst.msk [vmem:[#allocation3 + $0x8] sm:$0xff] %vm5685, %v5614
      %5688 = vst.msk [vmem:[#allocation3 + $0x10] sm:$0xff] %vm5685, %v5615
      %5689 = vst.msk [vmem:[#allocation3 + $0x18] sm:$0xff] %vm5685, %v5616
      %5690 = vst.msk [vmem:[#allocation3 + $0x20] sm:$0xff] %vm5685, %v5617
      %5691 = vst.msk [vmem:[#allocation3 + $0x28] sm:$0xff] %vm5685, %v5618
      %5692 = vst.msk [vmem:[#allocation3 + $0x30] sm:$0xff] %vm5685, %v5619
      %5693 = vst.msk [vmem:[#allocation3 + $0x38] sm:$0xff] %vm5685, %v5620
      %5694 = vst.msk [vmem:[#allocation3 + $0x40] sm:$0xff] %vm5685, %v5621
      %5695 = vst.msk [vmem:[#allocation3 + $0x48] sm:$0xff] %vm5685, %v5622
      %5696 = vst.msk [vmem:[#allocation3 + $0x50] sm:$0xff] %vm5685, %v5623
      %5697 = vst.msk [vmem:[#allocation3 + $0x58] sm:$0xff] %vm5685, %v5624
      %5698 = vst.msk [vmem:[#allocation3 + $0x60] sm:$0xff] %vm5685, %v5625
      %5699 = vst.msk [vmem:[#allocation3 + $0x68] sm:$0xff] %vm5685, %v5626
      %5700 = vst.msk [vmem:[#allocation3 + $0x70] sm:$0xff] %vm5685, %v5627
      %5701 = vst.msk [vmem:[#allocation3 + $0x78] sm:$0xff] %vm5685, %v5628
      %5702 = vst.msk [vmem:[#allocation3 + $0x80] sm:$0xff] %vm5685, %v5629
      %5703 = vst.msk [vmem:[#allocation3 + $0x88] sm:$0xff] %vm5685, %v5630
      %5704 = vst.msk [vmem:[#allocation3 + $0x90] sm:$0xff] %vm5685, %v5631
      %5705 = vst.msk [vmem:[#allocation3 + $0x98] sm:$0xff] %vm5685, %v5632
      %5706 = vst.msk [vmem:[#allocation3 + $0xa0] sm:$0xff] %vm5685, %v5633
      %5707 = vst.msk [vmem:[#allocation3 + $0xa8] sm:$0xff] %vm5685, %v5634
      %5708 = vst.msk [vmem:[#allocation3 + $0xb0] sm:$0xff] %vm5685, %v5635
      %5709 = vst.msk [vmem:[#allocation3 + $0xb8] sm:$0xff] %vm5685, %v5636
      %5710 = vst.msk [vmem:[#allocation3 + $0xc0] sm:$0xff] %vm5685, %v5637
      %5711 = vst.msk [vmem:[#allocation3 + $0xc8] sm:$0xff] %vm5685, %v5638
      %5712 = vst.msk [vmem:[#allocation3 + $0xd0] sm:$0xff] %vm5685, %v5639
      %5713 = vst.msk [vmem:[#allocation3 + $0xd8] sm:$0xff] %vm5685, %v5640
      %5714 = vst.msk [vmem:[#allocation3 + $0xe0] sm:$0xff] %vm5685, %v5641
      %5715 = vst.msk [vmem:[#allocation3 + $0xe8] sm:$0xff] %vm5685, %v5642
      %5716 = vst.msk [vmem:[#allocation3 + $0xf0] sm:$0xff] %vm5685, %v5643
      %5717 = vst.msk [vmem:[#allocation3 + $0xf8] sm:$0xff] %vm5685, %v5644
      %5718 = vst.msk [vmem:[#allocation3 + $0x100] sm:$0xff] %vm5685, %v5645
      %5719 = vst.msk [vmem:[#allocation3 + $0x108] sm:$0xff] %vm5685, %v5646
      %5720 = vst.msk [vmem:[#allocation3 + $0x110] sm:$0xff] %vm5685, %v5647
      %5721 = vst.msk [vmem:[#allocation3 + $0x118] sm:$0xff] %vm5685, %v5648
      %5722 = vst.msk [vmem:[#allocation3 + $0x120] sm:$0xff] %vm5685, %v5649
      %5723 = vst.msk [vmem:[#allocation3 + $0x128] sm:$0xff] %vm5685, %v5650
      %5724 = vst.msk [vmem:[#allocation3 + $0x130] sm:$0xff] %vm5685, %v5651
      %5725 = vst.msk [vmem:[#allocation3 + $0x138] sm:$0xff] %vm5685, %v5652
      %5726 = vst.msk [vmem:[#allocation3 + $0x140] sm:$0xff] %vm5685, %v5653
      %5727 = vst.msk [vmem:[#allocation3 + $0x148] sm:$0xff] %vm5685, %v5654
      %5728 = vst.msk [vmem:[#allocation3 + $0x150] sm:$0xff] %vm5685, %v5655
      %5729 = vst.msk [vmem:[#allocation3 + $0x158] sm:$0xff] %vm5685, %v5656
      %5730 = vst.msk [vmem:[#allocation3 + $0x160] sm:$0xff] %vm5685, %v5657
      %5731 = vst.msk [vmem:[#allocation3 + $0x168] sm:$0xff] %vm5685, %v5658
      %5732 = vst.msk [vmem:[#allocation3 + $0x170] sm:$0xff] %vm5685, %v5659
      %5733 = vst.msk [vmem:[#allocation3 + $0x178] sm:$0xff] %vm5685, %v5660
      %5734 = vst.msk [vmem:[#allocation3 + $0x180] sm:$0xff] %vm5685, %v5661
      %5735 = vst.msk [vmem:[#allocation3 + $0x188] sm:$0xff] %vm5685, %v5662
      %5736 = vst.msk [vmem:[#allocation3 + $0x190] sm:$0xff] %vm5685, %v5663
      %5737 = vst.msk [vmem:[#allocation3 + $0x198] sm:$0xff] %vm5685, %v5664
      %5738 = vst.msk [vmem:[#allocation3 + $0x1a0] sm:$0xff] %vm5685, %v5665
      %5739 = vst.msk [vmem:[#allocation3 + $0x1a8] sm:$0xff] %vm5685, %v5666
      %5740 = vst.msk [vmem:[#allocation3 + $0x1b0] sm:$0xff] %vm5685, %v5667
      %5741 = vst.msk [vmem:[#allocation3 + $0x1b8] sm:$0xff] %vm5685, %v5668
      %5742 = vst.msk [vmem:[#allocation3 + $0x1c0] sm:$0xff] %vm5685, %v5669
      %5743 = vst.msk [vmem:[#allocation3 + $0x1c8] sm:$0xff] %vm5685, %v5670
      %5744 = vst.msk [vmem:[#allocation3 + $0x1d0] sm:$0xff] %vm5685, %v5671
      %5745 = vst.msk [vmem:[#allocation3 + $0x1d8] sm:$0xff] %vm5685, %v5672
      %5746 = vst.msk [vmem:[#allocation3 + $0x1e0] sm:$0xff] %vm5685, %v5673
      %5747 = vst.msk [vmem:[#allocation3 + $0x1e8] sm:$0xff] %vm5685, %v5674
      %5748 = vst.msk [vmem:[#allocation3 + $0x1f0] sm:$0xff] %vm5685, %v5675
      %5749 = vst.msk [vmem:[#allocation3 + $0x1f8] sm:$0xff] %vm5685, %v5676
      %5750 = vst.msk [vmem:[#allocation3 + $0x200] sm:$0xff] %vm5685, %v5677
      %5751 = vst.msk [vmem:[#allocation3 + $0x208] sm:$0xff] %vm5685, %v5678
      %5752 = vst.msk [vmem:[#allocation3 + $0x210] sm:$0xff] %vm5685, %v5679
      %5753 = vst.msk [vmem:[#allocation3 + $0x218] sm:$0xff] %vm5685, %v5680
      %5754 = vst.msk [vmem:[#allocation3 + $0x220] sm:$0xff] %vm5685, %v5681
      %5755 = vst.msk [vmem:[#allocation3 + $0x228] sm:$0xff] %vm5685, %v5682
      %5756 = vst.msk [vmem:[#allocation3 + $0x230] sm:$0xff] %vm5685, %v5683
      %5757 = vst.msk [vmem:[#allocation3 + $0x238] sm:$0xff] %vm5685, %v5684
      %5758 = vst.msk [vmem:[#allocation3 + $0x240] sm:$0xff] %vm5685, 0.0
      %5759 = vst.msk [vmem:[#allocation3 + $0x248] sm:$0xff] %vm5685, 0.0
      %5760 = vst.msk [vmem:[#allocation3 + $0x250] sm:$0xff] %vm5685, 0.0
      %5761 = vst.msk [vmem:[#allocation3 + $0x258] sm:$0xff] %vm5685, 0.0
      %5762 = vst.msk [vmem:[#allocation3 + $0x260] sm:$0xff] %vm5685, 0.0
      %5763 = vst.msk [vmem:[#allocation3 + $0x268] sm:$0xff] %vm5685, 0.0
      %5764 = vst.msk [vmem:[#allocation3 + $0x270] sm:$0xff] %vm5685, 0.0
      %5765 = vst.msk [vmem:[#allocation3 + $0x278] sm:$0xff] %vm5685, 0.0
      %5766 = vst.msk [vmem:[#allocation3 + $0x280] sm:$0xff] %vm5685, 0.0
      %v5767 = vld [vmem:[#allocation3 + $0x18] sm:$0xff]
      %v5768 = vld [vmem:[#allocation3 + $0x20] sm:$0xff]
      %v5769 = vld [vmem:[#allocation3 + $0x28] sm:$0xff]
      %v5770 = vld [vmem:[#allocation3 + $0x30] sm:$0xff]
      %v5771 = vld [vmem:[#allocation3 + $0x38] sm:$0xff]
      %v5772 = vld [vmem:[#allocation3 + $0x40] sm:$0xff]
      %v5773 = vld [vmem:[#allocation3 + $0x48] sm:$0xff]
      %v5774 = vld [vmem:[#allocation3 + $0x50] sm:$0xff]
      %v5775 = vld [vmem:[#allocation3 + $0x58] sm:$0xff]
      %v5776 = vld [vmem:[#allocation3 + $0x60] sm:$0xff]
      %v5777 = vld [vmem:[#allocation3 + $0x68] sm:$0xff]
      %v5778 = vld [vmem:[#allocation3 + $0x70] sm:$0xff]
      %v5779 = vld [vmem:[#allocation3 + $0x78] sm:$0xff]
      %v5780 = vld [vmem:[#allocation3 + $0x80] sm:$0xff]
      %v5781 = vld [vmem:[#allocation3 + $0x88] sm:$0xff]
      %v5782 = vld [vmem:[#allocation3 + $0x90] sm:$0xff]
      %v5783 = vld [vmem:[#allocation3 + $0x98] sm:$0xff]
      %v5784 = vld [vmem:[#allocation3 + $0xa0] sm:$0xff]
      %v5785 = vld [vmem:[#allocation3 + $0xa8] sm:$0xff]
      %v5786 = vld [vmem:[#allocation3 + $0xb0] sm:$0xff]
      %v5787 = vld [vmem:[#allocation3 + $0xb8] sm:$0xff]
      %v5788 = vld [vmem:[#allocation3 + $0xc0] sm:$0xff]
      %v5789 = vld [vmem:[#allocation3 + $0xc8] sm:$0xff]
      %v5790 = vld [vmem:[#allocation3 + $0xd0] sm:$0xff]
      %v5791 = vld [vmem:[#allocation3 + $0xd8] sm:$0xff]
      %v5792 = vld [vmem:[#allocation3 + $0xe0] sm:$0xff]
      %v5793 = vld [vmem:[#allocation3 + $0xe8] sm:$0xff]
      %v5794 = vld [vmem:[#allocation3 + $0xf0] sm:$0xff]
      %v5795 = vld [vmem:[#allocation3 + $0xf8] sm:$0xff]
      %v5796 = vld [vmem:[#allocation3 + $0x100] sm:$0xff]
      %v5797 = vld [vmem:[#allocation3 + $0x108] sm:$0xff]
      %v5798 = vld [vmem:[#allocation3 + $0x110] sm:$0xff]
      %v5799 = vld [vmem:[#allocation3 + $0x118] sm:$0xff]
      %v5800 = vld [vmem:[#allocation3 + $0x120] sm:$0xff]
      %v5801 = vld [vmem:[#allocation3 + $0x128] sm:$0xff]
      %v5802 = vld [vmem:[#allocation3 + $0x130] sm:$0xff]
      %v5803 = vld [vmem:[#allocation3 + $0x138] sm:$0xff]
      %v5804 = vld [vmem:[#allocation3 + $0x140] sm:$0xff]
      %v5805 = vld [vmem:[#allocation3 + $0x148] sm:$0xff]
      %v5806 = vld [vmem:[#allocation3 + $0x150] sm:$0xff]
      %v5807 = vld [vmem:[#allocation3 + $0x158] sm:$0xff]
      %v5808 = vld [vmem:[#allocation3 + $0x160] sm:$0xff]
      %v5809 = vld [vmem:[#allocation3 + $0x168] sm:$0xff]
      %v5810 = vld [vmem:[#allocation3 + $0x170] sm:$0xff]
      %v5811 = vld [vmem:[#allocation3 + $0x178] sm:$0xff]
      %v5812 = vld [vmem:[#allocation3 + $0x180] sm:$0xff]
      %v5813 = vld [vmem:[#allocation3 + $0x188] sm:$0xff]
      %v5814 = vld [vmem:[#allocation3 + $0x190] sm:$0xff]
      %v5815 = vld [vmem:[#allocation3 + $0x198] sm:$0xff]
      %v5816 = vld [vmem:[#allocation3 + $0x1a0] sm:$0xff]
      %v5817 = vld [vmem:[#allocation3 + $0x1a8] sm:$0xff]
      %v5818 = vld [vmem:[#allocation3 + $0x1b0] sm:$0xff]
      %v5819 = vld [vmem:[#allocation3 + $0x1b8] sm:$0xff]
      %v5820 = vld [vmem:[#allocation3 + $0x1c0] sm:$0xff]
      %v5821 = vld [vmem:[#allocation3 + $0x1c8] sm:$0xff]
      %v5822 = vld [vmem:[#allocation3 + $0x1d0] sm:$0xff]
      %v5823 = vld [vmem:[#allocation3 + $0x1d8] sm:$0xff]
      %v5824 = vld [vmem:[#allocation3 + $0x1e0] sm:$0xff]
      %v5825 = vld [vmem:[#allocation3 + $0x1e8] sm:$0xff]
      %v5826 = vld [vmem:[#allocation3 + $0x1f0] sm:$0xff]
      %v5827 = vld [vmem:[#allocation3 + $0x1f8] sm:$0xff]
      %v5828 = vld [vmem:[#allocation3 + $0x200] sm:$0xff]
      %v5829 = vld [vmem:[#allocation3 + $0x208] sm:$0xff]
      %v5830 = vld [vmem:[#allocation3 + $0x210] sm:$0xff]
      %v5831 = vld [vmem:[#allocation3 + $0x218] sm:$0xff]
      %v5832 = vld [vmem:[#allocation3 + $0x220] sm:$0xff]
      %v5833 = vld [vmem:[#allocation3 + $0x228] sm:$0xff]
      %v5834 = vld [vmem:[#allocation3 + $0x230] sm:$0xff]
      %v5835 = vld [vmem:[#allocation3 + $0x238] sm:$0xff]
      %v5836 = vld [vmem:[#allocation3 + $0x240] sm:$0xff]
      %v5837 = vld [vmem:[#allocation3 + $0x248] sm:$0xff]
      %v5838 = vld [vmem:[#allocation3 + $0x250] sm:$0xff]
      %v5839 = vld [vmem:[%s4] sm:$0xff]
      %v5840 = vld [vmem:[%s4 + $0x8] sm:$0xff]
      %v5841 = vld [vmem:[%s4 + $0x10] sm:$0xff]
      %v5842 = vld [vmem:[%s4 + $0x18] sm:$0xff]
      %v5843 = vld [vmem:[%s4 + $0x20] sm:$0xff]
      %v5844 = vld [vmem:[%s4 + $0x28] sm:$0xff]
      %v5845 = vld [vmem:[%s4 + $0x30] sm:$0xff]
      %v5846 = vld [vmem:[%s4 + $0x38] sm:$0xff]
      %v5847 = vld [vmem:[%s4 + $0x40] sm:$0xff]
      %v5848 = vld [vmem:[%s4 + $0x48] sm:$0xff]
      %v5849 = vld [vmem:[%s4 + $0x50] sm:$0xff]
      %v5850 = vld [vmem:[%s4 + $0x58] sm:$0xff]
      %v5851 = vld [vmem:[%s4 + $0x60] sm:$0xff]
      %v5852 = vld [vmem:[%s4 + $0x68] sm:$0xff]
      %v5853 = vld [vmem:[%s4 + $0x70] sm:$0xff]
      %v5854 = vld [vmem:[#allocation3] sm:$0xff]
      %v5855 = vld [vmem:[#allocation3 + $0x8] sm:$0xff]
      %v5856 = vld [vmem:[#allocation3 + $0x10] sm:$0xff]
      %s5857 = scalar_lea.vmem %s4, 120
      %v5858 = vld [vmem:[%s5857] sm:$0xff]
      %v5859 = vld [vmem:[%s5857 + $0x8] sm:$0xff]
      %v5860 = vld [vmem:[%s5857 + $0x10] sm:$0xff]
      %v5861 = vld [vmem:[%s5857 + $0x18] sm:$0xff]
      %v5862 = vld [vmem:[%s5857 + $0x20] sm:$0xff]
      %v5863 = vld [vmem:[%s5857 + $0x28] sm:$0xff]
      %v5864 = vld [vmem:[%s5857 + $0x30] sm:$0xff]
      %v5865 = vld [vmem:[%s5857 + $0x38] sm:$0xff]
      %v5866 = vld [vmem:[%s5857 + $0x40] sm:$0xff]
      %v5867 = vld [vmem:[%s5857 + $0x48] sm:$0xff]
      %v5868 = vld [vmem:[%s5857 + $0x50] sm:$0xff]
      %v5869 = vld [vmem:[%s5857 + $0x58] sm:$0xff]
      %v5870 = vld [vmem:[%s5857 + $0x60] sm:$0xff]
      %v5871 = vld [vmem:[%s5857 + $0x68] sm:$0xff]
      %v5872 = vld [vmem:[%s5857 + $0x70] sm:$0xff]
      %v5874 = vsel %vm5685, %v5854, 0
      %v5877 = vsel %vm5685, %v5855, 0
      %v5880 = vsel %vm5685, %v5856, 0
      %v5883 = vsel %vm5685, %v5767, 0
      %v5886 = vsel %vm5685, %v5768, 0
      %v5889 = vsel %vm5685, %v5769, 0
      %v5892 = vsel %vm5685, %v5770, 0
      %v5895 = vsel %vm5685, %v5771, 0
      %v5898 = vsel %vm5685, %v5772, 0
      %v5901 = vsel %vm5685, %v5773, 0
      %v5904 = vsel %vm5685, %v5774, 0
      %v5907 = vsel %vm5685, %v5775, 0
      %v5910 = vsel %vm5685, %v5776, 0
      %v5913 = vsel %vm5685, %v5777, 0
      %v5916 = vsel %vm5685, %v5778, 0
      %v5919 = vsel %vm5685, %v5779, 0
      %v5922 = vsel %vm5685, %v5780, 0
      %v5925 = vsel %vm5685, %v5781, 0
      %v5928 = vsel %vm5685, %v5782, 0
      %v5931 = vsel %vm5685, %v5783, 0
      %v5934 = vsel %vm5685, %v5784, 0
      %v5937 = vsel %vm5685, %v5785, 0
      %v5940 = vsel %vm5685, %v5786, 0
      %v5943 = vsel %vm5685, %v5787, 0
      %v5946 = vsel %vm5685, %v5788, 0
      %v5949 = vsel %vm5685, %v5789, 0
      %v5952 = vsel %vm5685, %v5790, 0
      %v5955 = vsel %vm5685, %v5791, 0
      %v5958 = vsel %vm5685, %v5792, 0
      %v5961 = vsel %vm5685, %v5793, 0
      %v5964 = vsel %vm5685, %v5794, 0
      %v5967 = vsel %vm5685, %v5795, 0
      %v5970 = vsel %vm5685, %v5796, 0
      %v5973 = vsel %vm5685, %v5797, 0
      %v5976 = vsel %vm5685, %v5798, 0
      %v5979 = vsel %vm5685, %v5799, 0
      %v5982 = vsel %vm5685, %v5800, 0
      %v5985 = vsel %vm5685, %v5801, 0
      %v5988 = vsel %vm5685, %v5802, 0
      %v5991 = vsel %vm5685, %v5803, 0
      %v5994 = vsel %vm5685, %v5804, 0
      %v5997 = vsel %vm5685, %v5805, 0
      %v6000 = vsel %vm5685, %v5806, 0
      %v6003 = vsel %vm5685, %v5807, 0
      %v6006 = vsel %vm5685, %v5808, 0
      %v6009 = vsel %vm5685, %v5809, 0
      %v6012 = vsel %vm5685, %v5810, 0
      %v6015 = vsel %vm5685, %v5811, 0
      %v6018 = vsel %vm5685, %v5812, 0
      %v6021 = vsel %vm5685, %v5813, 0
      %v6024 = vsel %vm5685, %v5814, 0
      %v6027 = vsel %vm5685, %v5815, 0
      %v6030 = vsel %vm5685, %v5816, 0
      %v6033 = vsel %vm5685, %v5817, 0
      %v6036 = vsel %vm5685, %v5818, 0
      %v6039 = vsel %vm5685, %v5819, 0
      %v6042 = vsel %vm5685, %v5820, 0
      %v6045 = vsel %vm5685, %v5821, 0
      %v6048 = vsel %vm5685, %v5822, 0
      %v6051 = vsel %vm5685, %v5823, 0
      %v6054 = vsel %vm5685, %v5824, 0
      %v6057 = vsel %vm5685, %v5825, 0
      %v6060 = vsel %vm5685, %v5826, 0
      %v6063 = vsel %vm5685, %v5827, 0
      %v6066 = vsel %vm5685, %v5828, 0
      %v6069 = vsel %vm5685, %v5829, 0
      %v6072 = vsel %vm5685, %v5830, 0
      %v6075 = vsel %vm5685, %v5831, 0
      %v6078 = vsel %vm5685, %v5832, 0
      %v6081 = vsel %vm5685, %v5833, 0
      %v6084 = vsel %vm5685, %v5834, 0
      %v6087 = vsel %vm5685, %v5835, 0
      %6089 = vmatprep.subr.mxu0 0.0
      %6090 = vmatpush1.msra.mxu0 %v5858
      %6091 = vmatprep.subr.mxu0 0.0
      %6092 = vmatpush1.msra.mxu0 %v5859
      %6093 = vmatprep.subr.mxu0 0.0
      %6094 = vmatpush1.msra.mxu0 %v5860
      %6095 = vmatprep.subr.mxu0 0.0
      %6096 = vmatpush1.msra.mxu0 %v5861
      %6097 = vmatprep.subr.mxu0 0.0
      %6098 = vmatpush1.msra.mxu0 %v5862
      %6099 = vmatprep.subr.mxu0 0.0
      %6100 = vmatpush1.msra.mxu0 %v5863
      %6101 = vmatprep.subr.mxu0 0.0
      %6102 = vmatpush1.msra.mxu0 %v5864
      %6103 = vmatprep.subr.mxu0 0.0
      %6104 = vmatpush1.msra.mxu0 %v5865
      %6105 = vmatprep.subr.mxu0 0.0
      %6106 = vmatpush1.msra.mxu0 %v5866
      %6107 = vmatprep.subr.mxu0 0.0
      %6108 = vmatpush1.msra.mxu0 %v5867
      %6109 = vmatprep.subr.mxu0 0.0
      %6110 = vmatpush1.msra.mxu0 %v5868
      %6111 = vmatprep.subr.mxu0 0.0
      %6112 = vmatpush1.msra.mxu0 %v5869
      %6113 = vmatprep.subr.mxu0 0.0
      %6114 = vmatpush1.msra.mxu0 %v5870
      %6115 = vmatprep.subr.mxu0 0.0
      %6116 = vmatpush1.msra.mxu0 %v5871
      %6117 = vmatprep.subr.mxu0 0.0
      %6118 = vmatpush1.msra.mxu0 %v5872
      %6119 = vmatprep.subr.mxu0 0.0
      %6120 = vmatpush1.msra.mxu0 0.0
      %6121 = vmatprep.subr.mxu0 0.0
      %6122 = vmatpush1.msra.mxu0 0.0
      %6123 = vmatprep.subr.mxu0 0.0
      %6124 = vmatpush1.msra.mxu0 0.0
      %6125 = vmatprep.subr.mxu0 0.0
      %6126 = vmatpush1.msra.mxu0 0.0
      %6127 = vmatprep.subr.mxu0 0.0
      %6128 = vmatpush1.msra.mxu0 0.0
      %6129 = vmatprep.subr.mxu0 0.0
      %6130 = vmatpush1.msra.mxu0 0.0
      %6131 = vmatprep.subr.mxu0 0.0
      %6132 = vmatpush1.msra.mxu0 0.0
      %6133 = vmatprep.subr.mxu0 0.0
      %6134 = vmatpush1.msra.mxu0 0.0
      %6135 = vmatprep.subr.mxu0 0.0
      %6136 = vmatpush1.msra.mxu0 0.0
      %6137 = vmatprep.subr.mxu0 0.0
      %6138 = vmatpush1.msra.mxu0 0.0
      %6139 = vmatprep.subr.mxu0 0.0
      %6140 = vmatpush1.msra.mxu0 0.0
      %6141 = vmatprep.subr.mxu0 0.0
      %6142 = vmatpush1.msra.mxu0 0.0
      %6143 = vmatprep.subr.mxu0 0.0
      %6144 = vmatpush1.msra.mxu0 0.0
      %6145 = vmatprep.subr.mxu0 0.0
      %6146 = vmatpush1.msra.mxu0 0.0
      %6147 = vmatprep.subr.mxu0 0.0
      %6148 = vmatpush1.msra.mxu0 0.0
      %6149 = vmatprep.subr.mxu0 0.0
      %6150 = vmatpush1.msra.mxu0 0.0
      %6151 = vmatprep.subr.mxu0 0.0
      %6152 = vmatpush1.msra.mxu0 0.0
      %6153 = vmatprep.mubr.f32.mxu0 0.0
      %6154 = vmatmul.mubr.f32.gmra.mrb[0].mxu0 %v5874
      %v6155 = vpop.f32.mrb[0].mxu0
      %v6156 = vadd.f32 0.0, %v6155
      %v6157 = vpop.f32.mrb[0].mxu0
      %6158 = vmatprep.mubr.f32.mxu0 0.0
      %6159 = vmatmul.mubr.f32.gmra.mrb[0].mxu0 %v5877
      %v6160 = vpop.f32.mrb[0].mxu0
      %v6161 = vadd.f32 0.0, %v6160
      %v6162 = vpop.f32.mrb[0].mxu0
      %6163 = vmatprep.mubr.f32.mxu0 0.0
      %6164 = vmatmul.mubr.f32.gmra.mrb[0].mxu0 %v5880
      %v6165 = vpop.f32.mrb[0].mxu0
      %v6166 = vadd.f32 0.0, %v6165
      %v6167 = vpop.f32.mrb[0].mxu0
      %6168 = vmatprep.mubr.f32.mxu0 0.0
      %6169 = vmatmul.mubr.f32.gmra.mrb[0].mxu0 %v5883
      %v6170 = vpop.f32.mrb[0].mxu0
      %v6171 = vadd.f32 0.0, %v6170
      %v6172 = vpop.f32.mrb[0].mxu0
      %6173 = vmatprep.mubr.f32.mxu0 0.0
      %6174 = vmatmul.mubr.f32.gmra.mrb[0].mxu0 %v5886
      %v6175 = vpop.f32.mrb[0].mxu0
      %v6176 = vadd.f32 0.0, %v6175
      %v6177 = vpop.f32.mrb[0].mxu0
      %6178 = vmatprep.mubr.f32.mxu0 0.0
      %6179 = vmatmul.mubr.f32.gmra.mrb[0].mxu0 %v5889
      %v6180 = vpop.f32.mrb[0].mxu0
      %v6181 = vadd.f32 0.0, %v6180
      %v6182 = vpop.f32.mrb[0].mxu0
      %6183 = vmatprep.mubr.f32.mxu0 0.0
      %6184 = vmatmul.mubr.f32.gmra.mrb[0].mxu0 %v5892
      %v6185 = vpop.f32.mrb[0].mxu0
      %v6186 = vadd.f32 0.0, %v6185
      %v6187 = vpop.f32.mrb[0].mxu0
      %6188 = vmatprep.mubr.f32.mxu0 0.0
      %6189 = vmatmul.mubr.f32.gmra.mrb[0].mxu0 %v5895
      %v6190 = vpop.f32.mrb[0].mxu0
      %v6191 = vadd.f32 0.0, %v6190
      %v6192 = vpop.f32.mrb[0].mxu0
      %6193 = vmatprep.mubr.f32.mxu0 0.0
      %6194 = vmatmul.mubr.f32.gmra.mrb[0].mxu0 %v5898
      %v6195 = vpop.f32.mrb[0].mxu0
      %v6196 = vadd.f32 0.0, %v6195
      %v6197 = vpop.f32.mrb[0].mxu0
      %6198 = vmatprep.mubr.f32.mxu0 0.0
      %6199 = vmatmul.mubr.f32.gmra.mrb[0].mxu0 %v5901
      %v6200 = vpop.f32.mrb[0].mxu0
      %v6201 = vadd.f32 0.0, %v6200
      %v6202 = vpop.f32.mrb[0].mxu0
      %6203 = vmatprep.mubr.f32.mxu0 0.0
      %6204 = vmatmul.mubr.f32.gmra.mrb[0].mxu0 %v5904
      %v6205 = vpop.f32.mrb[0].mxu0
      %v6206 = vadd.f32 0.0, %v6205
      %v6207 = vpop.f32.mrb[0].mxu0
      %6208 = vmatprep.mubr.f32.mxu0 0.0
      %6209 = vmatmul.mubr.f32.gmra.mrb[0].mxu0 %v5907
      %v6210 = vpop.f32.mrb[0].mxu0
      %v6211 = vadd.f32 0.0, %v6210
      %v6212 = vpop.f32.mrb[0].mxu0
      %6213 = vmatprep.mubr.f32.mxu0 0.0
      %6214 = vmatmul.mubr.f32.gmra.mrb[0].mxu0 %v5910
      %v6215 = vpop.f32.mrb[0].mxu0
      %v6216 = vadd.f32 0.0, %v6215
      %v6217 = vpop.f32.mrb[0].mxu0
      %6218 = vmatprep.mubr.f32.mxu0 0.0
      %6219 = vmatmul.mubr.f32.gmra.mrb[0].mxu0 %v5913
      %v6220 = vpop.f32.mrb[0].mxu0
      %v6221 = vadd.f32 0.0, %v6220
      %v6222 = vpop.f32.mrb[0].mxu0
      %6223 = vmatprep.mubr.f32.mxu0 0.0
      %6224 = vmatmul.mubr.f32.gmra.mrb[0].mxu0 %v5916
      %v6225 = vpop.f32.mrb[0].mxu0
      %v6226 = vadd.f32 0.0, %v6225
      %v6227 = vpop.f32.mrb[0].mxu0
      %6228 = vmatprep.mubr.f32.mxu0 0.0
      %6229 = vmatmul.mubr.f32.gmra.mrb[0].mxu0 %v5919
      %v6230 = vpop.f32.mrb[0].mxu0
      %v6231 = vadd.f32 0.0, %v6230
      %v6232 = vpop.f32.mrb[0].mxu0
      %6233 = vmatprep.mubr.f32.mxu0 0.0
      %6234 = vmatmul.mubr.f32.gmra.mrb[0].mxu0 %v5922
      %v6235 = vpop.f32.mrb[0].mxu0
      %v6236 = vadd.f32 0.0, %v6235
      %v6237 = vpop.f32.mrb[0].mxu0
      %6238 = vmatprep.mubr.f32.mxu0 0.0
      %6239 = vmatmul.mubr.f32.gmra.mrb[0].mxu0 %v5925
      %v6240 = vpop.f32.mrb[0].mxu0
      %v6241 = vadd.f32 0.0, %v6240
      %v6242 = vpop.f32.mrb[0].mxu0
      %6243 = vmatprep.mubr.f32.mxu0 0.0
      %6244 = vmatmul.mubr.f32.gmra.mrb[0].mxu0 %v5928
      %v6245 = vpop.f32.mrb[0].mxu0
      %v6246 = vadd.f32 0.0, %v6245
      %v6247 = vpop.f32.mrb[0].mxu0
      %6248 = vmatprep.mubr.f32.mxu0 0.0
      %6249 = vmatmul.mubr.f32.gmra.mrb[0].mxu0 %v5931
      %v6250 = vpop.f32.mrb[0].mxu0
      %v6251 = vadd.f32 0.0, %v6250
      %v6252 = vpop.f32.mrb[0].mxu0
      %6253 = vmatprep.mubr.f32.mxu0 0.0
      %6254 = vmatmul.mubr.f32.gmra.mrb[0].mxu0 %v5934
      %v6255 = vpop.f32.mrb[0].mxu0
      %v6256 = vadd.f32 0.0, %v6255
      %v6257 = vpop.f32.mrb[0].mxu0
      %6258 = vmatprep.mubr.f32.mxu0 0.0
      %6259 = vmatmul.mubr.f32.gmra.mrb[0].mxu0 %v5937
      %v6260 = vpop.f32.mrb[0].mxu0
      %v6261 = vadd.f32 0.0, %v6260
      %v6262 = vpop.f32.mrb[0].mxu0
      %6263 = vmatprep.mubr.f32.mxu0 0.0
      %6264 = vmatmul.mubr.f32.gmra.mrb[0].mxu0 %v5940
      %v6265 = vpop.f32.mrb[0].mxu0
      %v6266 = vadd.f32 0.0, %v6265
      %v6267 = vpop.f32.mrb[0].mxu0
      %6268 = vmatprep.mubr.f32.mxu0 0.0
      %6269 = vmatmul.mubr.f32.gmra.mrb[0].mxu0 %v5943
      %v6270 = vpop.f32.mrb[0].mxu0
      %v6271 = vadd.f32 0.0, %v6270
      %v6272 = vpop.f32.mrb[0].mxu0
      %6273 = vmatprep.mubr.f32.mxu0 0.0
      %6274 = vmatmul.mubr.f32.gmra.mrb[0].mxu0 %v5946
      %v6275 = vpop.f32.mrb[0].mxu0
      %v6276 = vadd.f32 0.0, %v6275
      %v6277 = vpop.f32.mrb[0].mxu0
      %6278 = vmatprep.mubr.f32.mxu0 0.0
      %6279 = vmatmul.mubr.f32.gmra.mrb[0].mxu0 %v5949
      %v6280 = vpop.f32.mrb[0].mxu0
      %v6281 = vadd.f32 0.0, %v6280
      %v6282 = vpop.f32.mrb[0].mxu0
      %6283 = vmatprep.mubr.f32.mxu0 0.0
      %6284 = vmatmul.mubr.f32.gmra.mrb[0].mxu0 %v5952
      %v6285 = vpop.f32.mrb[0].mxu0
      %v6286 = vadd.f32 0.0, %v6285
      %v6287 = vpop.f32.mrb[0].mxu0
      %6288 = vmatprep.mubr.f32.mxu0 0.0
      %6289 = vmatmul.mubr.f32.gmra.mrb[0].mxu0 %v5955
      %v6290 = vpop.f32.mrb[0].mxu0
      %v6291 = vadd.f32 0.0, %v6290
      %v6292 = vpop.f32.mrb[0].mxu0
      %6293 = vmatprep.mubr.f32.mxu0 0.0
      %6294 = vmatmul.mubr.f32.gmra.mrb[0].mxu0 %v5958
      %v6295 = vpop.f32.mrb[0].mxu0
      %v6296 = vadd.f32 0.0, %v6295
      %v6297 = vpop.f32.mrb[0].mxu0
      %6298 = vmatprep.mubr.f32.mxu0 0.0
      %6299 = vmatmul.mubr.f32.gmra.mrb[0].mxu0 %v5961
      %v6300 = vpop.f32.mrb[0].mxu0
      %v6301 = vadd.f32 0.0, %v6300
      %v6302 = vpop.f32.mrb[0].mxu0
      %6303 = vmatprep.mubr.f32.mxu0 0.0
      %6304 = vmatmul.mubr.f32.gmra.mrb[0].mxu0 %v5964
      %v6305 = vpop.f32.mrb[0].mxu0
      %v6306 = vadd.f32 0.0, %v6305
      %v6307 = vpop.f32.mrb[0].mxu0
      %6308 = vmatprep.mubr.f32.mxu0 0.0
      %6309 = vmatmul.mubr.f32.gmra.mrb[0].mxu0 %v5967
      %v6310 = vpop.f32.mrb[0].mxu0
      %v6311 = vadd.f32 0.0, %v6310
      %v6312 = vpop.f32.mrb[0].mxu0
      %6313 = vmatprep.mubr.f32.mxu0 0.0
      %6314 = vmatmul.mubr.f32.gmra.mrb[0].mxu0 %v5970
      %v6315 = vpop.f32.mrb[0].mxu0
      %v6316 = vadd.f32 0.0, %v6315
      %v6317 = vpop.f32.mrb[0].mxu0
      %6318 = vmatprep.mubr.f32.mxu0 0.0
      %6319 = vmatmul.mubr.f32.gmra.mrb[0].mxu0 %v5973
      %v6320 = vpop.f32.mrb[0].mxu0
      %v6321 = vadd.f32 0.0, %v6320
      %v6322 = vpop.f32.mrb[0].mxu0
      %6323 = vmatprep.mubr.f32.mxu0 0.0
      %6324 = vmatmul.mubr.f32.gmra.mrb[0].mxu0 %v5976
      %v6325 = vpop.f32.mrb[0].mxu0
      %v6326 = vadd.f32 0.0, %v6325
      %v6327 = vpop.f32.mrb[0].mxu0
      %6328 = vmatprep.mubr.f32.mxu0 0.0
      %6329 = vmatmul.mubr.f32.gmra.mrb[0].mxu0 %v5979
      %v6330 = vpop.f32.mrb[0].mxu0
      %v6331 = vadd.f32 0.0, %v6330
      %v6332 = vpop.f32.mrb[0].mxu0
      %6333 = vmatprep.mubr.f32.mxu0 0.0
      %6334 = vmatmul.mubr.f32.gmra.mrb[0].mxu0 %v5982
      %v6335 = vpop.f32.mrb[0].mxu0
      %v6336 = vadd.f32 0.0, %v6335
      %v6337 = vpop.f32.mrb[0].mxu0
      %6338 = vmatprep.mubr.f32.mxu0 0.0
      %6339 = vmatmul.mubr.f32.gmra.mrb[0].mxu0 %v5985
      %v6340 = vpop.f32.mrb[0].mxu0
      %v6341 = vadd.f32 0.0, %v6340
      %v6342 = vpop.f32.mrb[0].mxu0
      %6343 = vmatprep.mubr.f32.mxu0 0.0
      %6344 = vmatmul.mubr.f32.gmra.mrb[0].mxu0 %v5988
      %v6345 = vpop.f32.mrb[0].mxu0
      %v6346 = vadd.f32 0.0, %v6345
      %v6347 = vpop.f32.mrb[0].mxu0
      %6348 = vmatprep.mubr.f32.mxu0 0.0
      %6349 = vmatmul.mubr.f32.gmra.mrb[0].mxu0 %v5991
      %v6350 = vpop.f32.mrb[0].mxu0
      %v6351 = vadd.f32 0.0, %v6350
      %v6352 = vpop.f32.mrb[0].mxu0
      %6353 = vmatprep.mubr.f32.mxu0 0.0
      %6354 = vmatmul.mubr.f32.gmra.mrb[0].mxu0 %v5994
      %v6355 = vpop.f32.mrb[0].mxu0
      %v6356 = vadd.f32 0.0, %v6355
      %v6357 = vpop.f32.mrb[0].mxu0
      %6358 = vmatprep.mubr.f32.mxu0 0.0
      %6359 = vmatmul.mubr.f32.gmra.mrb[0].mxu0 %v5997
      %v6360 = vpop.f32.mrb[0].mxu0
      %v6361 = vadd.f32 0.0, %v6360
      %v6362 = vpop.f32.mrb[0].mxu0
      %6363 = vmatprep.mubr.f32.mxu0 0.0
      %6364 = vmatmul.mubr.f32.gmra.mrb[0].mxu0 %v6000
      %v6365 = vpop.f32.mrb[0].mxu0
      %v6366 = vadd.f32 0.0, %v6365
      %v6367 = vpop.f32.mrb[0].mxu0
      %6368 = vmatprep.mubr.f32.mxu0 0.0
      %6369 = vmatmul.mubr.f32.gmra.mrb[0].mxu0 %v6003
      %v6370 = vpop.f32.mrb[0].mxu0
      %v6371 = vadd.f32 0.0, %v6370
      %v6372 = vpop.f32.mrb[0].mxu0
      %6373 = vmatprep.mubr.f32.mxu0 0.0
      %6374 = vmatmul.mubr.f32.gmra.mrb[0].mxu0 %v6006
      %v6375 = vpop.f32.mrb[0].mxu0
      %v6376 = vadd.f32 0.0, %v6375
      %v6377 = vpop.f32.mrb[0].mxu0
      %6378 = vmatprep.mubr.f32.mxu0 0.0
      %6379 = vmatmul.mubr.f32.gmra.mrb[0].mxu0 %v6009
      %v6380 = vpop.f32.mrb[0].mxu0
      %v6381 = vadd.f32 0.0, %v6380
      %v6382 = vpop.f32.mrb[0].mxu0
      %6383 = vmatprep.mubr.f32.mxu0 0.0
      %6384 = vmatmul.mubr.f32.gmra.mrb[0].mxu0 %v6012
      %v6385 = vpop.f32.mrb[0].mxu0
      %v6386 = vadd.f32 0.0, %v6385
      %v6387 = vpop.f32.mrb[0].mxu0
      %6388 = vmatprep.mubr.f32.mxu0 0.0
      %6389 = vmatmul.mubr.f32.gmra.mrb[0].mxu0 %v6015
      %v6390 = vpop.f32.mrb[0].mxu0
      %v6391 = vadd.f32 0.0, %v6390
      %v6392 = vpop.f32.mrb[0].mxu0
      %6393 = vmatprep.mubr.f32.mxu0 0.0
      %6394 = vmatmul.mubr.f32.gmra.mrb[0].mxu0 %v6018
      %v6395 = vpop.f32.mrb[0].mxu0
      %v6396 = vadd.f32 0.0, %v6395
      %v6397 = vpop.f32.mrb[0].mxu0
      %6398 = vmatprep.mubr.f32.mxu0 0.0
      %6399 = vmatmul.mubr.f32.gmra.mrb[0].mxu0 %v6021
      %v6400 = vpop.f32.mrb[0].mxu0
      %v6401 = vadd.f32 0.0, %v6400
      %v6402 = vpop.f32.mrb[0].mxu0
      %6403 = vmatprep.mubr.f32.mxu0 0.0
      %6404 = vmatmul.mubr.f32.gmra.mrb[0].mxu0 %v6024
      %v6405 = vpop.f32.mrb[0].mxu0
      %v6406 = vadd.f32 0.0, %v6405
      %v6407 = vpop.f32.mrb[0].mxu0
      %6408 = vmatprep.mubr.f32.mxu0 0.0
      %6409 = vmatmul.mubr.f32.gmra.mrb[0].mxu0 %v6027
      %v6410 = vpop.f32.mrb[0].mxu0
      %v6411 = vadd.f32 0.0, %v6410
      %v6412 = vpop.f32.mrb[0].mxu0
      %6413 = vmatprep.mubr.f32.mxu0 0.0
      %6414 = vmatmul.mubr.f32.gmra.mrb[0].mxu0 %v6030
      %v6415 = vpop.f32.mrb[0].mxu0
      %v6416 = vadd.f32 0.0, %v6415
      %v6417 = vpop.f32.mrb[0].mxu0
      %6418 = vmatprep.mubr.f32.mxu0 0.0
      %6419 = vmatmul.mubr.f32.gmra.mrb[0].mxu0 %v6033
      %v6420 = vpop.f32.mrb[0].mxu0
      %v6421 = vadd.f32 0.0, %v6420
      %v6422 = vpop.f32.mrb[0].mxu0
      %6423 = vmatprep.mubr.f32.mxu0 0.0
      %6424 = vmatmul.mubr.f32.gmra.mrb[0].mxu0 %v6036
      %v6425 = vpop.f32.mrb[0].mxu0
      %v6426 = vadd.f32 0.0, %v6425
      %v6427 = vpop.f32.mrb[0].mxu0
      %6428 = vmatprep.mubr.f32.mxu0 0.0
      %6429 = vmatmul.mubr.f32.gmra.mrb[0].mxu0 %v6039
      %v6430 = vpop.f32.mrb[0].mxu0
      %v6431 = vadd.f32 0.0, %v6430
      %v6432 = vpop.f32.mrb[0].mxu0
      %6433 = vmatprep.mubr.f32.mxu0 0.0
      %6434 = vmatmul.mubr.f32.gmra.mrb[0].mxu0 %v6042
      %v6435 = vpop.f32.mrb[0].mxu0
      %v6436 = vadd.f32 0.0, %v6435
      %v6437 = vpop.f32.mrb[0].mxu0
      %6438 = vmatprep.mubr.f32.mxu0 0.0
      %6439 = vmatmul.mubr.f32.gmra.mrb[0].mxu0 %v6045
      %v6440 = vpop.f32.mrb[0].mxu0
      %v6441 = vadd.f32 0.0, %v6440
      %v6442 = vpop.f32.mrb[0].mxu0
      %6443 = vmatprep.mubr.f32.mxu0 0.0
      %6444 = vmatmul.mubr.f32.gmra.mrb[0].mxu0 %v6048
      %v6445 = vpop.f32.mrb[0].mxu0
      %v6446 = vadd.f32 0.0, %v6445
      %v6447 = vpop.f32.mrb[0].mxu0
      %6448 = vmatprep.mubr.f32.mxu0 0.0
      %6449 = vmatmul.mubr.f32.gmra.mrb[0].mxu0 %v6051
      %v6450 = vpop.f32.mrb[0].mxu0
      %v6451 = vadd.f32 0.0, %v6450
      %v6452 = vpop.f32.mrb[0].mxu0
      %6453 = vmatprep.mubr.f32.mxu0 0.0
      %6454 = vmatmul.mubr.f32.gmra.mrb[0].mxu0 %v6054
      %v6455 = vpop.f32.mrb[0].mxu0
      %v6456 = vadd.f32 0.0, %v6455
      %v6457 = vpop.f32.mrb[0].mxu0
      %6458 = vmatprep.mubr.f32.mxu0 0.0
      %6459 = vmatmul.mubr.f32.gmra.mrb[0].mxu0 %v6057
      %v6460 = vpop.f32.mrb[0].mxu0
      %v6461 = vadd.f32 0.0, %v6460
      %v6462 = vpop.f32.mrb[0].mxu0
      %6463 = vmatprep.mubr.f32.mxu0 0.0
      %6464 = vmatmul.mubr.f32.gmra.mrb[0].mxu0 %v6060
      %v6465 = vpop.f32.mrb[0].mxu0
      %v6466 = vadd.f32 0.0, %v6465
      %v6467 = vpop.f32.mrb[0].mxu0
      %6468 = vmatprep.mubr.f32.mxu0 0.0
      %6469 = vmatmul.mubr.f32.gmra.mrb[0].mxu0 %v6063
      %v6470 = vpop.f32.mrb[0].mxu0
      %v6471 = vadd.f32 0.0, %v6470
      %v6472 = vpop.f32.mrb[0].mxu0
      %6473 = vmatprep.mubr.f32.mxu0 0.0
      %6474 = vmatmul.mubr.f32.gmra.mrb[0].mxu0 %v6066
      %v6475 = vpop.f32.mrb[0].mxu0
      %v6476 = vadd.f32 0.0, %v6475
      %v6477 = vpop.f32.mrb[0].mxu0
      %6478 = vmatprep.mubr.f32.mxu0 0.0
      %6479 = vmatmul.mubr.f32.gmra.mrb[0].mxu0 %v6069
      %v6480 = vpop.f32.mrb[0].mxu0
      %v6481 = vadd.f32 0.0, %v6480
      %v6482 = vpop.f32.mrb[0].mxu0
      %6483 = vmatprep.mubr.f32.mxu0 0.0
      %6484 = vmatmul.mubr.f32.gmra.mrb[0].mxu0 %v6072
      %v6485 = vpop.f32.mrb[0].mxu0
      %v6486 = vadd.f32 0.0, %v6485
      %v6487 = vpop.f32.mrb[0].mxu0
      %6488 = vmatprep.mubr.f32.mxu0 0.0
      %6489 = vmatmul.mubr.f32.gmra.mrb[0].mxu0 %v6075
      %v6490 = vpop.f32.mrb[0].mxu0
      %v6491 = vadd.f32 0.0, %v6490
      %v6492 = vpop.f32.mrb[0].mxu0
      %6493 = vmatprep.mubr.f32.mxu0 0.0
      %6494 = vmatmul.mubr.f32.gmra.mrb[0].mxu0 %v6078
      %v6495 = vpop.f32.mrb[0].mxu0
      %v6496 = vadd.f32 0.0, %v6495
      %v6497 = vpop.f32.mrb[0].mxu0
      %6498 = vmatprep.mubr.f32.mxu0 0.0
      %6499 = vmatmul.mubr.f32.gmra.mrb[0].mxu0 %v6081
      %v6500 = vpop.f32.mrb[0].mxu0
      %v6501 = vadd.f32 0.0, %v6500
      %v6502 = vpop.f32.mrb[0].mxu0
      %6503 = vmatprep.mubr.f32.mxu0 0.0
      %6504 = vmatmul.mubr.f32.gmra.mrb[0].mxu0 %v6084
      %v6505 = vpop.f32.mrb[0].mxu0
      %v6506 = vadd.f32 0.0, %v6505
      %v6507 = vpop.f32.mrb[0].mxu0
      %6508 = vmatprep.mubr.f32.mxu0 0.0
      %6509 = vmatmul.mubr.f32.gmra.mrb[0].mxu0 %v6087
      %v6510 = vpop.f32.mrb[0].mxu0
      %v6511 = vadd.f32 0.0, %v6510
      %v6512 = vpop.f32.mrb[0].mxu0
      %6513 = vdwg.mxu0
      %v6515 = vsel %vm5685, %v5836, 0
      %v6518 = vsel %vm5685, %v5837, 0
      %v6521 = vsel %vm5685, %v5838, 0
      %6523 = vmatprep.subr.mxu0 0.0
      %6524 = vmatpush1.msra.mxu0 %v5839
      %6525 = vmatprep.subr.mxu0 0.0
      %6526 = vmatpush1.msra.mxu0 %v5840
      %6527 = vmatprep.subr.mxu0 0.0
      %6528 = vmatpush1.msra.mxu0 %v5841
      %6529 = vmatprep.subr.mxu0 0.0
      %6530 = vmatpush1.msra.mxu0 %v5842
      %6531 = vmatprep.subr.mxu0 0.0
      %6532 = vmatpush1.msra.mxu0 %v5843
      %6533 = vmatprep.subr.mxu0 0.0
      %6534 = vmatpush1.msra.mxu0 %v5844
      %6535 = vmatprep.subr.mxu0 0.0
      %6536 = vmatpush1.msra.mxu0 %v5845
      %6537 = vmatprep.subr.mxu0 0.0
      %6538 = vmatpush1.msra.mxu0 %v5846
      %6539 = vmatprep.subr.mxu0 0.0
      %6540 = vmatpush1.msra.mxu0 %v5847
      %6541 = vmatprep.subr.mxu0 0.0
      %6542 = vmatpush1.msra.mxu0 %v5848
      %6543 = vmatprep.subr.mxu0 0.0
      %6544 = vmatpush1.msra.mxu0 %v5849
      %6545 = vmatprep.subr.mxu0 0.0
      %6546 = vmatpush1.msra.mxu0 %v5850
      %6547 = vmatprep.subr.mxu0 0.0
      %6548 = vmatpush1.msra.mxu0 %v5851
      %6549 = vmatprep.subr.mxu0 0.0
      %6550 = vmatpush1.msra.mxu0 %v5852
      %6551 = vmatprep.subr.mxu0 0.0
      %6552 = vmatpush1.msra.mxu0 %v5853
      %6553 = vmatprep.subr.mxu0 0.0
      %6554 = vmatpush1.msra.mxu0 0.0
      %6555 = vmatprep.subr.mxu0 0.0
      %6556 = vmatpush1.msra.mxu0 0.0
      %6557 = vmatprep.subr.mxu0 0.0
      %6558 = vmatpush1.msra.mxu0 0.0
      %6559 = vmatprep.subr.mxu0 0.0
      %6560 = vmatpush1.msra.mxu0 0.0
      %6561 = vmatprep.subr.mxu0 0.0
      %6562 = vmatpush1.msra.mxu0 0.0
      %6563 = vmatprep.subr.mxu0 0.0
      %6564 = vmatpush1.msra.mxu0 0.0
      %6565 = vmatprep.subr.mxu0 0.0
      %6566 = vmatpush1.msra.mxu0 0.0
      %6567 = vmatprep.subr.mxu0 0.0
      %6568 = vmatpush1.msra.mxu0 0.0
      %6569 = vmatprep.subr.mxu0 0.0
      %6570 = vmatpush1.msra.mxu0 0.0
      %6571 = vmatprep.subr.mxu0 0.0
      %6572 = vmatpush1.msra.mxu0 0.0
      %6573 = vmatprep.subr.mxu0 0.0
      %6574 = vmatpush1.msra.mxu0 0.0
      %6575 = vmatprep.subr.mxu0 0.0
      %6576 = vmatpush1.msra.mxu0 0.0
      %6577 = vmatprep.subr.mxu0 0.0
      %6578 = vmatpush1.msra.mxu0 0.0
      %6579 = vmatprep.subr.mxu0 0.0
      %6580 = vmatpush1.msra.mxu0 0.0
      %6581 = vmatprep.subr.mxu0 0.0
      %6582 = vmatpush1.msra.mxu0 0.0
      %6583 = vmatprep.subr.mxu0 0.0
      %6584 = vmatpush1.msra.mxu0 0.0
      %6585 = vmatprep.subr.mxu0 0.0
      %6586 = vmatpush1.msra.mxu0 0.0
      %6587 = vmatprep.mubr.f32.mxu0 0.0
      %6588 = vmatmul.mubr.f32.gmra.mrb[0].mxu0 %v5883
      %v6589 = vpop.f32.mrb[0].mxu0
      %v6590 = vadd.f32 %v6156, %v6589
      %v6591 = vpop.f32.mrb[0].mxu0
      %6592 = vmatprep.mubr.f32.mxu0 0.0
      %6593 = vmatmul.mubr.f32.gmra.mrb[0].mxu0 %v5886
      %v6594 = vpop.f32.mrb[0].mxu0
      %v6595 = vadd.f32 %v6161, %v6594
      %v6596 = vpop.f32.mrb[0].mxu0
      %6597 = vmatprep.mubr.f32.mxu0 0.0
      %6598 = vmatmul.mubr.f32.gmra.mrb[0].mxu0 %v5889
      %v6599 = vpop.f32.mrb[0].mxu0
      %v6600 = vadd.f32 %v6166, %v6599
      %v6601 = vpop.f32.mrb[0].mxu0
      %6602 = vmatprep.mubr.f32.mxu0 0.0
      %6603 = vmatmul.mubr.f32.gmra.mrb[0].mxu0 %v5892
      %v6604 = vpop.f32.mrb[0].mxu0
      %v6605 = vadd.f32 %v6171, %v6604
      %v6606 = vpop.f32.mrb[0].mxu0
      %6607 = vmatprep.mubr.f32.mxu0 0.0
      %6608 = vmatmul.mubr.f32.gmra.mrb[0].mxu0 %v5895
      %v6609 = vpop.f32.mrb[0].mxu0
      %v6610 = vadd.f32 %v6176, %v6609
      %v6611 = vpop.f32.mrb[0].mxu0
      %6612 = vmatprep.mubr.f32.mxu0 0.0
      %6613 = vmatmul.mubr.f32.gmra.mrb[0].mxu0 %v5898
      %v6614 = vpop.f32.mrb[0].mxu0
      %v6615 = vadd.f32 %v6181, %v6614
      %v6616 = vpop.f32.mrb[0].mxu0
      %6617 = vmatprep.mubr.f32.mxu0 0.0
      %6618 = vmatmul.mubr.f32.gmra.mrb[0].mxu0 %v5901
      %v6619 = vpop.f32.mrb[0].mxu0
      %v6620 = vadd.f32 %v6186, %v6619
      %v6621 = vpop.f32.mrb[0].mxu0
      %6622 = vmatprep.mubr.f32.mxu0 0.0
      %6623 = vmatmul.mubr.f32.gmra.mrb[0].mxu0 %v5904
      %v6624 = vpop.f32.mrb[0].mxu0
      %v6625 = vadd.f32 %v6191, %v6624
      %v6626 = vpop.f32.mrb[0].mxu0
      %6627 = vmatprep.mubr.f32.mxu0 0.0
      %6628 = vmatmul.mubr.f32.gmra.mrb[0].mxu0 %v5907
      %v6629 = vpop.f32.mrb[0].mxu0
      %v6630 = vadd.f32 %v6196, %v6629
      %v6631 = vpop.f32.mrb[0].mxu0
      %6632 = vmatprep.mubr.f32.mxu0 0.0
      %6633 = vmatmul.mubr.f32.gmra.mrb[0].mxu0 %v5910
      %v6634 = vpop.f32.mrb[0].mxu0
      %v6635 = vadd.f32 %v6201, %v6634
      %v6636 = vpop.f32.mrb[0].mxu0
      %6637 = vmatprep.mubr.f32.mxu0 0.0
      %6638 = vmatmul.mubr.f32.gmra.mrb[0].mxu0 %v5913
      %v6639 = vpop.f32.mrb[0].mxu0
      %v6640 = vadd.f32 %v6206, %v6639
      %v6641 = vpop.f32.mrb[0].mxu0
      %6642 = vmatprep.mubr.f32.mxu0 0.0
      %6643 = vmatmul.mubr.f32.gmra.mrb[0].mxu0 %v5916
      %v6644 = vpop.f32.mrb[0].mxu0
      %v6645 = vadd.f32 %v6211, %v6644
      %v6646 = vpop.f32.mrb[0].mxu0
      %6647 = vmatprep.mubr.f32.mxu0 0.0
      %6648 = vmatmul.mubr.f32.gmra.mrb[0].mxu0 %v5919
      %v6649 = vpop.f32.mrb[0].mxu0
      %v6650 = vadd.f32 %v6216, %v6649
      %v6651 = vpop.f32.mrb[0].mxu0
      %6652 = vmatprep.mubr.f32.mxu0 0.0
      %6653 = vmatmul.mubr.f32.gmra.mrb[0].mxu0 %v5922
      %v6654 = vpop.f32.mrb[0].mxu0
      %v6655 = vadd.f32 %v6221, %v6654
      %v6656 = vpop.f32.mrb[0].mxu0
      %6657 = vmatprep.mubr.f32.mxu0 0.0
      %6658 = vmatmul.mubr.f32.gmra.mrb[0].mxu0 %v5925
      %v6659 = vpop.f32.mrb[0].mxu0
      %v6660 = vadd.f32 %v6226, %v6659
      %v6661 = vpop.f32.mrb[0].mxu0
      %6662 = vmatprep.mubr.f32.mxu0 0.0
      %6663 = vmatmul.mubr.f32.gmra.mrb[0].mxu0 %v5928
      %v6664 = vpop.f32.mrb[0].mxu0
      %v6665 = vadd.f32 %v6231, %v6664
      %v6666 = vpop.f32.mrb[0].mxu0
      %6667 = vmatprep.mubr.f32.mxu0 0.0
      %6668 = vmatmul.mubr.f32.gmra.mrb[0].mxu0 %v5931
      %v6669 = vpop.f32.mrb[0].mxu0
      %v6670 = vadd.f32 %v6236, %v6669
      %v6671 = vpop.f32.mrb[0].mxu0
      %6672 = vmatprep.mubr.f32.mxu0 0.0
      %6673 = vmatmul.mubr.f32.gmra.mrb[0].mxu0 %v5934
      %v6674 = vpop.f32.mrb[0].mxu0
      %v6675 = vadd.f32 %v6241, %v6674
      %v6676 = vpop.f32.mrb[0].mxu0
      %6677 = vmatprep.mubr.f32.mxu0 0.0
      %6678 = vmatmul.mubr.f32.gmra.mrb[0].mxu0 %v5937
      %v6679 = vpop.f32.mrb[0].mxu0
      %v6680 = vadd.f32 %v6246, %v6679
      %v6681 = vpop.f32.mrb[0].mxu0
      %6682 = vmatprep.mubr.f32.mxu0 0.0
      %6683 = vmatmul.mubr.f32.gmra.mrb[0].mxu0 %v5940
      %v6684 = vpop.f32.mrb[0].mxu0
      %v6685 = vadd.f32 %v6251, %v6684
      %v6686 = vpop.f32.mrb[0].mxu0
      %6687 = vmatprep.mubr.f32.mxu0 0.0
      %6688 = vmatmul.mubr.f32.gmra.mrb[0].mxu0 %v5943
      %v6689 = vpop.f32.mrb[0].mxu0
      %v6690 = vadd.f32 %v6256, %v6689
      %v6691 = vpop.f32.mrb[0].mxu0
      %6692 = vmatprep.mubr.f32.mxu0 0.0
      %6693 = vmatmul.mubr.f32.gmra.mrb[0].mxu0 %v5946
      %v6694 = vpop.f32.mrb[0].mxu0
      %v6695 = vadd.f32 %v6261, %v6694
      %v6696 = vpop.f32.mrb[0].mxu0
      %6697 = vmatprep.mubr.f32.mxu0 0.0
      %6698 = vmatmul.mubr.f32.gmra.mrb[0].mxu0 %v5949
      %v6699 = vpop.f32.mrb[0].mxu0
      %v6700 = vadd.f32 %v6266, %v6699
      %v6701 = vpop.f32.mrb[0].mxu0
      %6702 = vmatprep.mubr.f32.mxu0 0.0
      %6703 = vmatmul.mubr.f32.gmra.mrb[0].mxu0 %v5952
      %v6704 = vpop.f32.mrb[0].mxu0
      %v6705 = vadd.f32 %v6271, %v6704
      %v6706 = vpop.f32.mrb[0].mxu0
      %6707 = vmatprep.mubr.f32.mxu0 0.0
      %6708 = vmatmul.mubr.f32.gmra.mrb[0].mxu0 %v5955
      %v6709 = vpop.f32.mrb[0].mxu0
      %v6710 = vadd.f32 %v6276, %v6709
      %v6711 = vpop.f32.mrb[0].mxu0
      %6712 = vmatprep.mubr.f32.mxu0 0.0
      %6713 = vmatmul.mubr.f32.gmra.mrb[0].mxu0 %v5958
      %v6714 = vpop.f32.mrb[0].mxu0
      %v6715 = vadd.f32 %v6281, %v6714
      %v6716 = vpop.f32.mrb[0].mxu0
      %6717 = vmatprep.mubr.f32.mxu0 0.0
      %6718 = vmatmul.mubr.f32.gmra.mrb[0].mxu0 %v5961
      %v6719 = vpop.f32.mrb[0].mxu0
      %v6720 = vadd.f32 %v6286, %v6719
      %v6721 = vpop.f32.mrb[0].mxu0
      %6722 = vmatprep.mubr.f32.mxu0 0.0
      %6723 = vmatmul.mubr.f32.gmra.mrb[0].mxu0 %v5964
      %v6724 = vpop.f32.mrb[0].mxu0
      %v6725 = vadd.f32 %v6291, %v6724
      %v6726 = vpop.f32.mrb[0].mxu0
      %6727 = vmatprep.mubr.f32.mxu0 0.0
      %6728 = vmatmul.mubr.f32.gmra.mrb[0].mxu0 %v5967
      %v6729 = vpop.f32.mrb[0].mxu0
      %v6730 = vadd.f32 %v6296, %v6729
      %v6731 = vpop.f32.mrb[0].mxu0
      %6732 = vmatprep.mubr.f32.mxu0 0.0
      %6733 = vmatmul.mubr.f32.gmra.mrb[0].mxu0 %v5970
      %v6734 = vpop.f32.mrb[0].mxu0
      %v6735 = vadd.f32 %v6301, %v6734
      %v6736 = vpop.f32.mrb[0].mxu0
      %6737 = vmatprep.mubr.f32.mxu0 0.0
      %6738 = vmatmul.mubr.f32.gmra.mrb[0].mxu0 %v5973
      %v6739 = vpop.f32.mrb[0].mxu0
      %v6740 = vadd.f32 %v6306, %v6739
      %v6741 = vpop.f32.mrb[0].mxu0
      %6742 = vmatprep.mubr.f32.mxu0 0.0
      %6743 = vmatmul.mubr.f32.gmra.mrb[0].mxu0 %v5976
      %v6744 = vpop.f32.mrb[0].mxu0
      %v6745 = vadd.f32 %v6311, %v6744
      %v6746 = vpop.f32.mrb[0].mxu0
      %6747 = vmatprep.mubr.f32.mxu0 0.0
      %6748 = vmatmul.mubr.f32.gmra.mrb[0].mxu0 %v5979
      %v6749 = vpop.f32.mrb[0].mxu0
      %v6750 = vadd.f32 %v6316, %v6749
      %v6751 = vpop.f32.mrb[0].mxu0
      %6752 = vmatprep.mubr.f32.mxu0 0.0
      %6753 = vmatmul.mubr.f32.gmra.mrb[0].mxu0 %v5982
      %v6754 = vpop.f32.mrb[0].mxu0
      %v6755 = vadd.f32 %v6321, %v6754
      %v6756 = vpop.f32.mrb[0].mxu0
      %6757 = vmatprep.mubr.f32.mxu0 0.0
      %6758 = vmatmul.mubr.f32.gmra.mrb[0].mxu0 %v5985
      %v6759 = vpop.f32.mrb[0].mxu0
      %v6760 = vadd.f32 %v6326, %v6759
      %v6761 = vpop.f32.mrb[0].mxu0
      %6762 = vmatprep.mubr.f32.mxu0 0.0
      %6763 = vmatmul.mubr.f32.gmra.mrb[0].mxu0 %v5988
      %v6764 = vpop.f32.mrb[0].mxu0
      %v6765 = vadd.f32 %v6331, %v6764
      %v6766 = vpop.f32.mrb[0].mxu0
      %6767 = vmatprep.mubr.f32.mxu0 0.0
      %6768 = vmatmul.mubr.f32.gmra.mrb[0].mxu0 %v5991
      %v6769 = vpop.f32.mrb[0].mxu0
      %v6770 = vadd.f32 %v6336, %v6769
      %v6771 = vpop.f32.mrb[0].mxu0
      %6772 = vmatprep.mubr.f32.mxu0 0.0
      %6773 = vmatmul.mubr.f32.gmra.mrb[0].mxu0 %v5994
      %v6774 = vpop.f32.mrb[0].mxu0
      %v6775 = vadd.f32 %v6341, %v6774
      %v6776 = vpop.f32.mrb[0].mxu0
      %6777 = vmatprep.mubr.f32.mxu0 0.0
      %6778 = vmatmul.mubr.f32.gmra.mrb[0].mxu0 %v5997
      %v6779 = vpop.f32.mrb[0].mxu0
      %v6780 = vadd.f32 %v6346, %v6779
      %v6781 = vpop.f32.mrb[0].mxu0
      %6782 = vmatprep.mubr.f32.mxu0 0.0
      %6783 = vmatmul.mubr.f32.gmra.mrb[0].mxu0 %v6000
      %v6784 = vpop.f32.mrb[0].mxu0
      %v6785 = vadd.f32 %v6351, %v6784
      %v6786 = vpop.f32.mrb[0].mxu0
      %6787 = vmatprep.mubr.f32.mxu0 0.0
      %6788 = vmatmul.mubr.f32.gmra.mrb[0].mxu0 %v6003
      %v6789 = vpop.f32.mrb[0].mxu0
      %v6790 = vadd.f32 %v6356, %v6789
      %v6791 = vpop.f32.mrb[0].mxu0
      %6792 = vmatprep.mubr.f32.mxu0 0.0
      %6793 = vmatmul.mubr.f32.gmra.mrb[0].mxu0 %v6006
      %v6794 = vpop.f32.mrb[0].mxu0
      %v6795 = vadd.f32 %v6361, %v6794
      %v6796 = vpop.f32.mrb[0].mxu0
      %6797 = vmatprep.mubr.f32.mxu0 0.0
      %6798 = vmatmul.mubr.f32.gmra.mrb[0].mxu0 %v6009
      %v6799 = vpop.f32.mrb[0].mxu0
      %v6800 = vadd.f32 %v6366, %v6799
      %v6801 = vpop.f32.mrb[0].mxu0
      %6802 = vmatprep.mubr.f32.mxu0 0.0
      %6803 = vmatmul.mubr.f32.gmra.mrb[0].mxu0 %v6012
      %v6804 = vpop.f32.mrb[0].mxu0
      %v6805 = vadd.f32 %v6371, %v6804
      %v6806 = vpop.f32.mrb[0].mxu0
      %6807 = vmatprep.mubr.f32.mxu0 0.0
      %6808 = vmatmul.mubr.f32.gmra.mrb[0].mxu0 %v6015
      %v6809 = vpop.f32.mrb[0].mxu0
      %v6810 = vadd.f32 %v6376, %v6809
      %v6811 = vpop.f32.mrb[0].mxu0
      %6812 = vmatprep.mubr.f32.mxu0 0.0
      %6813 = vmatmul.mubr.f32.gmra.mrb[0].mxu0 %v6018
      %v6814 = vpop.f32.mrb[0].mxu0
      %v6815 = vadd.f32 %v6381, %v6814
      %v6816 = vpop.f32.mrb[0].mxu0
      %6817 = vmatprep.mubr.f32.mxu0 0.0
      %6818 = vmatmul.mubr.f32.gmra.mrb[0].mxu0 %v6021
      %v6819 = vpop.f32.mrb[0].mxu0
      %v6820 = vadd.f32 %v6386, %v6819
      %v6821 = vpop.f32.mrb[0].mxu0
      %6822 = vmatprep.mubr.f32.mxu0 0.0
      %6823 = vmatmul.mubr.f32.gmra.mrb[0].mxu0 %v6024
      %v6824 = vpop.f32.mrb[0].mxu0
      %v6825 = vadd.f32 %v6391, %v6824
      %v6826 = vpop.f32.mrb[0].mxu0
      %6827 = vmatprep.mubr.f32.mxu0 0.0
      %6828 = vmatmul.mubr.f32.gmra.mrb[0].mxu0 %v6027
      %v6829 = vpop.f32.mrb[0].mxu0
      %v6830 = vadd.f32 %v6396, %v6829
      %v6831 = vpop.f32.mrb[0].mxu0
      %6832 = vmatprep.mubr.f32.mxu0 0.0
      %6833 = vmatmul.mubr.f32.gmra.mrb[0].mxu0 %v6030
      %v6834 = vpop.f32.mrb[0].mxu0
      %v6835 = vadd.f32 %v6401, %v6834
      %v6836 = vpop.f32.mrb[0].mxu0
      %6837 = vmatprep.mubr.f32.mxu0 0.0
      %6838 = vmatmul.mubr.f32.gmra.mrb[0].mxu0 %v6033
      %v6839 = vpop.f32.mrb[0].mxu0
      %v6840 = vadd.f32 %v6406, %v6839
      %v6841 = vpop.f32.mrb[0].mxu0
      %6842 = vmatprep.mubr.f32.mxu0 0.0
      %6843 = vmatmul.mubr.f32.gmra.mrb[0].mxu0 %v6036
      %v6844 = vpop.f32.mrb[0].mxu0
      %v6845 = vadd.f32 %v6411, %v6844
      %v6846 = vpop.f32.mrb[0].mxu0
      %6847 = vmatprep.mubr.f32.mxu0 0.0
      %6848 = vmatmul.mubr.f32.gmra.mrb[0].mxu0 %v6039
      %v6849 = vpop.f32.mrb[0].mxu0
      %v6850 = vadd.f32 %v6416, %v6849
      %v6851 = vpop.f32.mrb[0].mxu0
      %6852 = vmatprep.mubr.f32.mxu0 0.0
      %6853 = vmatmul.mubr.f32.gmra.mrb[0].mxu0 %v6042
      %v6854 = vpop.f32.mrb[0].mxu0
      %v6855 = vadd.f32 %v6421, %v6854
      %v6856 = vpop.f32.mrb[0].mxu0
      %6857 = vmatprep.mubr.f32.mxu0 0.0
      %6858 = vmatmul.mubr.f32.gmra.mrb[0].mxu0 %v6045
      %v6859 = vpop.f32.mrb[0].mxu0
      %v6860 = vadd.f32 %v6426, %v6859
      %v6861 = vpop.f32.mrb[0].mxu0
      %6862 = vmatprep.mubr.f32.mxu0 0.0
      %6863 = vmatmul.mubr.f32.gmra.mrb[0].mxu0 %v6048
      %v6864 = vpop.f32.mrb[0].mxu0
      %v6865 = vadd.f32 %v6431, %v6864
      %v6866 = vpop.f32.mrb[0].mxu0
      %6867 = vmatprep.mubr.f32.mxu0 0.0
      %6868 = vmatmul.mubr.f32.gmra.mrb[0].mxu0 %v6051
      %v6869 = vpop.f32.mrb[0].mxu0
      %v6870 = vadd.f32 %v6436, %v6869
      %v6871 = vpop.f32.mrb[0].mxu0
      %6872 = vmatprep.mubr.f32.mxu0 0.0
      %6873 = vmatmul.mubr.f32.gmra.mrb[0].mxu0 %v6054
      %v6874 = vpop.f32.mrb[0].mxu0
      %v6875 = vadd.f32 %v6441, %v6874
      %v6876 = vpop.f32.mrb[0].mxu0
      %6877 = vmatprep.mubr.f32.mxu0 0.0
      %6878 = vmatmul.mubr.f32.gmra.mrb[0].mxu0 %v6057
      %v6879 = vpop.f32.mrb[0].mxu0
      %v6880 = vadd.f32 %v6446, %v6879
      %v6881 = vpop.f32.mrb[0].mxu0
      %6882 = vmatprep.mubr.f32.mxu0 0.0
      %6883 = vmatmul.mubr.f32.gmra.mrb[0].mxu0 %v6060
      %v6884 = vpop.f32.mrb[0].mxu0
      %v6885 = vadd.f32 %v6451, %v6884
      %v6886 = vpop.f32.mrb[0].mxu0
      %6887 = vmatprep.mubr.f32.mxu0 0.0
      %6888 = vmatmul.mubr.f32.gmra.mrb[0].mxu0 %v6063
      %v6889 = vpop.f32.mrb[0].mxu0
      %v6890 = vadd.f32 %v6456, %v6889
      %v6891 = vpop.f32.mrb[0].mxu0
      %6892 = vmatprep.mubr.f32.mxu0 0.0
      %6893 = vmatmul.mubr.f32.gmra.mrb[0].mxu0 %v6066
      %v6894 = vpop.f32.mrb[0].mxu0
      %v6895 = vadd.f32 %v6461, %v6894
      %v6896 = vpop.f32.mrb[0].mxu0
      %6897 = vmatprep.mubr.f32.mxu0 0.0
      %6898 = vmatmul.mubr.f32.gmra.mrb[0].mxu0 %v6069
      %v6899 = vpop.f32.mrb[0].mxu0
      %v6900 = vadd.f32 %v6466, %v6899
      %v6901 = vpop.f32.mrb[0].mxu0
      %6902 = vmatprep.mubr.f32.mxu0 0.0
      %6903 = vmatmul.mubr.f32.gmra.mrb[0].mxu0 %v6072
      %v6904 = vpop.f32.mrb[0].mxu0
      %v6905 = vadd.f32 %v6471, %v6904
      %v6906 = vpop.f32.mrb[0].mxu0
      %6907 = vmatprep.mubr.f32.mxu0 0.0
      %6908 = vmatmul.mubr.f32.gmra.mrb[0].mxu0 %v6075
      %v6909 = vpop.f32.mrb[0].mxu0
      %v6910 = vadd.f32 %v6476, %v6909
      %v6911 = vpop.f32.mrb[0].mxu0
      %6912 = vmatprep.mubr.f32.mxu0 0.0
      %6913 = vmatmul.mubr.f32.gmra.mrb[0].mxu0 %v6078
      %v6914 = vpop.f32.mrb[0].mxu0
      %v6915 = vadd.f32 %v6481, %v6914
      %v6916 = vpop.f32.mrb[0].mxu0
      %6917 = vmatprep.mubr.f32.mxu0 0.0
      %6918 = vmatmul.mubr.f32.gmra.mrb[0].mxu0 %v6081
      %v6919 = vpop.f32.mrb[0].mxu0
      %v6920 = vadd.f32 %v6486, %v6919
      %v6921 = vpop.f32.mrb[0].mxu0
      %6922 = vmatprep.mubr.f32.mxu0 0.0
      %6923 = vmatmul.mubr.f32.gmra.mrb[0].mxu0 %v6084
      %v6924 = vpop.f32.mrb[0].mxu0
      %v6925 = vadd.f32 %v6491, %v6924
      %v6926 = vpop.f32.mrb[0].mxu0
      %6927 = vmatprep.mubr.f32.mxu0 0.0
      %6928 = vmatmul.mubr.f32.gmra.mrb[0].mxu0 %v6087
      %v6929 = vpop.f32.mrb[0].mxu0
      %v6930 = vadd.f32 %v6496, %v6929
      %v6931 = vpop.f32.mrb[0].mxu0
      %6932 = vmatprep.mubr.f32.mxu0 0.0
      %6933 = vmatmul.mubr.f32.gmra.mrb[0].mxu0 %v6515
      %v6934 = vpop.f32.mrb[0].mxu0
      %v6935 = vadd.f32 %v6501, %v6934
      %v6936 = vpop.f32.mrb[0].mxu0
      %6937 = vmatprep.mubr.f32.mxu0 0.0
      %6938 = vmatmul.mubr.f32.gmra.mrb[0].mxu0 %v6518
      %v6939 = vpop.f32.mrb[0].mxu0
      %v6940 = vadd.f32 %v6506, %v6939
      %v6941 = vpop.f32.mrb[0].mxu0
      %6942 = vmatprep.mubr.f32.mxu0 0.0
      %6943 = vmatmul.mubr.f32.gmra.mrb[0].mxu0 %v6521
      %v6944 = vpop.f32.mrb[0].mxu0
      %v6945 = vadd.f32 %v6511, %v6944
      %v6946 = vpop.f32.mrb[0].mxu0
      %6947 = vdwg.mxu0
      %v6948 = vld [vmem:[#allocation3 + $0x48] sm:$0xff]
      %v6949 = vld [vmem:[#allocation3 + $0x50] sm:$0xff]
      %v6950 = vld [vmem:[#allocation3 + $0x58] sm:$0xff]
      %v6951 = vld [vmem:[#allocation3 + $0x60] sm:$0xff]
      %v6952 = vld [vmem:[#allocation3 + $0x68] sm:$0xff]
      %v6953 = vld [vmem:[#allocation3 + $0x70] sm:$0xff]
      %v6954 = vld [vmem:[#allocation3 + $0x78] sm:$0xff]
      %v6955 = vld [vmem:[#allocation3 + $0x80] sm:$0xff]
      %v6956 = vld [vmem:[#allocation3 + $0x88] sm:$0xff]
      %v6957 = vld [vmem:[#allocation3 + $0x90] sm:$0xff]
      %v6958 = vld [vmem:[#allocation3 + $0x98] sm:$0xff]
      %v6959 = vld [vmem:[#allocation3 + $0xa0] sm:$0xff]
      %v6960 = vld [vmem:[#allocation3 + $0xa8] sm:$0xff]
      %v6961 = vld [vmem:[#allocation3 + $0xb0] sm:$0xff]
      %v6962 = vld [vmem:[#allocation3 + $0xb8] sm:$0xff]
      %v6963 = vld [vmem:[#allocation3 + $0xc0] sm:$0xff]
      %v6964 = vld [vmem:[#allocation3 + $0xc8] sm:$0xff]
      %v6965 = vld [vmem:[#allocation3 + $0xd0] sm:$0xff]
      %v6966 = vld [vmem:[#allocation3 + $0xd8] sm:$0xff]
      %v6967 = vld [vmem:[#allocation3 + $0xe0] sm:$0xff]
      %v6968 = vld [vmem:[#allocation3 + $0xe8] sm:$0xff]
      %v6969 = vld [vmem:[#allocation3 + $0xf0] sm:$0xff]
      %v6970 = vld [vmem:[#allocation3 + $0xf8] sm:$0xff]
      %v6971 = vld [vmem:[#allocation3 + $0x100] sm:$0xff]
      %v6972 = vld [vmem:[#allocation3 + $0x108] sm:$0xff]
      %v6973 = vld [vmem:[#allocation3 + $0x110] sm:$0xff]
      %v6974 = vld [vmem:[#allocation3 + $0x118] sm:$0xff]
      %v6975 = vld [vmem:[#allocation3 + $0x120] sm:$0xff]
      %v6976 = vld [vmem:[#allocation3 + $0x128] sm:$0xff]
      %v6977 = vld [vmem:[#allocation3 + $0x130] sm:$0xff]
      %v6978 = vld [vmem:[#allocation3 + $0x138] sm:$0xff]
      %v6979 = vld [vmem:[#allocation3 + $0x140] sm:$0xff]
      %v6980 = vld [vmem:[#allocation3 + $0x148] sm:$0xff]
      %v6981 = vld [vmem:[#allocation3 + $0x150] sm:$0xff]
      %v6982 = vld [vmem:[#allocation3 + $0x158] sm:$0xff]
      %v6983 = vld [vmem:[#allocation3 + $0x160] sm:$0xff]
      %v6984 = vld [vmem:[#allocation3 + $0x168] sm:$0xff]
      %v6985 = vld [vmem:[#allocation3 + $0x170] sm:$0xff]
      %v6986 = vld [vmem:[#allocation3 + $0x178] sm:$0xff]
      %v6987 = vld [vmem:[#allocation3 + $0x180] sm:$0xff]
      %v6988 = vld [vmem:[#allocation3 + $0x188] sm:$0xff]
      %v6989 = vld [vmem:[#allocation3 + $0x190] sm:$0xff]
      %v6990 = vld [vmem:[#allocation3 + $0x198] sm:$0xff]
      %v6991 = vld [vmem:[#allocation3 + $0x1a0] sm:$0xff]
      %v6992 = vld [vmem:[#allocation3 + $0x1a8] sm:$0xff]
      %v6993 = vld [vmem:[#allocation3 + $0x1b0] sm:$0xff]
      %v6994 = vld [vmem:[#allocation3 + $0x1b8] sm:$0xff]
      %v6995 = vld [vmem:[#allocation3 + $0x1c0] sm:$0xff]
      %v6996 = vld [vmem:[#allocation3 + $0x1c8] sm:$0xff]
      %v6997 = vld [vmem:[#allocation3 + $0x1d0] sm:$0xff]
      %v6998 = vld [vmem:[#allocation3 + $0x1d8] sm:$0xff]
      %v6999 = vld [vmem:[#allocation3 + $0x1e0] sm:$0xff]
      %v7000 = vld [vmem:[#allocation3 + $0x1e8] sm:$0xff]
      %v7001 = vld [vmem:[#allocation3 + $0x1f0] sm:$0xff]
      %v7002 = vld [vmem:[#allocation3 + $0x1f8] sm:$0xff]
      %v7003 = vld [vmem:[#allocation3 + $0x200] sm:$0xff]
      %v7004 = vld [vmem:[#allocation3 + $0x208] sm:$0xff]
      %v7005 = vld [vmem:[#allocation3 + $0x210] sm:$0xff]
      %v7006 = vld [vmem:[#allocation3 + $0x218] sm:$0xff]
      %v7007 = vld [vmem:[#allocation3 + $0x220] sm:$0xff]
      %v7008 = vld [vmem:[#allocation3 + $0x228] sm:$0xff]
      %v7009 = vld [vmem:[#allocation3 + $0x230] sm:$0xff]
      %v7010 = vld [vmem:[#allocation3 + $0x238] sm:$0xff]
      %v7011 = vld [vmem:[#allocation3 + $0x240] sm:$0xff]
      %v7012 = vld [vmem:[#allocation3 + $0x248] sm:$0xff]
      %v7013 = vld [vmem:[#allocation3 + $0x250] sm:$0xff]
      %v7014 = vld [vmem:[#allocation3 + $0x258] sm:$0xff]
      %v7015 = vld [vmem:[#allocation3 + $0x260] sm:$0xff]
      %v7016 = vld [vmem:[#allocation3 + $0x268] sm:$0xff]
      %v7017 = vld [vmem:[#allocation3 + $0x270] sm:$0xff]
      %v7018 = vld [vmem:[#allocation3 + $0x278] sm:$0xff]
      %v7019 = vld [vmem:[#allocation3 + $0x280] sm:$0xff]
      %s7020 = scalar_lea.vmem %s4, 240
      %v7021 = vld [vmem:[%s7020] sm:$0xff]
      %v7022 = vld [vmem:[%s7020 + $0x8] sm:$0xff]
      %v7023 = vld [vmem:[%s7020 + $0x10] sm:$0xff]
      %v7024 = vld [vmem:[%s7020 + $0x18] sm:$0xff]
      %v7025 = vld [vmem:[%s7020 + $0x20] sm:$0xff]
      %v7026 = vld [vmem:[%s7020 + $0x28] sm:$0xff]
      %v7027 = vld [vmem:[%s7020 + $0x30] sm:$0xff]
      %v7028 = vld [vmem:[%s7020 + $0x38] sm:$0xff]
      %v7029 = vld [vmem:[%s7020 + $0x40] sm:$0xff]
      %v7030 = vld [vmem:[%s7020 + $0x48] sm:$0xff]
      %v7031 = vld [vmem:[%s7020 + $0x50] sm:$0xff]
      %v7032 = vld [vmem:[%s7020 + $0x58] sm:$0xff]
      %v7033 = vld [vmem:[%s7020 + $0x60] sm:$0xff]
      %v7034 = vld [vmem:[%s7020 + $0x68] sm:$0xff]
      %v7035 = vld [vmem:[%s7020 + $0x70] sm:$0xff]
      %v7037 = vsel %vm5685, %v6948, 0
      %v7040 = vsel %vm5685, %v6949, 0
      %v7043 = vsel %vm5685, %v6950, 0
      %v7046 = vsel %vm5685, %v6951, 0
      %v7049 = vsel %vm5685, %v6952, 0
      %v7052 = vsel %vm5685, %v6953, 0
      %v7055 = vsel %vm5685, %v6954, 0
      %v7058 = vsel %vm5685, %v6955, 0
      %v7061 = vsel %vm5685, %v6956, 0
      %v7064 = vsel %vm5685, %v6957, 0
      %v7067 = vsel %vm5685, %v6958, 0
      %v7070 = vsel %vm5685, %v6959, 0
      %v7073 = vsel %vm5685, %v6960, 0
      %v7076 = vsel %vm5685, %v6961, 0
      %v7079 = vsel %vm5685, %v6962, 0
      %v7082 = vsel %vm5685, %v6963, 0
      %v7085 = vsel %vm5685, %v6964, 0
      %v7088 = vsel %vm5685, %v6965, 0
      %v7091 = vsel %vm5685, %v6966, 0
      %v7094 = vsel %vm5685, %v6967, 0
      %v7097 = vsel %vm5685, %v6968, 0
      %v7100 = vsel %vm5685, %v6969, 0
      %v7103 = vsel %vm5685, %v6970, 0
      %v7106 = vsel %vm5685, %v6971, 0
      %v7109 = vsel %vm5685, %v6972, 0
      %v7112 = vsel %vm5685, %v6973, 0
      %v7115 = vsel %vm5685, %v6974, 0
      %v7118 = vsel %vm5685, %v6975, 0
      %v7121 = vsel %vm5685, %v6976, 0
      %v7124 = vsel %vm5685, %v6977, 0
      %v7127 = vsel %vm5685, %v6978, 0
      %v7130 = vsel %vm5685, %v6979, 0
      %v7133 = vsel %vm5685, %v6980, 0
      %v7136 = vsel %vm5685, %v6981, 0
      %v7139 = vsel %vm5685, %v6982, 0
      %v7142 = vsel %vm5685, %v6983, 0
      %v7145 = vsel %vm5685, %v6984, 0
      %v7148 = vsel %vm5685, %v6985, 0
      %v7151 = vsel %vm5685, %v6986, 0
      %v7154 = vsel %vm5685, %v6987, 0
      %v7157 = vsel %vm5685, %v6988, 0
      %v7160 = vsel %vm5685, %v6989, 0
      %v7163 = vsel %vm5685, %v6990, 0
      %v7166 = vsel %vm5685, %v6991, 0
      %v7169 = vsel %vm5685, %v6992, 0
      %v7172 = vsel %vm5685, %v6993, 0
      %v7175 = vsel %vm5685, %v6994, 0
      %v7178 = vsel %vm5685, %v6995, 0
      %v7181 = vsel %vm5685, %v6996, 0
      %v7184 = vsel %vm5685, %v6997, 0
      %v7187 = vsel %vm5685, %v6998, 0
      %v7190 = vsel %vm5685, %v6999, 0
      %v7193 = vsel %vm5685, %v7000, 0
      %v7196 = vsel %vm5685, %v7001, 0
      %v7199 = vsel %vm5685, %v7002, 0
      %v7202 = vsel %vm5685, %v7003, 0
      %v7205 = vsel %vm5685, %v7004, 0
      %v7208 = vsel %vm5685, %v7005, 0
      %v7211 = vsel %vm5685, %v7006, 0
      %v7214 = vsel %vm5685, %v7007, 0
      %v7217 = vsel %vm5685, %v7008, 0
      %v7220 = vsel %vm5685, %v7009, 0
      %v7223 = vsel %vm5685, %v7010, 0
      %v7226 = vsel %vm5685, %v7011, 0
      %v7229 = vsel %vm5685, %v7012, 0
      %v7232 = vsel %vm5685, %v7013, 0
      %v7235 = vsel %vm5685, %v7014, 0
      %v7238 = vsel %vm5685, %v7015, 0
      %v7241 = vsel %vm5685, %v7016, 0
      %v7244 = vsel %vm5685, %v7017, 0
      %v7247 = vsel %vm5685, %v7018, 0
      %v7250 = vsel %vm5685, %v7019, 0
      %7252 = vmatprep.subr.mxu0 0.0
      %7253 = vmatpush1.msra.mxu0 %v7021
      %7254 = vmatprep.subr.mxu0 0.0
      %7255 = vmatpush1.msra.mxu0 %v7022
      %7256 = vmatprep.subr.mxu0 0.0
      %7257 = vmatpush1.msra.mxu0 %v7023
      %7258 = vmatprep.subr.mxu0 0.0
      %7259 = vmatpush1.msra.mxu0 %v7024
      %7260 = vmatprep.subr.mxu0 0.0
      %7261 = vmatpush1.msra.mxu0 %v7025
      %7262 = vmatprep.subr.mxu0 0.0
      %7263 = vmatpush1.msra.mxu0 %v7026
      %7264 = vmatprep.subr.mxu0 0.0
      %7265 = vmatpush1.msra.mxu0 %v7027
      %7266 = vmatprep.subr.mxu0 0.0
      %7267 = vmatpush1.msra.mxu0 %v7028
      %7268 = vmatprep.subr.mxu0 0.0
      %7269 = vmatpush1.msra.mxu0 %v7029
      %7270 = vmatprep.subr.mxu0 0.0
      %7271 = vmatpush1.msra.mxu0 %v7030
      %7272 = vmatprep.subr.mxu0 0.0
      %7273 = vmatpush1.msra.mxu0 %v7031
      %7274 = vmatprep.subr.mxu0 0.0
      %7275 = vmatpush1.msra.mxu0 %v7032
      %7276 = vmatprep.subr.mxu0 0.0
      %7277 = vmatpush1.msra.mxu0 %v7033
      %7278 = vmatprep.subr.mxu0 0.0
      %7279 = vmatpush1.msra.mxu0 %v7034
      %7280 = vmatprep.subr.mxu0 0.0
      %7281 = vmatpush1.msra.mxu0 %v7035
      %7282 = vmatprep.subr.mxu0 0.0
      %7283 = vmatpush1.msra.mxu0 0.0
      %7284 = vmatprep.subr.mxu0 0.0
      %7285 = vmatpush1.msra.mxu0 0.0
      %7286 = vmatprep.subr.mxu0 0.0
      %7287 = vmatpush1.msra.mxu0 0.0
      %7288 = vmatprep.subr.mxu0 0.0
      %7289 = vmatpush1.msra.mxu0 0.0
      %7290 = vmatprep.subr.mxu0 0.0
      %7291 = vmatpush1.msra.mxu0 0.0
      %7292 = vmatprep.subr.mxu0 0.0
      %7293 = vmatpush1.msra.mxu0 0.0
      %7294 = vmatprep.subr.mxu0 0.0
      %7295 = vmatpush1.msra.mxu0 0.0
      %7296 = vmatprep.subr.mxu0 0.0
      %7297 = vmatpush1.msra.mxu0 0.0
      %7298 = vmatprep.subr.mxu0 0.0
      %7299 = vmatpush1.msra.mxu0 0.0
      %7300 = vmatprep.subr.mxu0 0.0
      %7301 = vmatpush1.msra.mxu0 0.0
      %7302 = vmatprep.subr.mxu0 0.0
      %7303 = vmatpush1.msra.mxu0 0.0
      %7304 = vmatprep.subr.mxu0 0.0
      %7305 = vmatpush1.msra.mxu0 0.0
      %7306 = vmatprep.subr.mxu0 0.0
      %7307 = vmatpush1.msra.mxu0 0.0
      %7308 = vmatprep.subr.mxu0 0.0
      %7309 = vmatpush1.msra.mxu0 0.0
      %7310 = vmatprep.subr.mxu0 0.0
      %7311 = vmatpush1.msra.mxu0 0.0
      %7312 = vmatprep.subr.mxu0 0.0
      %7313 = vmatpush1.msra.mxu0 0.0
      %7314 = vmatprep.subr.mxu0 0.0
      %7315 = vmatpush1.msra.mxu0 0.0
      %7316 = vmatprep.mubr.f32.mxu0 0.0
      %7317 = vmatmul.mubr.f32.gmra.mrb[0].mxu0 %v7037
      %v7318 = vpop.f32.mrb[0].mxu0
      %v7319 = vadd.f32 0.0, %v7318
      %v7320 = vpop.f32.mrb[0].mxu0
      %7321 = vmatprep.mubr.f32.mxu0 0.0
      %7322 = vmatmul.mubr.f32.gmra.mrb[0].mxu0 %v7040
      %v7323 = vpop.f32.mrb[0].mxu0
      %v7324 = vadd.f32 0.0, %v7323
      %v7325 = vpop.f32.mrb[0].mxu0
      %7326 = vmatprep.mubr.f32.mxu0 0.0
      %7327 = vmatmul.mubr.f32.gmra.mrb[0].mxu0 %v7043
      %v7328 = vpop.f32.mrb[0].mxu0
      %v7329 = vadd.f32 0.0, %v7328
      %v7330 = vpop.f32.mrb[0].mxu0
      %7331 = vmatprep.mubr.f32.mxu0 0.0
      %7332 = vmatmul.mubr.f32.gmra.mrb[0].mxu0 %v7046
      %v7333 = vpop.f32.mrb[0].mxu0
      %v7334 = vadd.f32 0.0, %v7333
      %v7335 = vpop.f32.mrb[0].mxu0
      %7336 = vmatprep.mubr.f32.mxu0 0.0
      %7337 = vmatmul.mubr.f32.gmra.mrb[0].mxu0 %v7049
      %v7338 = vpop.f32.mrb[0].mxu0
      %v7339 = vadd.f32 0.0, %v7338
      %v7340 = vpop.f32.mrb[0].mxu0
      %7341 = vmatprep.mubr.f32.mxu0 0.0
      %7342 = vmatmul.mubr.f32.gmra.mrb[0].mxu0 %v7052
      %v7343 = vpop.f32.mrb[0].mxu0
      %v7344 = vadd.f32 0.0, %v7343
      %v7345 = vpop.f32.mrb[0].mxu0
      %7346 = vmatprep.mubr.f32.mxu0 0.0
      %7347 = vmatmul.mubr.f32.gmra.mrb[0].mxu0 %v7055
      %v7348 = vpop.f32.mrb[0].mxu0
      %v7349 = vadd.f32 0.0, %v7348
      %v7350 = vpop.f32.mrb[0].mxu0
      %7351 = vmatprep.mubr.f32.mxu0 0.0
      %7352 = vmatmul.mubr.f32.gmra.mrb[0].mxu0 %v7058
      %v7353 = vpop.f32.mrb[0].mxu0
      %v7354 = vadd.f32 0.0, %v7353
      %v7355 = vpop.f32.mrb[0].mxu0
      %7356 = vmatprep.mubr.f32.mxu0 0.0
      %7357 = vmatmul.mubr.f32.gmra.mrb[0].mxu0 %v7061
      %v7358 = vpop.f32.mrb[0].mxu0
      %v7359 = vadd.f32 0.0, %v7358
      %v7360 = vpop.f32.mrb[0].mxu0
      %7361 = vmatprep.mubr.f32.mxu0 0.0
      %7362 = vmatmul.mubr.f32.gmra.mrb[0].mxu0 %v7064
      %v7363 = vpop.f32.mrb[0].mxu0
      %v7364 = vadd.f32 0.0, %v7363
      %v7365 = vpop.f32.mrb[0].mxu0
      %7366 = vmatprep.mubr.f32.mxu0 0.0
      %7367 = vmatmul.mubr.f32.gmra.mrb[0].mxu0 %v7067
      %v7368 = vpop.f32.mrb[0].mxu0
      %v7369 = vadd.f32 0.0, %v7368
      %v7370 = vpop.f32.mrb[0].mxu0
      %7371 = vmatprep.mubr.f32.mxu0 0.0
      %7372 = vmatmul.mubr.f32.gmra.mrb[0].mxu0 %v7070
      %v7373 = vpop.f32.mrb[0].mxu0
      %v7374 = vadd.f32 0.0, %v7373
      %v7375 = vpop.f32.mrb[0].mxu0
      %7376 = vmatprep.mubr.f32.mxu0 0.0
      %7377 = vmatmul.mubr.f32.gmra.mrb[0].mxu0 %v7073
      %v7378 = vpop.f32.mrb[0].mxu0
      %v7379 = vadd.f32 0.0, %v7378
      %v7380 = vpop.f32.mrb[0].mxu0
      %7381 = vmatprep.mubr.f32.mxu0 0.0
      %7382 = vmatmul.mubr.f32.gmra.mrb[0].mxu0 %v7076
      %v7383 = vpop.f32.mrb[0].mxu0
      %v7384 = vadd.f32 0.0, %v7383
      %v7385 = vpop.f32.mrb[0].mxu0
      %7386 = vmatprep.mubr.f32.mxu0 0.0
      %7387 = vmatmul.mubr.f32.gmra.mrb[0].mxu0 %v7079
      %v7388 = vpop.f32.mrb[0].mxu0
      %v7389 = vadd.f32 0.0, %v7388
      %v7390 = vpop.f32.mrb[0].mxu0
      %7391 = vmatprep.mubr.f32.mxu0 0.0
      %7392 = vmatmul.mubr.f32.gmra.mrb[0].mxu0 %v7082
      %v7393 = vpop.f32.mrb[0].mxu0
      %v7394 = vadd.f32 0.0, %v7393
      %v7395 = vpop.f32.mrb[0].mxu0
      %7396 = vmatprep.mubr.f32.mxu0 0.0
      %7397 = vmatmul.mubr.f32.gmra.mrb[0].mxu0 %v7085
      %v7398 = vpop.f32.mrb[0].mxu0
      %v7399 = vadd.f32 0.0, %v7398
      %v7400 = vpop.f32.mrb[0].mxu0
      %7401 = vmatprep.mubr.f32.mxu0 0.0
      %7402 = vmatmul.mubr.f32.gmra.mrb[0].mxu0 %v7088
      %v7403 = vpop.f32.mrb[0].mxu0
      %v7404 = vadd.f32 0.0, %v7403
      %v7405 = vpop.f32.mrb[0].mxu0
      %7406 = vmatprep.mubr.f32.mxu0 0.0
      %7407 = vmatmul.mubr.f32.gmra.mrb[0].mxu0 %v7091
      %v7408 = vpop.f32.mrb[0].mxu0
      %v7409 = vadd.f32 0.0, %v7408
      %v7410 = vpop.f32.mrb[0].mxu0
      %7411 = vmatprep.mubr.f32.mxu0 0.0
      %7412 = vmatmul.mubr.f32.gmra.mrb[0].mxu0 %v7094
      %v7413 = vpop.f32.mrb[0].mxu0
      %v7414 = vadd.f32 0.0, %v7413
      %v7415 = vpop.f32.mrb[0].mxu0
      %7416 = vmatprep.mubr.f32.mxu0 0.0
      %7417 = vmatmul.mubr.f32.gmra.mrb[0].mxu0 %v7097
      %v7418 = vpop.f32.mrb[0].mxu0
      %v7419 = vadd.f32 0.0, %v7418
      %v7420 = vpop.f32.mrb[0].mxu0
      %7421 = vmatprep.mubr.f32.mxu0 0.0
      %7422 = vmatmul.mubr.f32.gmra.mrb[0].mxu0 %v7100
      %v7423 = vpop.f32.mrb[0].mxu0
      %v7424 = vadd.f32 0.0, %v7423
      %v7425 = vpop.f32.mrb[0].mxu0
      %7426 = vmatprep.mubr.f32.mxu0 0.0
      %7427 = vmatmul.mubr.f32.gmra.mrb[0].mxu0 %v7103
      %v7428 = vpop.f32.mrb[0].mxu0
      %v7429 = vadd.f32 0.0, %v7428
      %v7430 = vpop.f32.mrb[0].mxu0
      %7431 = vmatprep.mubr.f32.mxu0 0.0
      %7432 = vmatmul.mubr.f32.gmra.mrb[0].mxu0 %v7106
      %v7433 = vpop.f32.mrb[0].mxu0
      %v7434 = vadd.f32 0.0, %v7433
      %v7435 = vpop.f32.mrb[0].mxu0
      %7436 = vmatprep.mubr.f32.mxu0 0.0
      %7437 = vmatmul.mubr.f32.gmra.mrb[0].mxu0 %v7109
      %v7438 = vpop.f32.mrb[0].mxu0
      %v7439 = vadd.f32 0.0, %v7438
      %v7440 = vpop.f32.mrb[0].mxu0
      %7441 = vmatprep.mubr.f32.mxu0 0.0
      %7442 = vmatmul.mubr.f32.gmra.mrb[0].mxu0 %v7112
      %v7443 = vpop.f32.mrb[0].mxu0
      %v7444 = vadd.f32 0.0, %v7443
      %v7445 = vpop.f32.mrb[0].mxu0
      %7446 = vmatprep.mubr.f32.mxu0 0.0
      %7447 = vmatmul.mubr.f32.gmra.mrb[0].mxu0 %v7115
      %v7448 = vpop.f32.mrb[0].mxu0
      %v7449 = vadd.f32 0.0, %v7448
      %v7450 = vpop.f32.mrb[0].mxu0
      %7451 = vmatprep.mubr.f32.mxu0 0.0
      %7452 = vmatmul.mubr.f32.gmra.mrb[0].mxu0 %v7118
      %v7453 = vpop.f32.mrb[0].mxu0
      %v7454 = vadd.f32 0.0, %v7453
      %v7455 = vpop.f32.mrb[0].mxu0
      %7456 = vmatprep.mubr.f32.mxu0 0.0
      %7457 = vmatmul.mubr.f32.gmra.mrb[0].mxu0 %v7121
      %v7458 = vpop.f32.mrb[0].mxu0
      %v7459 = vadd.f32 0.0, %v7458
      %v7460 = vpop.f32.mrb[0].mxu0
      %7461 = vmatprep.mubr.f32.mxu0 0.0
      %7462 = vmatmul.mubr.f32.gmra.mrb[0].mxu0 %v7124
      %v7463 = vpop.f32.mrb[0].mxu0
      %v7464 = vadd.f32 0.0, %v7463
      %v7465 = vpop.f32.mrb[0].mxu0
      %7466 = vmatprep.mubr.f32.mxu0 0.0
      %7467 = vmatmul.mubr.f32.gmra.mrb[0].mxu0 %v7127
      %v7468 = vpop.f32.mrb[0].mxu0
      %v7469 = vadd.f32 0.0, %v7468
      %v7470 = vpop.f32.mrb[0].mxu0
      %7471 = vmatprep.mubr.f32.mxu0 0.0
      %7472 = vmatmul.mubr.f32.gmra.mrb[0].mxu0 %v7130
      %v7473 = vpop.f32.mrb[0].mxu0
      %v7474 = vadd.f32 0.0, %v7473
      %v7475 = vpop.f32.mrb[0].mxu0
      %7476 = vmatprep.mubr.f32.mxu0 0.0
      %7477 = vmatmul.mubr.f32.gmra.mrb[0].mxu0 %v7133
      %v7478 = vpop.f32.mrb[0].mxu0
      %v7479 = vadd.f32 0.0, %v7478
      %v7480 = vpop.f32.mrb[0].mxu0
      %7481 = vmatprep.mubr.f32.mxu0 0.0
      %7482 = vmatmul.mubr.f32.gmra.mrb[0].mxu0 %v7136
      %v7483 = vpop.f32.mrb[0].mxu0
      %v7484 = vadd.f32 0.0, %v7483
      %v7485 = vpop.f32.mrb[0].mxu0
      %7486 = vmatprep.mubr.f32.mxu0 0.0
      %7487 = vmatmul.mubr.f32.gmra.mrb[0].mxu0 %v7139
      %v7488 = vpop.f32.mrb[0].mxu0
      %v7489 = vadd.f32 0.0, %v7488
      %v7490 = vpop.f32.mrb[0].mxu0
      %7491 = vmatprep.mubr.f32.mxu0 0.0
      %7492 = vmatmul.mubr.f32.gmra.mrb[0].mxu0 %v7142
      %v7493 = vpop.f32.mrb[0].mxu0
      %v7494 = vadd.f32 0.0, %v7493
      %v7495 = vpop.f32.mrb[0].mxu0
      %7496 = vmatprep.mubr.f32.mxu0 0.0
      %7497 = vmatmul.mubr.f32.gmra.mrb[0].mxu0 %v7145
      %v7498 = vpop.f32.mrb[0].mxu0
      %v7499 = vadd.f32 0.0, %v7498
      %v7500 = vpop.f32.mrb[0].mxu0
      %7501 = vmatprep.mubr.f32.mxu0 0.0
      %7502 = vmatmul.mubr.f32.gmra.mrb[0].mxu0 %v7148
      %v7503 = vpop.f32.mrb[0].mxu0
      %v7504 = vadd.f32 0.0, %v7503
      %v7505 = vpop.f32.mrb[0].mxu0
      %7506 = vmatprep.mubr.f32.mxu0 0.0
      %7507 = vmatmul.mubr.f32.gmra.mrb[0].mxu0 %v7151
      %v7508 = vpop.f32.mrb[0].mxu0
      %v7509 = vadd.f32 0.0, %v7508
      %v7510 = vpop.f32.mrb[0].mxu0
      %7511 = vmatprep.mubr.f32.mxu0 0.0
      %7512 = vmatmul.mubr.f32.gmra.mrb[0].mxu0 %v7154
      %v7513 = vpop.f32.mrb[0].mxu0
      %v7514 = vadd.f32 0.0, %v7513
      %v7515 = vpop.f32.mrb[0].mxu0
      %7516 = vmatprep.mubr.f32.mxu0 0.0
      %7517 = vmatmul.mubr.f32.gmra.mrb[0].mxu0 %v7157
      %v7518 = vpop.f32.mrb[0].mxu0
      %v7519 = vadd.f32 0.0, %v7518
      %v7520 = vpop.f32.mrb[0].mxu0
      %7521 = vmatprep.mubr.f32.mxu0 0.0
      %7522 = vmatmul.mubr.f32.gmra.mrb[0].mxu0 %v7160
      %v7523 = vpop.f32.mrb[0].mxu0
      %v7524 = vadd.f32 0.0, %v7523
      %v7525 = vpop.f32.mrb[0].mxu0
      %7526 = vmatprep.mubr.f32.mxu0 0.0
      %7527 = vmatmul.mubr.f32.gmra.mrb[0].mxu0 %v7163
      %v7528 = vpop.f32.mrb[0].mxu0
      %v7529 = vadd.f32 0.0, %v7528
      %v7530 = vpop.f32.mrb[0].mxu0
      %7531 = vmatprep.mubr.f32.mxu0 0.0
      %7532 = vmatmul.mubr.f32.gmra.mrb[0].mxu0 %v7166
      %v7533 = vpop.f32.mrb[0].mxu0
      %v7534 = vadd.f32 0.0, %v7533
      %v7535 = vpop.f32.mrb[0].mxu0
      %7536 = vmatprep.mubr.f32.mxu0 0.0
      %7537 = vmatmul.mubr.f32.gmra.mrb[0].mxu0 %v7169
      %v7538 = vpop.f32.mrb[0].mxu0
      %v7539 = vadd.f32 0.0, %v7538
      %v7540 = vpop.f32.mrb[0].mxu0
      %7541 = vmatprep.mubr.f32.mxu0 0.0
      %7542 = vmatmul.mubr.f32.gmra.mrb[0].mxu0 %v7172
      %v7543 = vpop.f32.mrb[0].mxu0
      %v7544 = vadd.f32 0.0, %v7543
      %v7545 = vpop.f32.mrb[0].mxu0
      %7546 = vmatprep.mubr.f32.mxu0 0.0
      %7547 = vmatmul.mubr.f32.gmra.mrb[0].mxu0 %v7175
      %v7548 = vpop.f32.mrb[0].mxu0
      %v7549 = vadd.f32 0.0, %v7548
      %v7550 = vpop.f32.mrb[0].mxu0
      %7551 = vmatprep.mubr.f32.mxu0 0.0
      %7552 = vmatmul.mubr.f32.gmra.mrb[0].mxu0 %v7178
      %v7553 = vpop.f32.mrb[0].mxu0
      %v7554 = vadd.f32 0.0, %v7553
      %v7555 = vpop.f32.mrb[0].mxu0
      %7556 = vmatprep.mubr.f32.mxu0 0.0
      %7557 = vmatmul.mubr.f32.gmra.mrb[0].mxu0 %v7181
      %v7558 = vpop.f32.mrb[0].mxu0
      %v7559 = vadd.f32 0.0, %v7558
      %v7560 = vpop.f32.mrb[0].mxu0
      %7561 = vmatprep.mubr.f32.mxu0 0.0
      %7562 = vmatmul.mubr.f32.gmra.mrb[0].mxu0 %v7184
      %v7563 = vpop.f32.mrb[0].mxu0
      %v7564 = vadd.f32 0.0, %v7563
      %v7565 = vpop.f32.mrb[0].mxu0
      %7566 = vmatprep.mubr.f32.mxu0 0.0
      %7567 = vmatmul.mubr.f32.gmra.mrb[0].mxu0 %v7187
      %v7568 = vpop.f32.mrb[0].mxu0
      %v7569 = vadd.f32 0.0, %v7568
      %v7570 = vpop.f32.mrb[0].mxu0
      %7571 = vmatprep.mubr.f32.mxu0 0.0
      %7572 = vmatmul.mubr.f32.gmra.mrb[0].mxu0 %v7190
      %v7573 = vpop.f32.mrb[0].mxu0
      %v7574 = vadd.f32 0.0, %v7573
      %v7575 = vpop.f32.mrb[0].mxu0
      %7576 = vmatprep.mubr.f32.mxu0 0.0
      %7577 = vmatmul.mubr.f32.gmra.mrb[0].mxu0 %v7193
      %v7578 = vpop.f32.mrb[0].mxu0
      %v7579 = vadd.f32 0.0, %v7578
      %v7580 = vpop.f32.mrb[0].mxu0
      %7581 = vmatprep.mubr.f32.mxu0 0.0
      %7582 = vmatmul.mubr.f32.gmra.mrb[0].mxu0 %v7196
      %v7583 = vpop.f32.mrb[0].mxu0
      %v7584 = vadd.f32 0.0, %v7583
      %v7585 = vpop.f32.mrb[0].mxu0
      %7586 = vmatprep.mubr.f32.mxu0 0.0
      %7587 = vmatmul.mubr.f32.gmra.mrb[0].mxu0 %v7199
      %v7588 = vpop.f32.mrb[0].mxu0
      %v7589 = vadd.f32 0.0, %v7588
      %v7590 = vpop.f32.mrb[0].mxu0
      %7591 = vmatprep.mubr.f32.mxu0 0.0
      %7592 = vmatmul.mubr.f32.gmra.mrb[0].mxu0 %v7202
      %v7593 = vpop.f32.mrb[0].mxu0
      %v7594 = vadd.f32 0.0, %v7593
      %v7595 = vpop.f32.mrb[0].mxu0
      %7596 = vmatprep.mubr.f32.mxu0 0.0
      %7597 = vmatmul.mubr.f32.gmra.mrb[0].mxu0 %v7205
      %v7598 = vpop.f32.mrb[0].mxu0
      %v7599 = vadd.f32 0.0, %v7598
      %v7600 = vpop.f32.mrb[0].mxu0
      %7601 = vmatprep.mubr.f32.mxu0 0.0
      %7602 = vmatmul.mubr.f32.gmra.mrb[0].mxu0 %v7208
      %v7603 = vpop.f32.mrb[0].mxu0
      %v7604 = vadd.f32 0.0, %v7603
      %v7605 = vpop.f32.mrb[0].mxu0
      %7606 = vmatprep.mubr.f32.mxu0 0.0
      %7607 = vmatmul.mubr.f32.gmra.mrb[0].mxu0 %v7211
      %v7608 = vpop.f32.mrb[0].mxu0
      %v7609 = vadd.f32 0.0, %v7608
      %v7610 = vpop.f32.mrb[0].mxu0
      %7611 = vmatprep.mubr.f32.mxu0 0.0
      %7612 = vmatmul.mubr.f32.gmra.mrb[0].mxu0 %v7214
      %v7613 = vpop.f32.mrb[0].mxu0
      %v7614 = vadd.f32 0.0, %v7613
      %v7615 = vpop.f32.mrb[0].mxu0
      %7616 = vmatprep.mubr.f32.mxu0 0.0
      %7617 = vmatmul.mubr.f32.gmra.mrb[0].mxu0 %v7217
      %v7618 = vpop.f32.mrb[0].mxu0
      %v7619 = vadd.f32 0.0, %v7618
      %v7620 = vpop.f32.mrb[0].mxu0
      %7621 = vmatprep.mubr.f32.mxu0 0.0
      %7622 = vmatmul.mubr.f32.gmra.mrb[0].mxu0 %v7220
      %v7623 = vpop.f32.mrb[0].mxu0
      %v7624 = vadd.f32 0.0, %v7623
      %v7625 = vpop.f32.mrb[0].mxu0
      %7626 = vmatprep.mubr.f32.mxu0 0.0
      %7627 = vmatmul.mubr.f32.gmra.mrb[0].mxu0 %v7223
      %v7628 = vpop.f32.mrb[0].mxu0
      %v7629 = vadd.f32 0.0, %v7628
      %v7630 = vpop.f32.mrb[0].mxu0
      %7631 = vmatprep.mubr.f32.mxu0 0.0
      %7632 = vmatmul.mubr.f32.gmra.mrb[0].mxu0 %v7226
      %v7633 = vpop.f32.mrb[0].mxu0
      %v7634 = vadd.f32 0.0, %v7633
      %v7635 = vpop.f32.mrb[0].mxu0
      %7636 = vmatprep.mubr.f32.mxu0 0.0
      %7637 = vmatmul.mubr.f32.gmra.mrb[0].mxu0 %v7229
      %v7638 = vpop.f32.mrb[0].mxu0
      %v7639 = vadd.f32 0.0, %v7638
      %v7640 = vpop.f32.mrb[0].mxu0
      %7641 = vmatprep.mubr.f32.mxu0 0.0
      %7642 = vmatmul.mubr.f32.gmra.mrb[0].mxu0 %v7232
      %v7643 = vpop.f32.mrb[0].mxu0
      %v7644 = vadd.f32 0.0, %v7643
      %v7645 = vpop.f32.mrb[0].mxu0
      %7646 = vmatprep.mubr.f32.mxu0 0.0
      %7647 = vmatmul.mubr.f32.gmra.mrb[0].mxu0 %v7235
      %v7648 = vpop.f32.mrb[0].mxu0
      %v7649 = vadd.f32 0.0, %v7648
      %v7650 = vpop.f32.mrb[0].mxu0
      %7651 = vmatprep.mubr.f32.mxu0 0.0
      %7652 = vmatmul.mubr.f32.gmra.mrb[0].mxu0 %v7238
      %v7653 = vpop.f32.mrb[0].mxu0
      %v7654 = vadd.f32 0.0, %v7653
      %v7655 = vpop.f32.mrb[0].mxu0
      %7656 = vmatprep.mubr.f32.mxu0 0.0
      %7657 = vmatmul.mubr.f32.gmra.mrb[0].mxu0 %v7241
      %v7658 = vpop.f32.mrb[0].mxu0
      %v7659 = vadd.f32 0.0, %v7658
      %v7660 = vpop.f32.mrb[0].mxu0
      %7661 = vmatprep.mubr.f32.mxu0 0.0
      %7662 = vmatmul.mubr.f32.gmra.mrb[0].mxu0 %v7244
      %v7663 = vpop.f32.mrb[0].mxu0
      %v7664 = vadd.f32 0.0, %v7663
      %v7665 = vpop.f32.mrb[0].mxu0
      %7666 = vmatprep.mubr.f32.mxu0 0.0
      %7667 = vmatmul.mubr.f32.gmra.mrb[0].mxu0 %v7247
      %v7668 = vpop.f32.mrb[0].mxu0
      %v7669 = vadd.f32 0.0, %v7668
      %v7670 = vpop.f32.mrb[0].mxu0
      %7671 = vmatprep.mubr.f32.mxu0 0.0
      %7672 = vmatmul.mubr.f32.gmra.mrb[0].mxu0 %v7250
      %v7673 = vpop.f32.mrb[0].mxu0
      %v7674 = vadd.f32 0.0, %v7673
      %v7675 = vpop.f32.mrb[0].mxu0
      %7676 = vdwg.mxu0
      %v7677 = vadd.f32 %v6590, %v7319
      %v7678 = vadd.f32 %v6595, %v7324
      %v7679 = vadd.f32 %v6600, %v7329
      %v7680 = vadd.f32 %v6605, %v7334
      %v7681 = vadd.f32 %v6610, %v7339
      %v7682 = vadd.f32 %v6615, %v7344
      %v7683 = vadd.f32 %v6620, %v7349
      %v7684 = vadd.f32 %v6625, %v7354
      %v7685 = vadd.f32 %v6630, %v7359
      %v7686 = vadd.f32 %v6635, %v7364
      %v7687 = vadd.f32 %v6640, %v7369
      %v7688 = vadd.f32 %v6645, %v7374
      %v7689 = vadd.f32 %v6650, %v7379
      %v7690 = vadd.f32 %v6655, %v7384
      %v7691 = vadd.f32 %v6660, %v7389
      %v7692 = vadd.f32 %v6665, %v7394
      %v7693 = vadd.f32 %v6670, %v7399
      %v7694 = vadd.f32 %v6675, %v7404
      %v7695 = vadd.f32 %v6680, %v7409
      %v7696 = vadd.f32 %v6685, %v7414
      %v7697 = vadd.f32 %v6690, %v7419
      %v7698 = vadd.f32 %v6695, %v7424
      %v7699 = vadd.f32 %v6700, %v7429
      %v7700 = vadd.f32 %v6705, %v7434
      %v7701 = vadd.f32 %v6710, %v7439
      %v7702 = vadd.f32 %v6715, %v7444
      %v7703 = vadd.f32 %v6720, %v7449
      %v7704 = vadd.f32 %v6725, %v7454
      %v7705 = vadd.f32 %v6730, %v7459
      %v7706 = vadd.f32 %v6735, %v7464
      %v7707 = vadd.f32 %v6740, %v7469
      %v7708 = vadd.f32 %v6745, %v7474
      %v7709 = vadd.f32 %v6750, %v7479
      %v7710 = vadd.f32 %v6755, %v7484
      %v7711 = vadd.f32 %v6760, %v7489
      %v7712 = vadd.f32 %v6765, %v7494
      %v7713 = vadd.f32 %v6770, %v7499
      %v7714 = vadd.f32 %v6775, %v7504
      %v7715 = vadd.f32 %v6780, %v7509
      %v7716 = vadd.f32 %v6785, %v7514
      %v7717 = vadd.f32 %v6790, %v7519
      %v7718 = vadd.f32 %v6795, %v7524
      %v7719 = vadd.f32 %v6800, %v7529
      %v7720 = vadd.f32 %v6805, %v7534
      %v7721 = vadd.f32 %v6810, %v7539
      %v7722 = vadd.f32 %v6815, %v7544
      %v7723 = vadd.f32 %v6820, %v7549
      %v7724 = vadd.f32 %v6825, %v7554
      %v7725 = vadd.f32 %v6830, %v7559
      %v7726 = vadd.f32 %v6835, %v7564
      %v7727 = vadd.f32 %v6840, %v7569
      %v7728 = vadd.f32 %v6845, %v7574
      %v7729 = vadd.f32 %v6850, %v7579
      %v7730 = vadd.f32 %v6855, %v7584
      %v7731 = vadd.f32 %v6860, %v7589
      %v7732 = vadd.f32 %v6865, %v7594
      %v7733 = vadd.f32 %v6870, %v7599
      %v7734 = vadd.f32 %v6875, %v7604
      %v7735 = vadd.f32 %v6880, %v7609
      %v7736 = vadd.f32 %v6885, %v7614
      %v7737 = vadd.f32 %v6890, %v7619
      %v7738 = vadd.f32 %v6895, %v7624
      %v7739 = vadd.f32 %v6900, %v7629
      %v7740 = vadd.f32 %v6905, %v7634
      %v7741 = vadd.f32 %v6910, %v7639
      %v7742 = vadd.f32 %v6915, %v7644
      %v7743 = vadd.f32 %v6920, %v7649
      %v7744 = vadd.f32 %v6925, %v7654
      %v7745 = vadd.f32 %v6930, %v7659
      %v7746 = vadd.f32 %v6935, %v7664
      %v7747 = vadd.f32 %v6940, %v7669
      %v7748 = vadd.f32 %v6945, %v7674
      %v7749 = vld [vmem:[%s5] sm:$0x1]
      %v7751 = vlaneseq
      %v7752 = vshrl.u32 %v7751, 7
      %v7753 = vsub.s32 0, %v7752
      %v7754 = vrot.slane %v7749, %v7753
      %v7756 = vadd.f32 %v7677, %v7754
      %v7757 = vadd.f32 %v7678, %v7754
      %v7758 = vadd.f32 %v7679, %v7754
      %v7759 = vadd.f32 %v7680, %v7754
      %v7760 = vadd.f32 %v7681, %v7754
      %v7761 = vadd.f32 %v7682, %v7754
      %v7762 = vadd.f32 %v7683, %v7754
      %v7763 = vadd.f32 %v7684, %v7754
      %v7764 = vadd.f32 %v7685, %v7754
      %v7765 = vadd.f32 %v7686, %v7754
      %v7766 = vadd.f32 %v7687, %v7754
      %v7767 = vadd.f32 %v7688, %v7754
      %v7768 = vadd.f32 %v7689, %v7754
      %v7769 = vadd.f32 %v7690, %v7754
      %v7770 = vadd.f32 %v7691, %v7754
      %v7771 = vadd.f32 %v7692, %v7754
      %v7772 = vadd.f32 %v7693, %v7754
      %v7773 = vadd.f32 %v7694, %v7754
      %v7774 = vadd.f32 %v7695, %v7754
      %v7775 = vadd.f32 %v7696, %v7754
      %v7776 = vadd.f32 %v7697, %v7754
      %v7777 = vadd.f32 %v7698, %v7754
      %v7778 = vadd.f32 %v7699, %v7754
      %v7779 = vadd.f32 %v7700, %v7754
      %v7780 = vadd.f32 %v7701, %v7754
      %v7781 = vadd.f32 %v7702, %v7754
      %v7782 = vadd.f32 %v7703, %v7754
      %v7783 = vadd.f32 %v7704, %v7754
      %v7784 = vadd.f32 %v7705, %v7754
      %v7785 = vadd.f32 %v7706, %v7754
      %v7786 = vadd.f32 %v7707, %v7754
      %v7787 = vadd.f32 %v7708, %v7754
      %v7788 = vadd.f32 %v7709, %v7754
      %v7789 = vadd.f32 %v7710, %v7754
      %v7790 = vadd.f32 %v7711, %v7754
      %v7791 = vadd.f32 %v7712, %v7754
      %v7792 = vadd.f32 %v7713, %v7754
      %v7793 = vadd.f32 %v7714, %v7754
      %v7794 = vadd.f32 %v7715, %v7754
      %v7795 = vadd.f32 %v7716, %v7754
      %v7796 = vadd.f32 %v7717, %v7754
      %v7797 = vadd.f32 %v7718, %v7754
      %v7798 = vadd.f32 %v7719, %v7754
      %v7799 = vadd.f32 %v7720, %v7754
      %v7800 = vadd.f32 %v7721, %v7754
      %v7801 = vadd.f32 %v7722, %v7754
      %v7802 = vadd.f32 %v7723, %v7754
      %v7803 = vadd.f32 %v7724, %v7754
      %v7804 = vadd.f32 %v7725, %v7754
      %v7805 = vadd.f32 %v7726, %v7754
      %v7806 = vadd.f32 %v7727, %v7754
      %v7807 = vadd.f32 %v7728, %v7754
      %v7808 = vadd.f32 %v7729, %v7754
      %v7809 = vadd.f32 %v7730, %v7754
      %v7810 = vadd.f32 %v7731, %v7754
      %v7811 = vadd.f32 %v7732, %v7754
      %v7812 = vadd.f32 %v7733, %v7754
      %v7813 = vadd.f32 %v7734, %v7754
      %v7814 = vadd.f32 %v7735, %v7754
      %v7815 = vadd.f32 %v7736, %v7754
      %v7816 = vadd.f32 %v7737, %v7754
      %v7817 = vadd.f32 %v7738, %v7754
      %v7818 = vadd.f32 %v7739, %v7754
      %v7819 = vadd.f32 %v7740, %v7754
      %v7820 = vadd.f32 %v7741, %v7754
      %v7821 = vadd.f32 %v7742, %v7754
      %v7822 = vadd.f32 %v7743, %v7754
      %v7823 = vadd.f32 %v7744, %v7754
      %v7824 = vadd.f32 %v7745, %v7754
      %v7825 = vadd.f32 %v7746, %v7754
      %v7826 = vadd.f32 %v7747, %v7754
      %v7827 = vadd.f32 %v7748, %v7754
      %vm7828 = vcmp.gt.f32.partialorder %v7756, 0.0
      %vm7829 = vcmp.gt.f32.partialorder %v7757, 0.0
      %vm7830 = vcmp.gt.f32.partialorder %v7758, 0.0
      %vm7831 = vcmp.gt.f32.partialorder %v7759, 0.0
      %vm7832 = vcmp.gt.f32.partialorder %v7760, 0.0
      %vm7833 = vcmp.gt.f32.partialorder %v7761, 0.0
      %vm7834 = vcmp.gt.f32.partialorder %v7762, 0.0
      %vm7835 = vcmp.gt.f32.partialorder %v7763, 0.0
      %vm7836 = vcmp.gt.f32.partialorder %v7764, 0.0
      %vm7837 = vcmp.gt.f32.partialorder %v7765, 0.0
      %vm7838 = vcmp.gt.f32.partialorder %v7766, 0.0
      %vm7839 = vcmp.gt.f32.partialorder %v7767, 0.0
      %vm7840 = vcmp.gt.f32.partialorder %v7768, 0.0
      %vm7841 = vcmp.gt.f32.partialorder %v7769, 0.0
      %vm7842 = vcmp.gt.f32.partialorder %v7770, 0.0
      %vm7843 = vcmp.gt.f32.partialorder %v7771, 0.0
      %vm7844 = vcmp.gt.f32.partialorder %v7772, 0.0
      %vm7845 = vcmp.gt.f32.partialorder %v7773, 0.0
      %vm7846 = vcmp.gt.f32.partialorder %v7774, 0.0
      %vm7847 = vcmp.gt.f32.partialorder %v7775, 0.0
      %vm7848 = vcmp.gt.f32.partialorder %v7776, 0.0
      %vm7849 = vcmp.gt.f32.partialorder %v7777, 0.0
      %vm7850 = vcmp.gt.f32.partialorder %v7778, 0.0
      %vm7851 = vcmp.gt.f32.partialorder %v7779, 0.0
      %vm7852 = vcmp.gt.f32.partialorder %v7780, 0.0
      %vm7853 = vcmp.gt.f32.partialorder %v7781, 0.0
      %vm7854 = vcmp.gt.f32.partialorder %v7782, 0.0
      %vm7855 = vcmp.gt.f32.partialorder %v7783, 0.0
      %vm7856 = vcmp.gt.f32.partialorder %v7784, 0.0
      %vm7857 = vcmp.gt.f32.partialorder %v7785, 0.0
      %vm7858 = vcmp.gt.f32.partialorder %v7786, 0.0
      %vm7859 = vcmp.gt.f32.partialorder %v7787, 0.0
      %vm7860 = vcmp.gt.f32.partialorder %v7788, 0.0
      %vm7861 = vcmp.gt.f32.partialorder %v7789, 0.0
      %vm7862 = vcmp.gt.f32.partialorder %v7790, 0.0
      %vm7863 = vcmp.gt.f32.partialorder %v7791, 0.0
      %vm7864 = vcmp.gt.f32.partialorder %v7792, 0.0
      %vm7865 = vcmp.gt.f32.partialorder %v7793, 0.0
      %vm7866 = vcmp.gt.f32.partialorder %v7794, 0.0
      %vm7867 = vcmp.gt.f32.partialorder %v7795, 0.0
      %vm7868 = vcmp.gt.f32.partialorder %v7796, 0.0
      %vm7869 = vcmp.gt.f32.partialorder %v7797, 0.0
      %vm7870 = vcmp.gt.f32.partialorder %v7798, 0.0
      %vm7871 = vcmp.gt.f32.partialorder %v7799, 0.0
      %vm7872 = vcmp.gt.f32.partialorder %v7800, 0.0
      %vm7873 = vcmp.gt.f32.partialorder %v7801, 0.0
      %vm7874 = vcmp.gt.f32.partialorder %v7802, 0.0
      %vm7875 = vcmp.gt.f32.partialorder %v7803, 0.0
      %vm7876 = vcmp.gt.f32.partialorder %v7804, 0.0
      %vm7877 = vcmp.gt.f32.partialorder %v7805, 0.0
      %vm7878 = vcmp.gt.f32.partialorder %v7806, 0.0
      %vm7879 = vcmp.gt.f32.partialorder %v7807, 0.0
      %vm7880 = vcmp.gt.f32.partialorder %v7808, 0.0
      %vm7881 = vcmp.gt.f32.partialorder %v7809, 0.0
      %vm7882 = vcmp.gt.f32.partialorder %v7810, 0.0
      %vm7883 = vcmp.gt.f32.partialorder %v7811, 0.0
      %vm7884 = vcmp.gt.f32.partialorder %v7812, 0.0
      %vm7885 = vcmp.gt.f32.partialorder %v7813, 0.0
      %vm7886 = vcmp.gt.f32.partialorder %v7814, 0.0
      %vm7887 = vcmp.gt.f32.partialorder %v7815, 0.0
      %vm7888 = vcmp.gt.f32.partialorder %v7816, 0.0
      %vm7889 = vcmp.gt.f32.partialorder %v7817, 0.0
      %vm7890 = vcmp.gt.f32.partialorder %v7818, 0.0
      %vm7891 = vcmp.gt.f32.partialorder %v7819, 0.0
      %vm7892 = vcmp.gt.f32.partialorder %v7820, 0.0
      %vm7893 = vcmp.gt.f32.partialorder %v7821, 0.0
      %vm7894 = vcmp.gt.f32.partialorder %v7822, 0.0
      %vm7895 = vcmp.gt.f32.partialorder %v7823, 0.0
      %vm7896 = vcmp.gt.f32.partialorder %v7824, 0.0
      %vm7897 = vcmp.gt.f32.partialorder %v7825, 0.0
      %vm7898 = vcmp.gt.f32.partialorder %v7826, 0.0
      %vm7899 = vcmp.gt.f32.partialorder %v7827, 0.0
      %v7900 = vmul.f32 %v7756, -0.3
      %v7901 = vmul.f32 %v7757, -0.3
      %v7902 = vmul.f32 %v7758, -0.3
      %v7903 = vmul.f32 %v7759, -0.3
      %v7904 = vmul.f32 %v7760, -0.3
      %v7905 = vmul.f32 %v7761, -0.3
      %v7906 = vmul.f32 %v7762, -0.3
      %v7907 = vmul.f32 %v7763, -0.3
      %v7908 = vmul.f32 %v7764, -0.3
      %v7909 = vmul.f32 %v7765, -0.3
      %v7910 = vmul.f32 %v7766, -0.3
      %v7911 = vmul.f32 %v7767, -0.3
      %v7912 = vmul.f32 %v7768, -0.3
      %v7913 = vmul.f32 %v7769, -0.3
      %v7914 = vmul.f32 %v7770, -0.3
      %v7915 = vmul.f32 %v7771, -0.3
      %v7916 = vmul.f32 %v7772, -0.3
      %v7917 = vmul.f32 %v7773, -0.3
      %v7918 = vmul.f32 %v7774, -0.3
      %v7919 = vmul.f32 %v7775, -0.3
      %v7920 = vmul.f32 %v7776, -0.3
      %v7921 = vmul.f32 %v7777, -0.3
      %v7922 = vmul.f32 %v7778, -0.3
      %v7923 = vmul.f32 %v7779, -0.3
      %v7924 = vmul.f32 %v7780, -0.3
      %v7925 = vmul.f32 %v7781, -0.3
      %v7926 = vmul.f32 %v7782, -0.3
      %v7927 = vmul.f32 %v7783, -0.3
      %v7928 = vmul.f32 %v7784, -0.3
      %v7929 = vmul.f32 %v7785, -0.3
      %v7930 = vmul.f32 %v7786, -0.3
      %v7931 = vmul.f32 %v7787, -0.3
      %v7932 = vmul.f32 %v7788, -0.3
      %v7933 = vmul.f32 %v7789, -0.3
      %v7934 = vmul.f32 %v7790, -0.3
      %v7935 = vmul.f32 %v7791, -0.3
      %v7936 = vmul.f32 %v7792, -0.3
      %v7937 = vmul.f32 %v7793, -0.3
      %v7938 = vmul.f32 %v7794, -0.3
      %v7939 = vmul.f32 %v7795, -0.3
      %v7940 = vmul.f32 %v7796, -0.3
      %v7941 = vmul.f32 %v7797, -0.3
      %v7942 = vmul.f32 %v7798, -0.3
      %v7943 = vmul.f32 %v7799, -0.3
      %v7944 = vmul.f32 %v7800, -0.3
      %v7945 = vmul.f32 %v7801, -0.3
      %v7946 = vmul.f32 %v7802, -0.3
      %v7947 = vmul.f32 %v7803, -0.3
      %v7948 = vmul.f32 %v7804, -0.3
      %v7949 = vmul.f32 %v7805, -0.3
      %v7950 = vmul.f32 %v7806, -0.3
      %v7951 = vmul.f32 %v7807, -0.3
      %v7952 = vmul.f32 %v7808, -0.3
      %v7953 = vmul.f32 %v7809, -0.3
      %v7954 = vmul.f32 %v7810, -0.3
      %v7955 = vmul.f32 %v7811, -0.3
      %v7956 = vmul.f32 %v7812, -0.3
      %v7957 = vmul.f32 %v7813, -0.3
      %v7958 = vmul.f32 %v7814, -0.3
      %v7959 = vmul.f32 %v7815, -0.3
      %v7960 = vmul.f32 %v7816, -0.3
      %v7961 = vmul.f32 %v7817, -0.3
      %v7962 = vmul.f32 %v7818, -0.3
      %v7963 = vmul.f32 %v7819, -0.3
      %v7964 = vmul.f32 %v7820, -0.3
      %v7965 = vmul.f32 %v7821, -0.3
      %v7966 = vmul.f32 %v7822, -0.3
      %v7967 = vmul.f32 %v7823, -0.3
      %v7968 = vmul.f32 %v7824, -0.3
      %v7969 = vmul.f32 %v7825, -0.3
      %v7970 = vmul.f32 %v7826, -0.3
      %v7971 = vmul.f32 %v7827, -0.3
      %v7972 = vsel %vm7828, %v7756, %v7900
      %v7973 = vsel %vm7829, %v7757, %v7901
      %v7974 = vsel %vm7830, %v7758, %v7902
      %v7975 = vsel %vm7831, %v7759, %v7903
      %v7976 = vsel %vm7832, %v7760, %v7904
      %v7977 = vsel %vm7833, %v7761, %v7905
      %v7978 = vsel %vm7834, %v7762, %v7906
      %v7979 = vsel %vm7835, %v7763, %v7907
      %v7980 = vsel %vm7836, %v7764, %v7908
      %v7981 = vsel %vm7837, %v7765, %v7909
      %v7982 = vsel %vm7838, %v7766, %v7910
      %v7983 = vsel %vm7839, %v7767, %v7911
      %v7984 = vsel %vm7840, %v7768, %v7912
      %v7985 = vsel %vm7841, %v7769, %v7913
      %v7986 = vsel %vm7842, %v7770, %v7914
      %v7987 = vsel %vm7843, %v7771, %v7915
      %v7988 = vsel %vm7844, %v7772, %v7916
      %v7989 = vsel %vm7845, %v7773, %v7917
      %v7990 = vsel %vm7846, %v7774, %v7918
      %v7991 = vsel %vm7847, %v7775, %v7919
      %v7992 = vsel %vm7848, %v7776, %v7920
      %v7993 = vsel %vm7849, %v7777, %v7921
      %v7994 = vsel %vm7850, %v7778, %v7922
      %v7995 = vsel %vm7851, %v7779, %v7923
      %v7996 = vsel %vm7852, %v7780, %v7924
      %v7997 = vsel %vm7853, %v7781, %v7925
      %v7998 = vsel %vm7854, %v7782, %v7926
      %v7999 = vsel %vm7855, %v7783, %v7927
      %v8000 = vsel %vm7856, %v7784, %v7928
      %v8001 = vsel %vm7857, %v7785, %v7929
      %v8002 = vsel %vm7858, %v7786, %v7930
      %v8003 = vsel %vm7859, %v7787, %v7931
      %v8004 = vsel %vm7860, %v7788, %v7932
      %v8005 = vsel %vm7861, %v7789, %v7933
      %v8006 = vsel %vm7862, %v7790, %v7934
      %v8007 = vsel %vm7863, %v7791, %v7935
      %v8008 = vsel %vm7864, %v7792, %v7936
      %v8009 = vsel %vm7865, %v7793, %v7937
      %v8010 = vsel %vm7866, %v7794, %v7938
      %v8011 = vsel %vm7867, %v7795, %v7939
      %v8012 = vsel %vm7868, %v7796, %v7940
      %v8013 = vsel %vm7869, %v7797, %v7941
      %v8014 = vsel %vm7870, %v7798, %v7942
      %v8015 = vsel %vm7871, %v7799, %v7943
      %v8016 = vsel %vm7872, %v7800, %v7944
      %v8017 = vsel %vm7873, %v7801, %v7945
      %v8018 = vsel %vm7874, %v7802, %v7946
      %v8019 = vsel %vm7875, %v7803, %v7947
      %v8020 = vsel %vm7876, %v7804, %v7948
      %v8021 = vsel %vm7877, %v7805, %v7949
      %v8022 = vsel %vm7878, %v7806, %v7950
      %v8023 = vsel %vm7879, %v7807, %v7951
      %v8024 = vsel %vm7880, %v7808, %v7952
      %v8025 = vsel %vm7881, %v7809, %v7953
      %v8026 = vsel %vm7882, %v7810, %v7954
      %v8027 = vsel %vm7883, %v7811, %v7955
      %v8028 = vsel %vm7884, %v7812, %v7956
      %v8029 = vsel %vm7885, %v7813, %v7957
      %v8030 = vsel %vm7886, %v7814, %v7958
      %v8031 = vsel %vm7887, %v7815, %v7959
      %v8032 = vsel %vm7888, %v7816, %v7960
      %v8033 = vsel %vm7889, %v7817, %v7961
      %v8034 = vsel %vm7890, %v7818, %v7962
      %v8035 = vsel %vm7891, %v7819, %v7963
      %v8036 = vsel %vm7892, %v7820, %v7964
      %v8037 = vsel %vm7893, %v7821, %v7965
      %v8038 = vsel %vm7894, %v7822, %v7966
      %v8039 = vsel %vm7895, %v7823, %v7967
      %v8040 = vsel %vm7896, %v7824, %v7968
      %v8041 = vsel %vm7897, %v7825, %v7969
      %v8042 = vsel %vm7898, %v7826, %v7970
      %v8043 = vsel %vm7899, %v7827, %v7971
      %8044 = vst.msk [vmem:[%s251] sm:$0xff] %vm5612, %v7972
      %8045 = vst.msk [vmem:[%s251 + $0x8] sm:$0xff] %vm5612, %v7973
      %8046 = vst.msk [vmem:[%s251 + $0x10] sm:$0xff] %vm5612, %v7974
      %8047 = vst.msk [vmem:[%s251 + $0x18] sm:$0xff] %vm5612, %v7975
      %8048 = vst.msk [vmem:[%s251 + $0x20] sm:$0xff] %vm5612, %v7976
      %8049 = vst.msk [vmem:[%s251 + $0x28] sm:$0xff] %vm5612, %v7977
      %8050 = vst.msk [vmem:[%s251 + $0x30] sm:$0xff] %vm5612, %v7978
      %8051 = vst.msk [vmem:[%s251 + $0x38] sm:$0xff] %vm5612, %v7979
      %8052 = vst.msk [vmem:[%s251 + $0x40] sm:$0xff] %vm5612, %v7980
      %8053 = vst.msk [vmem:[%s251 + $0x48] sm:$0xff] %vm5612, %v7981
      %8054 = vst.msk [vmem:[%s251 + $0x50] sm:$0xff] %vm5612, %v7982
      %8055 = vst.msk [vmem:[%s251 + $0x58] sm:$0xff] %vm5612, %v7983
      %8056 = vst.msk [vmem:[%s251 + $0x60] sm:$0xff] %vm5612, %v7984
      %8057 = vst.msk [vmem:[%s251 + $0x68] sm:$0xff] %vm5612, %v7985
      %8058 = vst.msk [vmem:[%s251 + $0x70] sm:$0xff] %vm5612, %v7986
      %8059 = vst.msk [vmem:[%s251 + $0x78] sm:$0xff] %vm5612, %v7987
      %8060 = vst.msk [vmem:[%s251 + $0x80] sm:$0xff] %vm5612, %v7988
      %8061 = vst.msk [vmem:[%s251 + $0x88] sm:$0xff] %vm5612, %v7989
      %8062 = vst.msk [vmem:[%s251 + $0x90] sm:$0xff] %vm5612, %v7990
      %8063 = vst.msk [vmem:[%s251 + $0x98] sm:$0xff] %vm5612, %v7991
      %8064 = vst.msk [vmem:[%s251 + $0xa0] sm:$0xff] %vm5612, %v7992
      %8065 = vst.msk [vmem:[%s251 + $0xa8] sm:$0xff] %vm5612, %v7993
      %8066 = vst.msk [vmem:[%s251 + $0xb0] sm:$0xff] %vm5612, %v7994
      %8067 = vst.msk [vmem:[%s251 + $0xb8] sm:$0xff] %vm5612, %v7995
      %8068 = vst.msk [vmem:[%s251 + $0xc0] sm:$0xff] %vm5612, %v7996
      %8069 = vst.msk [vmem:[%s251 + $0xc8] sm:$0xff] %vm5612, %v7997
      %8070 = vst.msk [vmem:[%s251 + $0xd0] sm:$0xff] %vm5612, %v7998
      %8071 = vst.msk [vmem:[%s251 + $0xd8] sm:$0xff] %vm5612, %v7999
      %8072 = vst.msk [vmem:[%s251 + $0xe0] sm:$0xff] %vm5612, %v8000
      %8073 = vst.msk [vmem:[%s251 + $0xe8] sm:$0xff] %vm5612, %v8001
      %8074 = vst.msk [vmem:[%s251 + $0xf0] sm:$0xff] %vm5612, %v8002
      %8075 = vst.msk [vmem:[%s251 + $0xf8] sm:$0xff] %vm5612, %v8003
      %8076 = vst.msk [vmem:[%s251 + $0x100] sm:$0xff] %vm5612, %v8004
      %8077 = vst.msk [vmem:[%s251 + $0x108] sm:$0xff] %vm5612, %v8005
      %8078 = vst.msk [vmem:[%s251 + $0x110] sm:$0xff] %vm5612, %v8006
      %8079 = vst.msk [vmem:[%s251 + $0x118] sm:$0xff] %vm5612, %v8007
      %8080 = vst.msk [vmem:[%s251 + $0x120] sm:$0xff] %vm5612, %v8008
      %8081 = vst.msk [vmem:[%s251 + $0x128] sm:$0xff] %vm5612, %v8009
      %8082 = vst.msk [vmem:[%s251 + $0x130] sm:$0xff] %vm5612, %v8010
      %8083 = vst.msk [vmem:[%s251 + $0x138] sm:$0xff] %vm5612, %v8011
      %8084 = vst.msk [vmem:[%s251 + $0x140] sm:$0xff] %vm5612, %v8012
      %8085 = vst.msk [vmem:[%s251 + $0x148] sm:$0xff] %vm5612, %v8013
      %8086 = vst.msk [vmem:[%s251 + $0x150] sm:$0xff] %vm5612, %v8014
      %8087 = vst.msk [vmem:[%s251 + $0x158] sm:$0xff] %vm5612, %v8015
      %8088 = vst.msk [vmem:[%s251 + $0x160] sm:$0xff] %vm5612, %v8016
      %8089 = vst.msk [vmem:[%s251 + $0x168] sm:$0xff] %vm5612, %v8017
      %8090 = vst.msk [vmem:[%s251 + $0x170] sm:$0xff] %vm5612, %v8018
      %8091 = vst.msk [vmem:[%s251 + $0x178] sm:$0xff] %vm5612, %v8019
      %8092 = vst.msk [vmem:[%s251 + $0x180] sm:$0xff] %vm5612, %v8020
      %8093 = vst.msk [vmem:[%s251 + $0x188] sm:$0xff] %vm5612, %v8021
      %8094 = vst.msk [vmem:[%s251 + $0x190] sm:$0xff] %vm5612, %v8022
      %8095 = vst.msk [vmem:[%s251 + $0x198] sm:$0xff] %vm5612, %v8023
      %8096 = vst.msk [vmem:[%s251 + $0x1a0] sm:$0xff] %vm5612, %v8024
      %8097 = vst.msk [vmem:[%s251 + $0x1a8] sm:$0xff] %vm5612, %v8025
      %8098 = vst.msk [vmem:[%s251 + $0x1b0] sm:$0xff] %vm5612, %v8026
      %8099 = vst.msk [vmem:[%s251 + $0x1b8] sm:$0xff] %vm5612, %v8027
      %8100 = vst.msk [vmem:[%s251 + $0x1c0] sm:$0xff] %vm5612, %v8028
      %8101 = vst.msk [vmem:[%s251 + $0x1c8] sm:$0xff] %vm5612, %v8029
      %8102 = vst.msk [vmem:[%s251 + $0x1d0] sm:$0xff] %vm5612, %v8030
      %8103 = vst.msk [vmem:[%s251 + $0x1d8] sm:$0xff] %vm5612, %v8031
      %8104 = vst.msk [vmem:[%s251 + $0x1e0] sm:$0xff] %vm5612, %v8032
      %8105 = vst.msk [vmem:[%s251 + $0x1e8] sm:$0xff] %vm5612, %v8033
      %8106 = vst.msk [vmem:[%s251 + $0x1f0] sm:$0xff] %vm5612, %v8034
      %8107 = vst.msk [vmem:[%s251 + $0x1f8] sm:$0xff] %vm5612, %v8035
      %8108 = vst.msk [vmem:[%s251 + $0x200] sm:$0xff] %vm5612, %v8036
      %8109 = vst.msk [vmem:[%s251 + $0x208] sm:$0xff] %vm5612, %v8037
      %8110 = vst.msk [vmem:[%s251 + $0x210] sm:$0xff] %vm5612, %v8038
      %8111 = vst.msk [vmem:[%s251 + $0x218] sm:$0xff] %vm5612, %v8039
      %8112 = vst.msk [vmem:[%s251 + $0x220] sm:$0xff] %vm5612, %v8040
      %8113 = vst.msk [vmem:[%s251 + $0x228] sm:$0xff] %vm5612, %v8041
      %8114 = vst.msk [vmem:[%s251 + $0x230] sm:$0xff] %vm5612, %v8042
      %8115 = vst.msk [vmem:[%s251 + $0x238] sm:$0xff] %vm5612, %v8043
      %p8116 = scmp.lt.s32.totalorder %s17, 1
      %s8117 = scalar_select %p8116, %s17, 1
      %s8118 = smul.addr %s8117, 72
      %s8119 = smul.addr %s8118, 8
      %s8120 = scalar_lea.vmem %s6, %s8119
      // Predicated region
      $region45: #{model_forward.1} parent=43 // pred_check
        %p8121 = pneg %p166
      $region46: #{model_forward.1} parent=43 // pred_check_branch
        %8123 = sbr.rel (%p8121) target = $region48
      $region47: #{model_forward.1} parent=43 // pred_region
        _
      $region48: #{model_forward.1} parent=43 // pred_fallthru
        _
    $region44: #{model_forward.1} parent=5 // pred_fallthru
      _
    %p8124 = scmp.le.s32.totalorder 2, %s12
    // Predicated region
    $region49: #{model_forward.1} parent=5 // pred_check
      %p8125 = pneg %p8124
    $region50: #{model_forward.1} parent=5 // pred_check_branch
      %8127 = sbr.rel (%p8125) target = $region52
    $region51: #{model_forward.1} parent=5 // pred_region
      %s8128 = ssub.s32 %s12, 2
      // Predicated region
      $region53: #{model_forward.1} parent=51 // pred_check
        %p8129 = pneg %p172
      $region54: #{model_forward.1} parent=51 // pred_check_branch
        %8131 = sbr.rel (%p8129) target = $region56
      $region55: #{model_forward.1} parent=51 // pred_region
        %p8132 = scmp.lt.s32.totalorder %s18, 1
        %s8133 = scalar_select %p8132, %s18, 1
        %s8134 = smul.addr %s8133, 72
        %s8135 = smul.addr %s8134, 8
        %s8136 = scalar_lea.vmem %s6, %s8135
      $region56: #{model_forward.1} parent=51 // pred_fallthru
        _
    $region52: #{model_forward.1} parent=5 // pred_fallthru
      _
  $region6: #{model_forward.1} parent=0 // loop_footer
    %s16 = sadd.s32 1, %s12
  $region7: #{model_forward.1} parent=0 // loop_footer_branch
    %11 = sbr.rel target = $region3
  $region8: #{model_forward.1} parent=0 // loop_exit
    _

</llo_original>
